<compile_context>
chip_gen: v7x
topology: tpu7x:2x2x1
jax: 0.10.0
libtpu: 0.0.40
codegen_flags: <defaults>
</compile_context>

<pallas_src>
import jax
import jax.numpy as jnp
from jax.experimental import pallas as pl
from jax.experimental.pallas import tpu as pltpu

LANES = 128  # lane width: every padded feature dimension


# ---------------------------------------------------------------------------
# Kernel 1: conv1 as fused matmul + bias + ReLU
# ---------------------------------------------------------------------------
def _conv1_kernel(p_ref, w_ref, b_ref, o_ref):
    # p_ref: (tm, 16) bf16 patches, w_ref: (16, 128) bf16, b_ref: (1, 128) f32
    acc = jnp.dot(p_ref[...], w_ref[...], preferred_element_type=jnp.float32)
    acc = jnp.maximum(acc + b_ref[...], 0.0)        # bias + ReLU
    o_ref[...] = acc.astype(o_ref.dtype)            # lane-dense bf16 store


def _conv1_call(p1, w1p, b1p, tm):
    M, K = p1.shape
    grid = (M // tm,)
    flops = 2 * M * K * LANES
    bytes_acc = M * K * 2 + M * LANES * 2 + K * LANES * 2 + LANES * 4
    return pl.pallas_call(
        _conv1_kernel,
        out_shape=jax.ShapeDtypeStruct((M, LANES), jnp.bfloat16),
        grid=grid,
        in_specs=[
            pl.BlockSpec((tm, K), lambda i: (i, 0)),
            pl.BlockSpec((K, LANES), lambda i: (0, 0)),
            pl.BlockSpec((1, LANES), lambda i: (0, 0)),
        ],
        out_specs=pl.BlockSpec((tm, LANES), lambda i: (i, 0)),
        compiler_params=pltpu.CompilerParams(dimension_semantics=("parallel",)),
        cost_estimate=pl.CostEstimate(flops=flops, transcendentals=0,
                                      bytes_accessed=bytes_acc),
    )(p1, w1p, b1p)


# ---------------------------------------------------------------------------
# Kernel 2: conv2 + Binarize01Act + Flatten + fc1 + ReLU + fc2, fully fused.
#   p2_ref : (49, tb, 256) bf16  im2col patches, position-major
#   w2_ref : (256, 128) bf16     conv2 weight, Cout padded 32->128 (zeros)
#   w3_ref : (49, 128, 128) bf16 fc1 weight, (pos, chan, out); rows for padded
#                                conv2 channels are zero so the spurious ones
#                                from Binarize01Act(0)=1 on padded lanes cannot
#                                leak into fc1.
#   w4_ref : (128, 128) bf16     fc2 weight (K and Cout padded)
#   biases : (1, 128) f32 each (zero in padded lanes)
# ---------------------------------------------------------------------------
def _tail_kernel(p2_ref, w2_ref, b2_ref, w3_ref, b3_ref, w4_ref, b4_ref, o_ref):
    tb = p2_ref.shape[1]
    w2 = w2_ref[...]
    b2 = b2_ref[...]
    acc = jnp.zeros((tb, LANES), jnp.float32)       # fc1 accumulator (VMEM/vregs)
    for p in range(49):                             # 7x7 conv2 output positions
        s = jnp.dot(p2_ref[p], w2, preferred_element_type=jnp.float32) + b2
        # Binarize01Act: (x >= 0) -> {0, 1}
        y = jnp.where(s >= 0.0, 1.0, 0.0).astype(jnp.bfloat16)
        acc = acc + jnp.dot(y, w3_ref[p], preferred_element_type=jnp.float32)
    y3 = jnp.maximum(acc + b3_ref[...], 0.0).astype(jnp.bfloat16)   # fc1 + ReLU
    y4 = jnp.dot(y3, w4_ref[...], preferred_element_type=jnp.float32) + b4_ref[...]
    o_ref[...] = y4                                  # (tb, 128) f32, lane-dense


def _tail_call(p2, w2p, b2p, w3p, b3p, w4p, b4p, tb):
    P, Np, K2 = p2.shape                             # (49, npad, 256)
    grid = (Np // tb,)
    flops = Np * (49 * 2 * K2 * LANES + 49 * 2 * LANES * LANES + 2 * LANES * LANES)
    bytes_acc = (P * Np * K2 * 2 + Np * LANES * 4
                 + (Np // tb) * (K2 * LANES * 2 + 49 * LANES * LANES * 2
                                 + LANES * LANES * 2 + 3 * LANES * 4))
    return pl.pallas_call(
        _tail_kernel,
        out_shape=jax.ShapeDtypeStruct((Np, LANES), jnp.float32),
        grid=grid,
        in_specs=[
            pl.BlockSpec((P, tb, K2), lambda i: (0, i, 0)),
            pl.BlockSpec((K2, LANES), lambda i: (0, 0)),
            pl.BlockSpec((1, LANES), lambda i: (0, 0)),
            pl.BlockSpec((P, LANES, LANES), lambda i: (0, 0, 0)),
            pl.BlockSpec((1, LANES), lambda i: (0, 0)),
            pl.BlockSpec((LANES, LANES), lambda i: (0, 0)),
            pl.BlockSpec((1, LANES), lambda i: (0, 0)),
        ],
        out_specs=pl.BlockSpec((tb, LANES), lambda i: (i, 0)),
        compiler_params=pltpu.CompilerParams(dimension_semantics=("parallel",)),
        cost_estimate=pl.CostEstimate(flops=flops, transcendentals=0,
                                      bytes_accessed=bytes_acc),
    )(p2, w2p, b2p, w3p, b3p, w4p, b4p)


# ---------------------------------------------------------------------------
# XLA-side layout prep (im2col, channels-last, weight packing) — layout only.
# ---------------------------------------------------------------------------
def _im2col_nhwc(x, k, stride, pad):
    """x: (N,H,W,C) -> (N,Ho,Wo,k*k*C), feature order (kh, kw, Cin)."""
    N, H, W, C = x.shape
    xp = jnp.pad(x, ((0, 0), (pad, pad), (pad, pad), (0, 0)))
    Ho = (H + 2 * pad - k) // stride + 1
    Wo = (W + 2 * pad - k) // stride + 1
    taps = [xp[:, di:di + stride * Ho:stride, dj:dj + stride * Wo:stride, :]
            for di in range(k) for dj in range(k)]
    patches = jnp.stack(taps, axis=3)                # (N, Ho, Wo, k*k, C)
    return patches.reshape(N, Ho, Wo, k * k * C), Ho, Wo


def _prepare_weights(params):
    f32, bf16 = jnp.float32, jnp.bfloat16
    # conv1: (16,1,4,4) -> (kh,kw,Cin,Cout) -> (16,16), Cout padded to 128.
    w1 = params["w_conv1"].transpose(2, 3, 1, 0).reshape(16, 16)
    w1p = jnp.zeros((16, LANES), f32).at[:, :16].set(w1).astype(bf16)
    b1p = jnp.zeros((1, LANES), f32).at[0, :16].set(params["b_conv1"])
    # conv2: (32,16,4,4) -> (256,32), Cout padded to 128.
    w2 = params["w_conv2"].transpose(2, 3, 1, 0).reshape(256, 32)
    w2p = jnp.zeros((256, LANES), f32).at[:, :32].set(w2).astype(bf16)
    b2p = jnp.zeros((1, LANES), f32).at[0, :32].set(params["b_conv2"])
    # fc1: PyTorch cols are (C=32,H=7,W=7)-ordered; repack to (pos, chan, out)
    # to match the NHWC in-kernel flatten; padded-channel rows stay zero.
    w3 = params["w_fc1"].reshape(100, 32, 7, 7).transpose(2, 3, 1, 0)  # (7,7,32,100)
    w3 = w3.reshape(49, 32, 100)
    w3p = jnp.zeros((49, LANES, LANES), f32).at[:, :32, :100].set(w3).astype(bf16)
    b3p = jnp.zeros((1, LANES), f32).at[0, :100].set(params["b_fc1"])
    # fc2: (10,100) -> (128,128)
    w4p = jnp.zeros((LANES, LANES), f32).at[:100, :10].set(params["w_fc2"].T).astype(bf16)
    b4p = jnp.zeros((1, LANES), f32).at[0, :10].set(params["b_fc2"])
    return w1p, b1p, w2p, b2p, w3p, b3p, w4p, b4p


# ---------------------------------------------------------------------------
# Parameters (deterministic, synthetic — shapes from MnistReal0.__init__)
# ---------------------------------------------------------------------------
def init_params(key):
    ks = jax.random.split(key, 8)
    def u(k, shape, fan_in):
        bound = 1.0 / jnp.sqrt(fan_in)
        return jax.random.uniform(k, shape, jnp.float32, -bound, bound)
    return {
        "w_conv1": u(ks[0], (16, 1, 4, 4), 1 * 4 * 4),
        "b_conv1": u(ks[1], (16,), 1 * 4 * 4),
        "w_conv2": u(ks[2], (32, 16, 4, 4), 16 * 4 * 4),
        "b_conv2": u(ks[3], (32,), 16 * 4 * 4),
        "w_fc1":   u(ks[4], (100, 32 * 7 * 7), 32 * 7 * 7),
        "b_fc1":   u(ks[5], (100,), 32 * 7 * 7),
        "w_fc2":   u(ks[6], (10, 100), 100),
        "b_fc2":   u(ks[7], (10,), 100),
    }


# ---------------------------------------------------------------------------
# Forward pass
# ---------------------------------------------------------------------------
def mnist_real0_forward(x, params, quant_step=0.1):
    """x: (N, 1, 28, 28) float32 NCHW (like PyTorch) -> (N, 10) float32."""
    N, Cin, H, W = x.shape
    assert (Cin, H, W) == (1, 28, 28), "MnistReal0 expects 1x28x28 inputs"
    w1p, b1p, w2p, b2p, w3p, b3p, w4p, b4p = _prepare_weights(params)

    # Batch tile: whole (even-padded) batch when small, else tiles of 8
    # (keeps second-minor block dims 8-aligned and shards across v7x's 2 TCs).
    tb = 8 if N >= 8 else N + (N % 2)
    npad = ((N + tb - 1) // tb) * tb

    # InputQuantizer once on the raw image (not on 4x-replicated patches),
    # then channels-last; everything downstream stays NHWC (no transposes back).
    xq = jnp.round(x / quant_step) * quant_step
    xq = xq.transpose(0, 2, 3, 1)                            # (N, 28, 28, 1)
    if npad != N:
        xq = jnp.pad(xq, ((0, npad - N), (0, 0), (0, 0), (0, 0)))

    # conv1 (4x4, s=2, p=1) + ReLU            (28 -> 14)
    p1, H1, W1 = _im2col_nhwc(xq, 4, 2, 1)                   # (npad,14,14,16)
    p1 = p1.reshape(npad * H1 * W1, 16).astype(jnp.bfloat16)
    y1 = _conv1_call(p1, w1p, b1p, tm=tb * H1 * W1)          # (npad*196, 128) bf16
    y1 = y1[:, :16].reshape(npad, H1, W1, 16)                # drop Cout padding

    # conv2 + Binarize01Act + Flatten + fc1 + ReLU + fc2 (fused, VMEM-resident)
    p2, H2, W2 = _im2col_nhwc(y1, 4, 2, 1)                   # (npad,7,7,256)
    p2 = p2.reshape(npad, H2 * W2, 256).transpose(1, 0, 2)   # (49, npad, 256)
    p2 = p2.astype(jnp.bfloat16)
    out = _tail_call(p2, w2p, b2p, w3p, b3p, w4p, b4p, tb)   # (npad, 128) f32
    return out[:N, :10]


if __name__ == "__main__":
    key = jax.random.PRNGKey(0)
    k_param, k_x = jax.random.split(key)
    params = init_params(k_param)

    batch = 2
    x = jax.random.uniform(k_x, (batch, 1, 28, 28), jnp.float32)

    out = jax.jit(mnist_real0_forward)(x, params, 0.1)
    out = jax.block_until_ready(out)
    assert out.shape == (batch, 10) and out.dtype == jnp.float32
    print("KERNEL_OK")
</pallas_src>

<mosaic_0001>
module attributes {stable_mosaic.version = 11 : i64} {
  func.func @_conv1_kernel(%arg0: i32, %arg1: memref<392x16xbf16, #tpu.memory_space<vmem>>, %arg2: memref<16x128xbf16, #tpu.memory_space<vmem>>, %arg3: memref<1x128xf32, #tpu.memory_space<vmem>>, %arg4: memref<392x128xbf16, #tpu.memory_space<vmem>>) attributes {dimension_semantics = [#tpu.dimension_semantics<parallel>], iteration_bounds = array<i64: 1>, scalar_prefetch = 0 : i64, scratch_operands = 0 : i64, tpu.core_type = #tpu.core_type<tc>, window_params = [{transform_indices = @transform_0, window_bounds = array<i64: 392, 16>}, {pipeline_mode = #tpu.pipeline_mode<synchronous>, transform_indices = @transform_1, window_bounds = array<i64: 16, 128>}, {pipeline_mode = #tpu.pipeline_mode<synchronous>, transform_indices = @transform_2, window_bounds = array<i64: 1, 128>}, {transform_indices = @transform_3, window_bounds = array<i64: 392, 128>}]} {
    %c0 = arith.constant 0 : index
    %c0_0 = arith.constant 0 : index
    %0 = vector.load %arg1[%c0, %c0_0] : memref<392x16xbf16, #tpu.memory_space<vmem>>, vector<392x16xbf16>
    %c0_1 = arith.constant 0 : index
    %c0_2 = arith.constant 0 : index
    %1 = vector.load %arg2[%c0_1, %c0_2] : memref<16x128xbf16, #tpu.memory_space<vmem>>, vector<16x128xbf16>
    %cst = arith.constant dense<0.000000e+00> : vector<392x128xf32>
    %2 = tpu.matmul %0, %1, %cst {dimension_numbers = #tpu.dot_dimension_numbers<[1], [0], [0], [1], [0, 0, 1, 1], [], []>} : vector<392x16xbf16>, vector<16x128xbf16>, vector<392x128xf32> -> vector<392x128xf32>
    %c0_3 = arith.constant 0 : index
    %c0_4 = arith.constant 0 : index
    %3 = vector.load %arg3[%c0_3, %c0_4] : memref<1x128xf32, #tpu.memory_space<vmem>>, vector<1x128xf32>
    %4 = vector.broadcast %3 : vector<1x128xf32> to vector<392x128xf32>
    %5 = arith.addf %2, %4 : vector<392x128xf32>
    %cst_5 = arith.constant 0.000000e+00 : f32
    %6 = vector.broadcast %cst_5 : f32 to vector<392x128xf32>
    %7 = arith.maximumf %5, %6 : vector<392x128xf32>
    %8 = arith.truncf %7 : vector<392x128xf32> to vector<392x128xbf16>
    %c0_6 = arith.constant 0 : index
    %c0_7 = arith.constant 0 : index
    %9 = vector.load %arg4[%c0_6, %c0_7] : memref<392x128xbf16, #tpu.memory_space<vmem>>, vector<392x128xbf16>
    tpu.vector_store %arg4[%c0_6, %c0_7], %8 {strides = array<i32>} : memref<392x128xbf16, #tpu.memory_space<vmem>>, vector<392x128xbf16>,
    return
  }
  func.func @transform_0(%arg0: i32) -> (i32, i32) {
    %c0_i32 = arith.constant 0 : i32
    %c0_i32_0 = arith.constant 0 : i32
    return %arg0, %c0_i32 : i32, i32
  }
  func.func @transform_1(%arg0: i32) -> (i32, i32) {
    %c0_i32 = arith.constant 0 : i32
    %c0_i32_0 = arith.constant 0 : i32
    %c0_i32_1 = arith.constant 0 : i32
    return %c0_i32, %c0_i32_0 : i32, i32
  }
  func.func @transform_2(%arg0: i32) -> (i32, i32) {
    %c0_i32 = arith.constant 0 : i32
    %c0_i32_0 = arith.constant 0 : i32
    %c0_i32_1 = arith.constant 0 : i32
    return %c0_i32, %c0_i32_0 : i32, i32
  }
  func.func @transform_3(%arg0: i32) -> (i32, i32) {
    %c0_i32 = arith.constant 0 : i32
    %c0_i32_0 = arith.constant 0 : i32
    return %arg0, %c0_i32 : i32, i32
  }
}

module attributes {stable_mosaic.version = 11 : i64} {
  func.func @_tail_kernel(%arg0: i32, %arg1: memref<49x2x256xbf16, #tpu.memory_space<vmem>>, %arg2: memref<256x128xbf16, #tpu.memory_space<vmem>>, %arg3: memref<1x128xf32, #tpu.memory_space<vmem>>, %arg4: memref<49x128x128xbf16, #tpu.memory_space<vmem>>, %arg5: memref<1x128xf32, #tpu.memory_space<vmem>>, %arg6: memref<128x128xbf16, #tpu.memory_space<vmem>>, %arg7: memref<1x128xf32, #tpu.memory_space<vmem>>, %arg8: memref<2x128xf32, #tpu.memory_space<vmem>>) attributes {dimension_semantics = [#tpu.dimension_semantics<parallel>], iteration_bounds = array<i64: 1>, scalar_prefetch = 0 : i64, scratch_operands = 0 : i64, tpu.core_type = #tpu.core_type<tc>, window_params = [{transform_indices = @transform_0, window_bounds = array<i64: 49, 2, 256>}, {pipeline_mode = #tpu.pipeline_mode<synchronous>, transform_indices = @transform_1, window_bounds = array<i64: 256, 128>}, {pipeline_mode = #tpu.pipeline_mode<synchronous>, transform_indices = @transform_2, window_bounds = array<i64: 1, 128>}, {pipeline_mode = #tpu.pipeline_mode<synchronous>, transform_indices = @transform_3, window_bounds = array<i64: 49, 128, 128>}, {pipeline_mode = #tpu.pipeline_mode<synchronous>, transform_indices = @transform_4, window_bounds = array<i64: 1, 128>}, {pipeline_mode = #tpu.pipeline_mode<synchronous>, transform_indices = @transform_5, window_bounds = array<i64: 128, 128>}, {pipeline_mode = #tpu.pipeline_mode<synchronous>, transform_indices = @transform_6, window_bounds = array<i64: 1, 128>}, {transform_indices = @transform_7, window_bounds = array<i64: 2, 128>}]} {
    %c0 = arith.constant 0 : index
    %c0_0 = arith.constant 0 : index
    %0 = vector.load %arg2[%c0, %c0_0] : memref<256x128xbf16, #tpu.memory_space<vmem>>, vector<256x128xbf16>
    %c0_1 = arith.constant 0 : index
    %c0_2 = arith.constant 0 : index
    %1 = vector.load %arg3[%c0_1, %c0_2] : memref<1x128xf32, #tpu.memory_space<vmem>>, vector<1x128xf32>
    %cst = arith.constant 0.000000e+00 : f32
    %2 = vector.broadcast %cst : f32 to vector<2x128xf32>
    %c0_3 = arith.constant 0 : index
    %c0_4 = arith.constant 0 : index
    %c0_5 = arith.constant 0 : index
    %3 = vector.load %arg1[%c0_3, %c0_4, %c0_5] : memref<49x2x256xbf16, #tpu.memory_space<vmem>>, vector<1x2x256xbf16>
    %4 = vector.shape_cast %3 : vector<1x2x256xbf16> to vector<2x256xbf16>
    %cst_6 = arith.constant dense<0.000000e+00> : vector<2x128xf32>
    %5 = tpu.matmul %4, %0, %cst_6 {dimension_numbers = #tpu.dot_dimension_numbers<[1], [0], [0], [1], [0, 0, 1, 1], [], []>} : vector<2x256xbf16>, vector<256x128xbf16>, vector<2x128xf32> -> vector<2x128xf32>
    %6 = vector.broadcast %1 : vector<1x128xf32> to vector<2x128xf32>
    %7 = arith.addf %5, %6 : vector<2x128xf32>
    %cst_7 = arith.constant 0.000000e+00 : f32
    %8 = vector.broadcast %cst_7 : f32 to vector<2x128xf32>
    %9 = arith.cmpf oge, %7, %8 : vector<2x128xf32>
    %cst_8 = arith.constant 1.000000e+00 : f32
    %cst_9 = arith.constant 0.000000e+00 : f32
    %10 = vector.broadcast %cst_8 : f32 to vector<2x128xf32>
    %11 = vector.broadcast %cst_9 : f32 to vector<2x128xf32>
    %12 = arith.select %9, %10, %11 : vector<2x128xi1>, vector<2x128xf32>
    %13 = arith.truncf %12 : vector<2x128xf32> to vector<2x128xbf16>
    %c0_10 = arith.constant 0 : index
    %c0_11 = arith.constant 0 : index
    %c0_12 = arith.constant 0 : index
    %14 = vector.load %arg4[%c0_10, %c0_11, %c0_12] : memref<49x128x128xbf16, #tpu.memory_space<vmem>>, vector<1x128x128xbf16>
    %15 = vector.shape_cast %14 : vector<1x128x128xbf16> to vector<128x128xbf16>
    %cst_13 = arith.constant dense<0.000000e+00> : vector<2x128xf32>
    %16 = tpu.matmul %13, %15, %cst_13 {dimension_numbers = #tpu.dot_dimension_numbers<[1], [0], [0], [1], [0, 0, 1, 1], [], []>} : vector<2x128xbf16>, vector<128x128xbf16>, vector<2x128xf32> -> vector<2x128xf32>
    %17 = arith.addf %2, %16 : vector<2x128xf32>
    %c1 = arith.constant 1 : index
    %c0_14 = arith.constant 0 : index
    %c0_15 = arith.constant 0 : index
    %18 = vector.load %arg1[%c1, %c0_14, %c0_15] : memref<49x2x256xbf16, #tpu.memory_space<vmem>>, vector<1x2x256xbf16>
    %19 = vector.shape_cast %18 : vector<1x2x256xbf16> to vector<2x256xbf16>
    %cst_16 = arith.constant dense<0.000000e+00> : vector<2x128xf32>
    %20 = tpu.matmul %19, %0, %cst_16 {dimension_numbers = #tpu.dot_dimension_numbers<[1], [0], [0], [1], [0, 0, 1, 1], [], []>} : vector<2x256xbf16>, vector<256x128xbf16>, vector<2x128xf32> -> vector<2x128xf32>
    %21 = vector.broadcast %1 : vector<1x128xf32> to vector<2x128xf32>
    %22 = arith.addf %20, %21 : vector<2x128xf32>
    %cst_17 = arith.constant 0.000000e+00 : f32
    %23 = vector.broadcast %cst_17 : f32 to vector<2x128xf32>
    %24 = arith.cmpf oge, %22, %23 : vector<2x128xf32>
    %cst_18 = arith.constant 1.000000e+00 : f32
    %cst_19 = arith.constant 0.000000e+00 : f32
    %25 = vector.broadcast %cst_18 : f32 to vector<2x128xf32>
    %26 = vector.broadcast %cst_19 : f32 to vector<2x128xf32>
    %27 = arith.select %24, %25, %26 : vector<2x128xi1>, vector<2x128xf32>
    %28 = arith.truncf %27 : vector<2x128xf32> to vector<2x128xbf16>
    %c1_20 = arith.constant 1 : index
    %c0_21 = arith.constant 0 : index
    %c0_22 = arith.constant 0 : index
    %29 = vector.load %arg4[%c1_20, %c0_21, %c0_22] : memref<49x128x128xbf16, #tpu.memory_space<vmem>>, vector<1x128x128xbf16>
    %30 = vector.shape_cast %29 : vector<1x128x128xbf16> to vector<128x128xbf16>
    %cst_23 = arith.constant dense<0.000000e+00> : vector<2x128xf32>
    %31 = tpu.matmul %28, %30, %cst_23 {dimension_numbers = #tpu.dot_dimension_numbers<[1], [0], [0], [1], [0, 0, 1, 1], [], []>} : vector<2x128xbf16>, vector<128x128xbf16>, vector<2x128xf32> -> vector<2x128xf32>
    %32 = arith.addf %17, %31 : vector<2x128xf32>
    %c2 = arith.constant 2 : index
    %c0_24 = arith.constant 0 : index
    %c0_25 = arith.constant 0 : index
    %33 = vector.load %arg1[%c2, %c0_24, %c0_25] : memref<49x2x256xbf16, #tpu.memory_space<vmem>>, vector<1x2x256xbf16>
    %34 = vector.shape_cast %33 : vector<1x2x256xbf16> to vector<2x256xbf16>
    %cst_26 = arith.constant dense<0.000000e+00> : vector<2x128xf32>
    %35 = tpu.matmul %34, %0, %cst_26 {dimension_numbers = #tpu.dot_dimension_numbers<[1], [0], [0], [1], [0, 0, 1, 1], [], []>} : vector<2x256xbf16>, vector<256x128xbf16>, vector<2x128xf32> -> vector<2x128xf32>
    %36 = vector.broadcast %1 : vector<1x128xf32> to vector<2x128xf32>
    %37 = arith.addf %35, %36 : vector<2x128xf32>
    %cst_27 = arith.constant 0.000000e+00 : f32
    %38 = vector.broadcast %cst_27 : f32 to vector<2x128xf32>
    %39 = arith.cmpf oge, %37, %38 : vector<2x128xf32>
    %cst_28 = arith.constant 1.000000e+00 : f32
    %cst_29 = arith.constant 0.000000e+00 : f32
    %40 = vector.broadcast %cst_28 : f32 to vector<2x128xf32>
    %41 = vector.broadcast %cst_29 : f32 to vector<2x128xf32>
    %42 = arith.select %39, %40, %41 : vector<2x128xi1>, vector<2x128xf32>
    %43 = arith.truncf %42 : vector<2x128xf32> to vector<2x128xbf16>
    %c2_30 = arith.constant 2 : index
    %c0_31 = arith.constant 0 : index
    %c0_32 = arith.constant 0 : index
    %44 = vector.load %arg4[%c2_30, %c0_31, %c0_32] : memref<49x128x128xbf16, #tpu.memory_space<vmem>>, vector<1x128x128xbf16>
    %45 = vector.shape_cast %44 : vector<1x128x128xbf16> to vector<128x128xbf16>
    %cst_33 = arith.constant dense<0.000000e+00> : vector<2x128xf32>
    %46 = tpu.matmul %43, %45, %cst_33 {dimension_numbers = #tpu.dot_dimension_numbers<[1], [0], [0], [1], [0, 0, 1, 1], [], []>} : vector<2x128xbf16>, vector<128x128xbf16>, vector<2x128xf32> -> vector<2x128xf32>
    %47 = arith.addf %32, %46 : vector<2x128xf32>
    %c3 = arith.constant 3 : index
    %c0_34 = arith.constant 0 : index
    %c0_35 = arith.constant 0 : index
    %48 = vector.load %arg1[%c3, %c0_34, %c0_35] : memref<49x2x256xbf16, #tpu.memory_space<vmem>>, vector<1x2x256xbf16>
    %49 = vector.shape_cast %48 : vector<1x2x256xbf16> to vector<2x256xbf16>
    %cst_36 = arith.constant dense<0.000000e+00> : vector<2x128xf32>
    %50 = tpu.matmul %49, %0, %cst_36 {dimension_numbers = #tpu.dot_dimension_numbers<[1], [0], [0], [1], [0, 0, 1, 1], [], []>} : vector<2x256xbf16>, vector<256x128xbf16>, vector<2x128xf32> -> vector<2x128xf32>
    %51 = vector.broadcast %1 : vector<1x128xf32> to vector<2x128xf32>
    %52 = arith.addf %50, %51 : vector<2x128xf32>
    %cst_37 = arith.constant 0.000000e+00 : f32
    %53 = vector.broadcast %cst_37 : f32 to vector<2x128xf32>
    %54 = arith.cmpf oge, %52, %53 : vector<2x128xf32>
    %cst_38 = arith.constant 1.000000e+00 : f32
    %cst_39 = arith.constant 0.000000e+00 : f32
    %55 = vector.broadcast %cst_38 : f32 to vector<2x128xf32>
    %56 = vector.broadcast %cst_39 : f32 to vector<2x128xf32>
    %57 = arith.select %54, %55, %56 : vector<2x128xi1>, vector<2x128xf32>
    %58 = arith.truncf %57 : vector<2x128xf32> to vector<2x128xbf16>
    %c3_40 = arith.constant 3 : index
    %c0_41 = arith.constant 0 : index
    %c0_42 = arith.constant 0 : index
    %59 = vector.load %arg4[%c3_40, %c0_41, %c0_42] : memref<49x128x128xbf16, #tpu.memory_space<vmem>>, vector<1x128x128xbf16>
    %60 = vector.shape_cast %59 : vector<1x128x128xbf16> to vector<128x128xbf16>
    %cst_43 = arith.constant dense<0.000000e+00> : vector<2x128xf32>
    %61 = tpu.matmul %58, %60, %cst_43 {dimension_numbers = #tpu.dot_dimension_numbers<[1], [0], [0], [1], [0, 0, 1, 1], [], []>} : vector<2x128xbf16>, vector<128x128xbf16>, vector<2x128xf32> -> vector<2x128xf32>
    %62 = arith.addf %47, %61 : vector<2x128xf32>
    %c4 = arith.constant 4 : index
    %c0_44 = arith.constant 0 : index
    %c0_45 = arith.constant 0 : index
    %63 = vector.load %arg1[%c4, %c0_44, %c0_45] : memref<49x2x256xbf16, #tpu.memory_space<vmem>>, vector<1x2x256xbf16>
    %64 = vector.shape_cast %63 : vector<1x2x256xbf16> to vector<2x256xbf16>
    %cst_46 = arith.constant dense<0.000000e+00> : vector<2x128xf32>
    %65 = tpu.matmul %64, %0, %cst_46 {dimension_numbers = #tpu.dot_dimension_numbers<[1], [0], [0], [1], [0, 0, 1, 1], [], []>} : vector<2x256xbf16>, vector<256x128xbf16>, vector<2x128xf32> -> vector<2x128xf32>
    %66 = vector.broadcast %1 : vector<1x128xf32> to vector<2x128xf32>
    %67 = arith.addf %65, %66 : vector<2x128xf32>
    %cst_47 = arith.constant 0.000000e+00 : f32
    %68 = vector.broadcast %cst_47 : f32 to vector<2x128xf32>
    %69 = arith.cmpf oge, %67, %68 : vector<2x128xf32>
    %cst_48 = arith.constant 1.000000e+00 : f32
    %cst_49 = arith.constant 0.000000e+00 : f32
    %70 = vector.broadcast %cst_48 : f32 to vector<2x128xf32>
    %71 = vector.broadcast %cst_49 : f32 to vector<2x128xf32>
    %72 = arith.select %69, %70, %71 : vector<2x128xi1>, vector<2x128xf32>
    %73 = arith.truncf %72 : vector<2x128xf32> to vector<2x128xbf16>
    %c4_50 = arith.constant 4 : index
    %c0_51 = arith.constant 0 : index
    %c0_52 = arith.constant 0 : index
    %74 = vector.load %arg4[%c4_50, %c0_51, %c0_52] : memref<49x128x128xbf16, #tpu.memory_space<vmem>>, vector<1x128x128xbf16>
    %75 = vector.shape_cast %74 : vector<1x128x128xbf16> to vector<128x128xbf16>
    %cst_53 = arith.constant dense<0.000000e+00> : vector<2x128xf32>
    %76 = tpu.matmul %73, %75, %cst_53 {dimension_numbers = #tpu.dot_dimension_numbers<[1], [0], [0], [1], [0, 0, 1, 1], [], []>} : vector<2x128xbf16>, vector<128x128xbf16>, vector<2x128xf32> -> vector<2x128xf32>
    %77 = arith.addf %62, %76 : vector<2x128xf32>
    %c5 = arith.constant 5 : index
    %c0_54 = arith.constant 0 : index
    %c0_55 = arith.constant 0 : index
    %78 = vector.load %arg1[%c5, %c0_54, %c0_55] : memref<49x2x256xbf16, #tpu.memory_space<vmem>>, vector<1x2x256xbf16>
    %79 = vector.shape_cast %78 : vector<1x2x256xbf16> to vector<2x256xbf16>
    %cst_56 = arith.constant dense<0.000000e+00> : vector<2x128xf32>
    %80 = tpu.matmul %79, %0, %cst_56 {dimension_numbers = #tpu.dot_dimension_numbers<[1], [0], [0], [1], [0, 0, 1, 1], [], []>} : vector<2x256xbf16>, vector<256x128xbf16>, vector<2x128xf32> -> vector<2x128xf32>
    %81 = vector.broadcast %1 : vector<1x128xf32> to vector<2x128xf32>
    %82 = arith.addf %80, %81 : vector<2x128xf32>
    %cst_57 = arith.constant 0.000000e+00 : f32
    %83 = vector.broadcast %cst_57 : f32 to vector<2x128xf32>
    %84 = arith.cmpf oge, %82, %83 : vector<2x128xf32>
    %cst_58 = arith.constant 1.000000e+00 : f32
    %cst_59 = arith.constant 0.000000e+00 : f32
    %85 = vector.broadcast %cst_58 : f32 to vector<2x128xf32>
    %86 = vector.broadcast %cst_59 : f32 to vector<2x128xf32>
    %87 = arith.select %84, %85, %86 : vector<2x128xi1>, vector<2x128xf32>
    %88 = arith.truncf %87 : vector<2x128xf32> to vector<2x128xbf16>
    %c5_60 = arith.constant 5 : index
    %c0_61 = arith.constant 0 : index
    %c0_62 = arith.constant 0 : index
    %89 = vector.load %arg4[%c5_60, %c0_61, %c0_62] : memref<49x128x128xbf16, #tpu.memory_space<vmem>>, vector<1x128x128xbf16>
    %90 = vector.shape_cast %89 : vector<1x128x128xbf16> to vector<128x128xbf16>
    %cst_63 = arith.constant dense<0.000000e+00> : vector<2x128xf32>
    %91 = tpu.matmul %88, %90, %cst_63 {dimension_numbers = #tpu.dot_dimension_numbers<[1], [0], [0], [1], [0, 0, 1, 1], [], []>} : vector<2x128xbf16>, vector<128x128xbf16>, vector<2x128xf32> -> vector<2x128xf32>
    %92 = arith.addf %77, %91 : vector<2x128xf32>
    %c6 = arith.constant 6 : index
    %c0_64 = arith.constant 0 : index
    %c0_65 = arith.constant 0 : index
    %93 = vector.load %arg1[%c6, %c0_64, %c0_65] : memref<49x2x256xbf16, #tpu.memory_space<vmem>>, vector<1x2x256xbf16>
    %94 = vector.shape_cast %93 : vector<1x2x256xbf16> to vector<2x256xbf16>
    %cst_66 = arith.constant dense<0.000000e+00> : vector<2x128xf32>
    %95 = tpu.matmul %94, %0, %cst_66 {dimension_numbers = #tpu.dot_dimension_numbers<[1], [0], [0], [1], [0, 0, 1, 1], [], []>} : vector<2x256xbf16>, vector<256x128xbf16>, vector<2x128xf32> -> vector<2x128xf32>
    %96 = vector.broadcast %1 : vector<1x128xf32> to vector<2x128xf32>
    %97 = arith.addf %95, %96 : vector<2x128xf32>
    %cst_67 = arith.constant 0.000000e+00 : f32
    %98 = vector.broadcast %cst_67 : f32 to vector<2x128xf32>
    %99 = arith.cmpf oge, %97, %98 : vector<2x128xf32>
    %cst_68 = arith.constant 1.000000e+00 : f32
    %cst_69 = arith.constant 0.000000e+00 : f32
    %100 = vector.broadcast %cst_68 : f32 to vector<2x128xf32>
    %101 = vector.broadcast %cst_69 : f32 to vector<2x128xf32>
    %102 = arith.select %99, %100, %101 : vector<2x128xi1>, vector<2x128xf32>
    %103 = arith.truncf %102 : vector<2x128xf32> to vector<2x128xbf16>
    %c6_70 = arith.constant 6 : index
    %c0_71 = arith.constant 0 : index
    %c0_72 = arith.constant 0 : index
    %104 = vector.load %arg4[%c6_70, %c0_71, %c0_72] : memref<49x128x128xbf16, #tpu.memory_space<vmem>>, vector<1x128x128xbf16>
    %105 = vector.shape_cast %104 : vector<1x128x128xbf16> to vector<128x128xbf16>
    %cst_73 = arith.constant dense<0.000000e+00> : vector<2x128xf32>
    %106 = tpu.matmul %103, %105, %cst_73 {dimension_numbers = #tpu.dot_dimension_numbers<[1], [0], [0], [1], [0, 0, 1, 1], [], []>} : vector<2x128xbf16>, vector<128x128xbf16>, vector<2x128xf32> -> vector<2x128xf32>
    %107 = arith.addf %92, %106 : vector<2x128xf32>
    %c7 = arith.constant 7 : index
    %c0_74 = arith.constant 0 : index
    %c0_75 = arith.constant 0 : index
    %108 = vector.load %arg1[%c7, %c0_74, %c0_75] : memref<49x2x256xbf16, #tpu.memory_space<vmem>>, vector<1x2x256xbf16>
    %109 = vector.shape_cast %108 : vector<1x2x256xbf16> to vector<2x256xbf16>
    %cst_76 = arith.constant dense<0.000000e+00> : vector<2x128xf32>
    %110 = tpu.matmul %109, %0, %cst_76 {dimension_numbers = #tpu.dot_dimension_numbers<[1], [0], [0], [1], [0, 0, 1, 1], [], []>} : vector<2x256xbf16>, vector<256x128xbf16>, vector<2x128xf32> -> vector<2x128xf32>
    %111 = vector.broadcast %1 : vector<1x128xf32> to vector<2x128xf32>
    %112 = arith.addf %110, %111 : vector<2x128xf32>
    %cst_77 = arith.constant 0.000000e+00 : f32
    %113 = vector.broadcast %cst_77 : f32 to vector<2x128xf32>
    %114 = arith.cmpf oge, %112, %113 : vector<2x128xf32>
    %cst_78 = arith.constant 1.000000e+00 : f32
    %cst_79 = arith.constant 0.000000e+00 : f32
    %115 = vector.broadcast %cst_78 : f32 to vector<2x128xf32>
    %116 = vector.broadcast %cst_79 : f32 to vector<2x128xf32>
    %117 = arith.select %114, %115, %116 : vector<2x128xi1>, vector<2x128xf32>
    %118 = arith.truncf %117 : vector<2x128xf32> to vector<2x128xbf16>
    %c7_80 = arith.constant 7 : index
    %c0_81 = arith.constant 0 : index
    %c0_82 = arith.constant 0 : index
    %119 = vector.load %arg4[%c7_80, %c0_81, %c0_82] : memref<49x128x128xbf16, #tpu.memory_space<vmem>>, vector<1x128x128xbf16>
    %120 = vector.shape_cast %119 : vector<1x128x128xbf16> to vector<128x128xbf16>
    %cst_83 = arith.constant dense<0.000000e+00> : vector<2x128xf32>
    %121 = tpu.matmul %118, %120, %cst_83 {dimension_numbers = #tpu.dot_dimension_numbers<[1], [0], [0], [1], [0, 0, 1, 1], [], []>} : vector<2x128xbf16>, vector<128x128xbf16>, vector<2x128xf32> -> vector<2x128xf32>
    %122 = arith.addf %107, %121 : vector<2x128xf32>
    %c8 = arith.constant 8 : index
    %c0_84 = arith.constant 0 : index
    %c0_85 = arith.constant 0 : index
    %123 = vector.load %arg1[%c8, %c0_84, %c0_85] : memref<49x2x256xbf16, #tpu.memory_space<vmem>>, vector<1x2x256xbf16>
    %124 = vector.shape_cast %123 : vector<1x2x256xbf16> to vector<2x256xbf16>
    %cst_86 = arith.constant dense<0.000000e+00> : vector<2x128xf32>
    %125 = tpu.matmul %124, %0, %cst_86 {dimension_numbers = #tpu.dot_dimension_numbers<[1], [0], [0], [1], [0, 0, 1, 1], [], []>} : vector<2x256xbf16>, vector<256x128xbf16>, vector<2x128xf32> -> vector<2x128xf32>
    %126 = vector.broadcast %1 : vector<1x128xf32> to vector<2x128xf32>
    %127 = arith.addf %125, %126 : vector<2x128xf32>
    %cst_87 = arith.constant 0.000000e+00 : f32
    %128 = vector.broadcast %cst_87 : f32 to vector<2x128xf32>
    %129 = arith.cmpf oge, %127, %128 : vector<2x128xf32>
    %cst_88 = arith.constant 1.000000e+00 : f32
    %cst_89 = arith.constant 0.000000e+00 : f32
    %130 = vector.broadcast %cst_88 : f32 to vector<2x128xf32>
    %131 = vector.broadcast %cst_89 : f32 to vector<2x128xf32>
    %132 = arith.select %129, %130, %131 : vector<2x128xi1>, vector<2x128xf32>
    %133 = arith.truncf %132 : vector<2x128xf32> to vector<2x128xbf16>
    %c8_90 = arith.constant 8 : index
    %c0_91 = arith.constant 0 : index
    %c0_92 = arith.constant 0 : index
    %134 = vector.load %arg4[%c8_90, %c0_91, %c0_92] : memref<49x128x128xbf16, #tpu.memory_space<vmem>>, vector<1x128x128xbf16>
    %135 = vector.shape_cast %134 : vector<1x128x128xbf16> to vector<128x128xbf16>
    %cst_93 = arith.constant dense<0.000000e+00> : vector<2x128xf32>
    %136 = tpu.matmul %133, %135, %cst_93 {dimension_numbers = #tpu.dot_dimension_numbers<[1], [0], [0], [1], [0, 0, 1, 1], [], []>} : vector<2x128xbf16>, vector<128x128xbf16>, vector<2x128xf32> -> vector<2x128xf32>
    %137 = arith.addf %122, %136 : vector<2x128xf32>
    %c9 = arith.constant 9 : index
    %c0_94 = arith.constant 0 : index
    %c0_95 = arith.constant 0 : index
    %138 = vector.load %arg1[%c9, %c0_94, %c0_95] : memref<49x2x256xbf16, #tpu.memory_space<vmem>>, vector<1x2x256xbf16>
    %139 = vector.shape_cast %138 : vector<1x2x256xbf16> to vector<2x256xbf16>
    %cst_96 = arith.constant dense<0.000000e+00> : vector<2x128xf32>
    %140 = tpu.matmul %139, %0, %cst_96 {dimension_numbers = #tpu.dot_dimension_numbers<[1], [0], [0], [1], [0, 0, 1, 1], [], []>} : vector<2x256xbf16>, vector<256x128xbf16>, vector<2x128xf32> -> vector<2x128xf32>
    %141 = vector.broadcast %1 : vector<1x128xf32> to vector<2x128xf32>
    %142 = arith.addf %140, %141 : vector<2x128xf32>
    %cst_97 = arith.constant 0.000000e+00 : f32
    %143 = vector.broadcast %cst_97 : f32 to vector<2x128xf32>
    %144 = arith.cmpf oge, %142, %143 : vector<2x128xf32>
    %cst_98 = arith.constant 1.000000e+00 : f32
    %cst_99 = arith.constant 0.000000e+00 : f32
    %145 = vector.broadcast %cst_98 : f32 to vector<2x128xf32>
    %146 = vector.broadcast %cst_99 : f32 to vector<2x128xf32>
    %147 = arith.select %144, %145, %146 : vector<2x128xi1>, vector<2x128xf32>
    %148 = arith.truncf %147 : vector<2x128xf32> to vector<2x128xbf16>
    %c9_100 = arith.constant 9 : index
    %c0_101 = arith.constant 0 : index
    %c0_102 = arith.constant 0 : index
    %149 = vector.load %arg4[%c9_100, %c0_101, %c0_102] : memref<49x128x128xbf16, #tpu.memory_space<vmem>>, vector<1x128x128xbf16>
    %150 = vector.shape_cast %149 : vector<1x128x128xbf16> to vector<128x128xbf16>
    %cst_103 = arith.constant dense<0.000000e+00> : vector<2x128xf32>
    %151 = tpu.matmul %148, %150, %cst_103 {dimension_numbers = #tpu.dot_dimension_numbers<[1], [0], [0], [1], [0, 0, 1, 1], [], []>} : vector<2x128xbf16>, vector<128x128xbf16>, vector<2x128xf32> -> vector<2x128xf32>
    %152 = arith.addf %137, %151 : vector<2x128xf32>
    %c10 = arith.constant 10 : index
    %c0_104 = arith.constant 0 : index
    %c0_105 = arith.constant 0 : index
    %153 = vector.load %arg1[%c10, %c0_104, %c0_105] : memref<49x2x256xbf16, #tpu.memory_space<vmem>>, vector<1x2x256xbf16>
    %154 = vector.shape_cast %153 : vector<1x2x256xbf16> to vector<2x256xbf16>
    %cst_106 = arith.constant dense<0.000000e+00> : vector<2x128xf32>
    %155 = tpu.matmul %154, %0, %cst_106 {dimension_numbers = #tpu.dot_dimension_numbers<[1], [0], [0], [1], [0, 0, 1, 1], [], []>} : vector<2x256xbf16>, vector<256x128xbf16>, vector<2x128xf32> -> vector<2x128xf32>
    %156 = vector.broadcast %1 : vector<1x128xf32> to vector<2x128xf32>
    %157 = arith.addf %155, %156 : vector<2x128xf32>
    %cst_107 = arith.constant 0.000000e+00 : f32
    %158 = vector.broadcast %cst_107 : f32 to vector<2x128xf32>
    %159 = arith.cmpf oge, %157, %158 : vector<2x128xf32>
    %cst_108 = arith.constant 1.000000e+00 : f32
    %cst_109 = arith.constant 0.000000e+00 : f32
    %160 = vector.broadcast %cst_108 : f32 to vector<2x128xf32>
    %161 = vector.broadcast %cst_109 : f32 to vector<2x128xf32>
    %162 = arith.select %159, %160, %161 : vector<2x128xi1>, vector<2x128xf32>
    %163 = arith.truncf %162 : vector<2x128xf32> to vector<2x128xbf16>
    %c10_110 = arith.constant 10 : index
    %c0_111 = arith.constant 0 : index
    %c0_112 = arith.constant 0 : index
    %164 = vector.load %arg4[%c10_110, %c0_111, %c0_112] : memref<49x128x128xbf16, #tpu.memory_space<vmem>>, vector<1x128x128xbf16>
    %165 = vector.shape_cast %164 : vector<1x128x128xbf16> to vector<128x128xbf16>
    %cst_113 = arith.constant dense<0.000000e+00> : vector<2x128xf32>
    %166 = tpu.matmul %163, %165, %cst_113 {dimension_numbers = #tpu.dot_dimension_numbers<[1], [0], [0], [1], [0, 0, 1, 1], [], []>} : vector<2x128xbf16>, vector<128x128xbf16>, vector<2x128xf32> -> vector<2x128xf32>
    %167 = arith.addf %152, %166 : vector<2x128xf32>
    %c11 = arith.constant 11 : index
    %c0_114 = arith.constant 0 : index
    %c0_115 = arith.constant 0 : index
    %168 = vector.load %arg1[%c11, %c0_114, %c0_115] : memref<49x2x256xbf16, #tpu.memory_space<vmem>>, vector<1x2x256xbf16>
    %169 = vector.shape_cast %168 : vector<1x2x256xbf16> to vector<2x256xbf16>
    %cst_116 = arith.constant dense<0.000000e+00> : vector<2x128xf32>
    %170 = tpu.matmul %169, %0, %cst_116 {dimension_numbers = #tpu.dot_dimension_numbers<[1], [0], [0], [1], [0, 0, 1, 1], [], []>} : vector<2x256xbf16>, vector<256x128xbf16>, vector<2x128xf32> -> vector<2x128xf32>
    %171 = vector.broadcast %1 : vector<1x128xf32> to vector<2x128xf32>
    %172 = arith.addf %170, %171 : vector<2x128xf32>
    %cst_117 = arith.constant 0.000000e+00 : f32
    %173 = vector.broadcast %cst_117 : f32 to vector<2x128xf32>
    %174 = arith.cmpf oge, %172, %173 : vector<2x128xf32>
    %cst_118 = arith.constant 1.000000e+00 : f32
    %cst_119 = arith.constant 0.000000e+00 : f32
    %175 = vector.broadcast %cst_118 : f32 to vector<2x128xf32>
    %176 = vector.broadcast %cst_119 : f32 to vector<2x128xf32>
    %177 = arith.select %174, %175, %176 : vector<2x128xi1>, vector<2x128xf32>
    %178 = arith.truncf %177 : vector<2x128xf32> to vector<2x128xbf16>
    %c11_120 = arith.constant 11 : index
    %c0_121 = arith.constant 0 : index
    %c0_122 = arith.constant 0 : index
    %179 = vector.load %arg4[%c11_120, %c0_121, %c0_122] : memref<49x128x128xbf16, #tpu.memory_space<vmem>>, vector<1x128x128xbf16>
    %180 = vector.shape_cast %179 : vector<1x128x128xbf16> to vector<128x128xbf16>
    %cst_123 = arith.constant dense<0.000000e+00> : vector<2x128xf32>
    %181 = tpu.matmul %178, %180, %cst_123 {dimension_numbers = #tpu.dot_dimension_numbers<[1], [0], [0], [1], [0, 0, 1, 1], [], []>} : vector<2x128xbf16>, vector<128x128xbf16>, vector<2x128xf32> -> vector<2x128xf32>
    %182 = arith.addf %167, %181 : vector<2x128xf32>
    %c12 = arith.constant 12 : index
    %c0_124 = arith.constant 0 : index
    %c0_125 = arith.constant 0 : index
    %183 = vector.load %arg1[%c12, %c0_124, %c0_125] : memref<49x2x256xbf16, #tpu.memory_space<vmem>>, vector<1x2x256xbf16>
    %184 = vector.shape_cast %183 : vector<1x2x256xbf16> to vector<2x256xbf16>
    %cst_126 = arith.constant dense<0.000000e+00> : vector<2x128xf32>
    %185 = tpu.matmul %184, %0, %cst_126 {dimension_numbers = #tpu.dot_dimension_numbers<[1], [0], [0], [1], [0, 0, 1, 1], [], []>} : vector<2x256xbf16>, vector<256x128xbf16>, vector<2x128xf32> -> vector<2x128xf32>
    %186 = vector.broadcast %1 : vector<1x128xf32> to vector<2x128xf32>
    %187 = arith.addf %185, %186 : vector<2x128xf32>
    %cst_127 = arith.constant 0.000000e+00 : f32
    %188 = vector.broadcast %cst_127 : f32 to vector<2x128xf32>
    %189 = arith.cmpf oge, %187, %188 : vector<2x128xf32>
    %cst_128 = arith.constant 1.000000e+00 : f32
    %cst_129 = arith.constant 0.000000e+00 : f32
    %190 = vector.broadcast %cst_128 : f32 to vector<2x128xf32>
    %191 = vector.broadcast %cst_129 : f32 to vector<2x128xf32>
    %192 = arith.select %189, %190, %191 : vector<2x128xi1>, vector<2x128xf32>
    %193 = arith.truncf %192 : vector<2x128xf32> to vector<2x128xbf16>
    %c12_130 = arith.constant 12 : index
    %c0_131 = arith.constant 0 : index
    %c0_132 = arith.constant 0 : index
    %194 = vector.load %arg4[%c12_130, %c0_131, %c0_132] : memref<49x128x128xbf16, #tpu.memory_space<vmem>>, vector<1x128x128xbf16>
    %195 = vector.shape_cast %194 : vector<1x128x128xbf16> to vector<128x128xbf16>
    %cst_133 = arith.constant dense<0.000000e+00> : vector<2x128xf32>
    %196 = tpu.matmul %193, %195, %cst_133 {dimension_numbers = #tpu.dot_dimension_numbers<[1], [0], [0], [1], [0, 0, 1, 1], [], []>} : vector<2x128xbf16>, vector<128x128xbf16>, vector<2x128xf32> -> vector<2x128xf32>
    %197 = arith.addf %182, %196 : vector<2x128xf32>
    %c13 = arith.constant 13 : index
    %c0_134 = arith.constant 0 : index
    %c0_135 = arith.constant 0 : index
    %198 = vector.load %arg1[%c13, %c0_134, %c0_135] : memref<49x2x256xbf16, #tpu.memory_space<vmem>>, vector<1x2x256xbf16>
    %199 = vector.shape_cast %198 : vector<1x2x256xbf16> to vector<2x256xbf16>
    %cst_136 = arith.constant dense<0.000000e+00> : vector<2x128xf32>
    %200 = tpu.matmul %199, %0, %cst_136 {dimension_numbers = #tpu.dot_dimension_numbers<[1], [0], [0], [1], [0, 0, 1, 1], [], []>} : vector<2x256xbf16>, vector<256x128xbf16>, vector<2x128xf32> -> vector<2x128xf32>
    %201 = vector.broadcast %1 : vector<1x128xf32> to vector<2x128xf32>
    %202 = arith.addf %200, %201 : vector<2x128xf32>
    %cst_137 = arith.constant 0.000000e+00 : f32
    %203 = vector.broadcast %cst_137 : f32 to vector<2x128xf32>
    %204 = arith.cmpf oge, %202, %203 : vector<2x128xf32>
    %cst_138 = arith.constant 1.000000e+00 : f32
    %cst_139 = arith.constant 0.000000e+00 : f32
    %205 = vector.broadcast %cst_138 : f32 to vector<2x128xf32>
    %206 = vector.broadcast %cst_139 : f32 to vector<2x128xf32>
    %207 = arith.select %204, %205, %206 : vector<2x128xi1>, vector<2x128xf32>
    %208 = arith.truncf %207 : vector<2x128xf32> to vector<2x128xbf16>
    %c13_140 = arith.constant 13 : index
    %c0_141 = arith.constant 0 : index
    %c0_142 = arith.constant 0 : index
    %209 = vector.load %arg4[%c13_140, %c0_141, %c0_142] : memref<49x128x128xbf16, #tpu.memory_space<vmem>>, vector<1x128x128xbf16>
    %210 = vector.shape_cast %209 : vector<1x128x128xbf16> to vector<128x128xbf16>
    %cst_143 = arith.constant dense<0.000000e+00> : vector<2x128xf32>
    %211 = tpu.matmul %208, %210, %cst_143 {dimension_numbers = #tpu.dot_dimension_numbers<[1], [0], [0], [1], [0, 0, 1, 1], [], []>} : vector<2x128xbf16>, vector<128x128xbf16>, vector<2x128xf32> -> vector<2x128xf32>
    %212 = arith.addf %197, %211 : vector<2x128xf32>
    %c14 = arith.constant 14 : index
    %c0_144 = arith.constant 0 : index
    %c0_145 = arith.constant 0 : index
    %213 = vector.load %arg1[%c14, %c0_144, %c0_145] : memref<49x2x256xbf16, #tpu.memory_space<vmem>>, vector<1x2x256xbf16>
    %214 = vector.shape_cast %213 : vector<1x2x256xbf16> to vector<2x256xbf16>
    %cst_146 = arith.constant dense<0.000000e+00> : vector<2x128xf32>
    %215 = tpu.matmul %214, %0, %cst_146 {dimension_numbers = #tpu.dot_dimension_numbers<[1], [0], [0], [1], [0, 0, 1, 1], [], []>} : vector<2x256xbf16>, vector<256x128xbf16>, vector<2x128xf32> -> vector<2x128xf32>
    %216 = vector.broadcast %1 : vector<1x128xf32> to vector<2x128xf32>
    %217 = arith.addf %215, %216 : vector<2x128xf32>
    %cst_147 = arith.constant 0.000000e+00 : f32
    %218 = vector.broadcast %cst_147 : f32 to vector<2x128xf32>
    %219 = arith.cmpf oge, %217, %218 : vector<2x128xf32>
    %cst_148 = arith.constant 1.000000e+00 : f32
    %cst_149 = arith.constant 0.000000e+00 : f32
    %220 = vector.broadcast %cst_148 : f32 to vector<2x128xf32>
    %221 = vector.broadcast %cst_149 : f32 to vector<2x128xf32>
    %222 = arith.select %219, %220, %221 : vector<2x128xi1>, vector<2x128xf32>
    %223 = arith.truncf %222 : vector<2x128xf32> to vector<2x128xbf16>
    %c14_150 = arith.constant 14 : index
    %c0_151 = arith.constant 0 : index
    %c0_152 = arith.constant 0 : index
    %224 = vector.load %arg4[%c14_150, %c0_151, %c0_152] : memref<49x128x128xbf16, #tpu.memory_space<vmem>>, vector<1x128x128xbf16>
    %225 = vector.shape_cast %224 : vector<1x128x128xbf16> to vector<128x128xbf16>
    %cst_153 = arith.constant dense<0.000000e+00> : vector<2x128xf32>
    %226 = tpu.matmul %223, %225, %cst_153 {dimension_numbers = #tpu.dot_dimension_numbers<[1], [0], [0], [1], [0, 0, 1, 1], [], []>} : vector<2x128xbf16>, vector<128x128xbf16>, vector<2x128xf32> -> vector<2x128xf32>
    %227 = arith.addf %212, %226 : vector<2x128xf32>
    %c15 = arith.constant 15 : index
    %c0_154 = arith.constant 0 : index
    %c0_155 = arith.constant 0 : index
    %228 = vector.load %arg1[%c15, %c0_154, %c0_155] : memref<49x2x256xbf16, #tpu.memory_space<vmem>>, vector<1x2x256xbf16>
    %229 = vector.shape_cast %228 : vector<1x2x256xbf16> to vector<2x256xbf16>
    %cst_156 = arith.constant dense<0.000000e+00> : vector<2x128xf32>
    %230 = tpu.matmul %229, %0, %cst_156 {dimension_numbers = #tpu.dot_dimension_numbers<[1], [0], [0], [1], [0, 0, 1, 1], [], []>} : vector<2x256xbf16>, vector<256x128xbf16>, vector<2x128xf32> -> vector<2x128xf32>
    %231 = vector.broadcast %1 : vector<1x128xf32> to vector<2x128xf32>
    %232 = arith.addf %230, %231 : vector<2x128xf32>
    %cst_157 = arith.constant 0.000000e+00 : f32
    %233 = vector.broadcast %cst_157 : f32 to vector<2x128xf32>
    %234 = arith.cmpf oge, %232, %233 : vector<2x128xf32>
    %cst_158 = arith.constant 1.000000e+00 : f32
    %cst_159 = arith.constant 0.000000e+00 : f32
    %235 = vector.broadcast %cst_158 : f32 to vector<2x128xf32>
    %236 = vector.broadcast %cst_159 : f32 to vector<2x128xf32>
    %237 = arith.select %234, %235, %236 : vector<2x128xi1>, vector<2x128xf32>
    %238 = arith.truncf %237 : vector<2x128xf32> to vector<2x128xbf16>
    %c15_160 = arith.constant 15 : index
    %c0_161 = arith.constant 0 : index
    %c0_162 = arith.constant 0 : index
    %239 = vector.load %arg4[%c15_160, %c0_161, %c0_162] : memref<49x128x128xbf16, #tpu.memory_space<vmem>>, vector<1x128x128xbf16>
    %240 = vector.shape_cast %239 : vector<1x128x128xbf16> to vector<128x128xbf16>
    %cst_163 = arith.constant dense<0.000000e+00> : vector<2x128xf32>
    %241 = tpu.matmul %238, %240, %cst_163 {dimension_numbers = #tpu.dot_dimension_numbers<[1], [0], [0], [1], [0, 0, 1, 1], [], []>} : vector<2x128xbf16>, vector<128x128xbf16>, vector<2x128xf32> -> vector<2x128xf32>
    %242 = arith.addf %227, %241 : vector<2x128xf32>
    %c16 = arith.constant 16 : index
    %c0_164 = arith.constant 0 : index
    %c0_165 = arith.constant 0 : index
    %243 = vector.load %arg1[%c16, %c0_164, %c0_165] : memref<49x2x256xbf16, #tpu.memory_space<vmem>>, vector<1x2x256xbf16>
    %244 = vector.shape_cast %243 : vector<1x2x256xbf16> to vector<2x256xbf16>
    %cst_166 = arith.constant dense<0.000000e+00> : vector<2x128xf32>
    %245 = tpu.matmul %244, %0, %cst_166 {dimension_numbers = #tpu.dot_dimension_numbers<[1], [0], [0], [1], [0, 0, 1, 1], [], []>} : vector<2x256xbf16>, vector<256x128xbf16>, vector<2x128xf32> -> vector<2x128xf32>
    %246 = vector.broadcast %1 : vector<1x128xf32> to vector<2x128xf32>
    %247 = arith.addf %245, %246 : vector<2x128xf32>
    %cst_167 = arith.constant 0.000000e+00 : f32
    %248 = vector.broadcast %cst_167 : f32 to vector<2x128xf32>
    %249 = arith.cmpf oge, %247, %248 : vector<2x128xf32>
    %cst_168 = arith.constant 1.000000e+00 : f32
    %cst_169 = arith.constant 0.000000e+00 : f32
    %250 = vector.broadcast %cst_168 : f32 to vector<2x128xf32>
    %251 = vector.broadcast %cst_169 : f32 to vector<2x128xf32>
    %252 = arith.select %249, %250, %251 : vector<2x128xi1>, vector<2x128xf32>
    %253 = arith.truncf %252 : vector<2x128xf32> to vector<2x128xbf16>
    %c16_170 = arith.constant 16 : index
    %c0_171 = arith.constant 0 : index
    %c0_172 = arith.constant 0 : index
    %254 = vector.load %arg4[%c16_170, %c0_171, %c0_172] : memref<49x128x128xbf16, #tpu.memory_space<vmem>>, vector<1x128x128xbf16>
    %255 = vector.shape_cast %254 : vector<1x128x128xbf16> to vector<128x128xbf16>
    %cst_173 = arith.constant dense<0.000000e+00> : vector<2x128xf32>
    %256 = tpu.matmul %253, %255, %cst_173 {dimension_numbers = #tpu.dot_dimension_numbers<[1], [0], [0], [1], [0, 0, 1, 1], [], []>} : vector<2x128xbf16>, vector<128x128xbf16>, vector<2x128xf32> -> vector<2x128xf32>
    %257 = arith.addf %242, %256 : vector<2x128xf32>
    %c17 = arith.constant 17 : index
    %c0_174 = arith.constant 0 : index
    %c0_175 = arith.constant 0 : index
    %258 = vector.load %arg1[%c17, %c0_174, %c0_175] : memref<49x2x256xbf16, #tpu.memory_space<vmem>>, vector<1x2x256xbf16>
    %259 = vector.shape_cast %258 : vector<1x2x256xbf16> to vector<2x256xbf16>
    %cst_176 = arith.constant dense<0.000000e+00> : vector<2x128xf32>
    %260 = tpu.matmul %259, %0, %cst_176 {dimension_numbers = #tpu.dot_dimension_numbers<[1], [0], [0], [1], [0, 0, 1, 1], [], []>} : vector<2x256xbf16>, vector<256x128xbf16>, vector<2x128xf32> -> vector<2x128xf32>
    %261 = vector.broadcast %1 : vector<1x128xf32> to vector<2x128xf32>
    %262 = arith.addf %260, %261 : vector<2x128xf32>
    %cst_177 = arith.constant 0.000000e+00 : f32
    %263 = vector.broadcast %cst_177 : f32 to vector<2x128xf32>
    %264 = arith.cmpf oge, %262, %263 : vector<2x128xf32>
    %cst_178 = arith.constant 1.000000e+00 : f32
    %cst_179 = arith.constant 0.000000e+00 : f32
    %265 = vector.broadcast %cst_178 : f32 to vector<2x128xf32>
    %266 = vector.broadcast %cst_179 : f32 to vector<2x128xf32>
    %267 = arith.select %264, %265, %266 : vector<2x128xi1>, vector<2x128xf32>
    %268 = arith.truncf %267 : vector<2x128xf32> to vector<2x128xbf16>
    %c17_180 = arith.constant 17 : index
    %c0_181 = arith.constant 0 : index
    %c0_182 = arith.constant 0 : index
    %269 = vector.load %arg4[%c17_180, %c0_181, %c0_182] : memref<49x128x128xbf16, #tpu.memory_space<vmem>>, vector<1x128x128xbf16>
    %270 = vector.shape_cast %269 : vector<1x128x128xbf16> to vector<128x128xbf16>
    %cst_183 = arith.constant dense<0.000000e+00> : vector<2x128xf32>
    %271 = tpu.matmul %268, %270, %cst_183 {dimension_numbers = #tpu.dot_dimension_numbers<[1], [0], [0], [1], [0, 0, 1, 1], [], []>} : vector<2x128xbf16>, vector<128x128xbf16>, vector<2x128xf32> -> vector<2x128xf32>
    %272 = arith.addf %257, %271 : vector<2x128xf32>
    %c18 = arith.constant 18 : index
    %c0_184 = arith.constant 0 : index
    %c0_185 = arith.constant 0 : index
    %273 = vector.load %arg1[%c18, %c0_184, %c0_185] : memref<49x2x256xbf16, #tpu.memory_space<vmem>>, vector<1x2x256xbf16>
    %274 = vector.shape_cast %273 : vector<1x2x256xbf16> to vector<2x256xbf16>
    %cst_186 = arith.constant dense<0.000000e+00> : vector<2x128xf32>
    %275 = tpu.matmul %274, %0, %cst_186 {dimension_numbers = #tpu.dot_dimension_numbers<[1], [0], [0], [1], [0, 0, 1, 1], [], []>} : vector<2x256xbf16>, vector<256x128xbf16>, vector<2x128xf32> -> vector<2x128xf32>
    %276 = vector.broadcast %1 : vector<1x128xf32> to vector<2x128xf32>
    %277 = arith.addf %275, %276 : vector<2x128xf32>
    %cst_187 = arith.constant 0.000000e+00 : f32
    %278 = vector.broadcast %cst_187 : f32 to vector<2x128xf32>
    %279 = arith.cmpf oge, %277, %278 : vector<2x128xf32>
    %cst_188 = arith.constant 1.000000e+00 : f32
    %cst_189 = arith.constant 0.000000e+00 : f32
    %280 = vector.broadcast %cst_188 : f32 to vector<2x128xf32>
    %281 = vector.broadcast %cst_189 : f32 to vector<2x128xf32>
    %282 = arith.select %279, %280, %281 : vector<2x128xi1>, vector<2x128xf32>
    %283 = arith.truncf %282 : vector<2x128xf32> to vector<2x128xbf16>
    %c18_190 = arith.constant 18 : index
    %c0_191 = arith.constant 0 : index
    %c0_192 = arith.constant 0 : index
    %284 = vector.load %arg4[%c18_190, %c0_191, %c0_192] : memref<49x128x128xbf16, #tpu.memory_space<vmem>>, vector<1x128x128xbf16>
    %285 = vector.shape_cast %284 : vector<1x128x128xbf16> to vector<128x128xbf16>
    %cst_193 = arith.constant dense<0.000000e+00> : vector<2x128xf32>
    %286 = tpu.matmul %283, %285, %cst_193 {dimension_numbers = #tpu.dot_dimension_numbers<[1], [0], [0], [1], [0, 0, 1, 1], [], []>} : vector<2x128xbf16>, vector<128x128xbf16>, vector<2x128xf32> -> vector<2x128xf32>
    %287 = arith.addf %272, %286 : vector<2x128xf32>
    %c19 = arith.constant 19 : index
    %c0_194 = arith.constant 0 : index
    %c0_195 = arith.constant 0 : index
    %288 = vector.load %arg1[%c19, %c0_194, %c0_195] : memref<49x2x256xbf16, #tpu.memory_space<vmem>>, vector<1x2x256xbf16>
    %289 = vector.shape_cast %288 : vector<1x2x256xbf16> to vector<2x256xbf16>
    %cst_196 = arith.constant dense<0.000000e+00> : vector<2x128xf32>
    %290 = tpu.matmul %289, %0, %cst_196 {dimension_numbers = #tpu.dot_dimension_numbers<[1], [0], [0], [1], [0, 0, 1, 1], [], []>} : vector<2x256xbf16>, vector<256x128xbf16>, vector<2x128xf32> -> vector<2x128xf32>
    %291 = vector.broadcast %1 : vector<1x128xf32> to vector<2x128xf32>
    %292 = arith.addf %290, %291 : vector<2x128xf32>
    %cst_197 = arith.constant 0.000000e+00 : f32
    %293 = vector.broadcast %cst_197 : f32 to vector<2x128xf32>
    %294 = arith.cmpf oge, %292, %293 : vector<2x128xf32>
    %cst_198 = arith.constant 1.000000e+00 : f32
    %cst_199 = arith.constant 0.000000e+00 : f32
    %295 = vector.broadcast %cst_198 : f32 to vector<2x128xf32>
    %296 = vector.broadcast %cst_199 : f32 to vector<2x128xf32>
    %297 = arith.select %294, %295, %296 : vector<2x128xi1>, vector<2x128xf32>
    %298 = arith.truncf %297 : vector<2x128xf32> to vector<2x128xbf16>
    %c19_200 = arith.constant 19 : index
    %c0_201 = arith.constant 0 : index
    %c0_202 = arith.constant 0 : index
    %299 = vector.load %arg4[%c19_200, %c0_201, %c0_202] : memref<49x128x128xbf16, #tpu.memory_space<vmem>>, vector<1x128x128xbf16>
    %300 = vector.shape_cast %299 : vector<1x128x128xbf16> to vector<128x128xbf16>
    %cst_203 = arith.constant dense<0.000000e+00> : vector<2x128xf32>
    %301 = tpu.matmul %298, %300, %cst_203 {dimension_numbers = #tpu.dot_dimension_numbers<[1], [0], [0], [1], [0, 0, 1, 1], [], []>} : vector<2x128xbf16>, vector<128x128xbf16>, vector<2x128xf32> -> vector<2x128xf32>
    %302 = arith.addf %287, %301 : vector<2x128xf32>
    %c20 = arith.constant 20 : index
    %c0_204 = arith.constant 0 : index
    %c0_205 = arith.constant 0 : index
    %303 = vector.load %arg1[%c20, %c0_204, %c0_205] : memref<49x2x256xbf16, #tpu.memory_space<vmem>>, vector<1x2x256xbf16>
    %304 = vector.shape_cast %303 : vector<1x2x256xbf16> to vector<2x256xbf16>
    %cst_206 = arith.constant dense<0.000000e+00> : vector<2x128xf32>
    %305 = tpu.matmul %304, %0, %cst_206 {dimension_numbers = #tpu.dot_dimension_numbers<[1], [0], [0], [1], [0, 0, 1, 1], [], []>} : vector<2x256xbf16>, vector<256x128xbf16>, vector<2x128xf32> -> vector<2x128xf32>
    %306 = vector.broadcast %1 : vector<1x128xf32> to vector<2x128xf32>
    %307 = arith.addf %305, %306 : vector<2x128xf32>
    %cst_207 = arith.constant 0.000000e+00 : f32
    %308 = vector.broadcast %cst_207 : f32 to vector<2x128xf32>
    %309 = arith.cmpf oge, %307, %308 : vector<2x128xf32>
    %cst_208 = arith.constant 1.000000e+00 : f32
    %cst_209 = arith.constant 0.000000e+00 : f32
    %310 = vector.broadcast %cst_208 : f32 to vector<2x128xf32>
    %311 = vector.broadcast %cst_209 : f32 to vector<2x128xf32>
    %312 = arith.select %309, %310, %311 : vector<2x128xi1>, vector<2x128xf32>
    %313 = arith.truncf %312 : vector<2x128xf32> to vector<2x128xbf16>
    %c20_210 = arith.constant 20 : index
    %c0_211 = arith.constant 0 : index
    %c0_212 = arith.constant 0 : index
    %314 = vector.load %arg4[%c20_210, %c0_211, %c0_212] : memref<49x128x128xbf16, #tpu.memory_space<vmem>>, vector<1x128x128xbf16>
    %315 = vector.shape_cast %314 : vector<1x128x128xbf16> to vector<128x128xbf16>
    %cst_213 = arith.constant dense<0.000000e+00> : vector<2x128xf32>
    %316 = tpu.matmul %313, %315, %cst_213 {dimension_numbers = #tpu.dot_dimension_numbers<[1], [0], [0], [1], [0, 0, 1, 1], [], []>} : vector<2x128xbf16>, vector<128x128xbf16>, vector<2x128xf32> -> vector<2x128xf32>
    %317 = arith.addf %302, %316 : vector<2x128xf32>
    %c21 = arith.constant 21 : index
    %c0_214 = arith.constant 0 : index
    %c0_215 = arith.constant 0 : index
    %318 = vector.load %arg1[%c21, %c0_214, %c0_215] : memref<49x2x256xbf16, #tpu.memory_space<vmem>>, vector<1x2x256xbf16>
    %319 = vector.shape_cast %318 : vector<1x2x256xbf16> to vector<2x256xbf16>
    %cst_216 = arith.constant dense<0.000000e+00> : vector<2x128xf32>
    %320 = tpu.matmul %319, %0, %cst_216 {dimension_numbers = #tpu.dot_dimension_numbers<[1], [0], [0], [1], [0, 0, 1, 1], [], []>} : vector<2x256xbf16>, vector<256x128xbf16>, vector<2x128xf32> -> vector<2x128xf32>
    %321 = vector.broadcast %1 : vector<1x128xf32> to vector<2x128xf32>
    %322 = arith.addf %320, %321 : vector<2x128xf32>
    %cst_217 = arith.constant 0.000000e+00 : f32
    %323 = vector.broadcast %cst_217 : f32 to vector<2x128xf32>
    %324 = arith.cmpf oge, %322, %323 : vector<2x128xf32>
    %cst_218 = arith.constant 1.000000e+00 : f32
    %cst_219 = arith.constant 0.000000e+00 : f32
    %325 = vector.broadcast %cst_218 : f32 to vector<2x128xf32>
    %326 = vector.broadcast %cst_219 : f32 to vector<2x128xf32>
    %327 = arith.select %324, %325, %326 : vector<2x128xi1>, vector<2x128xf32>
    %328 = arith.truncf %327 : vector<2x128xf32> to vector<2x128xbf16>
    %c21_220 = arith.constant 21 : index
    %c0_221 = arith.constant 0 : index
    %c0_222 = arith.constant 0 : index
    %329 = vector.load %arg4[%c21_220, %c0_221, %c0_222] : memref<49x128x128xbf16, #tpu.memory_space<vmem>>, vector<1x128x128xbf16>
    %330 = vector.shape_cast %329 : vector<1x128x128xbf16> to vector<128x128xbf16>
    %cst_223 = arith.constant dense<0.000000e+00> : vector<2x128xf32>
    %331 = tpu.matmul %328, %330, %cst_223 {dimension_numbers = #tpu.dot_dimension_numbers<[1], [0], [0], [1], [0, 0, 1, 1], [], []>} : vector<2x128xbf16>, vector<128x128xbf16>, vector<2x128xf32> -> vector<2x128xf32>
    %332 = arith.addf %317, %331 : vector<2x128xf32>
    %c22 = arith.constant 22 : index
    %c0_224 = arith.constant 0 : index
    %c0_225 = arith.constant 0 : index
    %333 = vector.load %arg1[%c22, %c0_224, %c0_225] : memref<49x2x256xbf16, #tpu.memory_space<vmem>>, vector<1x2x256xbf16>
    %334 = vector.shape_cast %333 : vector<1x2x256xbf16> to vector<2x256xbf16>
    %cst_226 = arith.constant dense<0.000000e+00> : vector<2x128xf32>
    %335 = tpu.matmul %334, %0, %cst_226 {dimension_numbers = #tpu.dot_dimension_numbers<[1], [0], [0], [1], [0, 0, 1, 1], [], []>} : vector<2x256xbf16>, vector<256x128xbf16>, vector<2x128xf32> -> vector<2x128xf32>
    %336 = vector.broadcast %1 : vector<1x128xf32> to vector<2x128xf32>
    %337 = arith.addf %335, %336 : vector<2x128xf32>
    %cst_227 = arith.constant 0.000000e+00 : f32
    %338 = vector.broadcast %cst_227 : f32 to vector<2x128xf32>
    %339 = arith.cmpf oge, %337, %338 : vector<2x128xf32>
    %cst_228 = arith.constant 1.000000e+00 : f32
    %cst_229 = arith.constant 0.000000e+00 : f32
    %340 = vector.broadcast %cst_228 : f32 to vector<2x128xf32>
    %341 = vector.broadcast %cst_229 : f32 to vector<2x128xf32>
    %342 = arith.select %339, %340, %341 : vector<2x128xi1>, vector<2x128xf32>
    %343 = arith.truncf %342 : vector<2x128xf32> to vector<2x128xbf16>
    %c22_230 = arith.constant 22 : index
    %c0_231 = arith.constant 0 : index
    %c0_232 = arith.constant 0 : index
    %344 = vector.load %arg4[%c22_230, %c0_231, %c0_232] : memref<49x128x128xbf16, #tpu.memory_space<vmem>>, vector<1x128x128xbf16>
    %345 = vector.shape_cast %344 : vector<1x128x128xbf16> to vector<128x128xbf16>
    %cst_233 = arith.constant dense<0.000000e+00> : vector<2x128xf32>
    %346 = tpu.matmul %343, %345, %cst_233 {dimension_numbers = #tpu.dot_dimension_numbers<[1], [0], [0], [1], [0, 0, 1, 1], [], []>} : vector<2x128xbf16>, vector<128x128xbf16>, vector<2x128xf32> -> vector<2x128xf32>
    %347 = arith.addf %332, %346 : vector<2x128xf32>
    %c23 = arith.constant 23 : index
    %c0_234 = arith.constant 0 : index
    %c0_235 = arith.constant 0 : index
    %348 = vector.load %arg1[%c23, %c0_234, %c0_235] : memref<49x2x256xbf16, #tpu.memory_space<vmem>>, vector<1x2x256xbf16>
    %349 = vector.shape_cast %348 : vector<1x2x256xbf16> to vector<2x256xbf16>
    %cst_236 = arith.constant dense<0.000000e+00> : vector<2x128xf32>
    %350 = tpu.matmul %349, %0, %cst_236 {dimension_numbers = #tpu.dot_dimension_numbers<[1], [0], [0], [1], [0, 0, 1, 1], [], []>} : vector<2x256xbf16>, vector<256x128xbf16>, vector<2x128xf32> -> vector<2x128xf32>
    %351 = vector.broadcast %1 : vector<1x128xf32> to vector<2x128xf32>
    %352 = arith.addf %350, %351 : vector<2x128xf32>
    %cst_237 = arith.constant 0.000000e+00 : f32
    %353 = vector.broadcast %cst_237 : f32 to vector<2x128xf32>
    %354 = arith.cmpf oge, %352, %353 : vector<2x128xf32>
    %cst_238 = arith.constant 1.000000e+00 : f32
    %cst_239 = arith.constant 0.000000e+00 : f32
    %355 = vector.broadcast %cst_238 : f32 to vector<2x128xf32>
    %356 = vector.broadcast %cst_239 : f32 to vector<2x128xf32>
    %357 = arith.select %354, %355, %356 : vector<2x128xi1>, vector<2x128xf32>
    %358 = arith.truncf %357 : vector<2x128xf32> to vector<2x128xbf16>
    %c23_240 = arith.constant 23 : index
    %c0_241 = arith.constant 0 : index
    %c0_242 = arith.constant 0 : index
    %359 = vector.load %arg4[%c23_240, %c0_241, %c0_242] : memref<49x128x128xbf16, #tpu.memory_space<vmem>>, vector<1x128x128xbf16>
    %360 = vector.shape_cast %359 : vector<1x128x128xbf16> to vector<128x128xbf16>
    %cst_243 = arith.constant dense<0.000000e+00> : vector<2x128xf32>
    %361 = tpu.matmul %358, %360, %cst_243 {dimension_numbers = #tpu.dot_dimension_numbers<[1], [0], [0], [1], [0, 0, 1, 1], [], []>} : vector<2x128xbf16>, vector<128x128xbf16>, vector<2x128xf32> -> vector<2x128xf32>
    %362 = arith.addf %347, %361 : vector<2x128xf32>
    %c24 = arith.constant 24 : index
    %c0_244 = arith.constant 0 : index
    %c0_245 = arith.constant 0 : index
    %363 = vector.load %arg1[%c24, %c0_244, %c0_245] : memref<49x2x256xbf16, #tpu.memory_space<vmem>>, vector<1x2x256xbf16>
    %364 = vector.shape_cast %363 : vector<1x2x256xbf16> to vector<2x256xbf16>
    %cst_246 = arith.constant dense<0.000000e+00> : vector<2x128xf32>
    %365 = tpu.matmul %364, %0, %cst_246 {dimension_numbers = #tpu.dot_dimension_numbers<[1], [0], [0], [1], [0, 0, 1, 1], [], []>} : vector<2x256xbf16>, vector<256x128xbf16>, vector<2x128xf32> -> vector<2x128xf32>
    %366 = vector.broadcast %1 : vector<1x128xf32> to vector<2x128xf32>
    %367 = arith.addf %365, %366 : vector<2x128xf32>
    %cst_247 = arith.constant 0.000000e+00 : f32
    %368 = vector.broadcast %cst_247 : f32 to vector<2x128xf32>
    %369 = arith.cmpf oge, %367, %368 : vector<2x128xf32>
    %cst_248 = arith.constant 1.000000e+00 : f32
    %cst_249 = arith.constant 0.000000e+00 : f32
    %370 = vector.broadcast %cst_248 : f32 to vector<2x128xf32>
    %371 = vector.broadcast %cst_249 : f32 to vector<2x128xf32>
    %372 = arith.select %369, %370, %371 : vector<2x128xi1>, vector<2x128xf32>
    %373 = arith.truncf %372 : vector<2x128xf32> to vector<2x128xbf16>
    %c24_250 = arith.constant 24 : index
    %c0_251 = arith.constant 0 : index
    %c0_252 = arith.constant 0 : index
    %374 = vector.load %arg4[%c24_250, %c0_251, %c0_252] : memref<49x128x128xbf16, #tpu.memory_space<vmem>>, vector<1x128x128xbf16>
    %375 = vector.shape_cast %374 : vector<1x128x128xbf16> to vector<128x128xbf16>
    %cst_253 = arith.constant dense<0.000000e+00> : vector<2x128xf32>
    %376 = tpu.matmul %373, %375, %cst_253 {dimension_numbers = #tpu.dot_dimension_numbers<[1], [0], [0], [1], [0, 0, 1, 1], [], []>} : vector<2x128xbf16>, vector<128x128xbf16>, vector<2x128xf32> -> vector<2x128xf32>
    %377 = arith.addf %362, %376 : vector<2x128xf32>
    %c25 = arith.constant 25 : index
    %c0_254 = arith.constant 0 : index
    %c0_255 = arith.constant 0 : index
    %378 = vector.load %arg1[%c25, %c0_254, %c0_255] : memref<49x2x256xbf16, #tpu.memory_space<vmem>>, vector<1x2x256xbf16>
    %379 = vector.shape_cast %378 : vector<1x2x256xbf16> to vector<2x256xbf16>
    %cst_256 = arith.constant dense<0.000000e+00> : vector<2x128xf32>
    %380 = tpu.matmul %379, %0, %cst_256 {dimension_numbers = #tpu.dot_dimension_numbers<[1], [0], [0], [1], [0, 0, 1, 1], [], []>} : vector<2x256xbf16>, vector<256x128xbf16>, vector<2x128xf32> -> vector<2x128xf32>
    %381 = vector.broadcast %1 : vector<1x128xf32> to vector<2x128xf32>
    %382 = arith.addf %380, %381 : vector<2x128xf32>
    %cst_257 = arith.constant 0.000000e+00 : f32
    %383 = vector.broadcast %cst_257 : f32 to vector<2x128xf32>
    %384 = arith.cmpf oge, %382, %383 : vector<2x128xf32>
    %cst_258 = arith.constant 1.000000e+00 : f32
    %cst_259 = arith.constant 0.000000e+00 : f32
    %385 = vector.broadcast %cst_258 : f32 to vector<2x128xf32>
    %386 = vector.broadcast %cst_259 : f32 to vector<2x128xf32>
    %387 = arith.select %384, %385, %386 : vector<2x128xi1>, vector<2x128xf32>
    %388 = arith.truncf %387 : vector<2x128xf32> to vector<2x128xbf16>
    %c25_260 = arith.constant 25 : index
    %c0_261 = arith.constant 0 : index
    %c0_262 = arith.constant 0 : index
    %389 = vector.load %arg4[%c25_260, %c0_261, %c0_262] : memref<49x128x128xbf16, #tpu.memory_space<vmem>>, vector<1x128x128xbf16>
    %390 = vector.shape_cast %389 : vector<1x128x128xbf16> to vector<128x128xbf16>
    %cst_263 = arith.constant dense<0.000000e+00> : vector<2x128xf32>
    %391 = tpu.matmul %388, %390, %cst_263 {dimension_numbers = #tpu.dot_dimension_numbers<[1], [0], [0], [1], [0, 0, 1, 1], [], []>} : vector<2x128xbf16>, vector<128x128xbf16>, vector<2x128xf32> -> vector<2x128xf32>
    %392 = arith.addf %377, %391 : vector<2x128xf32>
    %c26 = arith.constant 26 : index
    %c0_264 = arith.constant 0 : index
    %c0_265 = arith.constant 0 : index
    %393 = vector.load %arg1[%c26, %c0_264, %c0_265] : memref<49x2x256xbf16, #tpu.memory_space<vmem>>, vector<1x2x256xbf16>
    %394 = vector.shape_cast %393 : vector<1x2x256xbf16> to vector<2x256xbf16>
    %cst_266 = arith.constant dense<0.000000e+00> : vector<2x128xf32>
    %395 = tpu.matmul %394, %0, %cst_266 {dimension_numbers = #tpu.dot_dimension_numbers<[1], [0], [0], [1], [0, 0, 1, 1], [], []>} : vector<2x256xbf16>, vector<256x128xbf16>, vector<2x128xf32> -> vector<2x128xf32>
    %396 = vector.broadcast %1 : vector<1x128xf32> to vector<2x128xf32>
    %397 = arith.addf %395, %396 : vector<2x128xf32>
    %cst_267 = arith.constant 0.000000e+00 : f32
    %398 = vector.broadcast %cst_267 : f32 to vector<2x128xf32>
    %399 = arith.cmpf oge, %397, %398 : vector<2x128xf32>
    %cst_268 = arith.constant 1.000000e+00 : f32
    %cst_269 = arith.constant 0.000000e+00 : f32
    %400 = vector.broadcast %cst_268 : f32 to vector<2x128xf32>
    %401 = vector.broadcast %cst_269 : f32 to vector<2x128xf32>
    %402 = arith.select %399, %400, %401 : vector<2x128xi1>, vector<2x128xf32>
    %403 = arith.truncf %402 : vector<2x128xf32> to vector<2x128xbf16>
    %c26_270 = arith.constant 26 : index
    %c0_271 = arith.constant 0 : index
    %c0_272 = arith.constant 0 : index
    %404 = vector.load %arg4[%c26_270, %c0_271, %c0_272] : memref<49x128x128xbf16, #tpu.memory_space<vmem>>, vector<1x128x128xbf16>
    %405 = vector.shape_cast %404 : vector<1x128x128xbf16> to vector<128x128xbf16>
    %cst_273 = arith.constant dense<0.000000e+00> : vector<2x128xf32>
    %406 = tpu.matmul %403, %405, %cst_273 {dimension_numbers = #tpu.dot_dimension_numbers<[1], [0], [0], [1], [0, 0, 1, 1], [], []>} : vector<2x128xbf16>, vector<128x128xbf16>, vector<2x128xf32> -> vector<2x128xf32>
    %407 = arith.addf %392, %406 : vector<2x128xf32>
    %c27 = arith.constant 27 : index
    %c0_274 = arith.constant 0 : index
    %c0_275 = arith.constant 0 : index
    %408 = vector.load %arg1[%c27, %c0_274, %c0_275] : memref<49x2x256xbf16, #tpu.memory_space<vmem>>, vector<1x2x256xbf16>
    %409 = vector.shape_cast %408 : vector<1x2x256xbf16> to vector<2x256xbf16>
    %cst_276 = arith.constant dense<0.000000e+00> : vector<2x128xf32>
    %410 = tpu.matmul %409, %0, %cst_276 {dimension_numbers = #tpu.dot_dimension_numbers<[1], [0], [0], [1], [0, 0, 1, 1], [], []>} : vector<2x256xbf16>, vector<256x128xbf16>, vector<2x128xf32> -> vector<2x128xf32>
    %411 = vector.broadcast %1 : vector<1x128xf32> to vector<2x128xf32>
    %412 = arith.addf %410, %411 : vector<2x128xf32>
    %cst_277 = arith.constant 0.000000e+00 : f32
    %413 = vector.broadcast %cst_277 : f32 to vector<2x128xf32>
    %414 = arith.cmpf oge, %412, %413 : vector<2x128xf32>
    %cst_278 = arith.constant 1.000000e+00 : f32
    %cst_279 = arith.constant 0.000000e+00 : f32
    %415 = vector.broadcast %cst_278 : f32 to vector<2x128xf32>
    %416 = vector.broadcast %cst_279 : f32 to vector<2x128xf32>
    %417 = arith.select %414, %415, %416 : vector<2x128xi1>, vector<2x128xf32>
    %418 = arith.truncf %417 : vector<2x128xf32> to vector<2x128xbf16>
    %c27_280 = arith.constant 27 : index
    %c0_281 = arith.constant 0 : index
    %c0_282 = arith.constant 0 : index
    %419 = vector.load %arg4[%c27_280, %c0_281, %c0_282] : memref<49x128x128xbf16, #tpu.memory_space<vmem>>, vector<1x128x128xbf16>
    %420 = vector.shape_cast %419 : vector<1x128x128xbf16> to vector<128x128xbf16>
    %cst_283 = arith.constant dense<0.000000e+00> : vector<2x128xf32>
    %421 = tpu.matmul %418, %420, %cst_283 {dimension_numbers = #tpu.dot_dimension_numbers<[1], [0], [0], [1], [0, 0, 1, 1], [], []>} : vector<2x128xbf16>, vector<128x128xbf16>, vector<2x128xf32> -> vector<2x128xf32>
    %422 = arith.addf %407, %421 : vector<2x128xf32>
    %c28 = arith.constant 28 : index
    %c0_284 = arith.constant 0 : index
    %c0_285 = arith.constant 0 : index
    %423 = vector.load %arg1[%c28, %c0_284, %c0_285] : memref<49x2x256xbf16, #tpu.memory_space<vmem>>, vector<1x2x256xbf16>
    %424 = vector.shape_cast %423 : vector<1x2x256xbf16> to vector<2x256xbf16>
    %cst_286 = arith.constant dense<0.000000e+00> : vector<2x128xf32>
    %425 = tpu.matmul %424, %0, %cst_286 {dimension_numbers = #tpu.dot_dimension_numbers<[1], [0], [0], [1], [0, 0, 1, 1], [], []>} : vector<2x256xbf16>, vector<256x128xbf16>, vector<2x128xf32> -> vector<2x128xf32>
    %426 = vector.broadcast %1 : vector<1x128xf32> to vector<2x128xf32>
    %427 = arith.addf %425, %426 : vector<2x128xf32>
    %cst_287 = arith.constant 0.000000e+00 : f32
    %428 = vector.broadcast %cst_287 : f32 to vector<2x128xf32>
    %429 = arith.cmpf oge, %427, %428 : vector<2x128xf32>
    %cst_288 = arith.constant 1.000000e+00 : f32
    %cst_289 = arith.constant 0.000000e+00 : f32
    %430 = vector.broadcast %cst_288 : f32 to vector<2x128xf32>
    %431 = vector.broadcast %cst_289 : f32 to vector<2x128xf32>
    %432 = arith.select %429, %430, %431 : vector<2x128xi1>, vector<2x128xf32>
    %433 = arith.truncf %432 : vector<2x128xf32> to vector<2x128xbf16>
    %c28_290 = arith.constant 28 : index
    %c0_291 = arith.constant 0 : index
    %c0_292 = arith.constant 0 : index
    %434 = vector.load %arg4[%c28_290, %c0_291, %c0_292] : memref<49x128x128xbf16, #tpu.memory_space<vmem>>, vector<1x128x128xbf16>
    %435 = vector.shape_cast %434 : vector<1x128x128xbf16> to vector<128x128xbf16>
    %cst_293 = arith.constant dense<0.000000e+00> : vector<2x128xf32>
    %436 = tpu.matmul %433, %435, %cst_293 {dimension_numbers = #tpu.dot_dimension_numbers<[1], [0], [0], [1], [0, 0, 1, 1], [], []>} : vector<2x128xbf16>, vector<128x128xbf16>, vector<2x128xf32> -> vector<2x128xf32>
    %437 = arith.addf %422, %436 : vector<2x128xf32>
    %c29 = arith.constant 29 : index
    %c0_294 = arith.constant 0 : index
    %c0_295 = arith.constant 0 : index
    %438 = vector.load %arg1[%c29, %c0_294, %c0_295] : memref<49x2x256xbf16, #tpu.memory_space<vmem>>, vector<1x2x256xbf16>
    %439 = vector.shape_cast %438 : vector<1x2x256xbf16> to vector<2x256xbf16>
    %cst_296 = arith.constant dense<0.000000e+00> : vector<2x128xf32>
    %440 = tpu.matmul %439, %0, %cst_296 {dimension_numbers = #tpu.dot_dimension_numbers<[1], [0], [0], [1], [0, 0, 1, 1], [], []>} : vector<2x256xbf16>, vector<256x128xbf16>, vector<2x128xf32> -> vector<2x128xf32>
    %441 = vector.broadcast %1 : vector<1x128xf32> to vector<2x128xf32>
    %442 = arith.addf %440, %441 : vector<2x128xf32>
    %cst_297 = arith.constant 0.000000e+00 : f32
    %443 = vector.broadcast %cst_297 : f32 to vector<2x128xf32>
    %444 = arith.cmpf oge, %442, %443 : vector<2x128xf32>
    %cst_298 = arith.constant 1.000000e+00 : f32
    %cst_299 = arith.constant 0.000000e+00 : f32
    %445 = vector.broadcast %cst_298 : f32 to vector<2x128xf32>
    %446 = vector.broadcast %cst_299 : f32 to vector<2x128xf32>
    %447 = arith.select %444, %445, %446 : vector<2x128xi1>, vector<2x128xf32>
    %448 = arith.truncf %447 : vector<2x128xf32> to vector<2x128xbf16>
    %c29_300 = arith.constant 29 : index
    %c0_301 = arith.constant 0 : index
    %c0_302 = arith.constant 0 : index
    %449 = vector.load %arg4[%c29_300, %c0_301, %c0_302] : memref<49x128x128xbf16, #tpu.memory_space<vmem>>, vector<1x128x128xbf16>
    %450 = vector.shape_cast %449 : vector<1x128x128xbf16> to vector<128x128xbf16>
    %cst_303 = arith.constant dense<0.000000e+00> : vector<2x128xf32>
    %451 = tpu.matmul %448, %450, %cst_303 {dimension_numbers = #tpu.dot_dimension_numbers<[1], [0], [0], [1], [0, 0, 1, 1], [], []>} : vector<2x128xbf16>, vector<128x128xbf16>, vector<2x128xf32> -> vector<2x128xf32>
    %452 = arith.addf %437, %451 : vector<2x128xf32>
    %c30 = arith.constant 30 : index
    %c0_304 = arith.constant 0 : index
    %c0_305 = arith.constant 0 : index
    %453 = vector.load %arg1[%c30, %c0_304, %c0_305] : memref<49x2x256xbf16, #tpu.memory_space<vmem>>, vector<1x2x256xbf16>
    %454 = vector.shape_cast %453 : vector<1x2x256xbf16> to vector<2x256xbf16>
    %cst_306 = arith.constant dense<0.000000e+00> : vector<2x128xf32>
    %455 = tpu.matmul %454, %0, %cst_306 {dimension_numbers = #tpu.dot_dimension_numbers<[1], [0], [0], [1], [0, 0, 1, 1], [], []>} : vector<2x256xbf16>, vector<256x128xbf16>, vector<2x128xf32> -> vector<2x128xf32>
    %456 = vector.broadcast %1 : vector<1x128xf32> to vector<2x128xf32>
    %457 = arith.addf %455, %456 : vector<2x128xf32>
    %cst_307 = arith.constant 0.000000e+00 : f32
    %458 = vector.broadcast %cst_307 : f32 to vector<2x128xf32>
    %459 = arith.cmpf oge, %457, %458 : vector<2x128xf32>
    %cst_308 = arith.constant 1.000000e+00 : f32
    %cst_309 = arith.constant 0.000000e+00 : f32
    %460 = vector.broadcast %cst_308 : f32 to vector<2x128xf32>
    %461 = vector.broadcast %cst_309 : f32 to vector<2x128xf32>
    %462 = arith.select %459, %460, %461 : vector<2x128xi1>, vector<2x128xf32>
    %463 = arith.truncf %462 : vector<2x128xf32> to vector<2x128xbf16>
    %c30_310 = arith.constant 30 : index
    %c0_311 = arith.constant 0 : index
    %c0_312 = arith.constant 0 : index
    %464 = vector.load %arg4[%c30_310, %c0_311, %c0_312] : memref<49x128x128xbf16, #tpu.memory_space<vmem>>, vector<1x128x128xbf16>
    %465 = vector.shape_cast %464 : vector<1x128x128xbf16> to vector<128x128xbf16>
    %cst_313 = arith.constant dense<0.000000e+00> : vector<2x128xf32>
    %466 = tpu.matmul %463, %465, %cst_313 {dimension_numbers = #tpu.dot_dimension_numbers<[1], [0], [0], [1], [0, 0, 1, 1], [], []>} : vector<2x128xbf16>, vector<128x128xbf16>, vector<2x128xf32> -> vector<2x128xf32>
    %467 = arith.addf %452, %466 : vector<2x128xf32>
    %c31 = arith.constant 31 : index
    %c0_314 = arith.constant 0 : index
    %c0_315 = arith.constant 0 : index
    %468 = vector.load %arg1[%c31, %c0_314, %c0_315] : memref<49x2x256xbf16, #tpu.memory_space<vmem>>, vector<1x2x256xbf16>
    %469 = vector.shape_cast %468 : vector<1x2x256xbf16> to vector<2x256xbf16>
    %cst_316 = arith.constant dense<0.000000e+00> : vector<2x128xf32>
    %470 = tpu.matmul %469, %0, %cst_316 {dimension_numbers = #tpu.dot_dimension_numbers<[1], [0], [0], [1], [0, 0, 1, 1], [], []>} : vector<2x256xbf16>, vector<256x128xbf16>, vector<2x128xf32> -> vector<2x128xf32>
    %471 = vector.broadcast %1 : vector<1x128xf32> to vector<2x128xf32>
    %472 = arith.addf %470, %471 : vector<2x128xf32>
    %cst_317 = arith.constant 0.000000e+00 : f32
    %473 = vector.broadcast %cst_317 : f32 to vector<2x128xf32>
    %474 = arith.cmpf oge, %472, %473 : vector<2x128xf32>
    %cst_318 = arith.constant 1.000000e+00 : f32
    %cst_319 = arith.constant 0.000000e+00 : f32
    %475 = vector.broadcast %cst_318 : f32 to vector<2x128xf32>
    %476 = vector.broadcast %cst_319 : f32 to vector<2x128xf32>
    %477 = arith.select %474, %475, %476 : vector<2x128xi1>, vector<2x128xf32>
    %478 = arith.truncf %477 : vector<2x128xf32> to vector<2x128xbf16>
    %c31_320 = arith.constant 31 : index
    %c0_321 = arith.constant 0 : index
    %c0_322 = arith.constant 0 : index
    %479 = vector.load %arg4[%c31_320, %c0_321, %c0_322] : memref<49x128x128xbf16, #tpu.memory_space<vmem>>, vector<1x128x128xbf16>
    %480 = vector.shape_cast %479 : vector<1x128x128xbf16> to vector<128x128xbf16>
    %cst_323 = arith.constant dense<0.000000e+00> : vector<2x128xf32>
    %481 = tpu.matmul %478, %480, %cst_323 {dimension_numbers = #tpu.dot_dimension_numbers<[1], [0], [0], [1], [0, 0, 1, 1], [], []>} : vector<2x128xbf16>, vector<128x128xbf16>, vector<2x128xf32> -> vector<2x128xf32>
    %482 = arith.addf %467, %481 : vector<2x128xf32>
    %c32 = arith.constant 32 : index
    %c0_324 = arith.constant 0 : index
    %c0_325 = arith.constant 0 : index
    %483 = vector.load %arg1[%c32, %c0_324, %c0_325] : memref<49x2x256xbf16, #tpu.memory_space<vmem>>, vector<1x2x256xbf16>
    %484 = vector.shape_cast %483 : vector<1x2x256xbf16> to vector<2x256xbf16>
    %cst_326 = arith.constant dense<0.000000e+00> : vector<2x128xf32>
    %485 = tpu.matmul %484, %0, %cst_326 {dimension_numbers = #tpu.dot_dimension_numbers<[1], [0], [0], [1], [0, 0, 1, 1], [], []>} : vector<2x256xbf16>, vector<256x128xbf16>, vector<2x128xf32> -> vector<2x128xf32>
    %486 = vector.broadcast %1 : vector<1x128xf32> to vector<2x128xf32>
    %487 = arith.addf %485, %486 : vector<2x128xf32>
    %cst_327 = arith.constant 0.000000e+00 : f32
    %488 = vector.broadcast %cst_327 : f32 to vector<2x128xf32>
    %489 = arith.cmpf oge, %487, %488 : vector<2x128xf32>
    %cst_328 = arith.constant 1.000000e+00 : f32
    %cst_329 = arith.constant 0.000000e+00 : f32
    %490 = vector.broadcast %cst_328 : f32 to vector<2x128xf32>
    %491 = vector.broadcast %cst_329 : f32 to vector<2x128xf32>
    %492 = arith.select %489, %490, %491 : vector<2x128xi1>, vector<2x128xf32>
    %493 = arith.truncf %492 : vector<2x128xf32> to vector<2x128xbf16>
    %c32_330 = arith.constant 32 : index
    %c0_331 = arith.constant 0 : index
    %c0_332 = arith.constant 0 : index
    %494 = vector.load %arg4[%c32_330, %c0_331, %c0_332] : memref<49x128x128xbf16, #tpu.memory_space<vmem>>, vector<1x128x128xbf16>
    %495 = vector.shape_cast %494 : vector<1x128x128xbf16> to vector<128x128xbf16>
    %cst_333 = arith.constant dense<0.000000e+00> : vector<2x128xf32>
    %496 = tpu.matmul %493, %495, %cst_333 {dimension_numbers = #tpu.dot_dimension_numbers<[1], [0], [0], [1], [0, 0, 1, 1], [], []>} : vector<2x128xbf16>, vector<128x128xbf16>, vector<2x128xf32> -> vector<2x128xf32>
    %497 = arith.addf %482, %496 : vector<2x128xf32>
    %c33 = arith.constant 33 : index
    %c0_334 = arith.constant 0 : index
    %c0_335 = arith.constant 0 : index
    %498 = vector.load %arg1[%c33, %c0_334, %c0_335] : memref<49x2x256xbf16, #tpu.memory_space<vmem>>, vector<1x2x256xbf16>
    %499 = vector.shape_cast %498 : vector<1x2x256xbf16> to vector<2x256xbf16>
    %cst_336 = arith.constant dense<0.000000e+00> : vector<2x128xf32>
    %500 = tpu.matmul %499, %0, %cst_336 {dimension_numbers = #tpu.dot_dimension_numbers<[1], [0], [0], [1], [0, 0, 1, 1], [], []>} : vector<2x256xbf16>, vector<256x128xbf16>, vector<2x128xf32> -> vector<2x128xf32>
    %501 = vector.broadcast %1 : vector<1x128xf32> to vector<2x128xf32>
    %502 = arith.addf %500, %501 : vector<2x128xf32>
    %cst_337 = arith.constant 0.000000e+00 : f32
    %503 = vector.broadcast %cst_337 : f32 to vector<2x128xf32>
    %504 = arith.cmpf oge, %502, %503 : vector<2x128xf32>
    %cst_338 = arith.constant 1.000000e+00 : f32
    %cst_339 = arith.constant 0.000000e+00 : f32
    %505 = vector.broadcast %cst_338 : f32 to vector<2x128xf32>
    %506 = vector.broadcast %cst_339 : f32 to vector<2x128xf32>
    %507 = arith.select %504, %505, %506 : vector<2x128xi1>, vector<2x128xf32>
    %508 = arith.truncf %507 : vector<2x128xf32> to vector<2x128xbf16>
    %c33_340 = arith.constant 33 : index
    %c0_341 = arith.constant 0 : index
    %c0_342 = arith.constant 0 : index
    %509 = vector.load %arg4[%c33_340, %c0_341, %c0_342] : memref<49x128x128xbf16, #tpu.memory_space<vmem>>, vector<1x128x128xbf16>
    %510 = vector.shape_cast %509 : vector<1x128x128xbf16> to vector<128x128xbf16>
    %cst_343 = arith.constant dense<0.000000e+00> : vector<2x128xf32>
    %511 = tpu.matmul %508, %510, %cst_343 {dimension_numbers = #tpu.dot_dimension_numbers<[1], [0], [0], [1], [0, 0, 1, 1], [], []>} : vector<2x128xbf16>, vector<128x128xbf16>, vector<2x128xf32> -> vector<2x128xf32>
    %512 = arith.addf %497, %511 : vector<2x128xf32>
    %c34 = arith.constant 34 : index
    %c0_344 = arith.constant 0 : index
    %c0_345 = arith.constant 0 : index
    %513 = vector.load %arg1[%c34, %c0_344, %c0_345] : memref<49x2x256xbf16, #tpu.memory_space<vmem>>, vector<1x2x256xbf16>
    %514 = vector.shape_cast %513 : vector<1x2x256xbf16> to vector<2x256xbf16>
    %cst_346 = arith.constant dense<0.000000e+00> : vector<2x128xf32>
    %515 = tpu.matmul %514, %0, %cst_346 {dimension_numbers = #tpu.dot_dimension_numbers<[1], [0], [0], [1], [0, 0, 1, 1], [], []>} : vector<2x256xbf16>, vector<256x128xbf16>, vector<2x128xf32> -> vector<2x128xf32>
    %516 = vector.broadcast %1 : vector<1x128xf32> to vector<2x128xf32>
    %517 = arith.addf %515, %516 : vector<2x128xf32>
    %cst_347 = arith.constant 0.000000e+00 : f32
    %518 = vector.broadcast %cst_347 : f32 to vector<2x128xf32>
    %519 = arith.cmpf oge, %517, %518 : vector<2x128xf32>
    %cst_348 = arith.constant 1.000000e+00 : f32
    %cst_349 = arith.constant 0.000000e+00 : f32
    %520 = vector.broadcast %cst_348 : f32 to vector<2x128xf32>
    %521 = vector.broadcast %cst_349 : f32 to vector<2x128xf32>
    %522 = arith.select %519, %520, %521 : vector<2x128xi1>, vector<2x128xf32>
    %523 = arith.truncf %522 : vector<2x128xf32> to vector<2x128xbf16>
    %c34_350 = arith.constant 34 : index
    %c0_351 = arith.constant 0 : index
    %c0_352 = arith.constant 0 : index
    %524 = vector.load %arg4[%c34_350, %c0_351, %c0_352] : memref<49x128x128xbf16, #tpu.memory_space<vmem>>, vector<1x128x128xbf16>
    %525 = vector.shape_cast %524 : vector<1x128x128xbf16> to vector<128x128xbf16>
    %cst_353 = arith.constant dense<0.000000e+00> : vector<2x128xf32>
    %526 = tpu.matmul %523, %525, %cst_353 {dimension_numbers = #tpu.dot_dimension_numbers<[1], [0], [0], [1], [0, 0, 1, 1], [], []>} : vector<2x128xbf16>, vector<128x128xbf16>, vector<2x128xf32> -> vector<2x128xf32>
    %527 = arith.addf %512, %526 : vector<2x128xf32>
    %c35 = arith.constant 35 : index
    %c0_354 = arith.constant 0 : index
    %c0_355 = arith.constant 0 : index
    %528 = vector.load %arg1[%c35, %c0_354, %c0_355] : memref<49x2x256xbf16, #tpu.memory_space<vmem>>, vector<1x2x256xbf16>
    %529 = vector.shape_cast %528 : vector<1x2x256xbf16> to vector<2x256xbf16>
    %cst_356 = arith.constant dense<0.000000e+00> : vector<2x128xf32>
    %530 = tpu.matmul %529, %0, %cst_356 {dimension_numbers = #tpu.dot_dimension_numbers<[1], [0], [0], [1], [0, 0, 1, 1], [], []>} : vector<2x256xbf16>, vector<256x128xbf16>, vector<2x128xf32> -> vector<2x128xf32>
    %531 = vector.broadcast %1 : vector<1x128xf32> to vector<2x128xf32>
    %532 = arith.addf %530, %531 : vector<2x128xf32>
    %cst_357 = arith.constant 0.000000e+00 : f32
    %533 = vector.broadcast %cst_357 : f32 to vector<2x128xf32>
    %534 = arith.cmpf oge, %532, %533 : vector<2x128xf32>
    %cst_358 = arith.constant 1.000000e+00 : f32
    %cst_359 = arith.constant 0.000000e+00 : f32
    %535 = vector.broadcast %cst_358 : f32 to vector<2x128xf32>
    %536 = vector.broadcast %cst_359 : f32 to vector<2x128xf32>
    %537 = arith.select %534, %535, %536 : vector<2x128xi1>, vector<2x128xf32>
    %538 = arith.truncf %537 : vector<2x128xf32> to vector<2x128xbf16>
    %c35_360 = arith.constant 35 : index
    %c0_361 = arith.constant 0 : index
    %c0_362 = arith.constant 0 : index
    %539 = vector.load %arg4[%c35_360, %c0_361, %c0_362] : memref<49x128x128xbf16, #tpu.memory_space<vmem>>, vector<1x128x128xbf16>
    %540 = vector.shape_cast %539 : vector<1x128x128xbf16> to vector<128x128xbf16>
    %cst_363 = arith.constant dense<0.000000e+00> : vector<2x128xf32>
    %541 = tpu.matmul %538, %540, %cst_363 {dimension_numbers = #tpu.dot_dimension_numbers<[1], [0], [0], [1], [0, 0, 1, 1], [], []>} : vector<2x128xbf16>, vector<128x128xbf16>, vector<2x128xf32> -> vector<2x128xf32>
    %542 = arith.addf %527, %541 : vector<2x128xf32>
    %c36 = arith.constant 36 : index
    %c0_364 = arith.constant 0 : index
    %c0_365 = arith.constant 0 : index
    %543 = vector.load %arg1[%c36, %c0_364, %c0_365] : memref<49x2x256xbf16, #tpu.memory_space<vmem>>, vector<1x2x256xbf16>
    %544 = vector.shape_cast %543 : vector<1x2x256xbf16> to vector<2x256xbf16>
    %cst_366 = arith.constant dense<0.000000e+00> : vector<2x128xf32>
    %545 = tpu.matmul %544, %0, %cst_366 {dimension_numbers = #tpu.dot_dimension_numbers<[1], [0], [0], [1], [0, 0, 1, 1], [], []>} : vector<2x256xbf16>, vector<256x128xbf16>, vector<2x128xf32> -> vector<2x128xf32>
    %546 = vector.broadcast %1 : vector<1x128xf32> to vector<2x128xf32>
    %547 = arith.addf %545, %546 : vector<2x128xf32>
    %cst_367 = arith.constant 0.000000e+00 : f32
    %548 = vector.broadcast %cst_367 : f32 to vector<2x128xf32>
    %549 = arith.cmpf oge, %547, %548 : vector<2x128xf32>
    %cst_368 = arith.constant 1.000000e+00 : f32
    %cst_369 = arith.constant 0.000000e+00 : f32
    %550 = vector.broadcast %cst_368 : f32 to vector<2x128xf32>
    %551 = vector.broadcast %cst_369 : f32 to vector<2x128xf32>
    %552 = arith.select %549, %550, %551 : vector<2x128xi1>, vector<2x128xf32>
    %553 = arith.truncf %552 : vector<2x128xf32> to vector<2x128xbf16>
    %c36_370 = arith.constant 36 : index
    %c0_371 = arith.constant 0 : index
    %c0_372 = arith.constant 0 : index
    %554 = vector.load %arg4[%c36_370, %c0_371, %c0_372] : memref<49x128x128xbf16, #tpu.memory_space<vmem>>, vector<1x128x128xbf16>
    %555 = vector.shape_cast %554 : vector<1x128x128xbf16> to vector<128x128xbf16>
    %cst_373 = arith.constant dense<0.000000e+00> : vector<2x128xf32>
    %556 = tpu.matmul %553, %555, %cst_373 {dimension_numbers = #tpu.dot_dimension_numbers<[1], [0], [0], [1], [0, 0, 1, 1], [], []>} : vector<2x128xbf16>, vector<128x128xbf16>, vector<2x128xf32> -> vector<2x128xf32>
    %557 = arith.addf %542, %556 : vector<2x128xf32>
    %c37 = arith.constant 37 : index
    %c0_374 = arith.constant 0 : index
    %c0_375 = arith.constant 0 : index
    %558 = vector.load %arg1[%c37, %c0_374, %c0_375] : memref<49x2x256xbf16, #tpu.memory_space<vmem>>, vector<1x2x256xbf16>
    %559 = vector.shape_cast %558 : vector<1x2x256xbf16> to vector<2x256xbf16>
    %cst_376 = arith.constant dense<0.000000e+00> : vector<2x128xf32>
    %560 = tpu.matmul %559, %0, %cst_376 {dimension_numbers = #tpu.dot_dimension_numbers<[1], [0], [0], [1], [0, 0, 1, 1], [], []>} : vector<2x256xbf16>, vector<256x128xbf16>, vector<2x128xf32> -> vector<2x128xf32>
    %561 = vector.broadcast %1 : vector<1x128xf32> to vector<2x128xf32>
    %562 = arith.addf %560, %561 : vector<2x128xf32>
    %cst_377 = arith.constant 0.000000e+00 : f32
    %563 = vector.broadcast %cst_377 : f32 to vector<2x128xf32>
    %564 = arith.cmpf oge, %562, %563 : vector<2x128xf32>
    %cst_378 = arith.constant 1.000000e+00 : f32
    %cst_379 = arith.constant 0.000000e+00 : f32
    %565 = vector.broadcast %cst_378 : f32 to vector<2x128xf32>
    %566 = vector.broadcast %cst_379 : f32 to vector<2x128xf32>
    %567 = arith.select %564, %565, %566 : vector<2x128xi1>, vector<2x128xf32>
    %568 = arith.truncf %567 : vector<2x128xf32> to vector<2x128xbf16>
    %c37_380 = arith.constant 37 : index
    %c0_381 = arith.constant 0 : index
    %c0_382 = arith.constant 0 : index
    %569 = vector.load %arg4[%c37_380, %c0_381, %c0_382] : memref<49x128x128xbf16, #tpu.memory_space<vmem>>, vector<1x128x128xbf16>
    %570 = vector.shape_cast %569 : vector<1x128x128xbf16> to vector<128x128xbf16>
    %cst_383 = arith.constant dense<0.000000e+00> : vector<2x128xf32>
    %571 = tpu.matmul %568, %570, %cst_383 {dimension_numbers = #tpu.dot_dimension_numbers<[1], [0], [0], [1], [0, 0, 1, 1], [], []>} : vector<2x128xbf16>, vector<128x128xbf16>, vector<2x128xf32> -> vector<2x128xf32>
    %572 = arith.addf %557, %571 : vector<2x128xf32>
    %c38 = arith.constant 38 : index
    %c0_384 = arith.constant 0 : index
    %c0_385 = arith.constant 0 : index
    %573 = vector.load %arg1[%c38, %c0_384, %c0_385] : memref<49x2x256xbf16, #tpu.memory_space<vmem>>, vector<1x2x256xbf16>
    %574 = vector.shape_cast %573 : vector<1x2x256xbf16> to vector<2x256xbf16>
    %cst_386 = arith.constant dense<0.000000e+00> : vector<2x128xf32>
    %575 = tpu.matmul %574, %0, %cst_386 {dimension_numbers = #tpu.dot_dimension_numbers<[1], [0], [0], [1], [0, 0, 1, 1], [], []>} : vector<2x256xbf16>, vector<256x128xbf16>, vector<2x128xf32> -> vector<2x128xf32>
    %576 = vector.broadcast %1 : vector<1x128xf32> to vector<2x128xf32>
    %577 = arith.addf %575, %576 : vector<2x128xf32>
    %cst_387 = arith.constant 0.000000e+00 : f32
    %578 = vector.broadcast %cst_387 : f32 to vector<2x128xf32>
    %579 = arith.cmpf oge, %577, %578 : vector<2x128xf32>
    %cst_388 = arith.constant 1.000000e+00 : f32
    %cst_389 = arith.constant 0.000000e+00 : f32
    %580 = vector.broadcast %cst_388 : f32 to vector<2x128xf32>
    %581 = vector.broadcast %cst_389 : f32 to vector<2x128xf32>
    %582 = arith.select %579, %580, %581 : vector<2x128xi1>, vector<2x128xf32>
    %583 = arith.truncf %582 : vector<2x128xf32> to vector<2x128xbf16>
    %c38_390 = arith.constant 38 : index
    %c0_391 = arith.constant 0 : index
    %c0_392 = arith.constant 0 : index
    %584 = vector.load %arg4[%c38_390, %c0_391, %c0_392] : memref<49x128x128xbf16, #tpu.memory_space<vmem>>, vector<1x128x128xbf16>
    %585 = vector.shape_cast %584 : vector<1x128x128xbf16> to vector<128x128xbf16>
    %cst_393 = arith.constant dense<0.000000e+00> : vector<2x128xf32>
    %586 = tpu.matmul %583, %585, %cst_393 {dimension_numbers = #tpu.dot_dimension_numbers<[1], [0], [0], [1], [0, 0, 1, 1], [], []>} : vector<2x128xbf16>, vector<128x128xbf16>, vector<2x128xf32> -> vector<2x128xf32>
    %587 = arith.addf %572, %586 : vector<2x128xf32>
    %c39 = arith.constant 39 : index
    %c0_394 = arith.constant 0 : index
    %c0_395 = arith.constant 0 : index
    %588 = vector.load %arg1[%c39, %c0_394, %c0_395] : memref<49x2x256xbf16, #tpu.memory_space<vmem>>, vector<1x2x256xbf16>
    %589 = vector.shape_cast %588 : vector<1x2x256xbf16> to vector<2x256xbf16>
    %cst_396 = arith.constant dense<0.000000e+00> : vector<2x128xf32>
    %590 = tpu.matmul %589, %0, %cst_396 {dimension_numbers = #tpu.dot_dimension_numbers<[1], [0], [0], [1], [0, 0, 1, 1], [], []>} : vector<2x256xbf16>, vector<256x128xbf16>, vector<2x128xf32> -> vector<2x128xf32>
    %591 = vector.broadcast %1 : vector<1x128xf32> to vector<2x128xf32>
    %592 = arith.addf %590, %591 : vector<2x128xf32>
    %cst_397 = arith.constant 0.000000e+00 : f32
    %593 = vector.broadcast %cst_397 : f32 to vector<2x128xf32>
    %594 = arith.cmpf oge, %592, %593 : vector<2x128xf32>
    %cst_398 = arith.constant 1.000000e+00 : f32
    %cst_399 = arith.constant 0.000000e+00 : f32
    %595 = vector.broadcast %cst_398 : f32 to vector<2x128xf32>
    %596 = vector.broadcast %cst_399 : f32 to vector<2x128xf32>
    %597 = arith.select %594, %595, %596 : vector<2x128xi1>, vector<2x128xf32>
    %598 = arith.truncf %597 : vector<2x128xf32> to vector<2x128xbf16>
    %c39_400 = arith.constant 39 : index
    %c0_401 = arith.constant 0 : index
    %c0_402 = arith.constant 0 : index
    %599 = vector.load %arg4[%c39_400, %c0_401, %c0_402] : memref<49x128x128xbf16, #tpu.memory_space<vmem>>, vector<1x128x128xbf16>
    %600 = vector.shape_cast %599 : vector<1x128x128xbf16> to vector<128x128xbf16>
    %cst_403 = arith.constant dense<0.000000e+00> : vector<2x128xf32>
    %601 = tpu.matmul %598, %600, %cst_403 {dimension_numbers = #tpu.dot_dimension_numbers<[1], [0], [0], [1], [0, 0, 1, 1], [], []>} : vector<2x128xbf16>, vector<128x128xbf16>, vector<2x128xf32> -> vector<2x128xf32>
    %602 = arith.addf %587, %601 : vector<2x128xf32>
    %c40 = arith.constant 40 : index
    %c0_404 = arith.constant 0 : index
    %c0_405 = arith.constant 0 : index
    %603 = vector.load %arg1[%c40, %c0_404, %c0_405] : memref<49x2x256xbf16, #tpu.memory_space<vmem>>, vector<1x2x256xbf16>
    %604 = vector.shape_cast %603 : vector<1x2x256xbf16> to vector<2x256xbf16>
    %cst_406 = arith.constant dense<0.000000e+00> : vector<2x128xf32>
    %605 = tpu.matmul %604, %0, %cst_406 {dimension_numbers = #tpu.dot_dimension_numbers<[1], [0], [0], [1], [0, 0, 1, 1], [], []>} : vector<2x256xbf16>, vector<256x128xbf16>, vector<2x128xf32> -> vector<2x128xf32>
    %606 = vector.broadcast %1 : vector<1x128xf32> to vector<2x128xf32>
    %607 = arith.addf %605, %606 : vector<2x128xf32>
    %cst_407 = arith.constant 0.000000e+00 : f32
    %608 = vector.broadcast %cst_407 : f32 to vector<2x128xf32>
    %609 = arith.cmpf oge, %607, %608 : vector<2x128xf32>
    %cst_408 = arith.constant 1.000000e+00 : f32
    %cst_409 = arith.constant 0.000000e+00 : f32
    %610 = vector.broadcast %cst_408 : f32 to vector<2x128xf32>
    %611 = vector.broadcast %cst_409 : f32 to vector<2x128xf32>
    %612 = arith.select %609, %610, %611 : vector<2x128xi1>, vector<2x128xf32>
    %613 = arith.truncf %612 : vector<2x128xf32> to vector<2x128xbf16>
    %c40_410 = arith.constant 40 : index
    %c0_411 = arith.constant 0 : index
    %c0_412 = arith.constant 0 : index
    %614 = vector.load %arg4[%c40_410, %c0_411, %c0_412] : memref<49x128x128xbf16, #tpu.memory_space<vmem>>, vector<1x128x128xbf16>
    %615 = vector.shape_cast %614 : vector<1x128x128xbf16> to vector<128x128xbf16>
    %cst_413 = arith.constant dense<0.000000e+00> : vector<2x128xf32>
    %616 = tpu.matmul %613, %615, %cst_413 {dimension_numbers = #tpu.dot_dimension_numbers<[1], [0], [0], [1], [0, 0, 1, 1], [], []>} : vector<2x128xbf16>, vector<128x128xbf16>, vector<2x128xf32> -> vector<2x128xf32>
    %617 = arith.addf %602, %616 : vector<2x128xf32>
    %c41 = arith.constant 41 : index
    %c0_414 = arith.constant 0 : index
    %c0_415 = arith.constant 0 : index
    %618 = vector.load %arg1[%c41, %c0_414, %c0_415] : memref<49x2x256xbf16, #tpu.memory_space<vmem>>, vector<1x2x256xbf16>
    %619 = vector.shape_cast %618 : vector<1x2x256xbf16> to vector<2x256xbf16>
    %cst_416 = arith.constant dense<0.000000e+00> : vector<2x128xf32>
    %620 = tpu.matmul %619, %0, %cst_416 {dimension_numbers = #tpu.dot_dimension_numbers<[1], [0], [0], [1], [0, 0, 1, 1], [], []>} : vector<2x256xbf16>, vector<256x128xbf16>, vector<2x128xf32> -> vector<2x128xf32>
    %621 = vector.broadcast %1 : vector<1x128xf32> to vector<2x128xf32>
    %622 = arith.addf %620, %621 : vector<2x128xf32>
    %cst_417 = arith.constant 0.000000e+00 : f32
    %623 = vector.broadcast %cst_417 : f32 to vector<2x128xf32>
    %624 = arith.cmpf oge, %622, %623 : vector<2x128xf32>
    %cst_418 = arith.constant 1.000000e+00 : f32
    %cst_419 = arith.constant 0.000000e+00 : f32
    %625 = vector.broadcast %cst_418 : f32 to vector<2x128xf32>
    %626 = vector.broadcast %cst_419 : f32 to vector<2x128xf32>
    %627 = arith.select %624, %625, %626 : vector<2x128xi1>, vector<2x128xf32>
    %628 = arith.truncf %627 : vector<2x128xf32> to vector<2x128xbf16>
    %c41_420 = arith.constant 41 : index
    %c0_421 = arith.constant 0 : index
    %c0_422 = arith.constant 0 : index
    %629 = vector.load %arg4[%c41_420, %c0_421, %c0_422] : memref<49x128x128xbf16, #tpu.memory_space<vmem>>, vector<1x128x128xbf16>
    %630 = vector.shape_cast %629 : vector<1x128x128xbf16> to vector<128x128xbf16>
    %cst_423 = arith.constant dense<0.000000e+00> : vector<2x128xf32>
    %631 = tpu.matmul %628, %630, %cst_423 {dimension_numbers = #tpu.dot_dimension_numbers<[1], [0], [0], [1], [0, 0, 1, 1], [], []>} : vector<2x128xbf16>, vector<128x128xbf16>, vector<2x128xf32> -> vector<2x128xf32>
    %632 = arith.addf %617, %631 : vector<2x128xf32>
    %c42 = arith.constant 42 : index
    %c0_424 = arith.constant 0 : index
    %c0_425 = arith.constant 0 : index
    %633 = vector.load %arg1[%c42, %c0_424, %c0_425] : memref<49x2x256xbf16, #tpu.memory_space<vmem>>, vector<1x2x256xbf16>
    %634 = vector.shape_cast %633 : vector<1x2x256xbf16> to vector<2x256xbf16>
    %cst_426 = arith.constant dense<0.000000e+00> : vector<2x128xf32>
    %635 = tpu.matmul %634, %0, %cst_426 {dimension_numbers = #tpu.dot_dimension_numbers<[1], [0], [0], [1], [0, 0, 1, 1], [], []>} : vector<2x256xbf16>, vector<256x128xbf16>, vector<2x128xf32> -> vector<2x128xf32>
    %636 = vector.broadcast %1 : vector<1x128xf32> to vector<2x128xf32>
    %637 = arith.addf %635, %636 : vector<2x128xf32>
    %cst_427 = arith.constant 0.000000e+00 : f32
    %638 = vector.broadcast %cst_427 : f32 to vector<2x128xf32>
    %639 = arith.cmpf oge, %637, %638 : vector<2x128xf32>
    %cst_428 = arith.constant 1.000000e+00 : f32
    %cst_429 = arith.constant 0.000000e+00 : f32
    %640 = vector.broadcast %cst_428 : f32 to vector<2x128xf32>
    %641 = vector.broadcast %cst_429 : f32 to vector<2x128xf32>
    %642 = arith.select %639, %640, %641 : vector<2x128xi1>, vector<2x128xf32>
    %643 = arith.truncf %642 : vector<2x128xf32> to vector<2x128xbf16>
    %c42_430 = arith.constant 42 : index
    %c0_431 = arith.constant 0 : index
    %c0_432 = arith.constant 0 : index
    %644 = vector.load %arg4[%c42_430, %c0_431, %c0_432] : memref<49x128x128xbf16, #tpu.memory_space<vmem>>, vector<1x128x128xbf16>
    %645 = vector.shape_cast %644 : vector<1x128x128xbf16> to vector<128x128xbf16>
    %cst_433 = arith.constant dense<0.000000e+00> : vector<2x128xf32>
    %646 = tpu.matmul %643, %645, %cst_433 {dimension_numbers = #tpu.dot_dimension_numbers<[1], [0], [0], [1], [0, 0, 1, 1], [], []>} : vector<2x128xbf16>, vector<128x128xbf16>, vector<2x128xf32> -> vector<2x128xf32>
    %647 = arith.addf %632, %646 : vector<2x128xf32>
    %c43 = arith.constant 43 : index
    %c0_434 = arith.constant 0 : index
    %c0_435 = arith.constant 0 : index
    %648 = vector.load %arg1[%c43, %c0_434, %c0_435] : memref<49x2x256xbf16, #tpu.memory_space<vmem>>, vector<1x2x256xbf16>
    %649 = vector.shape_cast %648 : vector<1x2x256xbf16> to vector<2x256xbf16>
    %cst_436 = arith.constant dense<0.000000e+00> : vector<2x128xf32>
    %650 = tpu.matmul %649, %0, %cst_436 {dimension_numbers = #tpu.dot_dimension_numbers<[1], [0], [0], [1], [0, 0, 1, 1], [], []>} : vector<2x256xbf16>, vector<256x128xbf16>, vector<2x128xf32> -> vector<2x128xf32>
    %651 = vector.broadcast %1 : vector<1x128xf32> to vector<2x128xf32>
    %652 = arith.addf %650, %651 : vector<2x128xf32>
    %cst_437 = arith.constant 0.000000e+00 : f32
    %653 = vector.broadcast %cst_437 : f32 to vector<2x128xf32>
    %654 = arith.cmpf oge, %652, %653 : vector<2x128xf32>
    %cst_438 = arith.constant 1.000000e+00 : f32
    %cst_439 = arith.constant 0.000000e+00 : f32
    %655 = vector.broadcast %cst_438 : f32 to vector<2x128xf32>
    %656 = vector.broadcast %cst_439 : f32 to vector<2x128xf32>
    %657 = arith.select %654, %655, %656 : vector<2x128xi1>, vector<2x128xf32>
    %658 = arith.truncf %657 : vector<2x128xf32> to vector<2x128xbf16>
    %c43_440 = arith.constant 43 : index
    %c0_441 = arith.constant 0 : index
    %c0_442 = arith.constant 0 : index
    %659 = vector.load %arg4[%c43_440, %c0_441, %c0_442] : memref<49x128x128xbf16, #tpu.memory_space<vmem>>, vector<1x128x128xbf16>
    %660 = vector.shape_cast %659 : vector<1x128x128xbf16> to vector<128x128xbf16>
    %cst_443 = arith.constant dense<0.000000e+00> : vector<2x128xf32>
    %661 = tpu.matmul %658, %660, %cst_443 {dimension_numbers = #tpu.dot_dimension_numbers<[1], [0], [0], [1], [0, 0, 1, 1], [], []>} : vector<2x128xbf16>, vector<128x128xbf16>, vector<2x128xf32> -> vector<2x128xf32>
    %662 = arith.addf %647, %661 : vector<2x128xf32>
    %c44 = arith.constant 44 : index
    %c0_444 = arith.constant 0 : index
    %c0_445 = arith.constant 0 : index
    %663 = vector.load %arg1[%c44, %c0_444, %c0_445] : memref<49x2x256xbf16, #tpu.memory_space<vmem>>, vector<1x2x256xbf16>
    %664 = vector.shape_cast %663 : vector<1x2x256xbf16> to vector<2x256xbf16>
    %cst_446 = arith.constant dense<0.000000e+00> : vector<2x128xf32>
    %665 = tpu.matmul %664, %0, %cst_446 {dimension_numbers = #tpu.dot_dimension_numbers<[1], [0], [0], [1], [0, 0, 1, 1], [], []>} : vector<2x256xbf16>, vector<256x128xbf16>, vector<2x128xf32> -> vector<2x128xf32>
    %666 = vector.broadcast %1 : vector<1x128xf32> to vector<2x128xf32>
    %667 = arith.addf %665, %666 : vector<2x128xf32>
    %cst_447 = arith.constant 0.000000e+00 : f32
    %668 = vector.broadcast %cst_447 : f32 to vector<2x128xf32>
    %669 = arith.cmpf oge, %667, %668 : vector<2x128xf32>
    %cst_448 = arith.constant 1.000000e+00 : f32
    %cst_449 = arith.constant 0.000000e+00 : f32
    %670 = vector.broadcast %cst_448 : f32 to vector<2x128xf32>
    %671 = vector.broadcast %cst_449 : f32 to vector<2x128xf32>
    %672 = arith.select %669, %670, %671 : vector<2x128xi1>, vector<2x128xf32>
    %673 = arith.truncf %672 : vector<2x128xf32> to vector<2x128xbf16>
    %c44_450 = arith.constant 44 : index
    %c0_451 = arith.constant 0 : index
    %c0_452 = arith.constant 0 : index
    %674 = vector.load %arg4[%c44_450, %c0_451, %c0_452] : memref<49x128x128xbf16, #tpu.memory_space<vmem>>, vector<1x128x128xbf16>
    %675 = vector.shape_cast %674 : vector<1x128x128xbf16> to vector<128x128xbf16>
    %cst_453 = arith.constant dense<0.000000e+00> : vector<2x128xf32>
    %676 = tpu.matmul %673, %675, %cst_453 {dimension_numbers = #tpu.dot_dimension_numbers<[1], [0], [0], [1], [0, 0, 1, 1], [], []>} : vector<2x128xbf16>, vector<128x128xbf16>, vector<2x128xf32> -> vector<2x128xf32>
    %677 = arith.addf %662, %676 : vector<2x128xf32>
    %c45 = arith.constant 45 : index
    %c0_454 = arith.constant 0 : index
    %c0_455 = arith.constant 0 : index
    %678 = vector.load %arg1[%c45, %c0_454, %c0_455] : memref<49x2x256xbf16, #tpu.memory_space<vmem>>, vector<1x2x256xbf16>
    %679 = vector.shape_cast %678 : vector<1x2x256xbf16> to vector<2x256xbf16>
    %cst_456 = arith.constant dense<0.000000e+00> : vector<2x128xf32>
    %680 = tpu.matmul %679, %0, %cst_456 {dimension_numbers = #tpu.dot_dimension_numbers<[1], [0], [0], [1], [0, 0, 1, 1], [], []>} : vector<2x256xbf16>, vector<256x128xbf16>, vector<2x128xf32> -> vector<2x128xf32>
    %681 = vector.broadcast %1 : vector<1x128xf32> to vector<2x128xf32>
    %682 = arith.addf %680, %681 : vector<2x128xf32>
    %cst_457 = arith.constant 0.000000e+00 : f32
    %683 = vector.broadcast %cst_457 : f32 to vector<2x128xf32>
    %684 = arith.cmpf oge, %682, %683 : vector<2x128xf32>
    %cst_458 = arith.constant 1.000000e+00 : f32
    %cst_459 = arith.constant 0.000000e+00 : f32
    %685 = vector.broadcast %cst_458 : f32 to vector<2x128xf32>
    %686 = vector.broadcast %cst_459 : f32 to vector<2x128xf32>
    %687 = arith.select %684, %685, %686 : vector<2x128xi1>, vector<2x128xf32>
    %688 = arith.truncf %687 : vector<2x128xf32> to vector<2x128xbf16>
    %c45_460 = arith.constant 45 : index
    %c0_461 = arith.constant 0 : index
    %c0_462 = arith.constant 0 : index
    %689 = vector.load %arg4[%c45_460, %c0_461, %c0_462] : memref<49x128x128xbf16, #tpu.memory_space<vmem>>, vector<1x128x128xbf16>
    %690 = vector.shape_cast %689 : vector<1x128x128xbf16> to vector<128x128xbf16>
    %cst_463 = arith.constant dense<0.000000e+00> : vector<2x128xf32>
    %691 = tpu.matmul %688, %690, %cst_463 {dimension_numbers = #tpu.dot_dimension_numbers<[1], [0], [0], [1], [0, 0, 1, 1], [], []>} : vector<2x128xbf16>, vector<128x128xbf16>, vector<2x128xf32> -> vector<2x128xf32>
    %692 = arith.addf %677, %691 : vector<2x128xf32>
    %c46 = arith.constant 46 : index
    %c0_464 = arith.constant 0 : index
    %c0_465 = arith.constant 0 : index
    %693 = vector.load %arg1[%c46, %c0_464, %c0_465] : memref<49x2x256xbf16, #tpu.memory_space<vmem>>, vector<1x2x256xbf16>
    %694 = vector.shape_cast %693 : vector<1x2x256xbf16> to vector<2x256xbf16>
    %cst_466 = arith.constant dense<0.000000e+00> : vector<2x128xf32>
    %695 = tpu.matmul %694, %0, %cst_466 {dimension_numbers = #tpu.dot_dimension_numbers<[1], [0], [0], [1], [0, 0, 1, 1], [], []>} : vector<2x256xbf16>, vector<256x128xbf16>, vector<2x128xf32> -> vector<2x128xf32>
    %696 = vector.broadcast %1 : vector<1x128xf32> to vector<2x128xf32>
    %697 = arith.addf %695, %696 : vector<2x128xf32>
    %cst_467 = arith.constant 0.000000e+00 : f32
    %698 = vector.broadcast %cst_467 : f32 to vector<2x128xf32>
    %699 = arith.cmpf oge, %697, %698 : vector<2x128xf32>
    %cst_468 = arith.constant 1.000000e+00 : f32
    %cst_469 = arith.constant 0.000000e+00 : f32
    %700 = vector.broadcast %cst_468 : f32 to vector<2x128xf32>
    %701 = vector.broadcast %cst_469 : f32 to vector<2x128xf32>
    %702 = arith.select %699, %700, %701 : vector<2x128xi1>, vector<2x128xf32>
    %703 = arith.truncf %702 : vector<2x128xf32> to vector<2x128xbf16>
    %c46_470 = arith.constant 46 : index
    %c0_471 = arith.constant 0 : index
    %c0_472 = arith.constant 0 : index
    %704 = vector.load %arg4[%c46_470, %c0_471, %c0_472] : memref<49x128x128xbf16, #tpu.memory_space<vmem>>, vector<1x128x128xbf16>
    %705 = vector.shape_cast %704 : vector<1x128x128xbf16> to vector<128x128xbf16>
    %cst_473 = arith.constant dense<0.000000e+00> : vector<2x128xf32>
    %706 = tpu.matmul %703, %705, %cst_473 {dimension_numbers = #tpu.dot_dimension_numbers<[1], [0], [0], [1], [0, 0, 1, 1], [], []>} : vector<2x128xbf16>, vector<128x128xbf16>, vector<2x128xf32> -> vector<2x128xf32>
    %707 = arith.addf %692, %706 : vector<2x128xf32>
    %c47 = arith.constant 47 : index
    %c0_474 = arith.constant 0 : index
    %c0_475 = arith.constant 0 : index
    %708 = vector.load %arg1[%c47, %c0_474, %c0_475] : memref<49x2x256xbf16, #tpu.memory_space<vmem>>, vector<1x2x256xbf16>
    %709 = vector.shape_cast %708 : vector<1x2x256xbf16> to vector<2x256xbf16>
    %cst_476 = arith.constant dense<0.000000e+00> : vector<2x128xf32>
    %710 = tpu.matmul %709, %0, %cst_476 {dimension_numbers = #tpu.dot_dimension_numbers<[1], [0], [0], [1], [0, 0, 1, 1], [], []>} : vector<2x256xbf16>, vector<256x128xbf16>, vector<2x128xf32> -> vector<2x128xf32>
    %711 = vector.broadcast %1 : vector<1x128xf32> to vector<2x128xf32>
    %712 = arith.addf %710, %711 : vector<2x128xf32>
    %cst_477 = arith.constant 0.000000e+00 : f32
    %713 = vector.broadcast %cst_477 : f32 to vector<2x128xf32>
    %714 = arith.cmpf oge, %712, %713 : vector<2x128xf32>
    %cst_478 = arith.constant 1.000000e+00 : f32
    %cst_479 = arith.constant 0.000000e+00 : f32
    %715 = vector.broadcast %cst_478 : f32 to vector<2x128xf32>
    %716 = vector.broadcast %cst_479 : f32 to vector<2x128xf32>
    %717 = arith.select %714, %715, %716 : vector<2x128xi1>, vector<2x128xf32>
    %718 = arith.truncf %717 : vector<2x128xf32> to vector<2x128xbf16>
    %c47_480 = arith.constant 47 : index
    %c0_481 = arith.constant 0 : index
    %c0_482 = arith.constant 0 : index
    %719 = vector.load %arg4[%c47_480, %c0_481, %c0_482] : memref<49x128x128xbf16, #tpu.memory_space<vmem>>, vector<1x128x128xbf16>
    %720 = vector.shape_cast %719 : vector<1x128x128xbf16> to vector<128x128xbf16>
    %cst_483 = arith.constant dense<0.000000e+00> : vector<2x128xf32>
    %721 = tpu.matmul %718, %720, %cst_483 {dimension_numbers = #tpu.dot_dimension_numbers<[1], [0], [0], [1], [0, 0, 1, 1], [], []>} : vector<2x128xbf16>, vector<128x128xbf16>, vector<2x128xf32> -> vector<2x128xf32>
    %722 = arith.addf %707, %721 : vector<2x128xf32>
    %c48 = arith.constant 48 : index
    %c0_484 = arith.constant 0 : index
    %c0_485 = arith.constant 0 : index
    %723 = vector.load %arg1[%c48, %c0_484, %c0_485] : memref<49x2x256xbf16, #tpu.memory_space<vmem>>, vector<1x2x256xbf16>
    %724 = vector.shape_cast %723 : vector<1x2x256xbf16> to vector<2x256xbf16>
    %cst_486 = arith.constant dense<0.000000e+00> : vector<2x128xf32>
    %725 = tpu.matmul %724, %0, %cst_486 {dimension_numbers = #tpu.dot_dimension_numbers<[1], [0], [0], [1], [0, 0, 1, 1], [], []>} : vector<2x256xbf16>, vector<256x128xbf16>, vector<2x128xf32> -> vector<2x128xf32>
    %726 = vector.broadcast %1 : vector<1x128xf32> to vector<2x128xf32>
    %727 = arith.addf %725, %726 : vector<2x128xf32>
    %cst_487 = arith.constant 0.000000e+00 : f32
    %728 = vector.broadcast %cst_487 : f32 to vector<2x128xf32>
    %729 = arith.cmpf oge, %727, %728 : vector<2x128xf32>
    %cst_488 = arith.constant 1.000000e+00 : f32
    %cst_489 = arith.constant 0.000000e+00 : f32
    %730 = vector.broadcast %cst_488 : f32 to vector<2x128xf32>
    %731 = vector.broadcast %cst_489 : f32 to vector<2x128xf32>
    %732 = arith.select %729, %730, %731 : vector<2x128xi1>, vector<2x128xf32>
    %733 = arith.truncf %732 : vector<2x128xf32> to vector<2x128xbf16>
    %c48_490 = arith.constant 48 : index
    %c0_491 = arith.constant 0 : index
    %c0_492 = arith.constant 0 : index
    %734 = vector.load %arg4[%c48_490, %c0_491, %c0_492] : memref<49x128x128xbf16, #tpu.memory_space<vmem>>, vector<1x128x128xbf16>
    %735 = vector.shape_cast %734 : vector<1x128x128xbf16> to vector<128x128xbf16>
    %cst_493 = arith.constant dense<0.000000e+00> : vector<2x128xf32>
    %736 = tpu.matmul %733, %735, %cst_493 {dimension_numbers = #tpu.dot_dimension_numbers<[1], [0], [0], [1], [0, 0, 1, 1], [], []>} : vector<2x128xbf16>, vector<128x128xbf16>, vector<2x128xf32> -> vector<2x128xf32>
    %737 = arith.addf %722, %736 : vector<2x128xf32>
    %c0_494 = arith.constant 0 : index
    %c0_495 = arith.constant 0 : index
    %738 = vector.load %arg5[%c0_494, %c0_495] : memref<1x128xf32, #tpu.memory_space<vmem>>, vector<1x128xf32>
    %739 = vector.broadcast %738 : vector<1x128xf32> to vector<2x128xf32>
    %740 = arith.addf %737, %739 : vector<2x128xf32>
    %cst_496 = arith.constant 0.000000e+00 : f32
    %741 = vector.broadcast %cst_496 : f32 to vector<2x128xf32>
    %742 = arith.maximumf %740, %741 : vector<2x128xf32>
    %743 = arith.truncf %742 : vector<2x128xf32> to vector<2x128xbf16>
    %c0_497 = arith.constant 0 : index
    %c0_498 = arith.constant 0 : index
    %744 = vector.load %arg6[%c0_497, %c0_498] : memref<128x128xbf16, #tpu.memory_space<vmem>>, vector<128x128xbf16>
    %cst_499 = arith.constant dense<0.000000e+00> : vector<2x128xf32>
    %745 = tpu.matmul %743, %744, %cst_499 {dimension_numbers = #tpu.dot_dimension_numbers<[1], [0], [0], [1], [0, 0, 1, 1], [], []>} : vector<2x128xbf16>, vector<128x128xbf16>, vector<2x128xf32> -> vector<2x128xf32>
    %c0_500 = arith.constant 0 : index
    %c0_501 = arith.constant 0 : index
    %746 = vector.load %arg7[%c0_500, %c0_501] : memref<1x128xf32, #tpu.memory_space<vmem>>, vector<1x128xf32>
    %747 = vector.broadcast %746 : vector<1x128xf32> to vector<2x128xf32>
    %748 = arith.addf %745, %747 : vector<2x128xf32>
    %c0_502 = arith.constant 0 : index
    %c0_503 = arith.constant 0 : index
    %749 = vector.load %arg8[%c0_502, %c0_503] : memref<2x128xf32, #tpu.memory_space<vmem>>, vector<2x128xf32>
    tpu.vector_store %arg8[%c0_502, %c0_503], %748 {strides = array<i32>} : memref<2x128xf32, #tpu.memory_space<vmem>>, vector<2x128xf32>,
    return
  }
  func.func @transform_0(%arg0: i32) -> (i32, i32, i32) {
    %c0_i32 = arith.constant 0 : i32
    %c0_i32_0 = arith.constant 0 : i32
    %c0_i32_1 = arith.constant 0 : i32
    return %c0_i32, %arg0, %c0_i32_0 : i32, i32, i32
  }
  func.func @transform_1(%arg0: i32) -> (i32, i32) {
    %c0_i32 = arith.constant 0 : i32
    %c0_i32_0 = arith.constant 0 : i32
    %c0_i32_1 = arith.constant 0 : i32
    return %c0_i32, %c0_i32_0 : i32, i32
  }
  func.func @transform_2(%arg0: i32) -> (i32, i32) {
    %c0_i32 = arith.constant 0 : i32
    %c0_i32_0 = arith.constant 0 : i32
    %c0_i32_1 = arith.constant 0 : i32
    return %c0_i32, %c0_i32_0 : i32, i32
  }
  func.func @transform_3(%arg0: i32) -> (i32, i32, i32) {
    %c0_i32 = arith.constant 0 : i32
    %c0_i32_0 = arith.constant 0 : i32
    %c0_i32_1 = arith.constant 0 : i32
    %c0_i32_2 = arith.constant 0 : i32
    return %c0_i32, %c0_i32_0, %c0_i32_1 : i32, i32, i32
  }
  func.func @transform_4(%arg0: i32) -> (i32, i32) {
    %c0_i32 = arith.constant 0 : i32
    %c0_i32_0 = arith.constant 0 : i32
    %c0_i32_1 = arith.constant 0 : i32
    return %c0_i32, %c0_i32_0 : i32, i32
  }
  func.func @transform_5(%arg0: i32) -> (i32, i32) {
    %c0_i32 = arith.constant 0 : i32
    %c0_i32_0 = arith.constant 0 : i32
    %c0_i32_1 = arith.constant 0 : i32
    return %c0_i32, %c0_i32_0 : i32, i32
  }
  func.func @transform_6(%arg0: i32) -> (i32, i32) {
    %c0_i32 = arith.constant 0 : i32
    %c0_i32_0 = arith.constant 0 : i32
    %c0_i32_1 = arith.constant 0 : i32
    return %c0_i32, %c0_i32_0 : i32, i32
  }
  func.func @transform_7(%arg0: i32) -> (i32, i32) {
    %c0_i32 = arith.constant 0 : i32
    %c0_i32_0 = arith.constant 0 : i32
    return %arg0, %c0_i32 : i32, i32
  }
}

</mosaic_0001>

<llo_original>
// kernel: mnist_real0_forward.2
$region0: #{mnist_real0_forward.2}
  #allocation0 [shape = 'u32[]', space=smem, size = 0x4, offset = 0x4, fixed_abs, tag = 'smem constant byte address 0x4 - core index']
  #allocation1 [shape = 'u32[144,128]{1,0:T(1,128)}', space=vmem, size = 0x12000, scoped, tag = 'internal scratch']
  %s0 = inlined_call_operand.vmem [shape: bf16[392,16], index: 0, kind: input, shape index: {}]
  %s1 = inlined_call_operand.vmem [shape: bf16[16,128], index: 1, kind: input, shape index: {}]
  %s2 = inlined_call_operand.vmem [shape: f32[1,128], index: 2, kind: input, shape index: {}]
  %s3 = inlined_call_operand.vmem [shape: bf16[392,128], index: 3, kind: output, shape index: {}]
  %s4 = sld [smem:[#allocation0]]
  $region22: #{mnist_real0_forward.2} parent=0
    _
  %s6 = ssub.s32 1, %s4
  %s7 = scalar_select 0, %s6, %s4
  // Predicated region
  $region2: #{mnist_real0_forward.2} parent=0 // pred_check
    _
  $region3: #{mnist_real0_forward.2} parent=0 // pred_check_branch
    %9 = sbr.rel (0) target = $region5
  $region4: #{mnist_real0_forward.2} parent=0 // pred_region
    _
  $region5: #{mnist_real0_forward.2} parent=0 // pred_fallthru
    _
  // Predicated region
  $region6: #{mnist_real0_forward.2} parent=0 // pred_check
    _
  $region7: #{mnist_real0_forward.2} parent=0 // pred_check_branch
    %11 = sbr.rel (0) target = $region9
  $region8: #{mnist_real0_forward.2} parent=0 // pred_region
    _
  $region9: #{mnist_real0_forward.2} parent=0 // pred_fallthru
    _
  // Predicated region
  $region10: #{mnist_real0_forward.2} parent=0 // pred_check
    _
  $region11: #{mnist_real0_forward.2} parent=0 // pred_check_branch
    %13 = sbr.rel (0) target = $region13
  $region12: #{mnist_real0_forward.2} parent=0 // pred_region
    _
  $region13: #{mnist_real0_forward.2} parent=0 // pred_fallthru
    _
  %v15 = vld [vmem:[%s0] sm:$0xf]
  %v16 = vld [vmem:[%s0 + $0x4] sm:$0xf]
  %v17 = vld [vmem:[%s0 + $0x8] sm:$0xf]
  %v18 = vld [vmem:[%s0 + $0xc] sm:$0xf]
  %v19 = vld [vmem:[%s0 + $0x10] sm:$0xf]
  %v20 = vld [vmem:[%s0 + $0x14] sm:$0xf]
  %v21 = vld [vmem:[%s0 + $0x18] sm:$0xf]
  %v22 = vld [vmem:[%s0 + $0x1c] sm:$0xf]
  %v23 = vld [vmem:[%s0 + $0x20] sm:$0xf]
  %v24 = vld [vmem:[%s0 + $0x24] sm:$0xf]
  %v25 = vld [vmem:[%s0 + $0x28] sm:$0xf]
  %v26 = vld [vmem:[%s0 + $0x2c] sm:$0xf]
  %v27 = vld [vmem:[%s0 + $0x30] sm:$0xf]
  %v28 = vld [vmem:[%s0 + $0x34] sm:$0xf]
  %v29 = vld [vmem:[%s0 + $0x38] sm:$0xf]
  %v30 = vld [vmem:[%s0 + $0x3c] sm:$0xf]
  %v31 = vld [vmem:[%s0 + $0x40] sm:$0xf]
  %v32 = vld [vmem:[%s0 + $0x44] sm:$0xf]
  %v33 = vld [vmem:[%s0 + $0x48] sm:$0xf]
  %v34 = vld [vmem:[%s0 + $0x4c] sm:$0xf]
  %v35 = vld [vmem:[%s0 + $0x50] sm:$0xf]
  %v36 = vld [vmem:[%s0 + $0x54] sm:$0xf]
  %v37 = vld [vmem:[%s0 + $0x58] sm:$0xf]
  %v38 = vld [vmem:[%s0 + $0x5c] sm:$0xf]
  %v39 = vld [vmem:[%s0 + $0x60] sm:$0xf]
  %v40 = vld [vmem:[%s0 + $0x64] sm:$0xf]
  %v41 = vld [vmem:[%s0 + $0x68] sm:$0xf]
  %v42 = vld [vmem:[%s0 + $0x6c] sm:$0xf]
  %v43 = vld [vmem:[%s0 + $0x70] sm:$0xf]
  %v44 = vld [vmem:[%s0 + $0x74] sm:$0xf]
  %v45 = vld [vmem:[%s0 + $0x78] sm:$0xf]
  %v46 = vld [vmem:[%s0 + $0x7c] sm:$0xf]
  %v47 = vld [vmem:[%s0 + $0x80] sm:$0xf]
  %v48 = vld [vmem:[%s0 + $0x84] sm:$0xf]
  %v49 = vld [vmem:[%s0 + $0x88] sm:$0xf]
  %v50 = vld [vmem:[%s0 + $0x8c] sm:$0xf]
  %v51 = vld [vmem:[%s0 + $0x90] sm:$0xf]
  %v52 = vld [vmem:[%s0 + $0x94] sm:$0xf]
  %v53 = vld [vmem:[%s0 + $0x98] sm:$0xf]
  %v54 = vld [vmem:[%s0 + $0x9c] sm:$0xf]
  %v55 = vld [vmem:[%s0 + $0xa0] sm:$0xf]
  %v56 = vld [vmem:[%s0 + $0xa4] sm:$0xf]
  %v57 = vld [vmem:[%s0 + $0xa8] sm:$0xf]
  %v58 = vld [vmem:[%s0 + $0xac] sm:$0xf]
  %v59 = vld [vmem:[%s0 + $0xb0] sm:$0xf]
  %v60 = vld [vmem:[%s0 + $0xb4] sm:$0xf]
  %v61 = vld [vmem:[%s0 + $0xb8] sm:$0xf]
  %v62 = vld [vmem:[%s0 + $0xbc] sm:$0xf]
  %v63 = vld [vmem:[%s0 + $0xc0] sm:$0xf]
  %v64 = vld [vmem:[%s1] sm:$0xf]
  %v65 = vld [vmem:[%s1 + $0x4] sm:$0xf]
  %v66 = vld [vmem:[%s2] sm:$0x1]
  %v68 = vlaneseq
  %v69 = vshrl.u32 %v68, 7
  %v70 = vsub.s32 0, %v69
  %v71 = vrot.slane %v66, %v70
  %v122 = vunpack.c.l.b16 %v15
  %v123 = vunpack.c.l.b16 %v16
  %v124 = vunpack.c.l.b16 %v17
  %v125 = vunpack.c.l.b16 %v18
  %v126 = vunpack.c.l.b16 %v19
  %v127 = vunpack.c.l.b16 %v20
  %v128 = vunpack.c.l.b16 %v21
  %v129 = vunpack.c.l.b16 %v22
  %v130 = vunpack.c.l.b16 %v23
  %v131 = vunpack.c.l.b16 %v24
  %v132 = vunpack.c.l.b16 %v25
  %v133 = vunpack.c.l.b16 %v26
  %v134 = vunpack.c.l.b16 %v27
  %v135 = vunpack.c.l.b16 %v28
  %v136 = vunpack.c.l.b16 %v29
  %v137 = vunpack.c.l.b16 %v30
  %v138 = vunpack.c.l.b16 %v31
  %v139 = vunpack.c.l.b16 %v32
  %v140 = vunpack.c.l.b16 %v33
  %v141 = vunpack.c.l.b16 %v34
  %v142 = vunpack.c.l.b16 %v35
  %v143 = vunpack.c.l.b16 %v36
  %v144 = vunpack.c.l.b16 %v37
  %v145 = vunpack.c.l.b16 %v38
  %v146 = vunpack.c.l.b16 %v39
  %v147 = vunpack.c.l.b16 %v40
  %v148 = vunpack.c.l.b16 %v41
  %v149 = vunpack.c.l.b16 %v42
  %v150 = vunpack.c.l.b16 %v43
  %v151 = vunpack.c.l.b16 %v44
  %v152 = vunpack.c.l.b16 %v45
  %v153 = vunpack.c.l.b16 %v46
  %v154 = vunpack.c.l.b16 %v47
  %v155 = vunpack.c.l.b16 %v48
  %v156 = vunpack.c.l.b16 %v49
  %v157 = vunpack.c.l.b16 %v50
  %v158 = vunpack.c.l.b16 %v51
  %v159 = vunpack.c.l.b16 %v52
  %v160 = vunpack.c.l.b16 %v53
  %v161 = vunpack.c.l.b16 %v54
  %v162 = vunpack.c.l.b16 %v55
  %v163 = vunpack.c.l.b16 %v56
  %v164 = vunpack.c.l.b16 %v57
  %v165 = vunpack.c.l.b16 %v58
  %v166 = vunpack.c.l.b16 %v59
  %v167 = vunpack.c.l.b16 %v60
  %v168 = vunpack.c.l.b16 %v61
  %v169 = vunpack.c.l.b16 %v62
  %v170 = vunpack.c.l.b16 %v63
  %v171 = vpack.c.b16 %v123, %v122
  %v172 = vpack.c.b16 %v125, %v124
  %v173 = vpack.c.b16 %v127, %v126
  %v174 = vpack.c.b16 %v129, %v128
  %v175 = vpack.c.b16 %v131, %v130
  %v176 = vpack.c.b16 %v133, %v132
  %v177 = vpack.c.b16 %v135, %v134
  %v178 = vpack.c.b16 %v137, %v136
  %v179 = vpack.c.b16 %v139, %v138
  %v180 = vpack.c.b16 %v141, %v140
  %v181 = vpack.c.b16 %v143, %v142
  %v182 = vpack.c.b16 %v145, %v144
  %v183 = vpack.c.b16 %v147, %v146
  %v184 = vpack.c.b16 %v149, %v148
  %v185 = vpack.c.b16 %v151, %v150
  %v186 = vpack.c.b16 %v153, %v152
  %v187 = vpack.c.b16 %v155, %v154
  %v188 = vpack.c.b16 %v157, %v156
  %v189 = vpack.c.b16 %v159, %v158
  %v190 = vpack.c.b16 %v161, %v160
  %v191 = vpack.c.b16 %v163, %v162
  %v192 = vpack.c.b16 %v165, %v164
  %v193 = vpack.c.b16 %v167, %v166
  %v194 = vpack.c.b16 %v169, %v168
  %v195 = vpack.c.b16 %v170, %v170
  %v198 = vunpack.c.l.b16 %v64
  %v199 = vunpack.c.l.b16 %v65
  %v200 = vpack.c.b16 %v199, %v198
  %vm202 = vcmask 130048
  %v204 = vsel %vm202, %v171, 0
  %v207 = vsel %vm202, %v172, 0
  %v210 = vsel %vm202, %v173, 0
  %v213 = vsel %vm202, %v174, 0
  %v216 = vsel %vm202, %v175, 0
  %v219 = vsel %vm202, %v176, 0
  %v222 = vsel %vm202, %v177, 0
  %v225 = vsel %vm202, %v178, 0
  %v228 = vsel %vm202, %v179, 0
  %v231 = vsel %vm202, %v180, 0
  %v234 = vsel %vm202, %v181, 0
  %v237 = vsel %vm202, %v182, 0
  %v240 = vsel %vm202, %v183, 0
  %v243 = vsel %vm202, %v184, 0
  %v246 = vsel %vm202, %v185, 0
  %v249 = vsel %vm202, %v186, 0
  %v252 = vsel %vm202, %v187, 0
  %v255 = vsel %vm202, %v188, 0
  %v258 = vsel %vm202, %v189, 0
  %v261 = vsel %vm202, %v190, 0
  %v264 = vsel %vm202, %v191, 0
  %v267 = vsel %vm202, %v192, 0
  %v270 = vsel %vm202, %v193, 0
  %v273 = vsel %vm202, %v194, 0
  %v276 = vsel %vm202, %v195, 0
  %278 = vmatprep.subr.bf16.mxu0 0
  %279 = vmatpush1.bf16.msra.mxu0 %v200
  %280 = vmatprep.subr.bf16.mxu0 0
  %281 = vmatpush1.bf16.msra.mxu0 0
  %282 = vmatprep.subr.bf16.mxu0 0
  %283 = vmatpush1.bf16.msra.mxu0 0
  %284 = vmatprep.subr.bf16.mxu0 0
  %285 = vmatpush1.bf16.msra.mxu0 0
  %286 = vmatprep.subr.bf16.mxu0 0
  %287 = vmatpush1.bf16.msra.mxu0 0
  %288 = vmatprep.subr.bf16.mxu0 0
  %289 = vmatpush1.bf16.msra.mxu0 0
  %290 = vmatprep.subr.bf16.mxu0 0
  %291 = vmatpush1.bf16.msra.mxu0 0
  %292 = vmatprep.subr.bf16.mxu0 0
  %293 = vmatpush1.bf16.msra.mxu0 0
  %294 = vmatprep.subr.bf16.mxu0 0
  %295 = vmatpush1.bf16.msra.mxu0 0
  %296 = vmatprep.subr.bf16.mxu0 0
  %297 = vmatpush1.bf16.msra.mxu0 0
  %298 = vmatprep.subr.bf16.mxu0 0
  %299 = vmatpush1.bf16.msra.mxu0 0
  %300 = vmatprep.subr.bf16.mxu0 0
  %301 = vmatpush1.bf16.msra.mxu0 0
  %302 = vmatprep.subr.bf16.mxu0 0
  %303 = vmatpush1.bf16.msra.mxu0 0
  %304 = vmatprep.subr.bf16.mxu0 0
  %305 = vmatpush1.bf16.msra.mxu0 0
  %306 = vmatprep.subr.bf16.mxu0 0
  %307 = vmatpush1.bf16.msra.mxu0 0
  %308 = vmatprep.subr.bf16.mxu0 0
  %309 = vmatpush1.bf16.msra.mxu0 0
  %310 = vmatprep.mubr.bf16.mxu0 0
  %311 = vmatmul.mubr.bf16.gmra.mrb[0].mxu0 %v204
  %v312 = vpop.f32.mrb[0].mxu0
  %v313 = vadd.f32 %v71, %v312
  %v314 = vpop.f32.mrb[0].mxu0
  %v315 = vpop.f32.mrb[0].mxu0
  %v316 = vadd.f32 %v71, %v315
  %v317 = vpop.f32.mrb[0].mxu0
  %318 = vmatprep.mubr.bf16.mxu0 0
  %319 = vmatmul.mubr.bf16.gmra.mrb[0].mxu0 %v207
  %v320 = vpop.f32.mrb[0].mxu0
  %v321 = vadd.f32 %v71, %v320
  %v322 = vpop.f32.mrb[0].mxu0
  %v323 = vpop.f32.mrb[0].mxu0
  %v324 = vadd.f32 %v71, %v323
  %v325 = vpop.f32.mrb[0].mxu0
  %326 = vmatprep.mubr.bf16.mxu0 0
  %327 = vmatmul.mubr.bf16.gmra.mrb[0].mxu0 %v210
  %v328 = vpop.f32.mrb[0].mxu0
  %v329 = vadd.f32 %v71, %v328
  %v330 = vpop.f32.mrb[0].mxu0
  %v331 = vpop.f32.mrb[0].mxu0
  %v332 = vadd.f32 %v71, %v331
  %v333 = vpop.f32.mrb[0].mxu0
  %334 = vmatprep.mubr.bf16.mxu0 0
  %335 = vmatmul.mubr.bf16.gmra.mrb[0].mxu0 %v213
  %v336 = vpop.f32.mrb[0].mxu0
  %v337 = vadd.f32 %v71, %v336
  %v338 = vpop.f32.mrb[0].mxu0
  %v339 = vpop.f32.mrb[0].mxu0
  %v340 = vadd.f32 %v71, %v339
  %v341 = vpop.f32.mrb[0].mxu0
  %342 = vmatprep.mubr.bf16.mxu0 0
  %343 = vmatmul.mubr.bf16.gmra.mrb[0].mxu0 %v216
  %v344 = vpop.f32.mrb[0].mxu0
  %v345 = vadd.f32 %v71, %v344
  %v346 = vpop.f32.mrb[0].mxu0
  %v347 = vpop.f32.mrb[0].mxu0
  %v348 = vadd.f32 %v71, %v347
  %v349 = vpop.f32.mrb[0].mxu0
  %350 = vmatprep.mubr.bf16.mxu0 0
  %351 = vmatmul.mubr.bf16.gmra.mrb[0].mxu0 %v219
  %v352 = vpop.f32.mrb[0].mxu0
  %v353 = vadd.f32 %v71, %v352
  %v354 = vpop.f32.mrb[0].mxu0
  %v355 = vpop.f32.mrb[0].mxu0
  %v356 = vadd.f32 %v71, %v355
  %v357 = vpop.f32.mrb[0].mxu0
  %358 = vmatprep.mubr.bf16.mxu0 0
  %359 = vmatmul.mubr.bf16.gmra.mrb[0].mxu0 %v222
  %v360 = vpop.f32.mrb[0].mxu0
  %v361 = vadd.f32 %v71, %v360
  %v362 = vpop.f32.mrb[0].mxu0
  %v363 = vpop.f32.mrb[0].mxu0
  %v364 = vadd.f32 %v71, %v363
  %v365 = vpop.f32.mrb[0].mxu0
  %366 = vmatprep.mubr.bf16.mxu0 0
  %367 = vmatmul.mubr.bf16.gmra.mrb[0].mxu0 %v225
  %v368 = vpop.f32.mrb[0].mxu0
  %v369 = vadd.f32 %v71, %v368
  %v370 = vpop.f32.mrb[0].mxu0
  %v371 = vpop.f32.mrb[0].mxu0
  %v372 = vadd.f32 %v71, %v371
  %v373 = vpop.f32.mrb[0].mxu0
  %374 = vmatprep.mubr.bf16.mxu0 0
  %375 = vmatmul.mubr.bf16.gmra.mrb[0].mxu0 %v228
  %v376 = vpop.f32.mrb[0].mxu0
  %v377 = vadd.f32 %v71, %v376
  %v378 = vpop.f32.mrb[0].mxu0
  %v379 = vpop.f32.mrb[0].mxu0
  %v380 = vadd.f32 %v71, %v379
  %v381 = vpop.f32.mrb[0].mxu0
  %382 = vmatprep.mubr.bf16.mxu0 0
  %383 = vmatmul.mubr.bf16.gmra.mrb[0].mxu0 %v231
  %v384 = vpop.f32.mrb[0].mxu0
  %v385 = vadd.f32 %v71, %v384
  %v386 = vpop.f32.mrb[0].mxu0
  %v387 = vpop.f32.mrb[0].mxu0
  %v388 = vadd.f32 %v71, %v387
  %v389 = vpop.f32.mrb[0].mxu0
  %390 = vmatprep.mubr.bf16.mxu0 0
  %391 = vmatmul.mubr.bf16.gmra.mrb[0].mxu0 %v234
  %v392 = vpop.f32.mrb[0].mxu0
  %v393 = vadd.f32 %v71, %v392
  %v394 = vpop.f32.mrb[0].mxu0
  %v395 = vpop.f32.mrb[0].mxu0
  %v396 = vadd.f32 %v71, %v395
  %v397 = vpop.f32.mrb[0].mxu0
  %398 = vmatprep.mubr.bf16.mxu0 0
  %399 = vmatmul.mubr.bf16.gmra.mrb[0].mxu0 %v237
  %v400 = vpop.f32.mrb[0].mxu0
  %v401 = vadd.f32 %v71, %v400
  %v402 = vpop.f32.mrb[0].mxu0
  %v403 = vpop.f32.mrb[0].mxu0
  %v404 = vadd.f32 %v71, %v403
  %v405 = vpop.f32.mrb[0].mxu0
  %406 = vmatprep.mubr.bf16.mxu0 0
  %407 = vmatmul.mubr.bf16.gmra.mrb[0].mxu0 %v240
  %v408 = vpop.f32.mrb[0].mxu0
  %v409 = vadd.f32 %v71, %v408
  %v410 = vpop.f32.mrb[0].mxu0
  %v411 = vpop.f32.mrb[0].mxu0
  %v412 = vadd.f32 %v71, %v411
  %v413 = vpop.f32.mrb[0].mxu0
  %414 = vmatprep.mubr.bf16.mxu0 0
  %415 = vmatmul.mubr.bf16.gmra.mrb[0].mxu0 %v243
  %v416 = vpop.f32.mrb[0].mxu0
  %v417 = vadd.f32 %v71, %v416
  %v418 = vpop.f32.mrb[0].mxu0
  %v419 = vpop.f32.mrb[0].mxu0
  %v420 = vadd.f32 %v71, %v419
  %v421 = vpop.f32.mrb[0].mxu0
  %422 = vmatprep.mubr.bf16.mxu0 0
  %423 = vmatmul.mubr.bf16.gmra.mrb[0].mxu0 %v246
  %v424 = vpop.f32.mrb[0].mxu0
  %v425 = vadd.f32 %v71, %v424
  %v426 = vpop.f32.mrb[0].mxu0
  %v427 = vpop.f32.mrb[0].mxu0
  %v428 = vadd.f32 %v71, %v427
  %v429 = vpop.f32.mrb[0].mxu0
  %430 = vmatprep.mubr.bf16.mxu0 0
  %431 = vmatmul.mubr.bf16.gmra.mrb[0].mxu0 %v249
  %v432 = vpop.f32.mrb[0].mxu0
  %v433 = vadd.f32 %v71, %v432
  %v434 = vpop.f32.mrb[0].mxu0
  %v435 = vpop.f32.mrb[0].mxu0
  %v436 = vadd.f32 %v71, %v435
  %v437 = vpop.f32.mrb[0].mxu0
  %438 = vmatprep.mubr.bf16.mxu0 0
  %439 = vmatmul.mubr.bf16.gmra.mrb[0].mxu0 %v252
  %v440 = vpop.f32.mrb[0].mxu0
  %v441 = vadd.f32 %v71, %v440
  %v442 = vpop.f32.mrb[0].mxu0
  %v443 = vpop.f32.mrb[0].mxu0
  %v444 = vadd.f32 %v71, %v443
  %v445 = vpop.f32.mrb[0].mxu0
  %446 = vmatprep.mubr.bf16.mxu0 0
  %447 = vmatmul.mubr.bf16.gmra.mrb[0].mxu0 %v255
  %v448 = vpop.f32.mrb[0].mxu0
  %v449 = vadd.f32 %v71, %v448
  %v450 = vpop.f32.mrb[0].mxu0
  %v451 = vpop.f32.mrb[0].mxu0
  %v452 = vadd.f32 %v71, %v451
  %v453 = vpop.f32.mrb[0].mxu0
  %454 = vmatprep.mubr.bf16.mxu0 0
  %455 = vmatmul.mubr.bf16.gmra.mrb[0].mxu0 %v258
  %v456 = vpop.f32.mrb[0].mxu0
  %v457 = vadd.f32 %v71, %v456
  %v458 = vpop.f32.mrb[0].mxu0
  %v459 = vpop.f32.mrb[0].mxu0
  %v460 = vadd.f32 %v71, %v459
  %v461 = vpop.f32.mrb[0].mxu0
  %462 = vmatprep.mubr.bf16.mxu0 0
  %463 = vmatmul.mubr.bf16.gmra.mrb[0].mxu0 %v261
  %v464 = vpop.f32.mrb[0].mxu0
  %v465 = vadd.f32 %v71, %v464
  %v466 = vpop.f32.mrb[0].mxu0
  %v467 = vpop.f32.mrb[0].mxu0
  %v468 = vadd.f32 %v71, %v467
  %v469 = vpop.f32.mrb[0].mxu0
  %470 = vmatprep.mubr.bf16.mxu0 0
  %471 = vmatmul.mubr.bf16.gmra.mrb[0].mxu0 %v264
  %v472 = vpop.f32.mrb[0].mxu0
  %v473 = vadd.f32 %v71, %v472
  %v474 = vpop.f32.mrb[0].mxu0
  %v475 = vpop.f32.mrb[0].mxu0
  %v476 = vadd.f32 %v71, %v475
  %v477 = vpop.f32.mrb[0].mxu0
  %478 = vmatprep.mubr.bf16.mxu0 0
  %479 = vmatmul.mubr.bf16.gmra.mrb[0].mxu0 %v267
  %v480 = vpop.f32.mrb[0].mxu0
  %v481 = vadd.f32 %v71, %v480
  %v482 = vpop.f32.mrb[0].mxu0
  %v483 = vpop.f32.mrb[0].mxu0
  %v484 = vadd.f32 %v71, %v483
  %v485 = vpop.f32.mrb[0].mxu0
  %486 = vmatprep.mubr.bf16.mxu0 0
  %487 = vmatmul.mubr.bf16.gmra.mrb[0].mxu0 %v270
  %v488 = vpop.f32.mrb[0].mxu0
  %v489 = vadd.f32 %v71, %v488
  %v490 = vpop.f32.mrb[0].mxu0
  %v491 = vpop.f32.mrb[0].mxu0
  %v492 = vadd.f32 %v71, %v491
  %v493 = vpop.f32.mrb[0].mxu0
  %494 = vmatprep.mubr.bf16.mxu0 0
  %495 = vmatmul.mubr.bf16.gmra.mrb[0].mxu0 %v273
  %v496 = vpop.f32.mrb[0].mxu0
  %v497 = vadd.f32 %v71, %v496
  %v498 = vpop.f32.mrb[0].mxu0
  %v499 = vpop.f32.mrb[0].mxu0
  %v500 = vadd.f32 %v71, %v499
  %v501 = vpop.f32.mrb[0].mxu0
  %502 = vmatprep.mubr.bf16.mxu0 0
  %503 = vmatmul.mubr.bf16.gmra.mrb[0].mxu0 %v276
  %v504 = vpop.f32.mrb[0].mxu0
  %v505 = vadd.f32 %v71, %v504
  %v506 = vpop.f32.mrb[0].mxu0
  %v507 = vpop.f32.mrb[0].mxu0
  %v508 = vpop.f32.mrb[0].mxu0
  %509 = vdwg.mxu0
  %v510 = vmax.f32 %v313, 0.0
  %v511 = vmax.f32 %v316, 0.0
  %v512 = vmax.f32 %v321, 0.0
  %v513 = vmax.f32 %v324, 0.0
  %v514 = vmax.f32 %v329, 0.0
  %v515 = vmax.f32 %v332, 0.0
  %v516 = vmax.f32 %v337, 0.0
  %v517 = vmax.f32 %v340, 0.0
  %v518 = vmax.f32 %v345, 0.0
  %v519 = vmax.f32 %v348, 0.0
  %v520 = vmax.f32 %v353, 0.0
  %v521 = vmax.f32 %v356, 0.0
  %v522 = vmax.f32 %v361, 0.0
  %v523 = vmax.f32 %v364, 0.0
  %v524 = vmax.f32 %v369, 0.0
  %v525 = vmax.f32 %v372, 0.0
  %v526 = vmax.f32 %v377, 0.0
  %v527 = vmax.f32 %v380, 0.0
  %v528 = vmax.f32 %v385, 0.0
  %v529 = vmax.f32 %v388, 0.0
  %v530 = vmax.f32 %v393, 0.0
  %v531 = vmax.f32 %v396, 0.0
  %v532 = vmax.f32 %v401, 0.0
  %v533 = vmax.f32 %v404, 0.0
  %v534 = vmax.f32 %v409, 0.0
  %v535 = vmax.f32 %v412, 0.0
  %v536 = vmax.f32 %v417, 0.0
  %v537 = vmax.f32 %v420, 0.0
  %v538 = vmax.f32 %v425, 0.0
  %v539 = vmax.f32 %v428, 0.0
  %v540 = vmax.f32 %v433, 0.0
  %v541 = vmax.f32 %v436, 0.0
  %v542 = vmax.f32 %v441, 0.0
  %v543 = vmax.f32 %v444, 0.0
  %v544 = vmax.f32 %v449, 0.0
  %v545 = vmax.f32 %v452, 0.0
  %v546 = vmax.f32 %v457, 0.0
  %v547 = vmax.f32 %v460, 0.0
  %v548 = vmax.f32 %v465, 0.0
  %v549 = vmax.f32 %v468, 0.0
  %v550 = vmax.f32 %v473, 0.0
  %v551 = vmax.f32 %v476, 0.0
  %v552 = vmax.f32 %v481, 0.0
  %v553 = vmax.f32 %v484, 0.0
  %v554 = vmax.f32 %v489, 0.0
  %v555 = vmax.f32 %v492, 0.0
  %v556 = vmax.f32 %v497, 0.0
  %v557 = vmax.f32 %v500, 0.0
  %v558 = vmax.f32 %v505, 0.0
  %v559 = vpack.c.bf16 %v511, %v510
  %v560 = vpack.c.bf16 %v513, %v512
  %v561 = vpack.c.bf16 %v515, %v514
  %v562 = vpack.c.bf16 %v517, %v516
  %v563 = vpack.c.bf16 %v519, %v518
  %v564 = vpack.c.bf16 %v521, %v520
  %v565 = vpack.c.bf16 %v523, %v522
  %v566 = vpack.c.bf16 %v525, %v524
  %v567 = vpack.c.bf16 %v527, %v526
  %v568 = vpack.c.bf16 %v529, %v528
  %v569 = vpack.c.bf16 %v531, %v530
  %v570 = vpack.c.bf16 %v533, %v532
  %v571 = vpack.c.bf16 %v535, %v534
  %v572 = vpack.c.bf16 %v537, %v536
  %v573 = vpack.c.bf16 %v539, %v538
  %v574 = vpack.c.bf16 %v541, %v540
  %v575 = vpack.c.bf16 %v543, %v542
  %v576 = vpack.c.bf16 %v545, %v544
  %v577 = vpack.c.bf16 %v547, %v546
  %v578 = vpack.c.bf16 %v549, %v548
  %v579 = vpack.c.bf16 %v551, %v550
  %v580 = vpack.c.bf16 %v553, %v552
  %v581 = vpack.c.bf16 %v555, %v554
  %v582 = vpack.c.bf16 %v557, %v556
  %v583 = vpack.c.bf16 %v558, %v558
  %v609 = vunpack.c.l.b16 %v559
  %v610 = vunpack.c.h.b16 %v559
  %v611 = vunpack.c.l.b16 %v560
  %v612 = vunpack.c.h.b16 %v560
  %v613 = vunpack.c.l.b16 %v561
  %v614 = vunpack.c.h.b16 %v561
  %v615 = vunpack.c.l.b16 %v562
  %v616 = vunpack.c.h.b16 %v562
  %v617 = vunpack.c.l.b16 %v563
  %v618 = vunpack.c.h.b16 %v563
  %v619 = vunpack.c.l.b16 %v564
  %v620 = vunpack.c.h.b16 %v564
  %v621 = vunpack.c.l.b16 %v565
  %v622 = vunpack.c.h.b16 %v565
  %v623 = vunpack.c.l.b16 %v566
  %v624 = vunpack.c.h.b16 %v566
  %v625 = vunpack.c.l.b16 %v567
  %v626 = vunpack.c.h.b16 %v567
  %v627 = vunpack.c.l.b16 %v568
  %v628 = vunpack.c.h.b16 %v568
  %v629 = vunpack.c.l.b16 %v569
  %v630 = vunpack.c.h.b16 %v569
  %v631 = vunpack.c.l.b16 %v570
  %v632 = vunpack.c.h.b16 %v570
  %v633 = vunpack.c.l.b16 %v571
  %v634 = vunpack.c.h.b16 %v571
  %v635 = vunpack.c.l.b16 %v572
  %v636 = vunpack.c.h.b16 %v572
  %v637 = vunpack.c.l.b16 %v573
  %v638 = vunpack.c.h.b16 %v573
  %v639 = vunpack.c.l.b16 %v574
  %v640 = vunpack.c.h.b16 %v574
  %v641 = vunpack.c.l.b16 %v575
  %v642 = vunpack.c.h.b16 %v575
  %v643 = vunpack.c.l.b16 %v576
  %v644 = vunpack.c.h.b16 %v576
  %v645 = vunpack.c.l.b16 %v577
  %v646 = vunpack.c.h.b16 %v577
  %v647 = vunpack.c.l.b16 %v578
  %v648 = vunpack.c.h.b16 %v578
  %v649 = vunpack.c.l.b16 %v579
  %v650 = vunpack.c.h.b16 %v579
  %v651 = vunpack.c.l.b16 %v580
  %v652 = vunpack.c.h.b16 %v580
  %v653 = vunpack.c.l.b16 %v581
  %v654 = vunpack.c.h.b16 %v581
  %v655 = vunpack.c.l.b16 %v582
  %v656 = vunpack.c.h.b16 %v582
  %v657 = vunpack.c.l.b16 %v583
  %v658 = vpack.c.b16 %v609, %v609
  %v659 = vpack.c.b16 %v610, %v610
  %v660 = vpack.c.b16 %v611, %v611
  %v661 = vpack.c.b16 %v612, %v612
  %v662 = vpack.c.b16 %v613, %v613
  %v663 = vpack.c.b16 %v614, %v614
  %v664 = vpack.c.b16 %v615, %v615
  %v665 = vpack.c.b16 %v616, %v616
  %v666 = vpack.c.b16 %v617, %v617
  %v667 = vpack.c.b16 %v618, %v618
  %v668 = vpack.c.b16 %v619, %v619
  %v669 = vpack.c.b16 %v620, %v620
  %v670 = vpack.c.b16 %v621, %v621
  %v671 = vpack.c.b16 %v622, %v622
  %v672 = vpack.c.b16 %v623, %v623
  %v673 = vpack.c.b16 %v624, %v624
  %v674 = vpack.c.b16 %v625, %v625
  %v675 = vpack.c.b16 %v626, %v626
  %v676 = vpack.c.b16 %v627, %v627
  %v677 = vpack.c.b16 %v628, %v628
  %v678 = vpack.c.b16 %v629, %v629
  %v679 = vpack.c.b16 %v630, %v630
  %v680 = vpack.c.b16 %v631, %v631
  %v681 = vpack.c.b16 %v632, %v632
  %v682 = vpack.c.b16 %v633, %v633
  %v683 = vpack.c.b16 %v634, %v634
  %v684 = vpack.c.b16 %v635, %v635
  %v685 = vpack.c.b16 %v636, %v636
  %v686 = vpack.c.b16 %v637, %v637
  %v687 = vpack.c.b16 %v638, %v638
  %v688 = vpack.c.b16 %v639, %v639
  %v689 = vpack.c.b16 %v640, %v640
  %v690 = vpack.c.b16 %v641, %v641
  %v691 = vpack.c.b16 %v642, %v642
  %v692 = vpack.c.b16 %v643, %v643
  %v693 = vpack.c.b16 %v644, %v644
  %v694 = vpack.c.b16 %v645, %v645
  %v695 = vpack.c.b16 %v646, %v646
  %v696 = vpack.c.b16 %v647, %v647
  %v697 = vpack.c.b16 %v648, %v648
  %v698 = vpack.c.b16 %v649, %v649
  %v699 = vpack.c.b16 %v650, %v650
  %v700 = vpack.c.b16 %v651, %v651
  %v701 = vpack.c.b16 %v652, %v652
  %v702 = vpack.c.b16 %v653, %v653
  %v703 = vpack.c.b16 %v654, %v654
  %v704 = vpack.c.b16 %v655, %v655
  %v705 = vpack.c.b16 %v656, %v656
  %v706 = vpack.c.b16 %v657, %v657
  %756 = vst [vmem:[%s3] sm:$0xf] %v658
  %757 = vst [vmem:[%s3 + $0x4] sm:$0xf] %v659
  %758 = vst [vmem:[%s3 + $0x8] sm:$0xf] %v660
  %759 = vst [vmem:[%s3 + $0xc] sm:$0xf] %v661
  %760 = vst [vmem:[%s3 + $0x10] sm:$0xf] %v662
  %761 = vst [vmem:[%s3 + $0x14] sm:$0xf] %v663
  %762 = vst [vmem:[%s3 + $0x18] sm:$0xf] %v664
  %763 = vst [vmem:[%s3 + $0x1c] sm:$0xf] %v665
  %764 = vst [vmem:[%s3 + $0x20] sm:$0xf] %v666
  %765 = vst [vmem:[%s3 + $0x24] sm:$0xf] %v667
  %766 = vst [vmem:[%s3 + $0x28] sm:$0xf] %v668
  %767 = vst [vmem:[%s3 + $0x2c] sm:$0xf] %v669
  %768 = vst [vmem:[%s3 + $0x30] sm:$0xf] %v670
  %769 = vst [vmem:[%s3 + $0x34] sm:$0xf] %v671
  %770 = vst [vmem:[%s3 + $0x38] sm:$0xf] %v672
  %771 = vst [vmem:[%s3 + $0x3c] sm:$0xf] %v673
  %772 = vst [vmem:[%s3 + $0x40] sm:$0xf] %v674
  %773 = vst [vmem:[%s3 + $0x44] sm:$0xf] %v675
  %774 = vst [vmem:[%s3 + $0x48] sm:$0xf] %v676
  %775 = vst [vmem:[%s3 + $0x4c] sm:$0xf] %v677
  %776 = vst [vmem:[%s3 + $0x50] sm:$0xf] %v678
  %777 = vst [vmem:[%s3 + $0x54] sm:$0xf] %v679
  %778 = vst [vmem:[%s3 + $0x58] sm:$0xf] %v680
  %779 = vst [vmem:[%s3 + $0x5c] sm:$0xf] %v681
  %780 = vst [vmem:[%s3 + $0x60] sm:$0xf] %v682
  %781 = vst [vmem:[%s3 + $0x64] sm:$0xf] %v683
  %782 = vst [vmem:[%s3 + $0x68] sm:$0xf] %v684
  %783 = vst [vmem:[%s3 + $0x6c] sm:$0xf] %v685
  %784 = vst [vmem:[%s3 + $0x70] sm:$0xf] %v686
  %785 = vst [vmem:[%s3 + $0x74] sm:$0xf] %v687
  %786 = vst [vmem:[%s3 + $0x78] sm:$0xf] %v688
  %787 = vst [vmem:[%s3 + $0x7c] sm:$0xf] %v689
  %788 = vst [vmem:[%s3 + $0x80] sm:$0xf] %v690
  %789 = vst [vmem:[%s3 + $0x84] sm:$0xf] %v691
  %790 = vst [vmem:[%s3 + $0x88] sm:$0xf] %v692
  %791 = vst [vmem:[%s3 + $0x8c] sm:$0xf] %v693
  %792 = vst [vmem:[%s3 + $0x90] sm:$0xf] %v694
  %793 = vst [vmem:[%s3 + $0x94] sm:$0xf] %v695
  %794 = vst [vmem:[%s3 + $0x98] sm:$0xf] %v696
  %795 = vst [vmem:[%s3 + $0x9c] sm:$0xf] %v697
  %796 = vst [vmem:[%s3 + $0xa0] sm:$0xf] %v698
  %797 = vst [vmem:[%s3 + $0xa4] sm:$0xf] %v699
  %798 = vst [vmem:[%s3 + $0xa8] sm:$0xf] %v700
  %799 = vst [vmem:[%s3 + $0xac] sm:$0xf] %v701
  %800 = vst [vmem:[%s3 + $0xb0] sm:$0xf] %v702
  %801 = vst [vmem:[%s3 + $0xb4] sm:$0xf] %v703
  %802 = vst [vmem:[%s3 + $0xb8] sm:$0xf] %v704
  %803 = vst [vmem:[%s3 + $0xbc] sm:$0xf] %v705
  %804 = vst [vmem:[%s3 + $0xc0] sm:$0xf] %v706
  // Predicated region
  $region14: #{mnist_real0_forward.2} parent=0 // pred_check
    _
  $region15: #{mnist_real0_forward.2} parent=0 // pred_check_branch
    %806 = sbr.rel (0) target = $region17
  $region16: #{mnist_real0_forward.2} parent=0 // pred_region
    _
  $region17: #{mnist_real0_forward.2} parent=0 // pred_fallthru
    _
  // Predicated region
  $region18: #{mnist_real0_forward.2} parent=0 // pred_check
    _
  $region19: #{mnist_real0_forward.2} parent=0 // pred_check_branch
    %808 = sbr.rel (0) target = $region21
  $region20: #{mnist_real0_forward.2} parent=0 // pred_region
    _
  $region21: #{mnist_real0_forward.2} parent=0 // pred_fallthru
    _

// kernel: mnist_real0_forward.3
$region0: #{mnist_real0_forward.3}
  #allocation0 [shape = 'u32[]', space=smem, size = 0x4, offset = 0x4, fixed_abs, tag = 'smem constant byte address 0x4 - core index']
  #allocation1 [shape = 'u32[144,128]{1,0:T(1,128)}', space=vmem, size = 0x12000, scoped, tag = 'internal scratch']
  %s0 = inlined_call_operand.vmem [shape: bf16[49,2,256], index: 0, kind: input, shape index: {}]
  %s1 = inlined_call_operand.vmem [shape: bf16[256,128], index: 1, kind: input, shape index: {}]
  %s2 = inlined_call_operand.vmem [shape: f32[1,128], index: 2, kind: input, shape index: {}]
  %s3 = inlined_call_operand.vmem [shape: bf16[49,128,128], index: 3, kind: input, shape index: {}]
  %s4 = inlined_call_operand.vmem [shape: f32[1,128], index: 4, kind: input, shape index: {}]
  %s5 = inlined_call_operand.vmem [shape: bf16[128,128], index: 5, kind: input, shape index: {}]
  %s6 = inlined_call_operand.vmem [shape: f32[1,128], index: 6, kind: input, shape index: {}]
  %s7 = inlined_call_operand.hbm [shape: f32[2,128], index: 7, kind: output, shape index: {}]
  %s8 = sld [smem:[#allocation0]]
  $region38: #{mnist_real0_forward.3} parent=0
    _
  %s10 = ssub.s32 1, %s8
  %s11 = scalar_select 0, %s10, %s8
  $region1: #{mnist_real0_forward.3} parent=0
    #allocation2 [shape = 'u8[1024]{0}', space=vmem, size = 0x400, scoped, tag = 'output window, operand 0, single buffered']
    #allocation3 [shape = 's32[1]{0}', space=sflag, size = 0x4, scoped, tag = 'scoped memory for mnist_real0_forward.3']
    %12 = vsyncpa [#allocation3], 0
    // Predicated region
    $region2: #{mnist_real0_forward.3} parent=1 // pred_check
      _
    $region3: #{mnist_real0_forward.3} parent=1 // pred_check_branch
      %14 = sbr.rel (0) target = $region5
    $region4: #{mnist_real0_forward.3} parent=1 // pred_region
      _
    $region5: #{mnist_real0_forward.3} parent=1 // pred_fallthru
      _
    // Predicated region
    $region6: #{mnist_real0_forward.3} parent=1 // pred_check
      _
    $region7: #{mnist_real0_forward.3} parent=1 // pred_check_branch
      %16 = sbr.rel (0) target = $region9
    $region8: #{mnist_real0_forward.3} parent=1 // pred_region
      _
    $region9: #{mnist_real0_forward.3} parent=1 // pred_fallthru
      _
    // Predicated region
    $region10: #{mnist_real0_forward.3} parent=1 // pred_check
      _
    $region11: #{mnist_real0_forward.3} parent=1 // pred_check_branch
      %18 = sbr.rel (0) target = $region13
    $region12: #{mnist_real0_forward.3} parent=1 // pred_region
      _
    $region13: #{mnist_real0_forward.3} parent=1 // pred_fallthru
      _
    // Predicated region
    $region14: #{mnist_real0_forward.3} parent=1 // pred_check
      _
    $region15: #{mnist_real0_forward.3} parent=1 // pred_check_branch
      %20 = sbr.rel (0) target = $region17
    $region16: #{mnist_real0_forward.3} parent=1 // pred_region
      _
    $region17: #{mnist_real0_forward.3} parent=1 // pred_fallthru
      _
    // Predicated region
    $region18: #{mnist_real0_forward.3} parent=1 // pred_check
      _
    $region19: #{mnist_real0_forward.3} parent=1 // pred_check_branch
      %22 = sbr.rel (0) target = $region21
    $region20: #{mnist_real0_forward.3} parent=1 // pred_region
      _
    $region21: #{mnist_real0_forward.3} parent=1 // pred_fallthru
      _
    // Predicated region
    $region22: #{mnist_real0_forward.3} parent=1 // pred_check
      _
    $region23: #{mnist_real0_forward.3} parent=1 // pred_check_branch
      %24 = sbr.rel (0) target = $region25
    $region24: #{mnist_real0_forward.3} parent=1 // pred_region
      _
    $region25: #{mnist_real0_forward.3} parent=1 // pred_fallthru
      _
    // Predicated region
    $region26: #{mnist_real0_forward.3} parent=1 // pred_check
      _
    $region27: #{mnist_real0_forward.3} parent=1 // pred_check_branch
      %26 = sbr.rel (0) target = $region29
    $region28: #{mnist_real0_forward.3} parent=1 // pred_region
      _
    $region29: #{mnist_real0_forward.3} parent=1 // pred_fallthru
      _
    %v28 = vld [vmem:[%s1] sm:$0xf]
    %v29 = vld [vmem:[%s1 + $0x4] sm:$0xf]
    %v30 = vld [vmem:[%s1 + $0x8] sm:$0xf]
    %v31 = vld [vmem:[%s1 + $0xc] sm:$0xf]
    %v32 = vld [vmem:[%s1 + $0x10] sm:$0xf]
    %v33 = vld [vmem:[%s1 + $0x14] sm:$0xf]
    %v34 = vld [vmem:[%s1 + $0x18] sm:$0xf]
    %v35 = vld [vmem:[%s1 + $0x1c] sm:$0xf]
    %v36 = vld [vmem:[%s1 + $0x20] sm:$0xf]
    %v37 = vld [vmem:[%s1 + $0x24] sm:$0xf]
    %v38 = vld [vmem:[%s1 + $0x28] sm:$0xf]
    %v39 = vld [vmem:[%s1 + $0x2c] sm:$0xf]
    %v40 = vld [vmem:[%s1 + $0x30] sm:$0xf]
    %v41 = vld [vmem:[%s1 + $0x34] sm:$0xf]
    %v42 = vld [vmem:[%s1 + $0x38] sm:$0xf]
    %v43 = vld [vmem:[%s1 + $0x3c] sm:$0xf]
    %v44 = vld [vmem:[%s1 + $0x40] sm:$0xf]
    %v45 = vld [vmem:[%s1 + $0x44] sm:$0xf]
    %v46 = vld [vmem:[%s1 + $0x48] sm:$0xf]
    %v47 = vld [vmem:[%s1 + $0x4c] sm:$0xf]
    %v48 = vld [vmem:[%s1 + $0x50] sm:$0xf]
    %v49 = vld [vmem:[%s1 + $0x54] sm:$0xf]
    %v50 = vld [vmem:[%s1 + $0x58] sm:$0xf]
    %v51 = vld [vmem:[%s1 + $0x5c] sm:$0xf]
    %v52 = vld [vmem:[%s1 + $0x60] sm:$0xf]
    %v53 = vld [vmem:[%s1 + $0x64] sm:$0xf]
    %v54 = vld [vmem:[%s1 + $0x68] sm:$0xf]
    %v55 = vld [vmem:[%s1 + $0x6c] sm:$0xf]
    %v56 = vld [vmem:[%s1 + $0x70] sm:$0xf]
    %v57 = vld [vmem:[%s1 + $0x74] sm:$0xf]
    %v58 = vld [vmem:[%s1 + $0x78] sm:$0xf]
    %v59 = vld [vmem:[%s1 + $0x7c] sm:$0xf]
    %v60 = vld [vmem:[%s2] sm:$0x1]
    %v61 = vld [vmem:[%s0] sm:$0x3]
    %v63 = vlaneseq
    %v64 = vshrl.u32 %v63, 7
    %v65 = vsub.s32 0, %v64
    %v66 = vrot.slane %v60, %v65
    %v70 = vunpack.c.l.s4 1966171168
    %v71 = vunpack.c.0.s8 %v70
    %v72 = vlaneseq
    %v73 = vshrl.u32 %v72, 7
    %v74 = vsub.s32 %v71, %v73
    %v75 = vrot.slane %v61, %v74
    %v76 = vcombine.high %v75, %v75
    %v78 = vunpack.c.l.s4 1966171168
    %v79 = vunpack.c.0.s8 %v78
    %v80 = vlaneseq
    %v81 = vshrl.u32 %v80, 7
    %v82 = vsub.s32 %v79, %v81
    %v83 = vrot.slane %v75, %v82
    %v85 = vunpack.c.l.s4 1966171168
    %v86 = vunpack.c.0.s8 %v85
    %v87 = vlaneseq
    %v88 = vshrl.u32 %v87, 7
    %v89 = vsub.s32 %v86, %v88
    %v90 = vrot.slane %v76, %v89
    %v125 = vunpack.c.l.b16 %v28
    %v126 = vunpack.c.l.b16 %v29
    %v127 = vunpack.c.l.b16 %v30
    %v128 = vunpack.c.l.b16 %v31
    %v129 = vunpack.c.l.b16 %v32
    %v130 = vunpack.c.l.b16 %v33
    %v131 = vunpack.c.l.b16 %v34
    %v132 = vunpack.c.l.b16 %v35
    %v133 = vunpack.c.l.b16 %v36
    %v134 = vunpack.c.l.b16 %v37
    %v135 = vunpack.c.l.b16 %v38
    %v136 = vunpack.c.l.b16 %v39
    %v137 = vunpack.c.l.b16 %v40
    %v138 = vunpack.c.l.b16 %v41
    %v139 = vunpack.c.l.b16 %v42
    %v140 = vunpack.c.l.b16 %v43
    %v141 = vunpack.c.l.b16 %v44
    %v142 = vunpack.c.l.b16 %v45
    %v143 = vunpack.c.l.b16 %v46
    %v144 = vunpack.c.l.b16 %v47
    %v145 = vunpack.c.l.b16 %v48
    %v146 = vunpack.c.l.b16 %v49
    %v147 = vunpack.c.l.b16 %v50
    %v148 = vunpack.c.l.b16 %v51
    %v149 = vunpack.c.l.b16 %v52
    %v150 = vunpack.c.l.b16 %v53
    %v151 = vunpack.c.l.b16 %v54
    %v152 = vunpack.c.l.b16 %v55
    %v153 = vunpack.c.l.b16 %v56
    %v154 = vunpack.c.l.b16 %v57
    %v155 = vunpack.c.l.b16 %v58
    %v156 = vunpack.c.l.b16 %v59
    %v157 = vpack.c.b16 %v126, %v125
    %v158 = vpack.c.b16 %v128, %v127
    %v159 = vpack.c.b16 %v130, %v129
    %v160 = vpack.c.b16 %v132, %v131
    %v161 = vpack.c.b16 %v134, %v133
    %v162 = vpack.c.b16 %v136, %v135
    %v163 = vpack.c.b16 %v138, %v137
    %v164 = vpack.c.b16 %v140, %v139
    %v165 = vpack.c.b16 %v142, %v141
    %v166 = vpack.c.b16 %v144, %v143
    %v167 = vpack.c.b16 %v146, %v145
    %v168 = vpack.c.b16 %v148, %v147
    %v169 = vpack.c.b16 %v150, %v149
    %v170 = vpack.c.b16 %v152, %v151
    %v171 = vpack.c.b16 %v154, %v153
    %v172 = vpack.c.b16 %v156, %v155
    %189 = vmatprep.subr.bf16.mxu0 0
    %190 = vmatpush1.bf16.msra.mxu0 %v157
    %191 = vmatprep.subr.bf16.mxu0 0
    %192 = vmatpush1.bf16.msra.mxu0 %v158
    %193 = vmatprep.subr.bf16.mxu0 0
    %194 = vmatpush1.bf16.msra.mxu0 %v159
    %195 = vmatprep.subr.bf16.mxu0 0
    %196 = vmatpush1.bf16.msra.mxu0 %v160
    %197 = vmatprep.subr.bf16.mxu0 0
    %198 = vmatpush1.bf16.msra.mxu0 %v161
    %199 = vmatprep.subr.bf16.mxu0 0
    %200 = vmatpush1.bf16.msra.mxu0 %v162
    %201 = vmatprep.subr.bf16.mxu0 0
    %202 = vmatpush1.bf16.msra.mxu0 %v163
    %203 = vmatprep.subr.bf16.mxu0 0
    %204 = vmatpush1.bf16.msra.mxu0 %v164
    %205 = vmatprep.subr.bf16.mxu0 0
    %206 = vmatpush1.bf16.msra.mxu0 %v165
    %207 = vmatprep.subr.bf16.mxu0 0
    %208 = vmatpush1.bf16.msra.mxu0 %v166
    %209 = vmatprep.subr.bf16.mxu0 0
    %210 = vmatpush1.bf16.msra.mxu0 %v167
    %211 = vmatprep.subr.bf16.mxu0 0
    %212 = vmatpush1.bf16.msra.mxu0 %v168
    %213 = vmatprep.subr.bf16.mxu0 0
    %214 = vmatpush1.bf16.msra.mxu0 %v169
    %215 = vmatprep.subr.bf16.mxu0 0
    %216 = vmatpush1.bf16.msra.mxu0 %v170
    %217 = vmatprep.subr.bf16.mxu0 0
    %218 = vmatpush1.bf16.msra.mxu0 %v171
    %219 = vmatprep.subr.bf16.mxu0 0
    %220 = vmatpush1.bf16.msra.mxu0 %v172
    %221 = vmatprep.mubr.bf16.mxu0 %v90
    %222 = vmatmul.mubr.bf16.gmra.mrb[0].mxu0 %v83
    %v223 = vpop.f32.mrb[0].mxu0
    %v224 = vadd.f32 %v66, %v223
    %v225 = vpop.f32.mrb[0].mxu0
    %v226 = vpop.f32.mrb[0].mxu0
    %v227 = vpop.f32.mrb[0].mxu0
    %228 = vdwg.mxu0
    %vm229 = vcmp.ge.f32.partialorder %v224, 0.0
    %v230 = vsel %vm229, 1.0, 0.0
    %v231 = vpack.c.bf16 %v230, %v230
    %v232 = vld [vmem:[%s3] sm:$0xf]
    %v233 = vld [vmem:[%s3 + $0x4] sm:$0xf]
    %v234 = vld [vmem:[%s3 + $0x8] sm:$0xf]
    %v235 = vld [vmem:[%s3 + $0xc] sm:$0xf]
    %v236 = vld [vmem:[%s3 + $0x10] sm:$0xf]
    %v237 = vld [vmem:[%s3 + $0x14] sm:$0xf]
    %v238 = vld [vmem:[%s3 + $0x18] sm:$0xf]
    %v239 = vld [vmem:[%s3 + $0x1c] sm:$0xf]
    %v240 = vld [vmem:[%s3 + $0x20] sm:$0xf]
    %v241 = vld [vmem:[%s3 + $0x24] sm:$0xf]
    %v242 = vld [vmem:[%s3 + $0x28] sm:$0xf]
    %v243 = vld [vmem:[%s3 + $0x2c] sm:$0xf]
    %v244 = vld [vmem:[%s3 + $0x30] sm:$0xf]
    %v245 = vld [vmem:[%s3 + $0x34] sm:$0xf]
    %v246 = vld [vmem:[%s3 + $0x38] sm:$0xf]
    %v247 = vld [vmem:[%s3 + $0x3c] sm:$0xf]
    %s248 = scalar_lea.vmem %s0, 2
    %v249 = vld [vmem:[%s248] sm:$0x3]
    %v252 = vunpack.c.l.s4 1966171168
    %v253 = vunpack.c.0.s8 %v252
    %v254 = vlaneseq
    %v255 = vshrl.u32 %v254, 7
    %v256 = vsub.s32 %v253, %v255
    %v257 = vrot.slane %v249, %v256
    %v258 = vcombine.high %v257, %v257
    %v260 = vunpack.c.l.s4 1966171168
    %v261 = vunpack.c.0.s8 %v260
    %v262 = vlaneseq
    %v263 = vshrl.u32 %v262, 7
    %v264 = vsub.s32 %v261, %v263
    %v265 = vrot.slane %v257, %v264
    %v267 = vunpack.c.l.s4 1966171168
    %v268 = vunpack.c.0.s8 %v267
    %v269 = vlaneseq
    %v270 = vshrl.u32 %v269, 7
    %v271 = vsub.s32 %v268, %v270
    %v272 = vrot.slane %v258, %v271
    %275 = vmatprep.subr.bf16.mxu0 0
    %276 = vmatpush1.bf16.msra.mxu0 %v157
    %277 = vmatprep.subr.bf16.mxu0 0
    %278 = vmatpush1.bf16.msra.mxu0 %v158
    %279 = vmatprep.subr.bf16.mxu0 0
    %280 = vmatpush1.bf16.msra.mxu0 %v159
    %281 = vmatprep.subr.bf16.mxu0 0
    %282 = vmatpush1.bf16.msra.mxu0 %v160
    %283 = vmatprep.subr.bf16.mxu0 0
    %284 = vmatpush1.bf16.msra.mxu0 %v161
    %285 = vmatprep.subr.bf16.mxu0 0
    %286 = vmatpush1.bf16.msra.mxu0 %v162
    %287 = vmatprep.subr.bf16.mxu0 0
    %288 = vmatpush1.bf16.msra.mxu0 %v163
    %289 = vmatprep.subr.bf16.mxu0 0
    %290 = vmatpush1.bf16.msra.mxu0 %v164
    %291 = vmatprep.subr.bf16.mxu0 0
    %292 = vmatpush1.bf16.msra.mxu0 %v165
    %293 = vmatprep.subr.bf16.mxu0 0
    %294 = vmatpush1.bf16.msra.mxu0 %v166
    %295 = vmatprep.subr.bf16.mxu0 0
    %296 = vmatpush1.bf16.msra.mxu0 %v167
    %297 = vmatprep.subr.bf16.mxu0 0
    %298 = vmatpush1.bf16.msra.mxu0 %v168
    %299 = vmatprep.subr.bf16.mxu0 0
    %300 = vmatpush1.bf16.msra.mxu0 %v169
    %301 = vmatprep.subr.bf16.mxu0 0
    %302 = vmatpush1.bf16.msra.mxu0 %v170
    %303 = vmatprep.subr.bf16.mxu0 0
    %304 = vmatpush1.bf16.msra.mxu0 %v171
    %305 = vmatprep.subr.bf16.mxu0 0
    %306 = vmatpush1.bf16.msra.mxu0 %v172
    %307 = vmatprep.mubr.bf16.mxu0 %v272
    %308 = vmatmul.mubr.bf16.gmra.mrb[0].mxu0 %v265
    %v309 = vpop.f32.mrb[0].mxu0
    %v310 = vadd.f32 %v66, %v309
    %v311 = vpop.f32.mrb[0].mxu0
    %v312 = vpop.f32.mrb[0].mxu0
    %v313 = vpop.f32.mrb[0].mxu0
    %314 = vdwg.mxu0
    %vm315 = vcmp.ge.f32.partialorder %v310, 0.0
    %v316 = vsel %vm315, 1.0, 0.0
    %v317 = vpack.c.bf16 %v316, %v316
    %s318 = scalar_lea.vmem %s3, 64
    %v319 = vld [vmem:[%s318] sm:$0xf]
    %v320 = vld [vmem:[%s318 + $0x4] sm:$0xf]
    %v321 = vld [vmem:[%s318 + $0x8] sm:$0xf]
    %v322 = vld [vmem:[%s318 + $0xc] sm:$0xf]
    %v323 = vld [vmem:[%s318 + $0x10] sm:$0xf]
    %v324 = vld [vmem:[%s318 + $0x14] sm:$0xf]
    %v325 = vld [vmem:[%s318 + $0x18] sm:$0xf]
    %v326 = vld [vmem:[%s318 + $0x1c] sm:$0xf]
    %v327 = vld [vmem:[%s318 + $0x20] sm:$0xf]
    %v328 = vld [vmem:[%s318 + $0x24] sm:$0xf]
    %v329 = vld [vmem:[%s318 + $0x28] sm:$0xf]
    %v330 = vld [vmem:[%s318 + $0x2c] sm:$0xf]
    %v331 = vld [vmem:[%s318 + $0x30] sm:$0xf]
    %v332 = vld [vmem:[%s318 + $0x34] sm:$0xf]
    %v333 = vld [vmem:[%s318 + $0x38] sm:$0xf]
    %v334 = vld [vmem:[%s318 + $0x3c] sm:$0xf]
    %v351 = vunpack.c.l.b16 %v319
    %v352 = vunpack.c.l.b16 %v320
    %v353 = vunpack.c.l.b16 %v321
    %v354 = vunpack.c.l.b16 %v322
    %v355 = vunpack.c.l.b16 %v323
    %v356 = vunpack.c.l.b16 %v324
    %v357 = vunpack.c.l.b16 %v325
    %v358 = vunpack.c.l.b16 %v326
    %v359 = vunpack.c.l.b16 %v327
    %v360 = vunpack.c.l.b16 %v328
    %v361 = vunpack.c.l.b16 %v329
    %v362 = vunpack.c.l.b16 %v330
    %v363 = vunpack.c.l.b16 %v331
    %v364 = vunpack.c.l.b16 %v332
    %v365 = vunpack.c.l.b16 %v333
    %v366 = vunpack.c.l.b16 %v334
    %v367 = vpack.c.b16 %v352, %v351
    %v368 = vpack.c.b16 %v354, %v353
    %v369 = vpack.c.b16 %v356, %v355
    %v370 = vpack.c.b16 %v358, %v357
    %v371 = vpack.c.b16 %v360, %v359
    %v372 = vpack.c.b16 %v362, %v361
    %v373 = vpack.c.b16 %v364, %v363
    %v374 = vpack.c.b16 %v366, %v365
    %383 = vmatprep.subr.bf16.mxu0 0
    %384 = vmatpush1.bf16.msra.mxu0 %v367
    %385 = vmatprep.subr.bf16.mxu0 0
    %386 = vmatpush1.bf16.msra.mxu0 %v368
    %387 = vmatprep.subr.bf16.mxu0 0
    %388 = vmatpush1.bf16.msra.mxu0 %v369
    %389 = vmatprep.subr.bf16.mxu0 0
    %390 = vmatpush1.bf16.msra.mxu0 %v370
    %391 = vmatprep.subr.bf16.mxu0 0
    %392 = vmatpush1.bf16.msra.mxu0 %v371
    %393 = vmatprep.subr.bf16.mxu0 0
    %394 = vmatpush1.bf16.msra.mxu0 %v372
    %395 = vmatprep.subr.bf16.mxu0 0
    %396 = vmatpush1.bf16.msra.mxu0 %v373
    %397 = vmatprep.subr.bf16.mxu0 0
    %398 = vmatpush1.bf16.msra.mxu0 %v374
    %399 = vmatprep.subr.bf16.mxu0 0
    %400 = vmatpush1.bf16.msra.mxu0 0
    %401 = vmatprep.subr.bf16.mxu0 0
    %402 = vmatpush1.bf16.msra.mxu0 0
    %403 = vmatprep.subr.bf16.mxu0 0
    %404 = vmatpush1.bf16.msra.mxu0 0
    %405 = vmatprep.subr.bf16.mxu0 0
    %406 = vmatpush1.bf16.msra.mxu0 0
    %407 = vmatprep.subr.bf16.mxu0 0
    %408 = vmatpush1.bf16.msra.mxu0 0
    %409 = vmatprep.subr.bf16.mxu0 0
    %410 = vmatpush1.bf16.msra.mxu0 0
    %411 = vmatprep.subr.bf16.mxu0 0
    %412 = vmatpush1.bf16.msra.mxu0 0
    %413 = vmatprep.subr.bf16.mxu0 0
    %414 = vmatpush1.bf16.msra.mxu0 0
    %415 = vmatprep.mubr.bf16.mxu0 0
    %416 = vmatmul.mubr.bf16.gmra.mrb[0].mxu0 %v317
    %v417 = vpop.f32.mrb[0].mxu0
    %v418 = vadd.f32 0.0, %v417
    %v419 = vpop.f32.mrb[0].mxu0
    %v420 = vpop.f32.mrb[0].mxu0
    %v421 = vpop.f32.mrb[0].mxu0
    %422 = vdwg.mxu0
    %v439 = vunpack.c.l.b16 %v232
    %v440 = vunpack.c.l.b16 %v233
    %v441 = vunpack.c.l.b16 %v234
    %v442 = vunpack.c.l.b16 %v235
    %v443 = vunpack.c.l.b16 %v236
    %v444 = vunpack.c.l.b16 %v237
    %v445 = vunpack.c.l.b16 %v238
    %v446 = vunpack.c.l.b16 %v239
    %v447 = vunpack.c.l.b16 %v240
    %v448 = vunpack.c.l.b16 %v241
    %v449 = vunpack.c.l.b16 %v242
    %v450 = vunpack.c.l.b16 %v243
    %v451 = vunpack.c.l.b16 %v244
    %v452 = vunpack.c.l.b16 %v245
    %v453 = vunpack.c.l.b16 %v246
    %v454 = vunpack.c.l.b16 %v247
    %v455 = vpack.c.b16 %v440, %v439
    %v456 = vpack.c.b16 %v442, %v441
    %v457 = vpack.c.b16 %v444, %v443
    %v458 = vpack.c.b16 %v446, %v445
    %v459 = vpack.c.b16 %v448, %v447
    %v460 = vpack.c.b16 %v450, %v449
    %v461 = vpack.c.b16 %v452, %v451
    %v462 = vpack.c.b16 %v454, %v453
    %471 = vmatprep.subr.bf16.mxu0 0
    %472 = vmatpush1.bf16.msra.mxu0 %v455
    %473 = vmatprep.subr.bf16.mxu0 0
    %474 = vmatpush1.bf16.msra.mxu0 %v456
    %475 = vmatprep.subr.bf16.mxu0 0
    %476 = vmatpush1.bf16.msra.mxu0 %v457
    %477 = vmatprep.subr.bf16.mxu0 0
    %478 = vmatpush1.bf16.msra.mxu0 %v458
    %479 = vmatprep.subr.bf16.mxu0 0
    %480 = vmatpush1.bf16.msra.mxu0 %v459
    %481 = vmatprep.subr.bf16.mxu0 0
    %482 = vmatpush1.bf16.msra.mxu0 %v460
    %483 = vmatprep.subr.bf16.mxu0 0
    %484 = vmatpush1.bf16.msra.mxu0 %v461
    %485 = vmatprep.subr.bf16.mxu0 0
    %486 = vmatpush1.bf16.msra.mxu0 %v462
    %487 = vmatprep.subr.bf16.mxu0 0
    %488 = vmatpush1.bf16.msra.mxu0 0
    %489 = vmatprep.subr.bf16.mxu0 0
    %490 = vmatpush1.bf16.msra.mxu0 0
    %491 = vmatprep.subr.bf16.mxu0 0
    %492 = vmatpush1.bf16.msra.mxu0 0
    %493 = vmatprep.subr.bf16.mxu0 0
    %494 = vmatpush1.bf16.msra.mxu0 0
    %495 = vmatprep.subr.bf16.mxu0 0
    %496 = vmatpush1.bf16.msra.mxu0 0
    %497 = vmatprep.subr.bf16.mxu0 0
    %498 = vmatpush1.bf16.msra.mxu0 0
    %499 = vmatprep.subr.bf16.mxu0 0
    %500 = vmatpush1.bf16.msra.mxu0 0
    %501 = vmatprep.subr.bf16.mxu0 0
    %502 = vmatpush1.bf16.msra.mxu0 0
    %503 = vmatprep.mubr.bf16.mxu0 0
    %504 = vmatmul.mubr.bf16.gmra.mrb[0].mxu0 %v231
    %v505 = vpop.f32.mrb[0].mxu0
    %v506 = vadd.f32 %v418, %v505
    %v507 = vpop.f32.mrb[0].mxu0
    %v508 = vpop.f32.mrb[0].mxu0
    %v509 = vpop.f32.mrb[0].mxu0
    %510 = vdwg.mxu0
    %s511 = scalar_lea.vmem %s0, 4
    %v512 = vld [vmem:[%s511] sm:$0x3]
    %v515 = vunpack.c.l.s4 1966171168
    %v516 = vunpack.c.0.s8 %v515
    %v517 = vlaneseq
    %v518 = vshrl.u32 %v517, 7
    %v519 = vsub.s32 %v516, %v518
    %v520 = vrot.slane %v512, %v519
    %v521 = vcombine.high %v520, %v520
    %v523 = vunpack.c.l.s4 1966171168
    %v524 = vunpack.c.0.s8 %v523
    %v525 = vlaneseq
    %v526 = vshrl.u32 %v525, 7
    %v527 = vsub.s32 %v524, %v526
    %v528 = vrot.slane %v520, %v527
    %v530 = vunpack.c.l.s4 1966171168
    %v531 = vunpack.c.0.s8 %v530
    %v532 = vlaneseq
    %v533 = vshrl.u32 %v532, 7
    %v534 = vsub.s32 %v531, %v533
    %v535 = vrot.slane %v521, %v534
    %538 = vmatprep.subr.bf16.mxu0 0
    %539 = vmatpush1.bf16.msra.mxu0 %v157
    %540 = vmatprep.subr.bf16.mxu0 0
    %541 = vmatpush1.bf16.msra.mxu0 %v158
    %542 = vmatprep.subr.bf16.mxu0 0
    %543 = vmatpush1.bf16.msra.mxu0 %v159
    %544 = vmatprep.subr.bf16.mxu0 0
    %545 = vmatpush1.bf16.msra.mxu0 %v160
    %546 = vmatprep.subr.bf16.mxu0 0
    %547 = vmatpush1.bf16.msra.mxu0 %v161
    %548 = vmatprep.subr.bf16.mxu0 0
    %549 = vmatpush1.bf16.msra.mxu0 %v162
    %550 = vmatprep.subr.bf16.mxu0 0
    %551 = vmatpush1.bf16.msra.mxu0 %v163
    %552 = vmatprep.subr.bf16.mxu0 0
    %553 = vmatpush1.bf16.msra.mxu0 %v164
    %554 = vmatprep.subr.bf16.mxu0 0
    %555 = vmatpush1.bf16.msra.mxu0 %v165
    %556 = vmatprep.subr.bf16.mxu0 0
    %557 = vmatpush1.bf16.msra.mxu0 %v166
    %558 = vmatprep.subr.bf16.mxu0 0
    %559 = vmatpush1.bf16.msra.mxu0 %v167
    %560 = vmatprep.subr.bf16.mxu0 0
    %561 = vmatpush1.bf16.msra.mxu0 %v168
    %562 = vmatprep.subr.bf16.mxu0 0
    %563 = vmatpush1.bf16.msra.mxu0 %v169
    %564 = vmatprep.subr.bf16.mxu0 0
    %565 = vmatpush1.bf16.msra.mxu0 %v170
    %566 = vmatprep.subr.bf16.mxu0 0
    %567 = vmatpush1.bf16.msra.mxu0 %v171
    %568 = vmatprep.subr.bf16.mxu0 0
    %569 = vmatpush1.bf16.msra.mxu0 %v172
    %570 = vmatprep.mubr.bf16.mxu0 %v535
    %571 = vmatmul.mubr.bf16.gmra.mrb[0].mxu0 %v528
    %v572 = vpop.f32.mrb[0].mxu0
    %v573 = vadd.f32 %v66, %v572
    %v574 = vpop.f32.mrb[0].mxu0
    %v575 = vpop.f32.mrb[0].mxu0
    %v576 = vpop.f32.mrb[0].mxu0
    %577 = vdwg.mxu0
    %vm578 = vcmp.ge.f32.partialorder %v573, 0.0
    %v579 = vsel %vm578, 1.0, 0.0
    %v580 = vpack.c.bf16 %v579, %v579
    %s581 = scalar_lea.vmem %s3, 128
    %v582 = vld [vmem:[%s581] sm:$0xf]
    %v583 = vld [vmem:[%s581 + $0x4] sm:$0xf]
    %v584 = vld [vmem:[%s581 + $0x8] sm:$0xf]
    %v585 = vld [vmem:[%s581 + $0xc] sm:$0xf]
    %v586 = vld [vmem:[%s581 + $0x10] sm:$0xf]
    %v587 = vld [vmem:[%s581 + $0x14] sm:$0xf]
    %v588 = vld [vmem:[%s581 + $0x18] sm:$0xf]
    %v589 = vld [vmem:[%s581 + $0x1c] sm:$0xf]
    %v590 = vld [vmem:[%s581 + $0x20] sm:$0xf]
    %v591 = vld [vmem:[%s581 + $0x24] sm:$0xf]
    %v592 = vld [vmem:[%s581 + $0x28] sm:$0xf]
    %v593 = vld [vmem:[%s581 + $0x2c] sm:$0xf]
    %v594 = vld [vmem:[%s581 + $0x30] sm:$0xf]
    %v595 = vld [vmem:[%s581 + $0x34] sm:$0xf]
    %v596 = vld [vmem:[%s581 + $0x38] sm:$0xf]
    %v597 = vld [vmem:[%s581 + $0x3c] sm:$0xf]
    %v614 = vunpack.c.l.b16 %v582
    %v615 = vunpack.c.l.b16 %v583
    %v616 = vunpack.c.l.b16 %v584
    %v617 = vunpack.c.l.b16 %v585
    %v618 = vunpack.c.l.b16 %v586
    %v619 = vunpack.c.l.b16 %v587
    %v620 = vunpack.c.l.b16 %v588
    %v621 = vunpack.c.l.b16 %v589
    %v622 = vunpack.c.l.b16 %v590
    %v623 = vunpack.c.l.b16 %v591
    %v624 = vunpack.c.l.b16 %v592
    %v625 = vunpack.c.l.b16 %v593
    %v626 = vunpack.c.l.b16 %v594
    %v627 = vunpack.c.l.b16 %v595
    %v628 = vunpack.c.l.b16 %v596
    %v629 = vunpack.c.l.b16 %v597
    %v630 = vpack.c.b16 %v615, %v614
    %v631 = vpack.c.b16 %v617, %v616
    %v632 = vpack.c.b16 %v619, %v618
    %v633 = vpack.c.b16 %v621, %v620
    %v634 = vpack.c.b16 %v623, %v622
    %v635 = vpack.c.b16 %v625, %v624
    %v636 = vpack.c.b16 %v627, %v626
    %v637 = vpack.c.b16 %v629, %v628
    %646 = vmatprep.subr.bf16.mxu0 0
    %647 = vmatpush1.bf16.msra.mxu0 %v630
    %648 = vmatprep.subr.bf16.mxu0 0
    %649 = vmatpush1.bf16.msra.mxu0 %v631
    %650 = vmatprep.subr.bf16.mxu0 0
    %651 = vmatpush1.bf16.msra.mxu0 %v632
    %652 = vmatprep.subr.bf16.mxu0 0
    %653 = vmatpush1.bf16.msra.mxu0 %v633
    %654 = vmatprep.subr.bf16.mxu0 0
    %655 = vmatpush1.bf16.msra.mxu0 %v634
    %656 = vmatprep.subr.bf16.mxu0 0
    %657 = vmatpush1.bf16.msra.mxu0 %v635
    %658 = vmatprep.subr.bf16.mxu0 0
    %659 = vmatpush1.bf16.msra.mxu0 %v636
    %660 = vmatprep.subr.bf16.mxu0 0
    %661 = vmatpush1.bf16.msra.mxu0 %v637
    %662 = vmatprep.subr.bf16.mxu0 0
    %663 = vmatpush1.bf16.msra.mxu0 0
    %664 = vmatprep.subr.bf16.mxu0 0
    %665 = vmatpush1.bf16.msra.mxu0 0
    %666 = vmatprep.subr.bf16.mxu0 0
    %667 = vmatpush1.bf16.msra.mxu0 0
    %668 = vmatprep.subr.bf16.mxu0 0
    %669 = vmatpush1.bf16.msra.mxu0 0
    %670 = vmatprep.subr.bf16.mxu0 0
    %671 = vmatpush1.bf16.msra.mxu0 0
    %672 = vmatprep.subr.bf16.mxu0 0
    %673 = vmatpush1.bf16.msra.mxu0 0
    %674 = vmatprep.subr.bf16.mxu0 0
    %675 = vmatpush1.bf16.msra.mxu0 0
    %676 = vmatprep.subr.bf16.mxu0 0
    %677 = vmatpush1.bf16.msra.mxu0 0
    %678 = vmatprep.mubr.bf16.mxu0 0
    %679 = vmatmul.mubr.bf16.gmra.mrb[0].mxu0 %v580
    %v680 = vpop.f32.mrb[0].mxu0
    %v681 = vadd.f32 0.0, %v680
    %v682 = vpop.f32.mrb[0].mxu0
    %v683 = vpop.f32.mrb[0].mxu0
    %v684 = vpop.f32.mrb[0].mxu0
    %685 = vdwg.mxu0
    %v686 = vadd.f32 %v506, %v681
    %s687 = scalar_lea.vmem %s0, 6
    %v688 = vld [vmem:[%s687] sm:$0x3]
    %v691 = vunpack.c.l.s4 1966171168
    %v692 = vunpack.c.0.s8 %v691
    %v693 = vlaneseq
    %v694 = vshrl.u32 %v693, 7
    %v695 = vsub.s32 %v692, %v694
    %v696 = vrot.slane %v688, %v695
    %v697 = vcombine.high %v696, %v696
    %v699 = vunpack.c.l.s4 1966171168
    %v700 = vunpack.c.0.s8 %v699
    %v701 = vlaneseq
    %v702 = vshrl.u32 %v701, 7
    %v703 = vsub.s32 %v700, %v702
    %v704 = vrot.slane %v696, %v703
    %v706 = vunpack.c.l.s4 1966171168
    %v707 = vunpack.c.0.s8 %v706
    %v708 = vlaneseq
    %v709 = vshrl.u32 %v708, 7
    %v710 = vsub.s32 %v707, %v709
    %v711 = vrot.slane %v697, %v710
    %714 = vmatprep.subr.bf16.mxu0 0
    %715 = vmatpush1.bf16.msra.mxu0 %v157
    %716 = vmatprep.subr.bf16.mxu0 0
    %717 = vmatpush1.bf16.msra.mxu0 %v158
    %718 = vmatprep.subr.bf16.mxu0 0
    %719 = vmatpush1.bf16.msra.mxu0 %v159
    %720 = vmatprep.subr.bf16.mxu0 0
    %721 = vmatpush1.bf16.msra.mxu0 %v160
    %722 = vmatprep.subr.bf16.mxu0 0
    %723 = vmatpush1.bf16.msra.mxu0 %v161
    %724 = vmatprep.subr.bf16.mxu0 0
    %725 = vmatpush1.bf16.msra.mxu0 %v162
    %726 = vmatprep.subr.bf16.mxu0 0
    %727 = vmatpush1.bf16.msra.mxu0 %v163
    %728 = vmatprep.subr.bf16.mxu0 0
    %729 = vmatpush1.bf16.msra.mxu0 %v164
    %730 = vmatprep.subr.bf16.mxu0 0
    %731 = vmatpush1.bf16.msra.mxu0 %v165
    %732 = vmatprep.subr.bf16.mxu0 0
    %733 = vmatpush1.bf16.msra.mxu0 %v166
    %734 = vmatprep.subr.bf16.mxu0 0
    %735 = vmatpush1.bf16.msra.mxu0 %v167
    %736 = vmatprep.subr.bf16.mxu0 0
    %737 = vmatpush1.bf16.msra.mxu0 %v168
    %738 = vmatprep.subr.bf16.mxu0 0
    %739 = vmatpush1.bf16.msra.mxu0 %v169
    %740 = vmatprep.subr.bf16.mxu0 0
    %741 = vmatpush1.bf16.msra.mxu0 %v170
    %742 = vmatprep.subr.bf16.mxu0 0
    %743 = vmatpush1.bf16.msra.mxu0 %v171
    %744 = vmatprep.subr.bf16.mxu0 0
    %745 = vmatpush1.bf16.msra.mxu0 %v172
    %746 = vmatprep.mubr.bf16.mxu0 %v711
    %747 = vmatmul.mubr.bf16.gmra.mrb[0].mxu0 %v704
    %v748 = vpop.f32.mrb[0].mxu0
    %v749 = vadd.f32 %v66, %v748
    %v750 = vpop.f32.mrb[0].mxu0
    %v751 = vpop.f32.mrb[0].mxu0
    %v752 = vpop.f32.mrb[0].mxu0
    %753 = vdwg.mxu0
    %vm754 = vcmp.ge.f32.partialorder %v749, 0.0
    %v755 = vsel %vm754, 1.0, 0.0
    %v756 = vpack.c.bf16 %v755, %v755
    %s757 = scalar_lea.vmem %s3, 192
    %v758 = vld [vmem:[%s757] sm:$0xf]
    %v759 = vld [vmem:[%s757 + $0x4] sm:$0xf]
    %v760 = vld [vmem:[%s757 + $0x8] sm:$0xf]
    %v761 = vld [vmem:[%s757 + $0xc] sm:$0xf]
    %v762 = vld [vmem:[%s757 + $0x10] sm:$0xf]
    %v763 = vld [vmem:[%s757 + $0x14] sm:$0xf]
    %v764 = vld [vmem:[%s757 + $0x18] sm:$0xf]
    %v765 = vld [vmem:[%s757 + $0x1c] sm:$0xf]
    %v766 = vld [vmem:[%s757 + $0x20] sm:$0xf]
    %v767 = vld [vmem:[%s757 + $0x24] sm:$0xf]
    %v768 = vld [vmem:[%s757 + $0x28] sm:$0xf]
    %v769 = vld [vmem:[%s757 + $0x2c] sm:$0xf]
    %v770 = vld [vmem:[%s757 + $0x30] sm:$0xf]
    %v771 = vld [vmem:[%s757 + $0x34] sm:$0xf]
    %v772 = vld [vmem:[%s757 + $0x38] sm:$0xf]
    %v773 = vld [vmem:[%s757 + $0x3c] sm:$0xf]
    %v790 = vunpack.c.l.b16 %v758
    %v791 = vunpack.c.l.b16 %v759
    %v792 = vunpack.c.l.b16 %v760
    %v793 = vunpack.c.l.b16 %v761
    %v794 = vunpack.c.l.b16 %v762
    %v795 = vunpack.c.l.b16 %v763
    %v796 = vunpack.c.l.b16 %v764
    %v797 = vunpack.c.l.b16 %v765
    %v798 = vunpack.c.l.b16 %v766
    %v799 = vunpack.c.l.b16 %v767
    %v800 = vunpack.c.l.b16 %v768
    %v801 = vunpack.c.l.b16 %v769
    %v802 = vunpack.c.l.b16 %v770
    %v803 = vunpack.c.l.b16 %v771
    %v804 = vunpack.c.l.b16 %v772
    %v805 = vunpack.c.l.b16 %v773
    %v806 = vpack.c.b16 %v791, %v790
    %v807 = vpack.c.b16 %v793, %v792
    %v808 = vpack.c.b16 %v795, %v794
    %v809 = vpack.c.b16 %v797, %v796
    %v810 = vpack.c.b16 %v799, %v798
    %v811 = vpack.c.b16 %v801, %v800
    %v812 = vpack.c.b16 %v803, %v802
    %v813 = vpack.c.b16 %v805, %v804
    %822 = vmatprep.subr.bf16.mxu0 0
    %823 = vmatpush1.bf16.msra.mxu0 %v806
    %824 = vmatprep.subr.bf16.mxu0 0
    %825 = vmatpush1.bf16.msra.mxu0 %v807
    %826 = vmatprep.subr.bf16.mxu0 0
    %827 = vmatpush1.bf16.msra.mxu0 %v808
    %828 = vmatprep.subr.bf16.mxu0 0
    %829 = vmatpush1.bf16.msra.mxu0 %v809
    %830 = vmatprep.subr.bf16.mxu0 0
    %831 = vmatpush1.bf16.msra.mxu0 %v810
    %832 = vmatprep.subr.bf16.mxu0 0
    %833 = vmatpush1.bf16.msra.mxu0 %v811
    %834 = vmatprep.subr.bf16.mxu0 0
    %835 = vmatpush1.bf16.msra.mxu0 %v812
    %836 = vmatprep.subr.bf16.mxu0 0
    %837 = vmatpush1.bf16.msra.mxu0 %v813
    %838 = vmatprep.subr.bf16.mxu0 0
    %839 = vmatpush1.bf16.msra.mxu0 0
    %840 = vmatprep.subr.bf16.mxu0 0
    %841 = vmatpush1.bf16.msra.mxu0 0
    %842 = vmatprep.subr.bf16.mxu0 0
    %843 = vmatpush1.bf16.msra.mxu0 0
    %844 = vmatprep.subr.bf16.mxu0 0
    %845 = vmatpush1.bf16.msra.mxu0 0
    %846 = vmatprep.subr.bf16.mxu0 0
    %847 = vmatpush1.bf16.msra.mxu0 0
    %848 = vmatprep.subr.bf16.mxu0 0
    %849 = vmatpush1.bf16.msra.mxu0 0
    %850 = vmatprep.subr.bf16.mxu0 0
    %851 = vmatpush1.bf16.msra.mxu0 0
    %852 = vmatprep.subr.bf16.mxu0 0
    %853 = vmatpush1.bf16.msra.mxu0 0
    %854 = vmatprep.mubr.bf16.mxu0 0
    %855 = vmatmul.mubr.bf16.gmra.mrb[0].mxu0 %v756
    %v856 = vpop.f32.mrb[0].mxu0
    %v857 = vadd.f32 0.0, %v856
    %v858 = vpop.f32.mrb[0].mxu0
    %v859 = vpop.f32.mrb[0].mxu0
    %v860 = vpop.f32.mrb[0].mxu0
    %861 = vdwg.mxu0
    %v862 = vadd.f32 %v686, %v857
    %s863 = scalar_lea.vmem %s0, 8
    %v864 = vld [vmem:[%s863] sm:$0x3]
    %v867 = vunpack.c.l.s4 1966171168
    %v868 = vunpack.c.0.s8 %v867
    %v869 = vlaneseq
    %v870 = vshrl.u32 %v869, 7
    %v871 = vsub.s32 %v868, %v870
    %v872 = vrot.slane %v864, %v871
    %v873 = vcombine.high %v872, %v872
    %v875 = vunpack.c.l.s4 1966171168
    %v876 = vunpack.c.0.s8 %v875
    %v877 = vlaneseq
    %v878 = vshrl.u32 %v877, 7
    %v879 = vsub.s32 %v876, %v878
    %v880 = vrot.slane %v872, %v879
    %v882 = vunpack.c.l.s4 1966171168
    %v883 = vunpack.c.0.s8 %v882
    %v884 = vlaneseq
    %v885 = vshrl.u32 %v884, 7
    %v886 = vsub.s32 %v883, %v885
    %v887 = vrot.slane %v873, %v886
    %890 = vmatprep.subr.bf16.mxu0 0
    %891 = vmatpush1.bf16.msra.mxu0 %v157
    %892 = vmatprep.subr.bf16.mxu0 0
    %893 = vmatpush1.bf16.msra.mxu0 %v158
    %894 = vmatprep.subr.bf16.mxu0 0
    %895 = vmatpush1.bf16.msra.mxu0 %v159
    %896 = vmatprep.subr.bf16.mxu0 0
    %897 = vmatpush1.bf16.msra.mxu0 %v160
    %898 = vmatprep.subr.bf16.mxu0 0
    %899 = vmatpush1.bf16.msra.mxu0 %v161
    %900 = vmatprep.subr.bf16.mxu0 0
    %901 = vmatpush1.bf16.msra.mxu0 %v162
    %902 = vmatprep.subr.bf16.mxu0 0
    %903 = vmatpush1.bf16.msra.mxu0 %v163
    %904 = vmatprep.subr.bf16.mxu0 0
    %905 = vmatpush1.bf16.msra.mxu0 %v164
    %906 = vmatprep.subr.bf16.mxu0 0
    %907 = vmatpush1.bf16.msra.mxu0 %v165
    %908 = vmatprep.subr.bf16.mxu0 0
    %909 = vmatpush1.bf16.msra.mxu0 %v166
    %910 = vmatprep.subr.bf16.mxu0 0
    %911 = vmatpush1.bf16.msra.mxu0 %v167
    %912 = vmatprep.subr.bf16.mxu0 0
    %913 = vmatpush1.bf16.msra.mxu0 %v168
    %914 = vmatprep.subr.bf16.mxu0 0
    %915 = vmatpush1.bf16.msra.mxu0 %v169
    %916 = vmatprep.subr.bf16.mxu0 0
    %917 = vmatpush1.bf16.msra.mxu0 %v170
    %918 = vmatprep.subr.bf16.mxu0 0
    %919 = vmatpush1.bf16.msra.mxu0 %v171
    %920 = vmatprep.subr.bf16.mxu0 0
    %921 = vmatpush1.bf16.msra.mxu0 %v172
    %922 = vmatprep.mubr.bf16.mxu0 %v887
    %923 = vmatmul.mubr.bf16.gmra.mrb[0].mxu0 %v880
    %v924 = vpop.f32.mrb[0].mxu0
    %v925 = vadd.f32 %v66, %v924
    %v926 = vpop.f32.mrb[0].mxu0
    %v927 = vpop.f32.mrb[0].mxu0
    %v928 = vpop.f32.mrb[0].mxu0
    %929 = vdwg.mxu0
    %vm930 = vcmp.ge.f32.partialorder %v925, 0.0
    %v931 = vsel %vm930, 1.0, 0.0
    %v932 = vpack.c.bf16 %v931, %v931
    %s933 = scalar_lea.vmem %s3, 256
    %v934 = vld [vmem:[%s933] sm:$0xf]
    %v935 = vld [vmem:[%s933 + $0x4] sm:$0xf]
    %v936 = vld [vmem:[%s933 + $0x8] sm:$0xf]
    %v937 = vld [vmem:[%s933 + $0xc] sm:$0xf]
    %v938 = vld [vmem:[%s933 + $0x10] sm:$0xf]
    %v939 = vld [vmem:[%s933 + $0x14] sm:$0xf]
    %v940 = vld [vmem:[%s933 + $0x18] sm:$0xf]
    %v941 = vld [vmem:[%s933 + $0x1c] sm:$0xf]
    %v942 = vld [vmem:[%s933 + $0x20] sm:$0xf]
    %v943 = vld [vmem:[%s933 + $0x24] sm:$0xf]
    %v944 = vld [vmem:[%s933 + $0x28] sm:$0xf]
    %v945 = vld [vmem:[%s933 + $0x2c] sm:$0xf]
    %v946 = vld [vmem:[%s933 + $0x30] sm:$0xf]
    %v947 = vld [vmem:[%s933 + $0x34] sm:$0xf]
    %v948 = vld [vmem:[%s933 + $0x38] sm:$0xf]
    %v949 = vld [vmem:[%s933 + $0x3c] sm:$0xf]
    %v966 = vunpack.c.l.b16 %v934
    %v967 = vunpack.c.l.b16 %v935
    %v968 = vunpack.c.l.b16 %v936
    %v969 = vunpack.c.l.b16 %v937
    %v970 = vunpack.c.l.b16 %v938
    %v971 = vunpack.c.l.b16 %v939
    %v972 = vunpack.c.l.b16 %v940
    %v973 = vunpack.c.l.b16 %v941
    %v974 = vunpack.c.l.b16 %v942
    %v975 = vunpack.c.l.b16 %v943
    %v976 = vunpack.c.l.b16 %v944
    %v977 = vunpack.c.l.b16 %v945
    %v978 = vunpack.c.l.b16 %v946
    %v979 = vunpack.c.l.b16 %v947
    %v980 = vunpack.c.l.b16 %v948
    %v981 = vunpack.c.l.b16 %v949
    %v982 = vpack.c.b16 %v967, %v966
    %v983 = vpack.c.b16 %v969, %v968
    %v984 = vpack.c.b16 %v971, %v970
    %v985 = vpack.c.b16 %v973, %v972
    %v986 = vpack.c.b16 %v975, %v974
    %v987 = vpack.c.b16 %v977, %v976
    %v988 = vpack.c.b16 %v979, %v978
    %v989 = vpack.c.b16 %v981, %v980
    %998 = vmatprep.subr.bf16.mxu0 0
    %999 = vmatpush1.bf16.msra.mxu0 %v982
    %1000 = vmatprep.subr.bf16.mxu0 0
    %1001 = vmatpush1.bf16.msra.mxu0 %v983
    %1002 = vmatprep.subr.bf16.mxu0 0
    %1003 = vmatpush1.bf16.msra.mxu0 %v984
    %1004 = vmatprep.subr.bf16.mxu0 0
    %1005 = vmatpush1.bf16.msra.mxu0 %v985
    %1006 = vmatprep.subr.bf16.mxu0 0
    %1007 = vmatpush1.bf16.msra.mxu0 %v986
    %1008 = vmatprep.subr.bf16.mxu0 0
    %1009 = vmatpush1.bf16.msra.mxu0 %v987
    %1010 = vmatprep.subr.bf16.mxu0 0
    %1011 = vmatpush1.bf16.msra.mxu0 %v988
    %1012 = vmatprep.subr.bf16.mxu0 0
    %1013 = vmatpush1.bf16.msra.mxu0 %v989
    %1014 = vmatprep.subr.bf16.mxu0 0
    %1015 = vmatpush1.bf16.msra.mxu0 0
    %1016 = vmatprep.subr.bf16.mxu0 0
    %1017 = vmatpush1.bf16.msra.mxu0 0
    %1018 = vmatprep.subr.bf16.mxu0 0
    %1019 = vmatpush1.bf16.msra.mxu0 0
    %1020 = vmatprep.subr.bf16.mxu0 0
    %1021 = vmatpush1.bf16.msra.mxu0 0
    %1022 = vmatprep.subr.bf16.mxu0 0
    %1023 = vmatpush1.bf16.msra.mxu0 0
    %1024 = vmatprep.subr.bf16.mxu0 0
    %1025 = vmatpush1.bf16.msra.mxu0 0
    %1026 = vmatprep.subr.bf16.mxu0 0
    %1027 = vmatpush1.bf16.msra.mxu0 0
    %1028 = vmatprep.subr.bf16.mxu0 0
    %1029 = vmatpush1.bf16.msra.mxu0 0
    %1030 = vmatprep.mubr.bf16.mxu0 0
    %1031 = vmatmul.mubr.bf16.gmra.mrb[0].mxu0 %v932
    %v1032 = vpop.f32.mrb[0].mxu0
    %v1033 = vadd.f32 0.0, %v1032
    %v1034 = vpop.f32.mrb[0].mxu0
    %v1035 = vpop.f32.mrb[0].mxu0
    %v1036 = vpop.f32.mrb[0].mxu0
    %1037 = vdwg.mxu0
    %v1038 = vadd.f32 %v862, %v1033
    %s1039 = scalar_lea.vmem %s0, 10
    %v1040 = vld [vmem:[%s1039] sm:$0x3]
    %v1043 = vunpack.c.l.s4 1966171168
    %v1044 = vunpack.c.0.s8 %v1043
    %v1045 = vlaneseq
    %v1046 = vshrl.u32 %v1045, 7
    %v1047 = vsub.s32 %v1044, %v1046
    %v1048 = vrot.slane %v1040, %v1047
    %v1049 = vcombine.high %v1048, %v1048
    %v1051 = vunpack.c.l.s4 1966171168
    %v1052 = vunpack.c.0.s8 %v1051
    %v1053 = vlaneseq
    %v1054 = vshrl.u32 %v1053, 7
    %v1055 = vsub.s32 %v1052, %v1054
    %v1056 = vrot.slane %v1048, %v1055
    %v1058 = vunpack.c.l.s4 1966171168
    %v1059 = vunpack.c.0.s8 %v1058
    %v1060 = vlaneseq
    %v1061 = vshrl.u32 %v1060, 7
    %v1062 = vsub.s32 %v1059, %v1061
    %v1063 = vrot.slane %v1049, %v1062
    %1066 = vmatprep.subr.bf16.mxu0 0
    %1067 = vmatpush1.bf16.msra.mxu0 %v157
    %1068 = vmatprep.subr.bf16.mxu0 0
    %1069 = vmatpush1.bf16.msra.mxu0 %v158
    %1070 = vmatprep.subr.bf16.mxu0 0
    %1071 = vmatpush1.bf16.msra.mxu0 %v159
    %1072 = vmatprep.subr.bf16.mxu0 0
    %1073 = vmatpush1.bf16.msra.mxu0 %v160
    %1074 = vmatprep.subr.bf16.mxu0 0
    %1075 = vmatpush1.bf16.msra.mxu0 %v161
    %1076 = vmatprep.subr.bf16.mxu0 0
    %1077 = vmatpush1.bf16.msra.mxu0 %v162
    %1078 = vmatprep.subr.bf16.mxu0 0
    %1079 = vmatpush1.bf16.msra.mxu0 %v163
    %1080 = vmatprep.subr.bf16.mxu0 0
    %1081 = vmatpush1.bf16.msra.mxu0 %v164
    %1082 = vmatprep.subr.bf16.mxu0 0
    %1083 = vmatpush1.bf16.msra.mxu0 %v165
    %1084 = vmatprep.subr.bf16.mxu0 0
    %1085 = vmatpush1.bf16.msra.mxu0 %v166
    %1086 = vmatprep.subr.bf16.mxu0 0
    %1087 = vmatpush1.bf16.msra.mxu0 %v167
    %1088 = vmatprep.subr.bf16.mxu0 0
    %1089 = vmatpush1.bf16.msra.mxu0 %v168
    %1090 = vmatprep.subr.bf16.mxu0 0
    %1091 = vmatpush1.bf16.msra.mxu0 %v169
    %1092 = vmatprep.subr.bf16.mxu0 0
    %1093 = vmatpush1.bf16.msra.mxu0 %v170
    %1094 = vmatprep.subr.bf16.mxu0 0
    %1095 = vmatpush1.bf16.msra.mxu0 %v171
    %1096 = vmatprep.subr.bf16.mxu0 0
    %1097 = vmatpush1.bf16.msra.mxu0 %v172
    %1098 = vmatprep.mubr.bf16.mxu0 %v1063
    %1099 = vmatmul.mubr.bf16.gmra.mrb[0].mxu0 %v1056
    %v1100 = vpop.f32.mrb[0].mxu0
    %v1101 = vadd.f32 %v66, %v1100
    %v1102 = vpop.f32.mrb[0].mxu0
    %v1103 = vpop.f32.mrb[0].mxu0
    %v1104 = vpop.f32.mrb[0].mxu0
    %1105 = vdwg.mxu0
    %vm1106 = vcmp.ge.f32.partialorder %v1101, 0.0
    %v1107 = vsel %vm1106, 1.0, 0.0
    %v1108 = vpack.c.bf16 %v1107, %v1107
    %s1109 = scalar_lea.vmem %s3, 320
    %v1110 = vld [vmem:[%s1109] sm:$0xf]
    %v1111 = vld [vmem:[%s1109 + $0x4] sm:$0xf]
    %v1112 = vld [vmem:[%s1109 + $0x8] sm:$0xf]
    %v1113 = vld [vmem:[%s1109 + $0xc] sm:$0xf]
    %v1114 = vld [vmem:[%s1109 + $0x10] sm:$0xf]
    %v1115 = vld [vmem:[%s1109 + $0x14] sm:$0xf]
    %v1116 = vld [vmem:[%s1109 + $0x18] sm:$0xf]
    %v1117 = vld [vmem:[%s1109 + $0x1c] sm:$0xf]
    %v1118 = vld [vmem:[%s1109 + $0x20] sm:$0xf]
    %v1119 = vld [vmem:[%s1109 + $0x24] sm:$0xf]
    %v1120 = vld [vmem:[%s1109 + $0x28] sm:$0xf]
    %v1121 = vld [vmem:[%s1109 + $0x2c] sm:$0xf]
    %v1122 = vld [vmem:[%s1109 + $0x30] sm:$0xf]
    %v1123 = vld [vmem:[%s1109 + $0x34] sm:$0xf]
    %v1124 = vld [vmem:[%s1109 + $0x38] sm:$0xf]
    %v1125 = vld [vmem:[%s1109 + $0x3c] sm:$0xf]
    %v1142 = vunpack.c.l.b16 %v1110
    %v1143 = vunpack.c.l.b16 %v1111
    %v1144 = vunpack.c.l.b16 %v1112
    %v1145 = vunpack.c.l.b16 %v1113
    %v1146 = vunpack.c.l.b16 %v1114
    %v1147 = vunpack.c.l.b16 %v1115
    %v1148 = vunpack.c.l.b16 %v1116
    %v1149 = vunpack.c.l.b16 %v1117
    %v1150 = vunpack.c.l.b16 %v1118
    %v1151 = vunpack.c.l.b16 %v1119
    %v1152 = vunpack.c.l.b16 %v1120
    %v1153 = vunpack.c.l.b16 %v1121
    %v1154 = vunpack.c.l.b16 %v1122
    %v1155 = vunpack.c.l.b16 %v1123
    %v1156 = vunpack.c.l.b16 %v1124
    %v1157 = vunpack.c.l.b16 %v1125
    %v1158 = vpack.c.b16 %v1143, %v1142
    %v1159 = vpack.c.b16 %v1145, %v1144
    %v1160 = vpack.c.b16 %v1147, %v1146
    %v1161 = vpack.c.b16 %v1149, %v1148
    %v1162 = vpack.c.b16 %v1151, %v1150
    %v1163 = vpack.c.b16 %v1153, %v1152
    %v1164 = vpack.c.b16 %v1155, %v1154
    %v1165 = vpack.c.b16 %v1157, %v1156
    %1174 = vmatprep.subr.bf16.mxu0 0
    %1175 = vmatpush1.bf16.msra.mxu0 %v1158
    %1176 = vmatprep.subr.bf16.mxu0 0
    %1177 = vmatpush1.bf16.msra.mxu0 %v1159
    %1178 = vmatprep.subr.bf16.mxu0 0
    %1179 = vmatpush1.bf16.msra.mxu0 %v1160
    %1180 = vmatprep.subr.bf16.mxu0 0
    %1181 = vmatpush1.bf16.msra.mxu0 %v1161
    %1182 = vmatprep.subr.bf16.mxu0 0
    %1183 = vmatpush1.bf16.msra.mxu0 %v1162
    %1184 = vmatprep.subr.bf16.mxu0 0
    %1185 = vmatpush1.bf16.msra.mxu0 %v1163
    %1186 = vmatprep.subr.bf16.mxu0 0
    %1187 = vmatpush1.bf16.msra.mxu0 %v1164
    %1188 = vmatprep.subr.bf16.mxu0 0
    %1189 = vmatpush1.bf16.msra.mxu0 %v1165
    %1190 = vmatprep.subr.bf16.mxu0 0
    %1191 = vmatpush1.bf16.msra.mxu0 0
    %1192 = vmatprep.subr.bf16.mxu0 0
    %1193 = vmatpush1.bf16.msra.mxu0 0
    %1194 = vmatprep.subr.bf16.mxu0 0
    %1195 = vmatpush1.bf16.msra.mxu0 0
    %1196 = vmatprep.subr.bf16.mxu0 0
    %1197 = vmatpush1.bf16.msra.mxu0 0
    %1198 = vmatprep.subr.bf16.mxu0 0
    %1199 = vmatpush1.bf16.msra.mxu0 0
    %1200 = vmatprep.subr.bf16.mxu0 0
    %1201 = vmatpush1.bf16.msra.mxu0 0
    %1202 = vmatprep.subr.bf16.mxu0 0
    %1203 = vmatpush1.bf16.msra.mxu0 0
    %1204 = vmatprep.subr.bf16.mxu0 0
    %1205 = vmatpush1.bf16.msra.mxu0 0
    %1206 = vmatprep.mubr.bf16.mxu0 0
    %1207 = vmatmul.mubr.bf16.gmra.mrb[0].mxu0 %v1108
    %v1208 = vpop.f32.mrb[0].mxu0
    %v1209 = vadd.f32 0.0, %v1208
    %v1210 = vpop.f32.mrb[0].mxu0
    %v1211 = vpop.f32.mrb[0].mxu0
    %v1212 = vpop.f32.mrb[0].mxu0
    %1213 = vdwg.mxu0
    %v1214 = vadd.f32 %v1038, %v1209
    %s1215 = scalar_lea.vmem %s0, 12
    %v1216 = vld [vmem:[%s1215] sm:$0x3]
    %v1219 = vunpack.c.l.s4 1966171168
    %v1220 = vunpack.c.0.s8 %v1219
    %v1221 = vlaneseq
    %v1222 = vshrl.u32 %v1221, 7
    %v1223 = vsub.s32 %v1220, %v1222
    %v1224 = vrot.slane %v1216, %v1223
    %v1225 = vcombine.high %v1224, %v1224
    %v1227 = vunpack.c.l.s4 1966171168
    %v1228 = vunpack.c.0.s8 %v1227
    %v1229 = vlaneseq
    %v1230 = vshrl.u32 %v1229, 7
    %v1231 = vsub.s32 %v1228, %v1230
    %v1232 = vrot.slane %v1224, %v1231
    %v1234 = vunpack.c.l.s4 1966171168
    %v1235 = vunpack.c.0.s8 %v1234
    %v1236 = vlaneseq
    %v1237 = vshrl.u32 %v1236, 7
    %v1238 = vsub.s32 %v1235, %v1237
    %v1239 = vrot.slane %v1225, %v1238
    %1242 = vmatprep.subr.bf16.mxu0 0
    %1243 = vmatpush1.bf16.msra.mxu0 %v157
    %1244 = vmatprep.subr.bf16.mxu0 0
    %1245 = vmatpush1.bf16.msra.mxu0 %v158
    %1246 = vmatprep.subr.bf16.mxu0 0
    %1247 = vmatpush1.bf16.msra.mxu0 %v159
    %1248 = vmatprep.subr.bf16.mxu0 0
    %1249 = vmatpush1.bf16.msra.mxu0 %v160
    %1250 = vmatprep.subr.bf16.mxu0 0
    %1251 = vmatpush1.bf16.msra.mxu0 %v161
    %1252 = vmatprep.subr.bf16.mxu0 0
    %1253 = vmatpush1.bf16.msra.mxu0 %v162
    %1254 = vmatprep.subr.bf16.mxu0 0
    %1255 = vmatpush1.bf16.msra.mxu0 %v163
    %1256 = vmatprep.subr.bf16.mxu0 0
    %1257 = vmatpush1.bf16.msra.mxu0 %v164
    %1258 = vmatprep.subr.bf16.mxu0 0
    %1259 = vmatpush1.bf16.msra.mxu0 %v165
    %1260 = vmatprep.subr.bf16.mxu0 0
    %1261 = vmatpush1.bf16.msra.mxu0 %v166
    %1262 = vmatprep.subr.bf16.mxu0 0
    %1263 = vmatpush1.bf16.msra.mxu0 %v167
    %1264 = vmatprep.subr.bf16.mxu0 0
    %1265 = vmatpush1.bf16.msra.mxu0 %v168
    %1266 = vmatprep.subr.bf16.mxu0 0
    %1267 = vmatpush1.bf16.msra.mxu0 %v169
    %1268 = vmatprep.subr.bf16.mxu0 0
    %1269 = vmatpush1.bf16.msra.mxu0 %v170
    %1270 = vmatprep.subr.bf16.mxu0 0
    %1271 = vmatpush1.bf16.msra.mxu0 %v171
    %1272 = vmatprep.subr.bf16.mxu0 0
    %1273 = vmatpush1.bf16.msra.mxu0 %v172
    %1274 = vmatprep.mubr.bf16.mxu0 %v1239
    %1275 = vmatmul.mubr.bf16.gmra.mrb[0].mxu0 %v1232
    %v1276 = vpop.f32.mrb[0].mxu0
    %v1277 = vadd.f32 %v66, %v1276
    %v1278 = vpop.f32.mrb[0].mxu0
    %v1279 = vpop.f32.mrb[0].mxu0
    %v1280 = vpop.f32.mrb[0].mxu0
    %1281 = vdwg.mxu0
    %vm1282 = vcmp.ge.f32.partialorder %v1277, 0.0
    %v1283 = vsel %vm1282, 1.0, 0.0
    %v1284 = vpack.c.bf16 %v1283, %v1283
    %s1285 = scalar_lea.vmem %s3, 384
    %v1286 = vld [vmem:[%s1285] sm:$0xf]
    %v1287 = vld [vmem:[%s1285 + $0x4] sm:$0xf]
    %v1288 = vld [vmem:[%s1285 + $0x8] sm:$0xf]
    %v1289 = vld [vmem:[%s1285 + $0xc] sm:$0xf]
    %v1290 = vld [vmem:[%s1285 + $0x10] sm:$0xf]
    %v1291 = vld [vmem:[%s1285 + $0x14] sm:$0xf]
    %v1292 = vld [vmem:[%s1285 + $0x18] sm:$0xf]
    %v1293 = vld [vmem:[%s1285 + $0x1c] sm:$0xf]
    %v1294 = vld [vmem:[%s1285 + $0x20] sm:$0xf]
    %v1295 = vld [vmem:[%s1285 + $0x24] sm:$0xf]
    %v1296 = vld [vmem:[%s1285 + $0x28] sm:$0xf]
    %v1297 = vld [vmem:[%s1285 + $0x2c] sm:$0xf]
    %v1298 = vld [vmem:[%s1285 + $0x30] sm:$0xf]
    %v1299 = vld [vmem:[%s1285 + $0x34] sm:$0xf]
    %v1300 = vld [vmem:[%s1285 + $0x38] sm:$0xf]
    %v1301 = vld [vmem:[%s1285 + $0x3c] sm:$0xf]
    %v1318 = vunpack.c.l.b16 %v1286
    %v1319 = vunpack.c.l.b16 %v1287
    %v1320 = vunpack.c.l.b16 %v1288
    %v1321 = vunpack.c.l.b16 %v1289
    %v1322 = vunpack.c.l.b16 %v1290
    %v1323 = vunpack.c.l.b16 %v1291
    %v1324 = vunpack.c.l.b16 %v1292
    %v1325 = vunpack.c.l.b16 %v1293
    %v1326 = vunpack.c.l.b16 %v1294
    %v1327 = vunpack.c.l.b16 %v1295
    %v1328 = vunpack.c.l.b16 %v1296
    %v1329 = vunpack.c.l.b16 %v1297
    %v1330 = vunpack.c.l.b16 %v1298
    %v1331 = vunpack.c.l.b16 %v1299
    %v1332 = vunpack.c.l.b16 %v1300
    %v1333 = vunpack.c.l.b16 %v1301
    %v1334 = vpack.c.b16 %v1319, %v1318
    %v1335 = vpack.c.b16 %v1321, %v1320
    %v1336 = vpack.c.b16 %v1323, %v1322
    %v1337 = vpack.c.b16 %v1325, %v1324
    %v1338 = vpack.c.b16 %v1327, %v1326
    %v1339 = vpack.c.b16 %v1329, %v1328
    %v1340 = vpack.c.b16 %v1331, %v1330
    %v1341 = vpack.c.b16 %v1333, %v1332
    %1350 = vmatprep.subr.bf16.mxu0 0
    %1351 = vmatpush1.bf16.msra.mxu0 %v1334
    %1352 = vmatprep.subr.bf16.mxu0 0
    %1353 = vmatpush1.bf16.msra.mxu0 %v1335
    %1354 = vmatprep.subr.bf16.mxu0 0
    %1355 = vmatpush1.bf16.msra.mxu0 %v1336
    %1356 = vmatprep.subr.bf16.mxu0 0
    %1357 = vmatpush1.bf16.msra.mxu0 %v1337
    %1358 = vmatprep.subr.bf16.mxu0 0
    %1359 = vmatpush1.bf16.msra.mxu0 %v1338
    %1360 = vmatprep.subr.bf16.mxu0 0
    %1361 = vmatpush1.bf16.msra.mxu0 %v1339
    %1362 = vmatprep.subr.bf16.mxu0 0
    %1363 = vmatpush1.bf16.msra.mxu0 %v1340
    %1364 = vmatprep.subr.bf16.mxu0 0
    %1365 = vmatpush1.bf16.msra.mxu0 %v1341
    %1366 = vmatprep.subr.bf16.mxu0 0
    %1367 = vmatpush1.bf16.msra.mxu0 0
    %1368 = vmatprep.subr.bf16.mxu0 0
    %1369 = vmatpush1.bf16.msra.mxu0 0
    %1370 = vmatprep.subr.bf16.mxu0 0
    %1371 = vmatpush1.bf16.msra.mxu0 0
    %1372 = vmatprep.subr.bf16.mxu0 0
    %1373 = vmatpush1.bf16.msra.mxu0 0
    %1374 = vmatprep.subr.bf16.mxu0 0
    %1375 = vmatpush1.bf16.msra.mxu0 0
    %1376 = vmatprep.subr.bf16.mxu0 0
    %1377 = vmatpush1.bf16.msra.mxu0 0
    %1378 = vmatprep.subr.bf16.mxu0 0
    %1379 = vmatpush1.bf16.msra.mxu0 0
    %1380 = vmatprep.subr.bf16.mxu0 0
    %1381 = vmatpush1.bf16.msra.mxu0 0
    %1382 = vmatprep.mubr.bf16.mxu0 0
    %1383 = vmatmul.mubr.bf16.gmra.mrb[0].mxu0 %v1284
    %v1384 = vpop.f32.mrb[0].mxu0
    %v1385 = vadd.f32 0.0, %v1384
    %v1386 = vpop.f32.mrb[0].mxu0
    %v1387 = vpop.f32.mrb[0].mxu0
    %v1388 = vpop.f32.mrb[0].mxu0
    %1389 = vdwg.mxu0
    %v1390 = vadd.f32 %v1214, %v1385
    %s1391 = scalar_lea.vmem %s0, 14
    %v1392 = vld [vmem:[%s1391] sm:$0x3]
    %v1395 = vunpack.c.l.s4 1966171168
    %v1396 = vunpack.c.0.s8 %v1395
    %v1397 = vlaneseq
    %v1398 = vshrl.u32 %v1397, 7
    %v1399 = vsub.s32 %v1396, %v1398
    %v1400 = vrot.slane %v1392, %v1399
    %v1401 = vcombine.high %v1400, %v1400
    %v1403 = vunpack.c.l.s4 1966171168
    %v1404 = vunpack.c.0.s8 %v1403
    %v1405 = vlaneseq
    %v1406 = vshrl.u32 %v1405, 7
    %v1407 = vsub.s32 %v1404, %v1406
    %v1408 = vrot.slane %v1400, %v1407
    %v1410 = vunpack.c.l.s4 1966171168
    %v1411 = vunpack.c.0.s8 %v1410
    %v1412 = vlaneseq
    %v1413 = vshrl.u32 %v1412, 7
    %v1414 = vsub.s32 %v1411, %v1413
    %v1415 = vrot.slane %v1401, %v1414
    %1418 = vmatprep.subr.bf16.mxu0 0
    %1419 = vmatpush1.bf16.msra.mxu0 %v157
    %1420 = vmatprep.subr.bf16.mxu0 0
    %1421 = vmatpush1.bf16.msra.mxu0 %v158
    %1422 = vmatprep.subr.bf16.mxu0 0
    %1423 = vmatpush1.bf16.msra.mxu0 %v159
    %1424 = vmatprep.subr.bf16.mxu0 0
    %1425 = vmatpush1.bf16.msra.mxu0 %v160
    %1426 = vmatprep.subr.bf16.mxu0 0
    %1427 = vmatpush1.bf16.msra.mxu0 %v161
    %1428 = vmatprep.subr.bf16.mxu0 0
    %1429 = vmatpush1.bf16.msra.mxu0 %v162
    %1430 = vmatprep.subr.bf16.mxu0 0
    %1431 = vmatpush1.bf16.msra.mxu0 %v163
    %1432 = vmatprep.subr.bf16.mxu0 0
    %1433 = vmatpush1.bf16.msra.mxu0 %v164
    %1434 = vmatprep.subr.bf16.mxu0 0
    %1435 = vmatpush1.bf16.msra.mxu0 %v165
    %1436 = vmatprep.subr.bf16.mxu0 0
    %1437 = vmatpush1.bf16.msra.mxu0 %v166
    %1438 = vmatprep.subr.bf16.mxu0 0
    %1439 = vmatpush1.bf16.msra.mxu0 %v167
    %1440 = vmatprep.subr.bf16.mxu0 0
    %1441 = vmatpush1.bf16.msra.mxu0 %v168
    %1442 = vmatprep.subr.bf16.mxu0 0
    %1443 = vmatpush1.bf16.msra.mxu0 %v169
    %1444 = vmatprep.subr.bf16.mxu0 0
    %1445 = vmatpush1.bf16.msra.mxu0 %v170
    %1446 = vmatprep.subr.bf16.mxu0 0
    %1447 = vmatpush1.bf16.msra.mxu0 %v171
    %1448 = vmatprep.subr.bf16.mxu0 0
    %1449 = vmatpush1.bf16.msra.mxu0 %v172
    %1450 = vmatprep.mubr.bf16.mxu0 %v1415
    %1451 = vmatmul.mubr.bf16.gmra.mrb[0].mxu0 %v1408
    %v1452 = vpop.f32.mrb[0].mxu0
    %v1453 = vadd.f32 %v66, %v1452
    %v1454 = vpop.f32.mrb[0].mxu0
    %v1455 = vpop.f32.mrb[0].mxu0
    %v1456 = vpop.f32.mrb[0].mxu0
    %1457 = vdwg.mxu0
    %vm1458 = vcmp.ge.f32.partialorder %v1453, 0.0
    %v1459 = vsel %vm1458, 1.0, 0.0
    %v1460 = vpack.c.bf16 %v1459, %v1459
    %s1461 = scalar_lea.vmem %s3, 448
    %v1462 = vld [vmem:[%s1461] sm:$0xf]
    %v1463 = vld [vmem:[%s1461 + $0x4] sm:$0xf]
    %v1464 = vld [vmem:[%s1461 + $0x8] sm:$0xf]
    %v1465 = vld [vmem:[%s1461 + $0xc] sm:$0xf]
    %v1466 = vld [vmem:[%s1461 + $0x10] sm:$0xf]
    %v1467 = vld [vmem:[%s1461 + $0x14] sm:$0xf]
    %v1468 = vld [vmem:[%s1461 + $0x18] sm:$0xf]
    %v1469 = vld [vmem:[%s1461 + $0x1c] sm:$0xf]
    %v1470 = vld [vmem:[%s1461 + $0x20] sm:$0xf]
    %v1471 = vld [vmem:[%s1461 + $0x24] sm:$0xf]
    %v1472 = vld [vmem:[%s1461 + $0x28] sm:$0xf]
    %v1473 = vld [vmem:[%s1461 + $0x2c] sm:$0xf]
    %v1474 = vld [vmem:[%s1461 + $0x30] sm:$0xf]
    %v1475 = vld [vmem:[%s1461 + $0x34] sm:$0xf]
    %v1476 = vld [vmem:[%s1461 + $0x38] sm:$0xf]
    %v1477 = vld [vmem:[%s1461 + $0x3c] sm:$0xf]
    %v1494 = vunpack.c.l.b16 %v1462
    %v1495 = vunpack.c.l.b16 %v1463
    %v1496 = vunpack.c.l.b16 %v1464
    %v1497 = vunpack.c.l.b16 %v1465
    %v1498 = vunpack.c.l.b16 %v1466
    %v1499 = vunpack.c.l.b16 %v1467
    %v1500 = vunpack.c.l.b16 %v1468
    %v1501 = vunpack.c.l.b16 %v1469
    %v1502 = vunpack.c.l.b16 %v1470
    %v1503 = vunpack.c.l.b16 %v1471
    %v1504 = vunpack.c.l.b16 %v1472
    %v1505 = vunpack.c.l.b16 %v1473
    %v1506 = vunpack.c.l.b16 %v1474
    %v1507 = vunpack.c.l.b16 %v1475
    %v1508 = vunpack.c.l.b16 %v1476
    %v1509 = vunpack.c.l.b16 %v1477
    %v1510 = vpack.c.b16 %v1495, %v1494
    %v1511 = vpack.c.b16 %v1497, %v1496
    %v1512 = vpack.c.b16 %v1499, %v1498
    %v1513 = vpack.c.b16 %v1501, %v1500
    %v1514 = vpack.c.b16 %v1503, %v1502
    %v1515 = vpack.c.b16 %v1505, %v1504
    %v1516 = vpack.c.b16 %v1507, %v1506
    %v1517 = vpack.c.b16 %v1509, %v1508
    %1526 = vmatprep.subr.bf16.mxu0 0
    %1527 = vmatpush1.bf16.msra.mxu0 %v1510
    %1528 = vmatprep.subr.bf16.mxu0 0
    %1529 = vmatpush1.bf16.msra.mxu0 %v1511
    %1530 = vmatprep.subr.bf16.mxu0 0
    %1531 = vmatpush1.bf16.msra.mxu0 %v1512
    %1532 = vmatprep.subr.bf16.mxu0 0
    %1533 = vmatpush1.bf16.msra.mxu0 %v1513
    %1534 = vmatprep.subr.bf16.mxu0 0
    %1535 = vmatpush1.bf16.msra.mxu0 %v1514
    %1536 = vmatprep.subr.bf16.mxu0 0
    %1537 = vmatpush1.bf16.msra.mxu0 %v1515
    %1538 = vmatprep.subr.bf16.mxu0 0
    %1539 = vmatpush1.bf16.msra.mxu0 %v1516
    %1540 = vmatprep.subr.bf16.mxu0 0
    %1541 = vmatpush1.bf16.msra.mxu0 %v1517
    %1542 = vmatprep.subr.bf16.mxu0 0
    %1543 = vmatpush1.bf16.msra.mxu0 0
    %1544 = vmatprep.subr.bf16.mxu0 0
    %1545 = vmatpush1.bf16.msra.mxu0 0
    %1546 = vmatprep.subr.bf16.mxu0 0
    %1547 = vmatpush1.bf16.msra.mxu0 0
    %1548 = vmatprep.subr.bf16.mxu0 0
    %1549 = vmatpush1.bf16.msra.mxu0 0
    %1550 = vmatprep.subr.bf16.mxu0 0
    %1551 = vmatpush1.bf16.msra.mxu0 0
    %1552 = vmatprep.subr.bf16.mxu0 0
    %1553 = vmatpush1.bf16.msra.mxu0 0
    %1554 = vmatprep.subr.bf16.mxu0 0
    %1555 = vmatpush1.bf16.msra.mxu0 0
    %1556 = vmatprep.subr.bf16.mxu0 0
    %1557 = vmatpush1.bf16.msra.mxu0 0
    %1558 = vmatprep.mubr.bf16.mxu0 0
    %1559 = vmatmul.mubr.bf16.gmra.mrb[0].mxu0 %v1460
    %v1560 = vpop.f32.mrb[0].mxu0
    %v1561 = vadd.f32 0.0, %v1560
    %v1562 = vpop.f32.mrb[0].mxu0
    %v1563 = vpop.f32.mrb[0].mxu0
    %v1564 = vpop.f32.mrb[0].mxu0
    %1565 = vdwg.mxu0
    %v1566 = vadd.f32 %v1390, %v1561
    %s1567 = scalar_lea.vmem %s0, 16
    %v1568 = vld [vmem:[%s1567] sm:$0x3]
    %v1571 = vunpack.c.l.s4 1966171168
    %v1572 = vunpack.c.0.s8 %v1571
    %v1573 = vlaneseq
    %v1574 = vshrl.u32 %v1573, 7
    %v1575 = vsub.s32 %v1572, %v1574
    %v1576 = vrot.slane %v1568, %v1575
    %v1577 = vcombine.high %v1576, %v1576
    %v1579 = vunpack.c.l.s4 1966171168
    %v1580 = vunpack.c.0.s8 %v1579
    %v1581 = vlaneseq
    %v1582 = vshrl.u32 %v1581, 7
    %v1583 = vsub.s32 %v1580, %v1582
    %v1584 = vrot.slane %v1576, %v1583
    %v1586 = vunpack.c.l.s4 1966171168
    %v1587 = vunpack.c.0.s8 %v1586
    %v1588 = vlaneseq
    %v1589 = vshrl.u32 %v1588, 7
    %v1590 = vsub.s32 %v1587, %v1589
    %v1591 = vrot.slane %v1577, %v1590
    %1594 = vmatprep.subr.bf16.mxu0 0
    %1595 = vmatpush1.bf16.msra.mxu0 %v157
    %1596 = vmatprep.subr.bf16.mxu0 0
    %1597 = vmatpush1.bf16.msra.mxu0 %v158
    %1598 = vmatprep.subr.bf16.mxu0 0
    %1599 = vmatpush1.bf16.msra.mxu0 %v159
    %1600 = vmatprep.subr.bf16.mxu0 0
    %1601 = vmatpush1.bf16.msra.mxu0 %v160
    %1602 = vmatprep.subr.bf16.mxu0 0
    %1603 = vmatpush1.bf16.msra.mxu0 %v161
    %1604 = vmatprep.subr.bf16.mxu0 0
    %1605 = vmatpush1.bf16.msra.mxu0 %v162
    %1606 = vmatprep.subr.bf16.mxu0 0
    %1607 = vmatpush1.bf16.msra.mxu0 %v163
    %1608 = vmatprep.subr.bf16.mxu0 0
    %1609 = vmatpush1.bf16.msra.mxu0 %v164
    %1610 = vmatprep.subr.bf16.mxu0 0
    %1611 = vmatpush1.bf16.msra.mxu0 %v165
    %1612 = vmatprep.subr.bf16.mxu0 0
    %1613 = vmatpush1.bf16.msra.mxu0 %v166
    %1614 = vmatprep.subr.bf16.mxu0 0
    %1615 = vmatpush1.bf16.msra.mxu0 %v167
    %1616 = vmatprep.subr.bf16.mxu0 0
    %1617 = vmatpush1.bf16.msra.mxu0 %v168
    %1618 = vmatprep.subr.bf16.mxu0 0
    %1619 = vmatpush1.bf16.msra.mxu0 %v169
    %1620 = vmatprep.subr.bf16.mxu0 0
    %1621 = vmatpush1.bf16.msra.mxu0 %v170
    %1622 = vmatprep.subr.bf16.mxu0 0
    %1623 = vmatpush1.bf16.msra.mxu0 %v171
    %1624 = vmatprep.subr.bf16.mxu0 0
    %1625 = vmatpush1.bf16.msra.mxu0 %v172
    %1626 = vmatprep.mubr.bf16.mxu0 %v1591
    %1627 = vmatmul.mubr.bf16.gmra.mrb[0].mxu0 %v1584
    %v1628 = vpop.f32.mrb[0].mxu0
    %v1629 = vadd.f32 %v66, %v1628
    %v1630 = vpop.f32.mrb[0].mxu0
    %v1631 = vpop.f32.mrb[0].mxu0
    %v1632 = vpop.f32.mrb[0].mxu0
    %1633 = vdwg.mxu0
    %vm1634 = vcmp.ge.f32.partialorder %v1629, 0.0
    %v1635 = vsel %vm1634, 1.0, 0.0
    %v1636 = vpack.c.bf16 %v1635, %v1635
    %s1637 = scalar_lea.vmem %s3, 512
    %v1638 = vld [vmem:[%s1637] sm:$0xf]
    %v1639 = vld [vmem:[%s1637 + $0x4] sm:$0xf]
    %v1640 = vld [vmem:[%s1637 + $0x8] sm:$0xf]
    %v1641 = vld [vmem:[%s1637 + $0xc] sm:$0xf]
    %v1642 = vld [vmem:[%s1637 + $0x10] sm:$0xf]
    %v1643 = vld [vmem:[%s1637 + $0x14] sm:$0xf]
    %v1644 = vld [vmem:[%s1637 + $0x18] sm:$0xf]
    %v1645 = vld [vmem:[%s1637 + $0x1c] sm:$0xf]
    %v1646 = vld [vmem:[%s1637 + $0x20] sm:$0xf]
    %v1647 = vld [vmem:[%s1637 + $0x24] sm:$0xf]
    %v1648 = vld [vmem:[%s1637 + $0x28] sm:$0xf]
    %v1649 = vld [vmem:[%s1637 + $0x2c] sm:$0xf]
    %v1650 = vld [vmem:[%s1637 + $0x30] sm:$0xf]
    %v1651 = vld [vmem:[%s1637 + $0x34] sm:$0xf]
    %v1652 = vld [vmem:[%s1637 + $0x38] sm:$0xf]
    %v1653 = vld [vmem:[%s1637 + $0x3c] sm:$0xf]
    %v1670 = vunpack.c.l.b16 %v1638
    %v1671 = vunpack.c.l.b16 %v1639
    %v1672 = vunpack.c.l.b16 %v1640
    %v1673 = vunpack.c.l.b16 %v1641
    %v1674 = vunpack.c.l.b16 %v1642
    %v1675 = vunpack.c.l.b16 %v1643
    %v1676 = vunpack.c.l.b16 %v1644
    %v1677 = vunpack.c.l.b16 %v1645
    %v1678 = vunpack.c.l.b16 %v1646
    %v1679 = vunpack.c.l.b16 %v1647
    %v1680 = vunpack.c.l.b16 %v1648
    %v1681 = vunpack.c.l.b16 %v1649
    %v1682 = vunpack.c.l.b16 %v1650
    %v1683 = vunpack.c.l.b16 %v1651
    %v1684 = vunpack.c.l.b16 %v1652
    %v1685 = vunpack.c.l.b16 %v1653
    %v1686 = vpack.c.b16 %v1671, %v1670
    %v1687 = vpack.c.b16 %v1673, %v1672
    %v1688 = vpack.c.b16 %v1675, %v1674
    %v1689 = vpack.c.b16 %v1677, %v1676
    %v1690 = vpack.c.b16 %v1679, %v1678
    %v1691 = vpack.c.b16 %v1681, %v1680
    %v1692 = vpack.c.b16 %v1683, %v1682
    %v1693 = vpack.c.b16 %v1685, %v1684
    %1702 = vmatprep.subr.bf16.mxu0 0
    %1703 = vmatpush1.bf16.msra.mxu0 %v1686
    %1704 = vmatprep.subr.bf16.mxu0 0
    %1705 = vmatpush1.bf16.msra.mxu0 %v1687
    %1706 = vmatprep.subr.bf16.mxu0 0
    %1707 = vmatpush1.bf16.msra.mxu0 %v1688
    %1708 = vmatprep.subr.bf16.mxu0 0
    %1709 = vmatpush1.bf16.msra.mxu0 %v1689
    %1710 = vmatprep.subr.bf16.mxu0 0
    %1711 = vmatpush1.bf16.msra.mxu0 %v1690
    %1712 = vmatprep.subr.bf16.mxu0 0
    %1713 = vmatpush1.bf16.msra.mxu0 %v1691
    %1714 = vmatprep.subr.bf16.mxu0 0
    %1715 = vmatpush1.bf16.msra.mxu0 %v1692
    %1716 = vmatprep.subr.bf16.mxu0 0
    %1717 = vmatpush1.bf16.msra.mxu0 %v1693
    %1718 = vmatprep.subr.bf16.mxu0 0
    %1719 = vmatpush1.bf16.msra.mxu0 0
    %1720 = vmatprep.subr.bf16.mxu0 0
    %1721 = vmatpush1.bf16.msra.mxu0 0
    %1722 = vmatprep.subr.bf16.mxu0 0
    %1723 = vmatpush1.bf16.msra.mxu0 0
    %1724 = vmatprep.subr.bf16.mxu0 0
    %1725 = vmatpush1.bf16.msra.mxu0 0
    %1726 = vmatprep.subr.bf16.mxu0 0
    %1727 = vmatpush1.bf16.msra.mxu0 0
    %1728 = vmatprep.subr.bf16.mxu0 0
    %1729 = vmatpush1.bf16.msra.mxu0 0
    %1730 = vmatprep.subr.bf16.mxu0 0
    %1731 = vmatpush1.bf16.msra.mxu0 0
    %1732 = vmatprep.subr.bf16.mxu0 0
    %1733 = vmatpush1.bf16.msra.mxu0 0
    %1734 = vmatprep.mubr.bf16.mxu0 0
    %1735 = vmatmul.mubr.bf16.gmra.mrb[0].mxu0 %v1636
    %v1736 = vpop.f32.mrb[0].mxu0
    %v1737 = vadd.f32 0.0, %v1736
    %v1738 = vpop.f32.mrb[0].mxu0
    %v1739 = vpop.f32.mrb[0].mxu0
    %v1740 = vpop.f32.mrb[0].mxu0
    %1741 = vdwg.mxu0
    %v1742 = vadd.f32 %v1566, %v1737
    %s1743 = scalar_lea.vmem %s0, 18
    %v1744 = vld [vmem:[%s1743] sm:$0x3]
    %v1747 = vunpack.c.l.s4 1966171168
    %v1748 = vunpack.c.0.s8 %v1747
    %v1749 = vlaneseq
    %v1750 = vshrl.u32 %v1749, 7
    %v1751 = vsub.s32 %v1748, %v1750
    %v1752 = vrot.slane %v1744, %v1751
    %v1753 = vcombine.high %v1752, %v1752
    %v1755 = vunpack.c.l.s4 1966171168
    %v1756 = vunpack.c.0.s8 %v1755
    %v1757 = vlaneseq
    %v1758 = vshrl.u32 %v1757, 7
    %v1759 = vsub.s32 %v1756, %v1758
    %v1760 = vrot.slane %v1752, %v1759
    %v1762 = vunpack.c.l.s4 1966171168
    %v1763 = vunpack.c.0.s8 %v1762
    %v1764 = vlaneseq
    %v1765 = vshrl.u32 %v1764, 7
    %v1766 = vsub.s32 %v1763, %v1765
    %v1767 = vrot.slane %v1753, %v1766
    %1770 = vmatprep.subr.bf16.mxu0 0
    %1771 = vmatpush1.bf16.msra.mxu0 %v157
    %1772 = vmatprep.subr.bf16.mxu0 0
    %1773 = vmatpush1.bf16.msra.mxu0 %v158
    %1774 = vmatprep.subr.bf16.mxu0 0
    %1775 = vmatpush1.bf16.msra.mxu0 %v159
    %1776 = vmatprep.subr.bf16.mxu0 0
    %1777 = vmatpush1.bf16.msra.mxu0 %v160
    %1778 = vmatprep.subr.bf16.mxu0 0
    %1779 = vmatpush1.bf16.msra.mxu0 %v161
    %1780 = vmatprep.subr.bf16.mxu0 0
    %1781 = vmatpush1.bf16.msra.mxu0 %v162
    %1782 = vmatprep.subr.bf16.mxu0 0
    %1783 = vmatpush1.bf16.msra.mxu0 %v163
    %1784 = vmatprep.subr.bf16.mxu0 0
    %1785 = vmatpush1.bf16.msra.mxu0 %v164
    %1786 = vmatprep.subr.bf16.mxu0 0
    %1787 = vmatpush1.bf16.msra.mxu0 %v165
    %1788 = vmatprep.subr.bf16.mxu0 0
    %1789 = vmatpush1.bf16.msra.mxu0 %v166
    %1790 = vmatprep.subr.bf16.mxu0 0
    %1791 = vmatpush1.bf16.msra.mxu0 %v167
    %1792 = vmatprep.subr.bf16.mxu0 0
    %1793 = vmatpush1.bf16.msra.mxu0 %v168
    %1794 = vmatprep.subr.bf16.mxu0 0
    %1795 = vmatpush1.bf16.msra.mxu0 %v169
    %1796 = vmatprep.subr.bf16.mxu0 0
    %1797 = vmatpush1.bf16.msra.mxu0 %v170
    %1798 = vmatprep.subr.bf16.mxu0 0
    %1799 = vmatpush1.bf16.msra.mxu0 %v171
    %1800 = vmatprep.subr.bf16.mxu0 0
    %1801 = vmatpush1.bf16.msra.mxu0 %v172
    %1802 = vmatprep.mubr.bf16.mxu0 %v1767
    %1803 = vmatmul.mubr.bf16.gmra.mrb[0].mxu0 %v1760
    %v1804 = vpop.f32.mrb[0].mxu0
    %v1805 = vadd.f32 %v66, %v1804
    %v1806 = vpop.f32.mrb[0].mxu0
    %v1807 = vpop.f32.mrb[0].mxu0
    %v1808 = vpop.f32.mrb[0].mxu0
    %1809 = vdwg.mxu0
    %vm1810 = vcmp.ge.f32.partialorder %v1805, 0.0
    %v1811 = vsel %vm1810, 1.0, 0.0
    %v1812 = vpack.c.bf16 %v1811, %v1811
    %s1813 = scalar_lea.vmem %s3, 576
    %v1814 = vld [vmem:[%s1813] sm:$0xf]
    %v1815 = vld [vmem:[%s1813 + $0x4] sm:$0xf]
    %v1816 = vld [vmem:[%s1813 + $0x8] sm:$0xf]
    %v1817 = vld [vmem:[%s1813 + $0xc] sm:$0xf]
    %v1818 = vld [vmem:[%s1813 + $0x10] sm:$0xf]
    %v1819 = vld [vmem:[%s1813 + $0x14] sm:$0xf]
    %v1820 = vld [vmem:[%s1813 + $0x18] sm:$0xf]
    %v1821 = vld [vmem:[%s1813 + $0x1c] sm:$0xf]
    %v1822 = vld [vmem:[%s1813 + $0x20] sm:$0xf]
    %v1823 = vld [vmem:[%s1813 + $0x24] sm:$0xf]
    %v1824 = vld [vmem:[%s1813 + $0x28] sm:$0xf]
    %v1825 = vld [vmem:[%s1813 + $0x2c] sm:$0xf]
    %v1826 = vld [vmem:[%s1813 + $0x30] sm:$0xf]
    %v1827 = vld [vmem:[%s1813 + $0x34] sm:$0xf]
    %v1828 = vld [vmem:[%s1813 + $0x38] sm:$0xf]
    %v1829 = vld [vmem:[%s1813 + $0x3c] sm:$0xf]
    %v1846 = vunpack.c.l.b16 %v1814
    %v1847 = vunpack.c.l.b16 %v1815
    %v1848 = vunpack.c.l.b16 %v1816
    %v1849 = vunpack.c.l.b16 %v1817
    %v1850 = vunpack.c.l.b16 %v1818
    %v1851 = vunpack.c.l.b16 %v1819
    %v1852 = vunpack.c.l.b16 %v1820
    %v1853 = vunpack.c.l.b16 %v1821
    %v1854 = vunpack.c.l.b16 %v1822
    %v1855 = vunpack.c.l.b16 %v1823
    %v1856 = vunpack.c.l.b16 %v1824
    %v1857 = vunpack.c.l.b16 %v1825
    %v1858 = vunpack.c.l.b16 %v1826
    %v1859 = vunpack.c.l.b16 %v1827
    %v1860 = vunpack.c.l.b16 %v1828
    %v1861 = vunpack.c.l.b16 %v1829
    %v1862 = vpack.c.b16 %v1847, %v1846
    %v1863 = vpack.c.b16 %v1849, %v1848
    %v1864 = vpack.c.b16 %v1851, %v1850
    %v1865 = vpack.c.b16 %v1853, %v1852
    %v1866 = vpack.c.b16 %v1855, %v1854
    %v1867 = vpack.c.b16 %v1857, %v1856
    %v1868 = vpack.c.b16 %v1859, %v1858
    %v1869 = vpack.c.b16 %v1861, %v1860
    %1878 = vmatprep.subr.bf16.mxu0 0
    %1879 = vmatpush1.bf16.msra.mxu0 %v1862
    %1880 = vmatprep.subr.bf16.mxu0 0
    %1881 = vmatpush1.bf16.msra.mxu0 %v1863
    %1882 = vmatprep.subr.bf16.mxu0 0
    %1883 = vmatpush1.bf16.msra.mxu0 %v1864
    %1884 = vmatprep.subr.bf16.mxu0 0
    %1885 = vmatpush1.bf16.msra.mxu0 %v1865
    %1886 = vmatprep.subr.bf16.mxu0 0
    %1887 = vmatpush1.bf16.msra.mxu0 %v1866
    %1888 = vmatprep.subr.bf16.mxu0 0
    %1889 = vmatpush1.bf16.msra.mxu0 %v1867
    %1890 = vmatprep.subr.bf16.mxu0 0
    %1891 = vmatpush1.bf16.msra.mxu0 %v1868
    %1892 = vmatprep.subr.bf16.mxu0 0
    %1893 = vmatpush1.bf16.msra.mxu0 %v1869
    %1894 = vmatprep.subr.bf16.mxu0 0
    %1895 = vmatpush1.bf16.msra.mxu0 0
    %1896 = vmatprep.subr.bf16.mxu0 0
    %1897 = vmatpush1.bf16.msra.mxu0 0
    %1898 = vmatprep.subr.bf16.mxu0 0
    %1899 = vmatpush1.bf16.msra.mxu0 0
    %1900 = vmatprep.subr.bf16.mxu0 0
    %1901 = vmatpush1.bf16.msra.mxu0 0
    %1902 = vmatprep.subr.bf16.mxu0 0
    %1903 = vmatpush1.bf16.msra.mxu0 0
    %1904 = vmatprep.subr.bf16.mxu0 0
    %1905 = vmatpush1.bf16.msra.mxu0 0
    %1906 = vmatprep.subr.bf16.mxu0 0
    %1907 = vmatpush1.bf16.msra.mxu0 0
    %1908 = vmatprep.subr.bf16.mxu0 0
    %1909 = vmatpush1.bf16.msra.mxu0 0
    %1910 = vmatprep.mubr.bf16.mxu0 0
    %1911 = vmatmul.mubr.bf16.gmra.mrb[0].mxu0 %v1812
    %v1912 = vpop.f32.mrb[0].mxu0
    %v1913 = vadd.f32 0.0, %v1912
    %v1914 = vpop.f32.mrb[0].mxu0
    %v1915 = vpop.f32.mrb[0].mxu0
    %v1916 = vpop.f32.mrb[0].mxu0
    %1917 = vdwg.mxu0
    %v1918 = vadd.f32 %v1742, %v1913
    %s1919 = scalar_lea.vmem %s0, 20
    %v1920 = vld [vmem:[%s1919] sm:$0x3]
    %v1923 = vunpack.c.l.s4 1966171168
    %v1924 = vunpack.c.0.s8 %v1923
    %v1925 = vlaneseq
    %v1926 = vshrl.u32 %v1925, 7
    %v1927 = vsub.s32 %v1924, %v1926
    %v1928 = vrot.slane %v1920, %v1927
    %v1929 = vcombine.high %v1928, %v1928
    %v1931 = vunpack.c.l.s4 1966171168
    %v1932 = vunpack.c.0.s8 %v1931
    %v1933 = vlaneseq
    %v1934 = vshrl.u32 %v1933, 7
    %v1935 = vsub.s32 %v1932, %v1934
    %v1936 = vrot.slane %v1928, %v1935
    %v1938 = vunpack.c.l.s4 1966171168
    %v1939 = vunpack.c.0.s8 %v1938
    %v1940 = vlaneseq
    %v1941 = vshrl.u32 %v1940, 7
    %v1942 = vsub.s32 %v1939, %v1941
    %v1943 = vrot.slane %v1929, %v1942
    %1946 = vmatprep.subr.bf16.mxu0 0
    %1947 = vmatpush1.bf16.msra.mxu0 %v157
    %1948 = vmatprep.subr.bf16.mxu0 0
    %1949 = vmatpush1.bf16.msra.mxu0 %v158
    %1950 = vmatprep.subr.bf16.mxu0 0
    %1951 = vmatpush1.bf16.msra.mxu0 %v159
    %1952 = vmatprep.subr.bf16.mxu0 0
    %1953 = vmatpush1.bf16.msra.mxu0 %v160
    %1954 = vmatprep.subr.bf16.mxu0 0
    %1955 = vmatpush1.bf16.msra.mxu0 %v161
    %1956 = vmatprep.subr.bf16.mxu0 0
    %1957 = vmatpush1.bf16.msra.mxu0 %v162
    %1958 = vmatprep.subr.bf16.mxu0 0
    %1959 = vmatpush1.bf16.msra.mxu0 %v163
    %1960 = vmatprep.subr.bf16.mxu0 0
    %1961 = vmatpush1.bf16.msra.mxu0 %v164
    %1962 = vmatprep.subr.bf16.mxu0 0
    %1963 = vmatpush1.bf16.msra.mxu0 %v165
    %1964 = vmatprep.subr.bf16.mxu0 0
    %1965 = vmatpush1.bf16.msra.mxu0 %v166
    %1966 = vmatprep.subr.bf16.mxu0 0
    %1967 = vmatpush1.bf16.msra.mxu0 %v167
    %1968 = vmatprep.subr.bf16.mxu0 0
    %1969 = vmatpush1.bf16.msra.mxu0 %v168
    %1970 = vmatprep.subr.bf16.mxu0 0
    %1971 = vmatpush1.bf16.msra.mxu0 %v169
    %1972 = vmatprep.subr.bf16.mxu0 0
    %1973 = vmatpush1.bf16.msra.mxu0 %v170
    %1974 = vmatprep.subr.bf16.mxu0 0
    %1975 = vmatpush1.bf16.msra.mxu0 %v171
    %1976 = vmatprep.subr.bf16.mxu0 0
    %1977 = vmatpush1.bf16.msra.mxu0 %v172
    %1978 = vmatprep.mubr.bf16.mxu0 %v1943
    %1979 = vmatmul.mubr.bf16.gmra.mrb[0].mxu0 %v1936
    %v1980 = vpop.f32.mrb[0].mxu0
    %v1981 = vadd.f32 %v66, %v1980
    %v1982 = vpop.f32.mrb[0].mxu0
    %v1983 = vpop.f32.mrb[0].mxu0
    %v1984 = vpop.f32.mrb[0].mxu0
    %1985 = vdwg.mxu0
    %vm1986 = vcmp.ge.f32.partialorder %v1981, 0.0
    %v1987 = vsel %vm1986, 1.0, 0.0
    %v1988 = vpack.c.bf16 %v1987, %v1987
    %s1989 = scalar_lea.vmem %s3, 640
    %v1990 = vld [vmem:[%s1989] sm:$0xf]
    %v1991 = vld [vmem:[%s1989 + $0x4] sm:$0xf]
    %v1992 = vld [vmem:[%s1989 + $0x8] sm:$0xf]
    %v1993 = vld [vmem:[%s1989 + $0xc] sm:$0xf]
    %v1994 = vld [vmem:[%s1989 + $0x10] sm:$0xf]
    %v1995 = vld [vmem:[%s1989 + $0x14] sm:$0xf]
    %v1996 = vld [vmem:[%s1989 + $0x18] sm:$0xf]
    %v1997 = vld [vmem:[%s1989 + $0x1c] sm:$0xf]
    %v1998 = vld [vmem:[%s1989 + $0x20] sm:$0xf]
    %v1999 = vld [vmem:[%s1989 + $0x24] sm:$0xf]
    %v2000 = vld [vmem:[%s1989 + $0x28] sm:$0xf]
    %v2001 = vld [vmem:[%s1989 + $0x2c] sm:$0xf]
    %v2002 = vld [vmem:[%s1989 + $0x30] sm:$0xf]
    %v2003 = vld [vmem:[%s1989 + $0x34] sm:$0xf]
    %v2004 = vld [vmem:[%s1989 + $0x38] sm:$0xf]
    %v2005 = vld [vmem:[%s1989 + $0x3c] sm:$0xf]
    %v2022 = vunpack.c.l.b16 %v1990
    %v2023 = vunpack.c.l.b16 %v1991
    %v2024 = vunpack.c.l.b16 %v1992
    %v2025 = vunpack.c.l.b16 %v1993
    %v2026 = vunpack.c.l.b16 %v1994
    %v2027 = vunpack.c.l.b16 %v1995
    %v2028 = vunpack.c.l.b16 %v1996
    %v2029 = vunpack.c.l.b16 %v1997
    %v2030 = vunpack.c.l.b16 %v1998
    %v2031 = vunpack.c.l.b16 %v1999
    %v2032 = vunpack.c.l.b16 %v2000
    %v2033 = vunpack.c.l.b16 %v2001
    %v2034 = vunpack.c.l.b16 %v2002
    %v2035 = vunpack.c.l.b16 %v2003
    %v2036 = vunpack.c.l.b16 %v2004
    %v2037 = vunpack.c.l.b16 %v2005
    %v2038 = vpack.c.b16 %v2023, %v2022
    %v2039 = vpack.c.b16 %v2025, %v2024
    %v2040 = vpack.c.b16 %v2027, %v2026
    %v2041 = vpack.c.b16 %v2029, %v2028
    %v2042 = vpack.c.b16 %v2031, %v2030
    %v2043 = vpack.c.b16 %v2033, %v2032
    %v2044 = vpack.c.b16 %v2035, %v2034
    %v2045 = vpack.c.b16 %v2037, %v2036
    %2054 = vmatprep.subr.bf16.mxu0 0
    %2055 = vmatpush1.bf16.msra.mxu0 %v2038
    %2056 = vmatprep.subr.bf16.mxu0 0
    %2057 = vmatpush1.bf16.msra.mxu0 %v2039
    %2058 = vmatprep.subr.bf16.mxu0 0
    %2059 = vmatpush1.bf16.msra.mxu0 %v2040
    %2060 = vmatprep.subr.bf16.mxu0 0
    %2061 = vmatpush1.bf16.msra.mxu0 %v2041
    %2062 = vmatprep.subr.bf16.mxu0 0
    %2063 = vmatpush1.bf16.msra.mxu0 %v2042
    %2064 = vmatprep.subr.bf16.mxu0 0
    %2065 = vmatpush1.bf16.msra.mxu0 %v2043
    %2066 = vmatprep.subr.bf16.mxu0 0
    %2067 = vmatpush1.bf16.msra.mxu0 %v2044
    %2068 = vmatprep.subr.bf16.mxu0 0
    %2069 = vmatpush1.bf16.msra.mxu0 %v2045
    %2070 = vmatprep.subr.bf16.mxu0 0
    %2071 = vmatpush1.bf16.msra.mxu0 0
    %2072 = vmatprep.subr.bf16.mxu0 0
    %2073 = vmatpush1.bf16.msra.mxu0 0
    %2074 = vmatprep.subr.bf16.mxu0 0
    %2075 = vmatpush1.bf16.msra.mxu0 0
    %2076 = vmatprep.subr.bf16.mxu0 0
    %2077 = vmatpush1.bf16.msra.mxu0 0
    %2078 = vmatprep.subr.bf16.mxu0 0
    %2079 = vmatpush1.bf16.msra.mxu0 0
    %2080 = vmatprep.subr.bf16.mxu0 0
    %2081 = vmatpush1.bf16.msra.mxu0 0
    %2082 = vmatprep.subr.bf16.mxu0 0
    %2083 = vmatpush1.bf16.msra.mxu0 0
    %2084 = vmatprep.subr.bf16.mxu0 0
    %2085 = vmatpush1.bf16.msra.mxu0 0
    %2086 = vmatprep.mubr.bf16.mxu0 0
    %2087 = vmatmul.mubr.bf16.gmra.mrb[0].mxu0 %v1988
    %v2088 = vpop.f32.mrb[0].mxu0
    %v2089 = vadd.f32 0.0, %v2088
    %v2090 = vpop.f32.mrb[0].mxu0
    %v2091 = vpop.f32.mrb[0].mxu0
    %v2092 = vpop.f32.mrb[0].mxu0
    %2093 = vdwg.mxu0
    %v2094 = vadd.f32 %v1918, %v2089
    %s2095 = scalar_lea.vmem %s0, 22
    %v2096 = vld [vmem:[%s2095] sm:$0x3]
    %v2099 = vunpack.c.l.s4 1966171168
    %v2100 = vunpack.c.0.s8 %v2099
    %v2101 = vlaneseq
    %v2102 = vshrl.u32 %v2101, 7
    %v2103 = vsub.s32 %v2100, %v2102
    %v2104 = vrot.slane %v2096, %v2103
    %v2105 = vcombine.high %v2104, %v2104
    %v2107 = vunpack.c.l.s4 1966171168
    %v2108 = vunpack.c.0.s8 %v2107
    %v2109 = vlaneseq
    %v2110 = vshrl.u32 %v2109, 7
    %v2111 = vsub.s32 %v2108, %v2110
    %v2112 = vrot.slane %v2104, %v2111
    %v2114 = vunpack.c.l.s4 1966171168
    %v2115 = vunpack.c.0.s8 %v2114
    %v2116 = vlaneseq
    %v2117 = vshrl.u32 %v2116, 7
    %v2118 = vsub.s32 %v2115, %v2117
    %v2119 = vrot.slane %v2105, %v2118
    %2122 = vmatprep.subr.bf16.mxu0 0
    %2123 = vmatpush1.bf16.msra.mxu0 %v157
    %2124 = vmatprep.subr.bf16.mxu0 0
    %2125 = vmatpush1.bf16.msra.mxu0 %v158
    %2126 = vmatprep.subr.bf16.mxu0 0
    %2127 = vmatpush1.bf16.msra.mxu0 %v159
    %2128 = vmatprep.subr.bf16.mxu0 0
    %2129 = vmatpush1.bf16.msra.mxu0 %v160
    %2130 = vmatprep.subr.bf16.mxu0 0
    %2131 = vmatpush1.bf16.msra.mxu0 %v161
    %2132 = vmatprep.subr.bf16.mxu0 0
    %2133 = vmatpush1.bf16.msra.mxu0 %v162
    %2134 = vmatprep.subr.bf16.mxu0 0
    %2135 = vmatpush1.bf16.msra.mxu0 %v163
    %2136 = vmatprep.subr.bf16.mxu0 0
    %2137 = vmatpush1.bf16.msra.mxu0 %v164
    %2138 = vmatprep.subr.bf16.mxu0 0
    %2139 = vmatpush1.bf16.msra.mxu0 %v165
    %2140 = vmatprep.subr.bf16.mxu0 0
    %2141 = vmatpush1.bf16.msra.mxu0 %v166
    %2142 = vmatprep.subr.bf16.mxu0 0
    %2143 = vmatpush1.bf16.msra.mxu0 %v167
    %2144 = vmatprep.subr.bf16.mxu0 0
    %2145 = vmatpush1.bf16.msra.mxu0 %v168
    %2146 = vmatprep.subr.bf16.mxu0 0
    %2147 = vmatpush1.bf16.msra.mxu0 %v169
    %2148 = vmatprep.subr.bf16.mxu0 0
    %2149 = vmatpush1.bf16.msra.mxu0 %v170
    %2150 = vmatprep.subr.bf16.mxu0 0
    %2151 = vmatpush1.bf16.msra.mxu0 %v171
    %2152 = vmatprep.subr.bf16.mxu0 0
    %2153 = vmatpush1.bf16.msra.mxu0 %v172
    %2154 = vmatprep.mubr.bf16.mxu0 %v2119
    %2155 = vmatmul.mubr.bf16.gmra.mrb[0].mxu0 %v2112
    %v2156 = vpop.f32.mrb[0].mxu0
    %v2157 = vadd.f32 %v66, %v2156
    %v2158 = vpop.f32.mrb[0].mxu0
    %v2159 = vpop.f32.mrb[0].mxu0
    %v2160 = vpop.f32.mrb[0].mxu0
    %2161 = vdwg.mxu0
    %vm2162 = vcmp.ge.f32.partialorder %v2157, 0.0
    %v2163 = vsel %vm2162, 1.0, 0.0
    %v2164 = vpack.c.bf16 %v2163, %v2163
    %s2165 = scalar_lea.vmem %s3, 704
    %v2166 = vld [vmem:[%s2165] sm:$0xf]
    %v2167 = vld [vmem:[%s2165 + $0x4] sm:$0xf]
    %v2168 = vld [vmem:[%s2165 + $0x8] sm:$0xf]
    %v2169 = vld [vmem:[%s2165 + $0xc] sm:$0xf]
    %v2170 = vld [vmem:[%s2165 + $0x10] sm:$0xf]
    %v2171 = vld [vmem:[%s2165 + $0x14] sm:$0xf]
    %v2172 = vld [vmem:[%s2165 + $0x18] sm:$0xf]
    %v2173 = vld [vmem:[%s2165 + $0x1c] sm:$0xf]
    %v2174 = vld [vmem:[%s2165 + $0x20] sm:$0xf]
    %v2175 = vld [vmem:[%s2165 + $0x24] sm:$0xf]
    %v2176 = vld [vmem:[%s2165 + $0x28] sm:$0xf]
    %v2177 = vld [vmem:[%s2165 + $0x2c] sm:$0xf]
    %v2178 = vld [vmem:[%s2165 + $0x30] sm:$0xf]
    %v2179 = vld [vmem:[%s2165 + $0x34] sm:$0xf]
    %v2180 = vld [vmem:[%s2165 + $0x38] sm:$0xf]
    %v2181 = vld [vmem:[%s2165 + $0x3c] sm:$0xf]
    %v2198 = vunpack.c.l.b16 %v2166
    %v2199 = vunpack.c.l.b16 %v2167
    %v2200 = vunpack.c.l.b16 %v2168
    %v2201 = vunpack.c.l.b16 %v2169
    %v2202 = vunpack.c.l.b16 %v2170
    %v2203 = vunpack.c.l.b16 %v2171
    %v2204 = vunpack.c.l.b16 %v2172
    %v2205 = vunpack.c.l.b16 %v2173
    %v2206 = vunpack.c.l.b16 %v2174
    %v2207 = vunpack.c.l.b16 %v2175
    %v2208 = vunpack.c.l.b16 %v2176
    %v2209 = vunpack.c.l.b16 %v2177
    %v2210 = vunpack.c.l.b16 %v2178
    %v2211 = vunpack.c.l.b16 %v2179
    %v2212 = vunpack.c.l.b16 %v2180
    %v2213 = vunpack.c.l.b16 %v2181
    %v2214 = vpack.c.b16 %v2199, %v2198
    %v2215 = vpack.c.b16 %v2201, %v2200
    %v2216 = vpack.c.b16 %v2203, %v2202
    %v2217 = vpack.c.b16 %v2205, %v2204
    %v2218 = vpack.c.b16 %v2207, %v2206
    %v2219 = vpack.c.b16 %v2209, %v2208
    %v2220 = vpack.c.b16 %v2211, %v2210
    %v2221 = vpack.c.b16 %v2213, %v2212
    %2230 = vmatprep.subr.bf16.mxu0 0
    %2231 = vmatpush1.bf16.msra.mxu0 %v2214
    %2232 = vmatprep.subr.bf16.mxu0 0
    %2233 = vmatpush1.bf16.msra.mxu0 %v2215
    %2234 = vmatprep.subr.bf16.mxu0 0
    %2235 = vmatpush1.bf16.msra.mxu0 %v2216
    %2236 = vmatprep.subr.bf16.mxu0 0
    %2237 = vmatpush1.bf16.msra.mxu0 %v2217
    %2238 = vmatprep.subr.bf16.mxu0 0
    %2239 = vmatpush1.bf16.msra.mxu0 %v2218
    %2240 = vmatprep.subr.bf16.mxu0 0
    %2241 = vmatpush1.bf16.msra.mxu0 %v2219
    %2242 = vmatprep.subr.bf16.mxu0 0
    %2243 = vmatpush1.bf16.msra.mxu0 %v2220
    %2244 = vmatprep.subr.bf16.mxu0 0
    %2245 = vmatpush1.bf16.msra.mxu0 %v2221
    %2246 = vmatprep.subr.bf16.mxu0 0
    %2247 = vmatpush1.bf16.msra.mxu0 0
    %2248 = vmatprep.subr.bf16.mxu0 0
    %2249 = vmatpush1.bf16.msra.mxu0 0
    %2250 = vmatprep.subr.bf16.mxu0 0
    %2251 = vmatpush1.bf16.msra.mxu0 0
    %2252 = vmatprep.subr.bf16.mxu0 0
    %2253 = vmatpush1.bf16.msra.mxu0 0
    %2254 = vmatprep.subr.bf16.mxu0 0
    %2255 = vmatpush1.bf16.msra.mxu0 0
    %2256 = vmatprep.subr.bf16.mxu0 0
    %2257 = vmatpush1.bf16.msra.mxu0 0
    %2258 = vmatprep.subr.bf16.mxu0 0
    %2259 = vmatpush1.bf16.msra.mxu0 0
    %2260 = vmatprep.subr.bf16.mxu0 0
    %2261 = vmatpush1.bf16.msra.mxu0 0
    %2262 = vmatprep.mubr.bf16.mxu0 0
    %2263 = vmatmul.mubr.bf16.gmra.mrb[0].mxu0 %v2164
    %v2264 = vpop.f32.mrb[0].mxu0
    %v2265 = vadd.f32 0.0, %v2264
    %v2266 = vpop.f32.mrb[0].mxu0
    %v2267 = vpop.f32.mrb[0].mxu0
    %v2268 = vpop.f32.mrb[0].mxu0
    %2269 = vdwg.mxu0
    %v2270 = vadd.f32 %v2094, %v2265
    %s2271 = scalar_lea.vmem %s0, 24
    %v2272 = vld [vmem:[%s2271] sm:$0x3]
    %v2275 = vunpack.c.l.s4 1966171168
    %v2276 = vunpack.c.0.s8 %v2275
    %v2277 = vlaneseq
    %v2278 = vshrl.u32 %v2277, 7
    %v2279 = vsub.s32 %v2276, %v2278
    %v2280 = vrot.slane %v2272, %v2279
    %v2281 = vcombine.high %v2280, %v2280
    %v2283 = vunpack.c.l.s4 1966171168
    %v2284 = vunpack.c.0.s8 %v2283
    %v2285 = vlaneseq
    %v2286 = vshrl.u32 %v2285, 7
    %v2287 = vsub.s32 %v2284, %v2286
    %v2288 = vrot.slane %v2280, %v2287
    %v2290 = vunpack.c.l.s4 1966171168
    %v2291 = vunpack.c.0.s8 %v2290
    %v2292 = vlaneseq
    %v2293 = vshrl.u32 %v2292, 7
    %v2294 = vsub.s32 %v2291, %v2293
    %v2295 = vrot.slane %v2281, %v2294
    %2298 = vmatprep.subr.bf16.mxu0 0
    %2299 = vmatpush1.bf16.msra.mxu0 %v157
    %2300 = vmatprep.subr.bf16.mxu0 0
    %2301 = vmatpush1.bf16.msra.mxu0 %v158
    %2302 = vmatprep.subr.bf16.mxu0 0
    %2303 = vmatpush1.bf16.msra.mxu0 %v159
    %2304 = vmatprep.subr.bf16.mxu0 0
    %2305 = vmatpush1.bf16.msra.mxu0 %v160
    %2306 = vmatprep.subr.bf16.mxu0 0
    %2307 = vmatpush1.bf16.msra.mxu0 %v161
    %2308 = vmatprep.subr.bf16.mxu0 0
    %2309 = vmatpush1.bf16.msra.mxu0 %v162
    %2310 = vmatprep.subr.bf16.mxu0 0
    %2311 = vmatpush1.bf16.msra.mxu0 %v163
    %2312 = vmatprep.subr.bf16.mxu0 0
    %2313 = vmatpush1.bf16.msra.mxu0 %v164
    %2314 = vmatprep.subr.bf16.mxu0 0
    %2315 = vmatpush1.bf16.msra.mxu0 %v165
    %2316 = vmatprep.subr.bf16.mxu0 0
    %2317 = vmatpush1.bf16.msra.mxu0 %v166
    %2318 = vmatprep.subr.bf16.mxu0 0
    %2319 = vmatpush1.bf16.msra.mxu0 %v167
    %2320 = vmatprep.subr.bf16.mxu0 0
    %2321 = vmatpush1.bf16.msra.mxu0 %v168
    %2322 = vmatprep.subr.bf16.mxu0 0
    %2323 = vmatpush1.bf16.msra.mxu0 %v169
    %2324 = vmatprep.subr.bf16.mxu0 0
    %2325 = vmatpush1.bf16.msra.mxu0 %v170
    %2326 = vmatprep.subr.bf16.mxu0 0
    %2327 = vmatpush1.bf16.msra.mxu0 %v171
    %2328 = vmatprep.subr.bf16.mxu0 0
    %2329 = vmatpush1.bf16.msra.mxu0 %v172
    %2330 = vmatprep.mubr.bf16.mxu0 %v2295
    %2331 = vmatmul.mubr.bf16.gmra.mrb[0].mxu0 %v2288
    %v2332 = vpop.f32.mrb[0].mxu0
    %v2333 = vadd.f32 %v66, %v2332
    %v2334 = vpop.f32.mrb[0].mxu0
    %v2335 = vpop.f32.mrb[0].mxu0
    %v2336 = vpop.f32.mrb[0].mxu0
    %2337 = vdwg.mxu0
    %vm2338 = vcmp.ge.f32.partialorder %v2333, 0.0
    %v2339 = vsel %vm2338, 1.0, 0.0
    %v2340 = vpack.c.bf16 %v2339, %v2339
    %s2341 = scalar_lea.vmem %s3, 768
    %v2342 = vld [vmem:[%s2341] sm:$0xf]
    %v2343 = vld [vmem:[%s2341 + $0x4] sm:$0xf]
    %v2344 = vld [vmem:[%s2341 + $0x8] sm:$0xf]
    %v2345 = vld [vmem:[%s2341 + $0xc] sm:$0xf]
    %v2346 = vld [vmem:[%s2341 + $0x10] sm:$0xf]
    %v2347 = vld [vmem:[%s2341 + $0x14] sm:$0xf]
    %v2348 = vld [vmem:[%s2341 + $0x18] sm:$0xf]
    %v2349 = vld [vmem:[%s2341 + $0x1c] sm:$0xf]
    %v2350 = vld [vmem:[%s2341 + $0x20] sm:$0xf]
    %v2351 = vld [vmem:[%s2341 + $0x24] sm:$0xf]
    %v2352 = vld [vmem:[%s2341 + $0x28] sm:$0xf]
    %v2353 = vld [vmem:[%s2341 + $0x2c] sm:$0xf]
    %v2354 = vld [vmem:[%s2341 + $0x30] sm:$0xf]
    %v2355 = vld [vmem:[%s2341 + $0x34] sm:$0xf]
    %v2356 = vld [vmem:[%s2341 + $0x38] sm:$0xf]
    %v2357 = vld [vmem:[%s2341 + $0x3c] sm:$0xf]
    %v2374 = vunpack.c.l.b16 %v2342
    %v2375 = vunpack.c.l.b16 %v2343
    %v2376 = vunpack.c.l.b16 %v2344
    %v2377 = vunpack.c.l.b16 %v2345
    %v2378 = vunpack.c.l.b16 %v2346
    %v2379 = vunpack.c.l.b16 %v2347
    %v2380 = vunpack.c.l.b16 %v2348
    %v2381 = vunpack.c.l.b16 %v2349
    %v2382 = vunpack.c.l.b16 %v2350
    %v2383 = vunpack.c.l.b16 %v2351
    %v2384 = vunpack.c.l.b16 %v2352
    %v2385 = vunpack.c.l.b16 %v2353
    %v2386 = vunpack.c.l.b16 %v2354
    %v2387 = vunpack.c.l.b16 %v2355
    %v2388 = vunpack.c.l.b16 %v2356
    %v2389 = vunpack.c.l.b16 %v2357
    %v2390 = vpack.c.b16 %v2375, %v2374
    %v2391 = vpack.c.b16 %v2377, %v2376
    %v2392 = vpack.c.b16 %v2379, %v2378
    %v2393 = vpack.c.b16 %v2381, %v2380
    %v2394 = vpack.c.b16 %v2383, %v2382
    %v2395 = vpack.c.b16 %v2385, %v2384
    %v2396 = vpack.c.b16 %v2387, %v2386
    %v2397 = vpack.c.b16 %v2389, %v2388
    %2406 = vmatprep.subr.bf16.mxu0 0
    %2407 = vmatpush1.bf16.msra.mxu0 %v2390
    %2408 = vmatprep.subr.bf16.mxu0 0
    %2409 = vmatpush1.bf16.msra.mxu0 %v2391
    %2410 = vmatprep.subr.bf16.mxu0 0
    %2411 = vmatpush1.bf16.msra.mxu0 %v2392
    %2412 = vmatprep.subr.bf16.mxu0 0
    %2413 = vmatpush1.bf16.msra.mxu0 %v2393
    %2414 = vmatprep.subr.bf16.mxu0 0
    %2415 = vmatpush1.bf16.msra.mxu0 %v2394
    %2416 = vmatprep.subr.bf16.mxu0 0
    %2417 = vmatpush1.bf16.msra.mxu0 %v2395
    %2418 = vmatprep.subr.bf16.mxu0 0
    %2419 = vmatpush1.bf16.msra.mxu0 %v2396
    %2420 = vmatprep.subr.bf16.mxu0 0
    %2421 = vmatpush1.bf16.msra.mxu0 %v2397
    %2422 = vmatprep.subr.bf16.mxu0 0
    %2423 = vmatpush1.bf16.msra.mxu0 0
    %2424 = vmatprep.subr.bf16.mxu0 0
    %2425 = vmatpush1.bf16.msra.mxu0 0
    %2426 = vmatprep.subr.bf16.mxu0 0
    %2427 = vmatpush1.bf16.msra.mxu0 0
    %2428 = vmatprep.subr.bf16.mxu0 0
    %2429 = vmatpush1.bf16.msra.mxu0 0
    %2430 = vmatprep.subr.bf16.mxu0 0
    %2431 = vmatpush1.bf16.msra.mxu0 0
    %2432 = vmatprep.subr.bf16.mxu0 0
    %2433 = vmatpush1.bf16.msra.mxu0 0
    %2434 = vmatprep.subr.bf16.mxu0 0
    %2435 = vmatpush1.bf16.msra.mxu0 0
    %2436 = vmatprep.subr.bf16.mxu0 0
    %2437 = vmatpush1.bf16.msra.mxu0 0
    %2438 = vmatprep.mubr.bf16.mxu0 0
    %2439 = vmatmul.mubr.bf16.gmra.mrb[0].mxu0 %v2340
    %v2440 = vpop.f32.mrb[0].mxu0
    %v2441 = vadd.f32 0.0, %v2440
    %v2442 = vpop.f32.mrb[0].mxu0
    %v2443 = vpop.f32.mrb[0].mxu0
    %v2444 = vpop.f32.mrb[0].mxu0
    %2445 = vdwg.mxu0
    %v2446 = vadd.f32 %v2270, %v2441
    %s2447 = scalar_lea.vmem %s0, 26
    %v2448 = vld [vmem:[%s2447] sm:$0x3]
    %v2451 = vunpack.c.l.s4 1966171168
    %v2452 = vunpack.c.0.s8 %v2451
    %v2453 = vlaneseq
    %v2454 = vshrl.u32 %v2453, 7
    %v2455 = vsub.s32 %v2452, %v2454
    %v2456 = vrot.slane %v2448, %v2455
    %v2457 = vcombine.high %v2456, %v2456
    %v2459 = vunpack.c.l.s4 1966171168
    %v2460 = vunpack.c.0.s8 %v2459
    %v2461 = vlaneseq
    %v2462 = vshrl.u32 %v2461, 7
    %v2463 = vsub.s32 %v2460, %v2462
    %v2464 = vrot.slane %v2456, %v2463
    %v2466 = vunpack.c.l.s4 1966171168
    %v2467 = vunpack.c.0.s8 %v2466
    %v2468 = vlaneseq
    %v2469 = vshrl.u32 %v2468, 7
    %v2470 = vsub.s32 %v2467, %v2469
    %v2471 = vrot.slane %v2457, %v2470
    %2474 = vmatprep.subr.bf16.mxu0 0
    %2475 = vmatpush1.bf16.msra.mxu0 %v157
    %2476 = vmatprep.subr.bf16.mxu0 0
    %2477 = vmatpush1.bf16.msra.mxu0 %v158
    %2478 = vmatprep.subr.bf16.mxu0 0
    %2479 = vmatpush1.bf16.msra.mxu0 %v159
    %2480 = vmatprep.subr.bf16.mxu0 0
    %2481 = vmatpush1.bf16.msra.mxu0 %v160
    %2482 = vmatprep.subr.bf16.mxu0 0
    %2483 = vmatpush1.bf16.msra.mxu0 %v161
    %2484 = vmatprep.subr.bf16.mxu0 0
    %2485 = vmatpush1.bf16.msra.mxu0 %v162
    %2486 = vmatprep.subr.bf16.mxu0 0
    %2487 = vmatpush1.bf16.msra.mxu0 %v163
    %2488 = vmatprep.subr.bf16.mxu0 0
    %2489 = vmatpush1.bf16.msra.mxu0 %v164
    %2490 = vmatprep.subr.bf16.mxu0 0
    %2491 = vmatpush1.bf16.msra.mxu0 %v165
    %2492 = vmatprep.subr.bf16.mxu0 0
    %2493 = vmatpush1.bf16.msra.mxu0 %v166
    %2494 = vmatprep.subr.bf16.mxu0 0
    %2495 = vmatpush1.bf16.msra.mxu0 %v167
    %2496 = vmatprep.subr.bf16.mxu0 0
    %2497 = vmatpush1.bf16.msra.mxu0 %v168
    %2498 = vmatprep.subr.bf16.mxu0 0
    %2499 = vmatpush1.bf16.msra.mxu0 %v169
    %2500 = vmatprep.subr.bf16.mxu0 0
    %2501 = vmatpush1.bf16.msra.mxu0 %v170
    %2502 = vmatprep.subr.bf16.mxu0 0
    %2503 = vmatpush1.bf16.msra.mxu0 %v171
    %2504 = vmatprep.subr.bf16.mxu0 0
    %2505 = vmatpush1.bf16.msra.mxu0 %v172
    %2506 = vmatprep.mubr.bf16.mxu0 %v2471
    %2507 = vmatmul.mubr.bf16.gmra.mrb[0].mxu0 %v2464
    %v2508 = vpop.f32.mrb[0].mxu0
    %v2509 = vadd.f32 %v66, %v2508
    %v2510 = vpop.f32.mrb[0].mxu0
    %v2511 = vpop.f32.mrb[0].mxu0
    %v2512 = vpop.f32.mrb[0].mxu0
    %2513 = vdwg.mxu0
    %vm2514 = vcmp.ge.f32.partialorder %v2509, 0.0
    %v2515 = vsel %vm2514, 1.0, 0.0
    %v2516 = vpack.c.bf16 %v2515, %v2515
    %s2517 = scalar_lea.vmem %s3, 832
    %v2518 = vld [vmem:[%s2517] sm:$0xf]
    %v2519 = vld [vmem:[%s2517 + $0x4] sm:$0xf]
    %v2520 = vld [vmem:[%s2517 + $0x8] sm:$0xf]
    %v2521 = vld [vmem:[%s2517 + $0xc] sm:$0xf]
    %v2522 = vld [vmem:[%s2517 + $0x10] sm:$0xf]
    %v2523 = vld [vmem:[%s2517 + $0x14] sm:$0xf]
    %v2524 = vld [vmem:[%s2517 + $0x18] sm:$0xf]
    %v2525 = vld [vmem:[%s2517 + $0x1c] sm:$0xf]
    %v2526 = vld [vmem:[%s2517 + $0x20] sm:$0xf]
    %v2527 = vld [vmem:[%s2517 + $0x24] sm:$0xf]
    %v2528 = vld [vmem:[%s2517 + $0x28] sm:$0xf]
    %v2529 = vld [vmem:[%s2517 + $0x2c] sm:$0xf]
    %v2530 = vld [vmem:[%s2517 + $0x30] sm:$0xf]
    %v2531 = vld [vmem:[%s2517 + $0x34] sm:$0xf]
    %v2532 = vld [vmem:[%s2517 + $0x38] sm:$0xf]
    %v2533 = vld [vmem:[%s2517 + $0x3c] sm:$0xf]
    %v2550 = vunpack.c.l.b16 %v2518
    %v2551 = vunpack.c.l.b16 %v2519
    %v2552 = vunpack.c.l.b16 %v2520
    %v2553 = vunpack.c.l.b16 %v2521
    %v2554 = vunpack.c.l.b16 %v2522
    %v2555 = vunpack.c.l.b16 %v2523
    %v2556 = vunpack.c.l.b16 %v2524
    %v2557 = vunpack.c.l.b16 %v2525
    %v2558 = vunpack.c.l.b16 %v2526
    %v2559 = vunpack.c.l.b16 %v2527
    %v2560 = vunpack.c.l.b16 %v2528
    %v2561 = vunpack.c.l.b16 %v2529
    %v2562 = vunpack.c.l.b16 %v2530
    %v2563 = vunpack.c.l.b16 %v2531
    %v2564 = vunpack.c.l.b16 %v2532
    %v2565 = vunpack.c.l.b16 %v2533
    %v2566 = vpack.c.b16 %v2551, %v2550
    %v2567 = vpack.c.b16 %v2553, %v2552
    %v2568 = vpack.c.b16 %v2555, %v2554
    %v2569 = vpack.c.b16 %v2557, %v2556
    %v2570 = vpack.c.b16 %v2559, %v2558
    %v2571 = vpack.c.b16 %v2561, %v2560
    %v2572 = vpack.c.b16 %v2563, %v2562
    %v2573 = vpack.c.b16 %v2565, %v2564
    %2582 = vmatprep.subr.bf16.mxu0 0
    %2583 = vmatpush1.bf16.msra.mxu0 %v2566
    %2584 = vmatprep.subr.bf16.mxu0 0
    %2585 = vmatpush1.bf16.msra.mxu0 %v2567
    %2586 = vmatprep.subr.bf16.mxu0 0
    %2587 = vmatpush1.bf16.msra.mxu0 %v2568
    %2588 = vmatprep.subr.bf16.mxu0 0
    %2589 = vmatpush1.bf16.msra.mxu0 %v2569
    %2590 = vmatprep.subr.bf16.mxu0 0
    %2591 = vmatpush1.bf16.msra.mxu0 %v2570
    %2592 = vmatprep.subr.bf16.mxu0 0
    %2593 = vmatpush1.bf16.msra.mxu0 %v2571
    %2594 = vmatprep.subr.bf16.mxu0 0
    %2595 = vmatpush1.bf16.msra.mxu0 %v2572
    %2596 = vmatprep.subr.bf16.mxu0 0
    %2597 = vmatpush1.bf16.msra.mxu0 %v2573
    %2598 = vmatprep.subr.bf16.mxu0 0
    %2599 = vmatpush1.bf16.msra.mxu0 0
    %2600 = vmatprep.subr.bf16.mxu0 0
    %2601 = vmatpush1.bf16.msra.mxu0 0
    %2602 = vmatprep.subr.bf16.mxu0 0
    %2603 = vmatpush1.bf16.msra.mxu0 0
    %2604 = vmatprep.subr.bf16.mxu0 0
    %2605 = vmatpush1.bf16.msra.mxu0 0
    %2606 = vmatprep.subr.bf16.mxu0 0
    %2607 = vmatpush1.bf16.msra.mxu0 0
    %2608 = vmatprep.subr.bf16.mxu0 0
    %2609 = vmatpush1.bf16.msra.mxu0 0
    %2610 = vmatprep.subr.bf16.mxu0 0
    %2611 = vmatpush1.bf16.msra.mxu0 0
    %2612 = vmatprep.subr.bf16.mxu0 0
    %2613 = vmatpush1.bf16.msra.mxu0 0
    %2614 = vmatprep.mubr.bf16.mxu0 0
    %2615 = vmatmul.mubr.bf16.gmra.mrb[0].mxu0 %v2516
    %v2616 = vpop.f32.mrb[0].mxu0
    %v2617 = vadd.f32 0.0, %v2616
    %v2618 = vpop.f32.mrb[0].mxu0
    %v2619 = vpop.f32.mrb[0].mxu0
    %v2620 = vpop.f32.mrb[0].mxu0
    %2621 = vdwg.mxu0
    %v2622 = vadd.f32 %v2446, %v2617
    %s2623 = scalar_lea.vmem %s0, 28
    %v2624 = vld [vmem:[%s2623] sm:$0x3]
    %v2627 = vunpack.c.l.s4 1966171168
    %v2628 = vunpack.c.0.s8 %v2627
    %v2629 = vlaneseq
    %v2630 = vshrl.u32 %v2629, 7
    %v2631 = vsub.s32 %v2628, %v2630
    %v2632 = vrot.slane %v2624, %v2631
    %v2633 = vcombine.high %v2632, %v2632
    %v2635 = vunpack.c.l.s4 1966171168
    %v2636 = vunpack.c.0.s8 %v2635
    %v2637 = vlaneseq
    %v2638 = vshrl.u32 %v2637, 7
    %v2639 = vsub.s32 %v2636, %v2638
    %v2640 = vrot.slane %v2632, %v2639
    %v2642 = vunpack.c.l.s4 1966171168
    %v2643 = vunpack.c.0.s8 %v2642
    %v2644 = vlaneseq
    %v2645 = vshrl.u32 %v2644, 7
    %v2646 = vsub.s32 %v2643, %v2645
    %v2647 = vrot.slane %v2633, %v2646
    %2650 = vmatprep.subr.bf16.mxu0 0
    %2651 = vmatpush1.bf16.msra.mxu0 %v157
    %2652 = vmatprep.subr.bf16.mxu0 0
    %2653 = vmatpush1.bf16.msra.mxu0 %v158
    %2654 = vmatprep.subr.bf16.mxu0 0
    %2655 = vmatpush1.bf16.msra.mxu0 %v159
    %2656 = vmatprep.subr.bf16.mxu0 0
    %2657 = vmatpush1.bf16.msra.mxu0 %v160
    %2658 = vmatprep.subr.bf16.mxu0 0
    %2659 = vmatpush1.bf16.msra.mxu0 %v161
    %2660 = vmatprep.subr.bf16.mxu0 0
    %2661 = vmatpush1.bf16.msra.mxu0 %v162
    %2662 = vmatprep.subr.bf16.mxu0 0
    %2663 = vmatpush1.bf16.msra.mxu0 %v163
    %2664 = vmatprep.subr.bf16.mxu0 0
    %2665 = vmatpush1.bf16.msra.mxu0 %v164
    %2666 = vmatprep.subr.bf16.mxu0 0
    %2667 = vmatpush1.bf16.msra.mxu0 %v165
    %2668 = vmatprep.subr.bf16.mxu0 0
    %2669 = vmatpush1.bf16.msra.mxu0 %v166
    %2670 = vmatprep.subr.bf16.mxu0 0
    %2671 = vmatpush1.bf16.msra.mxu0 %v167
    %2672 = vmatprep.subr.bf16.mxu0 0
    %2673 = vmatpush1.bf16.msra.mxu0 %v168
    %2674 = vmatprep.subr.bf16.mxu0 0
    %2675 = vmatpush1.bf16.msra.mxu0 %v169
    %2676 = vmatprep.subr.bf16.mxu0 0
    %2677 = vmatpush1.bf16.msra.mxu0 %v170
    %2678 = vmatprep.subr.bf16.mxu0 0
    %2679 = vmatpush1.bf16.msra.mxu0 %v171
    %2680 = vmatprep.subr.bf16.mxu0 0
    %2681 = vmatpush1.bf16.msra.mxu0 %v172
    %2682 = vmatprep.mubr.bf16.mxu0 %v2647
    %2683 = vmatmul.mubr.bf16.gmra.mrb[0].mxu0 %v2640
    %v2684 = vpop.f32.mrb[0].mxu0
    %v2685 = vadd.f32 %v66, %v2684
    %v2686 = vpop.f32.mrb[0].mxu0
    %v2687 = vpop.f32.mrb[0].mxu0
    %v2688 = vpop.f32.mrb[0].mxu0
    %2689 = vdwg.mxu0
    %vm2690 = vcmp.ge.f32.partialorder %v2685, 0.0
    %v2691 = vsel %vm2690, 1.0, 0.0
    %v2692 = vpack.c.bf16 %v2691, %v2691
    %s2693 = scalar_lea.vmem %s3, 896
    %v2694 = vld [vmem:[%s2693] sm:$0xf]
    %v2695 = vld [vmem:[%s2693 + $0x4] sm:$0xf]
    %v2696 = vld [vmem:[%s2693 + $0x8] sm:$0xf]
    %v2697 = vld [vmem:[%s2693 + $0xc] sm:$0xf]
    %v2698 = vld [vmem:[%s2693 + $0x10] sm:$0xf]
    %v2699 = vld [vmem:[%s2693 + $0x14] sm:$0xf]
    %v2700 = vld [vmem:[%s2693 + $0x18] sm:$0xf]
    %v2701 = vld [vmem:[%s2693 + $0x1c] sm:$0xf]
    %v2702 = vld [vmem:[%s2693 + $0x20] sm:$0xf]
    %v2703 = vld [vmem:[%s2693 + $0x24] sm:$0xf]
    %v2704 = vld [vmem:[%s2693 + $0x28] sm:$0xf]
    %v2705 = vld [vmem:[%s2693 + $0x2c] sm:$0xf]
    %v2706 = vld [vmem:[%s2693 + $0x30] sm:$0xf]
    %v2707 = vld [vmem:[%s2693 + $0x34] sm:$0xf]
    %v2708 = vld [vmem:[%s2693 + $0x38] sm:$0xf]
    %v2709 = vld [vmem:[%s2693 + $0x3c] sm:$0xf]
    %v2726 = vunpack.c.l.b16 %v2694
    %v2727 = vunpack.c.l.b16 %v2695
    %v2728 = vunpack.c.l.b16 %v2696
    %v2729 = vunpack.c.l.b16 %v2697
    %v2730 = vunpack.c.l.b16 %v2698
    %v2731 = vunpack.c.l.b16 %v2699
    %v2732 = vunpack.c.l.b16 %v2700
    %v2733 = vunpack.c.l.b16 %v2701
    %v2734 = vunpack.c.l.b16 %v2702
    %v2735 = vunpack.c.l.b16 %v2703
    %v2736 = vunpack.c.l.b16 %v2704
    %v2737 = vunpack.c.l.b16 %v2705
    %v2738 = vunpack.c.l.b16 %v2706
    %v2739 = vunpack.c.l.b16 %v2707
    %v2740 = vunpack.c.l.b16 %v2708
    %v2741 = vunpack.c.l.b16 %v2709
    %v2742 = vpack.c.b16 %v2727, %v2726
    %v2743 = vpack.c.b16 %v2729, %v2728
    %v2744 = vpack.c.b16 %v2731, %v2730
    %v2745 = vpack.c.b16 %v2733, %v2732
    %v2746 = vpack.c.b16 %v2735, %v2734
    %v2747 = vpack.c.b16 %v2737, %v2736
    %v2748 = vpack.c.b16 %v2739, %v2738
    %v2749 = vpack.c.b16 %v2741, %v2740
    %2758 = vmatprep.subr.bf16.mxu0 0
    %2759 = vmatpush1.bf16.msra.mxu0 %v2742
    %2760 = vmatprep.subr.bf16.mxu0 0
    %2761 = vmatpush1.bf16.msra.mxu0 %v2743
    %2762 = vmatprep.subr.bf16.mxu0 0
    %2763 = vmatpush1.bf16.msra.mxu0 %v2744
    %2764 = vmatprep.subr.bf16.mxu0 0
    %2765 = vmatpush1.bf16.msra.mxu0 %v2745
    %2766 = vmatprep.subr.bf16.mxu0 0
    %2767 = vmatpush1.bf16.msra.mxu0 %v2746
    %2768 = vmatprep.subr.bf16.mxu0 0
    %2769 = vmatpush1.bf16.msra.mxu0 %v2747
    %2770 = vmatprep.subr.bf16.mxu0 0
    %2771 = vmatpush1.bf16.msra.mxu0 %v2748
    %2772 = vmatprep.subr.bf16.mxu0 0
    %2773 = vmatpush1.bf16.msra.mxu0 %v2749
    %2774 = vmatprep.subr.bf16.mxu0 0
    %2775 = vmatpush1.bf16.msra.mxu0 0
    %2776 = vmatprep.subr.bf16.mxu0 0
    %2777 = vmatpush1.bf16.msra.mxu0 0
    %2778 = vmatprep.subr.bf16.mxu0 0
    %2779 = vmatpush1.bf16.msra.mxu0 0
    %2780 = vmatprep.subr.bf16.mxu0 0
    %2781 = vmatpush1.bf16.msra.mxu0 0
    %2782 = vmatprep.subr.bf16.mxu0 0
    %2783 = vmatpush1.bf16.msra.mxu0 0
    %2784 = vmatprep.subr.bf16.mxu0 0
    %2785 = vmatpush1.bf16.msra.mxu0 0
    %2786 = vmatprep.subr.bf16.mxu0 0
    %2787 = vmatpush1.bf16.msra.mxu0 0
    %2788 = vmatprep.subr.bf16.mxu0 0
    %2789 = vmatpush1.bf16.msra.mxu0 0
    %2790 = vmatprep.mubr.bf16.mxu0 0
    %2791 = vmatmul.mubr.bf16.gmra.mrb[0].mxu0 %v2692
    %v2792 = vpop.f32.mrb[0].mxu0
    %v2793 = vadd.f32 0.0, %v2792
    %v2794 = vpop.f32.mrb[0].mxu0
    %v2795 = vpop.f32.mrb[0].mxu0
    %v2796 = vpop.f32.mrb[0].mxu0
    %2797 = vdwg.mxu0
    %v2798 = vadd.f32 %v2622, %v2793
    %s2799 = scalar_lea.vmem %s0, 30
    %v2800 = vld [vmem:[%s2799] sm:$0x3]
    %v2803 = vunpack.c.l.s4 1966171168
    %v2804 = vunpack.c.0.s8 %v2803
    %v2805 = vlaneseq
    %v2806 = vshrl.u32 %v2805, 7
    %v2807 = vsub.s32 %v2804, %v2806
    %v2808 = vrot.slane %v2800, %v2807
    %v2809 = vcombine.high %v2808, %v2808
    %v2811 = vunpack.c.l.s4 1966171168
    %v2812 = vunpack.c.0.s8 %v2811
    %v2813 = vlaneseq
    %v2814 = vshrl.u32 %v2813, 7
    %v2815 = vsub.s32 %v2812, %v2814
    %v2816 = vrot.slane %v2808, %v2815
    %v2818 = vunpack.c.l.s4 1966171168
    %v2819 = vunpack.c.0.s8 %v2818
    %v2820 = vlaneseq
    %v2821 = vshrl.u32 %v2820, 7
    %v2822 = vsub.s32 %v2819, %v2821
    %v2823 = vrot.slane %v2809, %v2822
    %2826 = vmatprep.subr.bf16.mxu0 0
    %2827 = vmatpush1.bf16.msra.mxu0 %v157
    %2828 = vmatprep.subr.bf16.mxu0 0
    %2829 = vmatpush1.bf16.msra.mxu0 %v158
    %2830 = vmatprep.subr.bf16.mxu0 0
    %2831 = vmatpush1.bf16.msra.mxu0 %v159
    %2832 = vmatprep.subr.bf16.mxu0 0
    %2833 = vmatpush1.bf16.msra.mxu0 %v160
    %2834 = vmatprep.subr.bf16.mxu0 0
    %2835 = vmatpush1.bf16.msra.mxu0 %v161
    %2836 = vmatprep.subr.bf16.mxu0 0
    %2837 = vmatpush1.bf16.msra.mxu0 %v162
    %2838 = vmatprep.subr.bf16.mxu0 0
    %2839 = vmatpush1.bf16.msra.mxu0 %v163
    %2840 = vmatprep.subr.bf16.mxu0 0
    %2841 = vmatpush1.bf16.msra.mxu0 %v164
    %2842 = vmatprep.subr.bf16.mxu0 0
    %2843 = vmatpush1.bf16.msra.mxu0 %v165
    %2844 = vmatprep.subr.bf16.mxu0 0
    %2845 = vmatpush1.bf16.msra.mxu0 %v166
    %2846 = vmatprep.subr.bf16.mxu0 0
    %2847 = vmatpush1.bf16.msra.mxu0 %v167
    %2848 = vmatprep.subr.bf16.mxu0 0
    %2849 = vmatpush1.bf16.msra.mxu0 %v168
    %2850 = vmatprep.subr.bf16.mxu0 0
    %2851 = vmatpush1.bf16.msra.mxu0 %v169
    %2852 = vmatprep.subr.bf16.mxu0 0
    %2853 = vmatpush1.bf16.msra.mxu0 %v170
    %2854 = vmatprep.subr.bf16.mxu0 0
    %2855 = vmatpush1.bf16.msra.mxu0 %v171
    %2856 = vmatprep.subr.bf16.mxu0 0
    %2857 = vmatpush1.bf16.msra.mxu0 %v172
    %2858 = vmatprep.mubr.bf16.mxu0 %v2823
    %2859 = vmatmul.mubr.bf16.gmra.mrb[0].mxu0 %v2816
    %v2860 = vpop.f32.mrb[0].mxu0
    %v2861 = vadd.f32 %v66, %v2860
    %v2862 = vpop.f32.mrb[0].mxu0
    %v2863 = vpop.f32.mrb[0].mxu0
    %v2864 = vpop.f32.mrb[0].mxu0
    %2865 = vdwg.mxu0
    %vm2866 = vcmp.ge.f32.partialorder %v2861, 0.0
    %v2867 = vsel %vm2866, 1.0, 0.0
    %v2868 = vpack.c.bf16 %v2867, %v2867
    %s2869 = scalar_lea.vmem %s3, 960
    %v2870 = vld [vmem:[%s2869] sm:$0xf]
    %v2871 = vld [vmem:[%s2869 + $0x4] sm:$0xf]
    %v2872 = vld [vmem:[%s2869 + $0x8] sm:$0xf]
    %v2873 = vld [vmem:[%s2869 + $0xc] sm:$0xf]
    %v2874 = vld [vmem:[%s2869 + $0x10] sm:$0xf]
    %v2875 = vld [vmem:[%s2869 + $0x14] sm:$0xf]
    %v2876 = vld [vmem:[%s2869 + $0x18] sm:$0xf]
    %v2877 = vld [vmem:[%s2869 + $0x1c] sm:$0xf]
    %v2878 = vld [vmem:[%s2869 + $0x20] sm:$0xf]
    %v2879 = vld [vmem:[%s2869 + $0x24] sm:$0xf]
    %v2880 = vld [vmem:[%s2869 + $0x28] sm:$0xf]
    %v2881 = vld [vmem:[%s2869 + $0x2c] sm:$0xf]
    %v2882 = vld [vmem:[%s2869 + $0x30] sm:$0xf]
    %v2883 = vld [vmem:[%s2869 + $0x34] sm:$0xf]
    %v2884 = vld [vmem:[%s2869 + $0x38] sm:$0xf]
    %v2885 = vld [vmem:[%s2869 + $0x3c] sm:$0xf]
    %v2902 = vunpack.c.l.b16 %v2870
    %v2903 = vunpack.c.l.b16 %v2871
    %v2904 = vunpack.c.l.b16 %v2872
    %v2905 = vunpack.c.l.b16 %v2873
    %v2906 = vunpack.c.l.b16 %v2874
    %v2907 = vunpack.c.l.b16 %v2875
    %v2908 = vunpack.c.l.b16 %v2876
    %v2909 = vunpack.c.l.b16 %v2877
    %v2910 = vunpack.c.l.b16 %v2878
    %v2911 = vunpack.c.l.b16 %v2879
    %v2912 = vunpack.c.l.b16 %v2880
    %v2913 = vunpack.c.l.b16 %v2881
    %v2914 = vunpack.c.l.b16 %v2882
    %v2915 = vunpack.c.l.b16 %v2883
    %v2916 = vunpack.c.l.b16 %v2884
    %v2917 = vunpack.c.l.b16 %v2885
    %v2918 = vpack.c.b16 %v2903, %v2902
    %v2919 = vpack.c.b16 %v2905, %v2904
    %v2920 = vpack.c.b16 %v2907, %v2906
    %v2921 = vpack.c.b16 %v2909, %v2908
    %v2922 = vpack.c.b16 %v2911, %v2910
    %v2923 = vpack.c.b16 %v2913, %v2912
    %v2924 = vpack.c.b16 %v2915, %v2914
    %v2925 = vpack.c.b16 %v2917, %v2916
    %2934 = vmatprep.subr.bf16.mxu0 0
    %2935 = vmatpush1.bf16.msra.mxu0 %v2918
    %2936 = vmatprep.subr.bf16.mxu0 0
    %2937 = vmatpush1.bf16.msra.mxu0 %v2919
    %2938 = vmatprep.subr.bf16.mxu0 0
    %2939 = vmatpush1.bf16.msra.mxu0 %v2920
    %2940 = vmatprep.subr.bf16.mxu0 0
    %2941 = vmatpush1.bf16.msra.mxu0 %v2921
    %2942 = vmatprep.subr.bf16.mxu0 0
    %2943 = vmatpush1.bf16.msra.mxu0 %v2922
    %2944 = vmatprep.subr.bf16.mxu0 0
    %2945 = vmatpush1.bf16.msra.mxu0 %v2923
    %2946 = vmatprep.subr.bf16.mxu0 0
    %2947 = vmatpush1.bf16.msra.mxu0 %v2924
    %2948 = vmatprep.subr.bf16.mxu0 0
    %2949 = vmatpush1.bf16.msra.mxu0 %v2925
    %2950 = vmatprep.subr.bf16.mxu0 0
    %2951 = vmatpush1.bf16.msra.mxu0 0
    %2952 = vmatprep.subr.bf16.mxu0 0
    %2953 = vmatpush1.bf16.msra.mxu0 0
    %2954 = vmatprep.subr.bf16.mxu0 0
    %2955 = vmatpush1.bf16.msra.mxu0 0
    %2956 = vmatprep.subr.bf16.mxu0 0
    %2957 = vmatpush1.bf16.msra.mxu0 0
    %2958 = vmatprep.subr.bf16.mxu0 0
    %2959 = vmatpush1.bf16.msra.mxu0 0
    %2960 = vmatprep.subr.bf16.mxu0 0
    %2961 = vmatpush1.bf16.msra.mxu0 0
    %2962 = vmatprep.subr.bf16.mxu0 0
    %2963 = vmatpush1.bf16.msra.mxu0 0
    %2964 = vmatprep.subr.bf16.mxu0 0
    %2965 = vmatpush1.bf16.msra.mxu0 0
    %2966 = vmatprep.mubr.bf16.mxu0 0
    %2967 = vmatmul.mubr.bf16.gmra.mrb[0].mxu0 %v2868
    %v2968 = vpop.f32.mrb[0].mxu0
    %v2969 = vadd.f32 0.0, %v2968
    %v2970 = vpop.f32.mrb[0].mxu0
    %v2971 = vpop.f32.mrb[0].mxu0
    %v2972 = vpop.f32.mrb[0].mxu0
    %2973 = vdwg.mxu0
    %v2974 = vadd.f32 %v2798, %v2969
    %s2975 = scalar_lea.vmem %s0, 32
    %v2976 = vld [vmem:[%s2975] sm:$0x3]
    %v2979 = vunpack.c.l.s4 1966171168
    %v2980 = vunpack.c.0.s8 %v2979
    %v2981 = vlaneseq
    %v2982 = vshrl.u32 %v2981, 7
    %v2983 = vsub.s32 %v2980, %v2982
    %v2984 = vrot.slane %v2976, %v2983
    %v2985 = vcombine.high %v2984, %v2984
    %v2987 = vunpack.c.l.s4 1966171168
    %v2988 = vunpack.c.0.s8 %v2987
    %v2989 = vlaneseq
    %v2990 = vshrl.u32 %v2989, 7
    %v2991 = vsub.s32 %v2988, %v2990
    %v2992 = vrot.slane %v2984, %v2991
    %v2994 = vunpack.c.l.s4 1966171168
    %v2995 = vunpack.c.0.s8 %v2994
    %v2996 = vlaneseq
    %v2997 = vshrl.u32 %v2996, 7
    %v2998 = vsub.s32 %v2995, %v2997
    %v2999 = vrot.slane %v2985, %v2998
    %3002 = vmatprep.subr.bf16.mxu0 0
    %3003 = vmatpush1.bf16.msra.mxu0 %v157
    %3004 = vmatprep.subr.bf16.mxu0 0
    %3005 = vmatpush1.bf16.msra.mxu0 %v158
    %3006 = vmatprep.subr.bf16.mxu0 0
    %3007 = vmatpush1.bf16.msra.mxu0 %v159
    %3008 = vmatprep.subr.bf16.mxu0 0
    %3009 = vmatpush1.bf16.msra.mxu0 %v160
    %3010 = vmatprep.subr.bf16.mxu0 0
    %3011 = vmatpush1.bf16.msra.mxu0 %v161
    %3012 = vmatprep.subr.bf16.mxu0 0
    %3013 = vmatpush1.bf16.msra.mxu0 %v162
    %3014 = vmatprep.subr.bf16.mxu0 0
    %3015 = vmatpush1.bf16.msra.mxu0 %v163
    %3016 = vmatprep.subr.bf16.mxu0 0
    %3017 = vmatpush1.bf16.msra.mxu0 %v164
    %3018 = vmatprep.subr.bf16.mxu0 0
    %3019 = vmatpush1.bf16.msra.mxu0 %v165
    %3020 = vmatprep.subr.bf16.mxu0 0
    %3021 = vmatpush1.bf16.msra.mxu0 %v166
    %3022 = vmatprep.subr.bf16.mxu0 0
    %3023 = vmatpush1.bf16.msra.mxu0 %v167
    %3024 = vmatprep.subr.bf16.mxu0 0
    %3025 = vmatpush1.bf16.msra.mxu0 %v168
    %3026 = vmatprep.subr.bf16.mxu0 0
    %3027 = vmatpush1.bf16.msra.mxu0 %v169
    %3028 = vmatprep.subr.bf16.mxu0 0
    %3029 = vmatpush1.bf16.msra.mxu0 %v170
    %3030 = vmatprep.subr.bf16.mxu0 0
    %3031 = vmatpush1.bf16.msra.mxu0 %v171
    %3032 = vmatprep.subr.bf16.mxu0 0
    %3033 = vmatpush1.bf16.msra.mxu0 %v172
    %3034 = vmatprep.mubr.bf16.mxu0 %v2999
    %3035 = vmatmul.mubr.bf16.gmra.mrb[0].mxu0 %v2992
    %v3036 = vpop.f32.mrb[0].mxu0
    %v3037 = vadd.f32 %v66, %v3036
    %v3038 = vpop.f32.mrb[0].mxu0
    %v3039 = vpop.f32.mrb[0].mxu0
    %v3040 = vpop.f32.mrb[0].mxu0
    %3041 = vdwg.mxu0
    %vm3042 = vcmp.ge.f32.partialorder %v3037, 0.0
    %v3043 = vsel %vm3042, 1.0, 0.0
    %v3044 = vpack.c.bf16 %v3043, %v3043
    %s3045 = scalar_lea.vmem %s3, 1024
    %v3046 = vld [vmem:[%s3045] sm:$0xf]
    %v3047 = vld [vmem:[%s3045 + $0x4] sm:$0xf]
    %v3048 = vld [vmem:[%s3045 + $0x8] sm:$0xf]
    %v3049 = vld [vmem:[%s3045 + $0xc] sm:$0xf]
    %v3050 = vld [vmem:[%s3045 + $0x10] sm:$0xf]
    %v3051 = vld [vmem:[%s3045 + $0x14] sm:$0xf]
    %v3052 = vld [vmem:[%s3045 + $0x18] sm:$0xf]
    %v3053 = vld [vmem:[%s3045 + $0x1c] sm:$0xf]
    %v3054 = vld [vmem:[%s3045 + $0x20] sm:$0xf]
    %v3055 = vld [vmem:[%s3045 + $0x24] sm:$0xf]
    %v3056 = vld [vmem:[%s3045 + $0x28] sm:$0xf]
    %v3057 = vld [vmem:[%s3045 + $0x2c] sm:$0xf]
    %v3058 = vld [vmem:[%s3045 + $0x30] sm:$0xf]
    %v3059 = vld [vmem:[%s3045 + $0x34] sm:$0xf]
    %v3060 = vld [vmem:[%s3045 + $0x38] sm:$0xf]
    %v3061 = vld [vmem:[%s3045 + $0x3c] sm:$0xf]
    %v3078 = vunpack.c.l.b16 %v3046
    %v3079 = vunpack.c.l.b16 %v3047
    %v3080 = vunpack.c.l.b16 %v3048
    %v3081 = vunpack.c.l.b16 %v3049
    %v3082 = vunpack.c.l.b16 %v3050
    %v3083 = vunpack.c.l.b16 %v3051
    %v3084 = vunpack.c.l.b16 %v3052
    %v3085 = vunpack.c.l.b16 %v3053
    %v3086 = vunpack.c.l.b16 %v3054
    %v3087 = vunpack.c.l.b16 %v3055
    %v3088 = vunpack.c.l.b16 %v3056
    %v3089 = vunpack.c.l.b16 %v3057
    %v3090 = vunpack.c.l.b16 %v3058
    %v3091 = vunpack.c.l.b16 %v3059
    %v3092 = vunpack.c.l.b16 %v3060
    %v3093 = vunpack.c.l.b16 %v3061
    %v3094 = vpack.c.b16 %v3079, %v3078
    %v3095 = vpack.c.b16 %v3081, %v3080
    %v3096 = vpack.c.b16 %v3083, %v3082
    %v3097 = vpack.c.b16 %v3085, %v3084
    %v3098 = vpack.c.b16 %v3087, %v3086
    %v3099 = vpack.c.b16 %v3089, %v3088
    %v3100 = vpack.c.b16 %v3091, %v3090
    %v3101 = vpack.c.b16 %v3093, %v3092
    %3110 = vmatprep.subr.bf16.mxu0 0
    %3111 = vmatpush1.bf16.msra.mxu0 %v3094
    %3112 = vmatprep.subr.bf16.mxu0 0
    %3113 = vmatpush1.bf16.msra.mxu0 %v3095
    %3114 = vmatprep.subr.bf16.mxu0 0
    %3115 = vmatpush1.bf16.msra.mxu0 %v3096
    %3116 = vmatprep.subr.bf16.mxu0 0
    %3117 = vmatpush1.bf16.msra.mxu0 %v3097
    %3118 = vmatprep.subr.bf16.mxu0 0
    %3119 = vmatpush1.bf16.msra.mxu0 %v3098
    %3120 = vmatprep.subr.bf16.mxu0 0
    %3121 = vmatpush1.bf16.msra.mxu0 %v3099
    %3122 = vmatprep.subr.bf16.mxu0 0
    %3123 = vmatpush1.bf16.msra.mxu0 %v3100
    %3124 = vmatprep.subr.bf16.mxu0 0
    %3125 = vmatpush1.bf16.msra.mxu0 %v3101
    %3126 = vmatprep.subr.bf16.mxu0 0
    %3127 = vmatpush1.bf16.msra.mxu0 0
    %3128 = vmatprep.subr.bf16.mxu0 0
    %3129 = vmatpush1.bf16.msra.mxu0 0
    %3130 = vmatprep.subr.bf16.mxu0 0
    %3131 = vmatpush1.bf16.msra.mxu0 0
    %3132 = vmatprep.subr.bf16.mxu0 0
    %3133 = vmatpush1.bf16.msra.mxu0 0
    %3134 = vmatprep.subr.bf16.mxu0 0
    %3135 = vmatpush1.bf16.msra.mxu0 0
    %3136 = vmatprep.subr.bf16.mxu0 0
    %3137 = vmatpush1.bf16.msra.mxu0 0
    %3138 = vmatprep.subr.bf16.mxu0 0
    %3139 = vmatpush1.bf16.msra.mxu0 0
    %3140 = vmatprep.subr.bf16.mxu0 0
    %3141 = vmatpush1.bf16.msra.mxu0 0
    %3142 = vmatprep.mubr.bf16.mxu0 0
    %3143 = vmatmul.mubr.bf16.gmra.mrb[0].mxu0 %v3044
    %v3144 = vpop.f32.mrb[0].mxu0
    %v3145 = vadd.f32 0.0, %v3144
    %v3146 = vpop.f32.mrb[0].mxu0
    %v3147 = vpop.f32.mrb[0].mxu0
    %v3148 = vpop.f32.mrb[0].mxu0
    %3149 = vdwg.mxu0
    %v3150 = vadd.f32 %v2974, %v3145
    %s3151 = scalar_lea.vmem %s0, 34
    %v3152 = vld [vmem:[%s3151] sm:$0x3]
    %v3155 = vunpack.c.l.s4 1966171168
    %v3156 = vunpack.c.0.s8 %v3155
    %v3157 = vlaneseq
    %v3158 = vshrl.u32 %v3157, 7
    %v3159 = vsub.s32 %v3156, %v3158
    %v3160 = vrot.slane %v3152, %v3159
    %v3161 = vcombine.high %v3160, %v3160
    %v3163 = vunpack.c.l.s4 1966171168
    %v3164 = vunpack.c.0.s8 %v3163
    %v3165 = vlaneseq
    %v3166 = vshrl.u32 %v3165, 7
    %v3167 = vsub.s32 %v3164, %v3166
    %v3168 = vrot.slane %v3160, %v3167
    %v3170 = vunpack.c.l.s4 1966171168
    %v3171 = vunpack.c.0.s8 %v3170
    %v3172 = vlaneseq
    %v3173 = vshrl.u32 %v3172, 7
    %v3174 = vsub.s32 %v3171, %v3173
    %v3175 = vrot.slane %v3161, %v3174
    %3178 = vmatprep.subr.bf16.mxu0 0
    %3179 = vmatpush1.bf16.msra.mxu0 %v157
    %3180 = vmatprep.subr.bf16.mxu0 0
    %3181 = vmatpush1.bf16.msra.mxu0 %v158
    %3182 = vmatprep.subr.bf16.mxu0 0
    %3183 = vmatpush1.bf16.msra.mxu0 %v159
    %3184 = vmatprep.subr.bf16.mxu0 0
    %3185 = vmatpush1.bf16.msra.mxu0 %v160
    %3186 = vmatprep.subr.bf16.mxu0 0
    %3187 = vmatpush1.bf16.msra.mxu0 %v161
    %3188 = vmatprep.subr.bf16.mxu0 0
    %3189 = vmatpush1.bf16.msra.mxu0 %v162
    %3190 = vmatprep.subr.bf16.mxu0 0
    %3191 = vmatpush1.bf16.msra.mxu0 %v163
    %3192 = vmatprep.subr.bf16.mxu0 0
    %3193 = vmatpush1.bf16.msra.mxu0 %v164
    %3194 = vmatprep.subr.bf16.mxu0 0
    %3195 = vmatpush1.bf16.msra.mxu0 %v165
    %3196 = vmatprep.subr.bf16.mxu0 0
    %3197 = vmatpush1.bf16.msra.mxu0 %v166
    %3198 = vmatprep.subr.bf16.mxu0 0
    %3199 = vmatpush1.bf16.msra.mxu0 %v167
    %3200 = vmatprep.subr.bf16.mxu0 0
    %3201 = vmatpush1.bf16.msra.mxu0 %v168
    %3202 = vmatprep.subr.bf16.mxu0 0
    %3203 = vmatpush1.bf16.msra.mxu0 %v169
    %3204 = vmatprep.subr.bf16.mxu0 0
    %3205 = vmatpush1.bf16.msra.mxu0 %v170
    %3206 = vmatprep.subr.bf16.mxu0 0
    %3207 = vmatpush1.bf16.msra.mxu0 %v171
    %3208 = vmatprep.subr.bf16.mxu0 0
    %3209 = vmatpush1.bf16.msra.mxu0 %v172
    %3210 = vmatprep.mubr.bf16.mxu0 %v3175
    %3211 = vmatmul.mubr.bf16.gmra.mrb[0].mxu0 %v3168
    %v3212 = vpop.f32.mrb[0].mxu0
    %v3213 = vadd.f32 %v66, %v3212
    %v3214 = vpop.f32.mrb[0].mxu0
    %v3215 = vpop.f32.mrb[0].mxu0
    %v3216 = vpop.f32.mrb[0].mxu0
    %3217 = vdwg.mxu0
    %vm3218 = vcmp.ge.f32.partialorder %v3213, 0.0
    %v3219 = vsel %vm3218, 1.0, 0.0
    %v3220 = vpack.c.bf16 %v3219, %v3219
    %s3221 = scalar_lea.vmem %s3, 1088
    %v3222 = vld [vmem:[%s3221] sm:$0xf]
    %v3223 = vld [vmem:[%s3221 + $0x4] sm:$0xf]
    %v3224 = vld [vmem:[%s3221 + $0x8] sm:$0xf]
    %v3225 = vld [vmem:[%s3221 + $0xc] sm:$0xf]
    %v3226 = vld [vmem:[%s3221 + $0x10] sm:$0xf]
    %v3227 = vld [vmem:[%s3221 + $0x14] sm:$0xf]
    %v3228 = vld [vmem:[%s3221 + $0x18] sm:$0xf]
    %v3229 = vld [vmem:[%s3221 + $0x1c] sm:$0xf]
    %v3230 = vld [vmem:[%s3221 + $0x20] sm:$0xf]
    %v3231 = vld [vmem:[%s3221 + $0x24] sm:$0xf]
    %v3232 = vld [vmem:[%s3221 + $0x28] sm:$0xf]
    %v3233 = vld [vmem:[%s3221 + $0x2c] sm:$0xf]
    %v3234 = vld [vmem:[%s3221 + $0x30] sm:$0xf]
    %v3235 = vld [vmem:[%s3221 + $0x34] sm:$0xf]
    %v3236 = vld [vmem:[%s3221 + $0x38] sm:$0xf]
    %v3237 = vld [vmem:[%s3221 + $0x3c] sm:$0xf]
    %v3254 = vunpack.c.l.b16 %v3222
    %v3255 = vunpack.c.l.b16 %v3223
    %v3256 = vunpack.c.l.b16 %v3224
    %v3257 = vunpack.c.l.b16 %v3225
    %v3258 = vunpack.c.l.b16 %v3226
    %v3259 = vunpack.c.l.b16 %v3227
    %v3260 = vunpack.c.l.b16 %v3228
    %v3261 = vunpack.c.l.b16 %v3229
    %v3262 = vunpack.c.l.b16 %v3230
    %v3263 = vunpack.c.l.b16 %v3231
    %v3264 = vunpack.c.l.b16 %v3232
    %v3265 = vunpack.c.l.b16 %v3233
    %v3266 = vunpack.c.l.b16 %v3234
    %v3267 = vunpack.c.l.b16 %v3235
    %v3268 = vunpack.c.l.b16 %v3236
    %v3269 = vunpack.c.l.b16 %v3237
    %v3270 = vpack.c.b16 %v3255, %v3254
    %v3271 = vpack.c.b16 %v3257, %v3256
    %v3272 = vpack.c.b16 %v3259, %v3258
    %v3273 = vpack.c.b16 %v3261, %v3260
    %v3274 = vpack.c.b16 %v3263, %v3262
    %v3275 = vpack.c.b16 %v3265, %v3264
    %v3276 = vpack.c.b16 %v3267, %v3266
    %v3277 = vpack.c.b16 %v3269, %v3268
    %3286 = vmatprep.subr.bf16.mxu0 0
    %3287 = vmatpush1.bf16.msra.mxu0 %v3270
    %3288 = vmatprep.subr.bf16.mxu0 0
    %3289 = vmatpush1.bf16.msra.mxu0 %v3271
    %3290 = vmatprep.subr.bf16.mxu0 0
    %3291 = vmatpush1.bf16.msra.mxu0 %v3272
    %3292 = vmatprep.subr.bf16.mxu0 0
    %3293 = vmatpush1.bf16.msra.mxu0 %v3273
    %3294 = vmatprep.subr.bf16.mxu0 0
    %3295 = vmatpush1.bf16.msra.mxu0 %v3274
    %3296 = vmatprep.subr.bf16.mxu0 0
    %3297 = vmatpush1.bf16.msra.mxu0 %v3275
    %3298 = vmatprep.subr.bf16.mxu0 0
    %3299 = vmatpush1.bf16.msra.mxu0 %v3276
    %3300 = vmatprep.subr.bf16.mxu0 0
    %3301 = vmatpush1.bf16.msra.mxu0 %v3277
    %3302 = vmatprep.subr.bf16.mxu0 0
    %3303 = vmatpush1.bf16.msra.mxu0 0
    %3304 = vmatprep.subr.bf16.mxu0 0
    %3305 = vmatpush1.bf16.msra.mxu0 0
    %3306 = vmatprep.subr.bf16.mxu0 0
    %3307 = vmatpush1.bf16.msra.mxu0 0
    %3308 = vmatprep.subr.bf16.mxu0 0
    %3309 = vmatpush1.bf16.msra.mxu0 0
    %3310 = vmatprep.subr.bf16.mxu0 0
    %3311 = vmatpush1.bf16.msra.mxu0 0
    %3312 = vmatprep.subr.bf16.mxu0 0
    %3313 = vmatpush1.bf16.msra.mxu0 0
    %3314 = vmatprep.subr.bf16.mxu0 0
    %3315 = vmatpush1.bf16.msra.mxu0 0
    %3316 = vmatprep.subr.bf16.mxu0 0
    %3317 = vmatpush1.bf16.msra.mxu0 0
    %3318 = vmatprep.mubr.bf16.mxu0 0
    %3319 = vmatmul.mubr.bf16.gmra.mrb[0].mxu0 %v3220
    %v3320 = vpop.f32.mrb[0].mxu0
    %v3321 = vadd.f32 0.0, %v3320
    %v3322 = vpop.f32.mrb[0].mxu0
    %v3323 = vpop.f32.mrb[0].mxu0
    %v3324 = vpop.f32.mrb[0].mxu0
    %3325 = vdwg.mxu0
    %v3326 = vadd.f32 %v3150, %v3321
    %s3327 = scalar_lea.vmem %s0, 36
    %v3328 = vld [vmem:[%s3327] sm:$0x3]
    %v3331 = vunpack.c.l.s4 1966171168
    %v3332 = vunpack.c.0.s8 %v3331
    %v3333 = vlaneseq
    %v3334 = vshrl.u32 %v3333, 7
    %v3335 = vsub.s32 %v3332, %v3334
    %v3336 = vrot.slane %v3328, %v3335
    %v3337 = vcombine.high %v3336, %v3336
    %v3339 = vunpack.c.l.s4 1966171168
    %v3340 = vunpack.c.0.s8 %v3339
    %v3341 = vlaneseq
    %v3342 = vshrl.u32 %v3341, 7
    %v3343 = vsub.s32 %v3340, %v3342
    %v3344 = vrot.slane %v3336, %v3343
    %v3346 = vunpack.c.l.s4 1966171168
    %v3347 = vunpack.c.0.s8 %v3346
    %v3348 = vlaneseq
    %v3349 = vshrl.u32 %v3348, 7
    %v3350 = vsub.s32 %v3347, %v3349
    %v3351 = vrot.slane %v3337, %v3350
    %3354 = vmatprep.subr.bf16.mxu0 0
    %3355 = vmatpush1.bf16.msra.mxu0 %v157
    %3356 = vmatprep.subr.bf16.mxu0 0
    %3357 = vmatpush1.bf16.msra.mxu0 %v158
    %3358 = vmatprep.subr.bf16.mxu0 0
    %3359 = vmatpush1.bf16.msra.mxu0 %v159
    %3360 = vmatprep.subr.bf16.mxu0 0
    %3361 = vmatpush1.bf16.msra.mxu0 %v160
    %3362 = vmatprep.subr.bf16.mxu0 0
    %3363 = vmatpush1.bf16.msra.mxu0 %v161
    %3364 = vmatprep.subr.bf16.mxu0 0
    %3365 = vmatpush1.bf16.msra.mxu0 %v162
    %3366 = vmatprep.subr.bf16.mxu0 0
    %3367 = vmatpush1.bf16.msra.mxu0 %v163
    %3368 = vmatprep.subr.bf16.mxu0 0
    %3369 = vmatpush1.bf16.msra.mxu0 %v164
    %3370 = vmatprep.subr.bf16.mxu0 0
    %3371 = vmatpush1.bf16.msra.mxu0 %v165
    %3372 = vmatprep.subr.bf16.mxu0 0
    %3373 = vmatpush1.bf16.msra.mxu0 %v166
    %3374 = vmatprep.subr.bf16.mxu0 0
    %3375 = vmatpush1.bf16.msra.mxu0 %v167
    %3376 = vmatprep.subr.bf16.mxu0 0
    %3377 = vmatpush1.bf16.msra.mxu0 %v168
    %3378 = vmatprep.subr.bf16.mxu0 0
    %3379 = vmatpush1.bf16.msra.mxu0 %v169
    %3380 = vmatprep.subr.bf16.mxu0 0
    %3381 = vmatpush1.bf16.msra.mxu0 %v170
    %3382 = vmatprep.subr.bf16.mxu0 0
    %3383 = vmatpush1.bf16.msra.mxu0 %v171
    %3384 = vmatprep.subr.bf16.mxu0 0
    %3385 = vmatpush1.bf16.msra.mxu0 %v172
    %3386 = vmatprep.mubr.bf16.mxu0 %v3351
    %3387 = vmatmul.mubr.bf16.gmra.mrb[0].mxu0 %v3344
    %v3388 = vpop.f32.mrb[0].mxu0
    %v3389 = vadd.f32 %v66, %v3388
    %v3390 = vpop.f32.mrb[0].mxu0
    %v3391 = vpop.f32.mrb[0].mxu0
    %v3392 = vpop.f32.mrb[0].mxu0
    %3393 = vdwg.mxu0
    %vm3394 = vcmp.ge.f32.partialorder %v3389, 0.0
    %v3395 = vsel %vm3394, 1.0, 0.0
    %v3396 = vpack.c.bf16 %v3395, %v3395
    %s3397 = scalar_lea.vmem %s3, 1152
    %v3398 = vld [vmem:[%s3397] sm:$0xf]
    %v3399 = vld [vmem:[%s3397 + $0x4] sm:$0xf]
    %v3400 = vld [vmem:[%s3397 + $0x8] sm:$0xf]
    %v3401 = vld [vmem:[%s3397 + $0xc] sm:$0xf]
    %v3402 = vld [vmem:[%s3397 + $0x10] sm:$0xf]
    %v3403 = vld [vmem:[%s3397 + $0x14] sm:$0xf]
    %v3404 = vld [vmem:[%s3397 + $0x18] sm:$0xf]
    %v3405 = vld [vmem:[%s3397 + $0x1c] sm:$0xf]
    %v3406 = vld [vmem:[%s3397 + $0x20] sm:$0xf]
    %v3407 = vld [vmem:[%s3397 + $0x24] sm:$0xf]
    %v3408 = vld [vmem:[%s3397 + $0x28] sm:$0xf]
    %v3409 = vld [vmem:[%s3397 + $0x2c] sm:$0xf]
    %v3410 = vld [vmem:[%s3397 + $0x30] sm:$0xf]
    %v3411 = vld [vmem:[%s3397 + $0x34] sm:$0xf]
    %v3412 = vld [vmem:[%s3397 + $0x38] sm:$0xf]
    %v3413 = vld [vmem:[%s3397 + $0x3c] sm:$0xf]
    %v3430 = vunpack.c.l.b16 %v3398
    %v3431 = vunpack.c.l.b16 %v3399
    %v3432 = vunpack.c.l.b16 %v3400
    %v3433 = vunpack.c.l.b16 %v3401
    %v3434 = vunpack.c.l.b16 %v3402
    %v3435 = vunpack.c.l.b16 %v3403
    %v3436 = vunpack.c.l.b16 %v3404
    %v3437 = vunpack.c.l.b16 %v3405
    %v3438 = vunpack.c.l.b16 %v3406
    %v3439 = vunpack.c.l.b16 %v3407
    %v3440 = vunpack.c.l.b16 %v3408
    %v3441 = vunpack.c.l.b16 %v3409
    %v3442 = vunpack.c.l.b16 %v3410
    %v3443 = vunpack.c.l.b16 %v3411
    %v3444 = vunpack.c.l.b16 %v3412
    %v3445 = vunpack.c.l.b16 %v3413
    %v3446 = vpack.c.b16 %v3431, %v3430
    %v3447 = vpack.c.b16 %v3433, %v3432
    %v3448 = vpack.c.b16 %v3435, %v3434
    %v3449 = vpack.c.b16 %v3437, %v3436
    %v3450 = vpack.c.b16 %v3439, %v3438
    %v3451 = vpack.c.b16 %v3441, %v3440
    %v3452 = vpack.c.b16 %v3443, %v3442
    %v3453 = vpack.c.b16 %v3445, %v3444
    %3462 = vmatprep.subr.bf16.mxu0 0
    %3463 = vmatpush1.bf16.msra.mxu0 %v3446
    %3464 = vmatprep.subr.bf16.mxu0 0
    %3465 = vmatpush1.bf16.msra.mxu0 %v3447
    %3466 = vmatprep.subr.bf16.mxu0 0
    %3467 = vmatpush1.bf16.msra.mxu0 %v3448
    %3468 = vmatprep.subr.bf16.mxu0 0
    %3469 = vmatpush1.bf16.msra.mxu0 %v3449
    %3470 = vmatprep.subr.bf16.mxu0 0
    %3471 = vmatpush1.bf16.msra.mxu0 %v3450
    %3472 = vmatprep.subr.bf16.mxu0 0
    %3473 = vmatpush1.bf16.msra.mxu0 %v3451
    %3474 = vmatprep.subr.bf16.mxu0 0
    %3475 = vmatpush1.bf16.msra.mxu0 %v3452
    %3476 = vmatprep.subr.bf16.mxu0 0
    %3477 = vmatpush1.bf16.msra.mxu0 %v3453
    %3478 = vmatprep.subr.bf16.mxu0 0
    %3479 = vmatpush1.bf16.msra.mxu0 0
    %3480 = vmatprep.subr.bf16.mxu0 0
    %3481 = vmatpush1.bf16.msra.mxu0 0
    %3482 = vmatprep.subr.bf16.mxu0 0
    %3483 = vmatpush1.bf16.msra.mxu0 0
    %3484 = vmatprep.subr.bf16.mxu0 0
    %3485 = vmatpush1.bf16.msra.mxu0 0
    %3486 = vmatprep.subr.bf16.mxu0 0
    %3487 = vmatpush1.bf16.msra.mxu0 0
    %3488 = vmatprep.subr.bf16.mxu0 0
    %3489 = vmatpush1.bf16.msra.mxu0 0
    %3490 = vmatprep.subr.bf16.mxu0 0
    %3491 = vmatpush1.bf16.msra.mxu0 0
    %3492 = vmatprep.subr.bf16.mxu0 0
    %3493 = vmatpush1.bf16.msra.mxu0 0
    %3494 = vmatprep.mubr.bf16.mxu0 0
    %3495 = vmatmul.mubr.bf16.gmra.mrb[0].mxu0 %v3396
    %v3496 = vpop.f32.mrb[0].mxu0
    %v3497 = vadd.f32 0.0, %v3496
    %v3498 = vpop.f32.mrb[0].mxu0
    %v3499 = vpop.f32.mrb[0].mxu0
    %v3500 = vpop.f32.mrb[0].mxu0
    %3501 = vdwg.mxu0
    %v3502 = vadd.f32 %v3326, %v3497
    %s3503 = scalar_lea.vmem %s0, 38
    %v3504 = vld [vmem:[%s3503] sm:$0x3]
    %v3507 = vunpack.c.l.s4 1966171168
    %v3508 = vunpack.c.0.s8 %v3507
    %v3509 = vlaneseq
    %v3510 = vshrl.u32 %v3509, 7
    %v3511 = vsub.s32 %v3508, %v3510
    %v3512 = vrot.slane %v3504, %v3511
    %v3513 = vcombine.high %v3512, %v3512
    %v3515 = vunpack.c.l.s4 1966171168
    %v3516 = vunpack.c.0.s8 %v3515
    %v3517 = vlaneseq
    %v3518 = vshrl.u32 %v3517, 7
    %v3519 = vsub.s32 %v3516, %v3518
    %v3520 = vrot.slane %v3512, %v3519
    %v3522 = vunpack.c.l.s4 1966171168
    %v3523 = vunpack.c.0.s8 %v3522
    %v3524 = vlaneseq
    %v3525 = vshrl.u32 %v3524, 7
    %v3526 = vsub.s32 %v3523, %v3525
    %v3527 = vrot.slane %v3513, %v3526
    %3530 = vmatprep.subr.bf16.mxu0 0
    %3531 = vmatpush1.bf16.msra.mxu0 %v157
    %3532 = vmatprep.subr.bf16.mxu0 0
    %3533 = vmatpush1.bf16.msra.mxu0 %v158
    %3534 = vmatprep.subr.bf16.mxu0 0
    %3535 = vmatpush1.bf16.msra.mxu0 %v159
    %3536 = vmatprep.subr.bf16.mxu0 0
    %3537 = vmatpush1.bf16.msra.mxu0 %v160
    %3538 = vmatprep.subr.bf16.mxu0 0
    %3539 = vmatpush1.bf16.msra.mxu0 %v161
    %3540 = vmatprep.subr.bf16.mxu0 0
    %3541 = vmatpush1.bf16.msra.mxu0 %v162
    %3542 = vmatprep.subr.bf16.mxu0 0
    %3543 = vmatpush1.bf16.msra.mxu0 %v163
    %3544 = vmatprep.subr.bf16.mxu0 0
    %3545 = vmatpush1.bf16.msra.mxu0 %v164
    %3546 = vmatprep.subr.bf16.mxu0 0
    %3547 = vmatpush1.bf16.msra.mxu0 %v165
    %3548 = vmatprep.subr.bf16.mxu0 0
    %3549 = vmatpush1.bf16.msra.mxu0 %v166
    %3550 = vmatprep.subr.bf16.mxu0 0
    %3551 = vmatpush1.bf16.msra.mxu0 %v167
    %3552 = vmatprep.subr.bf16.mxu0 0
    %3553 = vmatpush1.bf16.msra.mxu0 %v168
    %3554 = vmatprep.subr.bf16.mxu0 0
    %3555 = vmatpush1.bf16.msra.mxu0 %v169
    %3556 = vmatprep.subr.bf16.mxu0 0
    %3557 = vmatpush1.bf16.msra.mxu0 %v170
    %3558 = vmatprep.subr.bf16.mxu0 0
    %3559 = vmatpush1.bf16.msra.mxu0 %v171
    %3560 = vmatprep.subr.bf16.mxu0 0
    %3561 = vmatpush1.bf16.msra.mxu0 %v172
    %3562 = vmatprep.mubr.bf16.mxu0 %v3527
    %3563 = vmatmul.mubr.bf16.gmra.mrb[0].mxu0 %v3520
    %v3564 = vpop.f32.mrb[0].mxu0
    %v3565 = vadd.f32 %v66, %v3564
    %v3566 = vpop.f32.mrb[0].mxu0
    %v3567 = vpop.f32.mrb[0].mxu0
    %v3568 = vpop.f32.mrb[0].mxu0
    %3569 = vdwg.mxu0
    %vm3570 = vcmp.ge.f32.partialorder %v3565, 0.0
    %v3571 = vsel %vm3570, 1.0, 0.0
    %v3572 = vpack.c.bf16 %v3571, %v3571
    %s3573 = scalar_lea.vmem %s3, 1216
    %v3574 = vld [vmem:[%s3573] sm:$0xf]
    %v3575 = vld [vmem:[%s3573 + $0x4] sm:$0xf]
    %v3576 = vld [vmem:[%s3573 + $0x8] sm:$0xf]
    %v3577 = vld [vmem:[%s3573 + $0xc] sm:$0xf]
    %v3578 = vld [vmem:[%s3573 + $0x10] sm:$0xf]
    %v3579 = vld [vmem:[%s3573 + $0x14] sm:$0xf]
    %v3580 = vld [vmem:[%s3573 + $0x18] sm:$0xf]
    %v3581 = vld [vmem:[%s3573 + $0x1c] sm:$0xf]
    %v3582 = vld [vmem:[%s3573 + $0x20] sm:$0xf]
    %v3583 = vld [vmem:[%s3573 + $0x24] sm:$0xf]
    %v3584 = vld [vmem:[%s3573 + $0x28] sm:$0xf]
    %v3585 = vld [vmem:[%s3573 + $0x2c] sm:$0xf]
    %v3586 = vld [vmem:[%s3573 + $0x30] sm:$0xf]
    %v3587 = vld [vmem:[%s3573 + $0x34] sm:$0xf]
    %v3588 = vld [vmem:[%s3573 + $0x38] sm:$0xf]
    %v3589 = vld [vmem:[%s3573 + $0x3c] sm:$0xf]
    %v3606 = vunpack.c.l.b16 %v3574
    %v3607 = vunpack.c.l.b16 %v3575
    %v3608 = vunpack.c.l.b16 %v3576
    %v3609 = vunpack.c.l.b16 %v3577
    %v3610 = vunpack.c.l.b16 %v3578
    %v3611 = vunpack.c.l.b16 %v3579
    %v3612 = vunpack.c.l.b16 %v3580
    %v3613 = vunpack.c.l.b16 %v3581
    %v3614 = vunpack.c.l.b16 %v3582
    %v3615 = vunpack.c.l.b16 %v3583
    %v3616 = vunpack.c.l.b16 %v3584
    %v3617 = vunpack.c.l.b16 %v3585
    %v3618 = vunpack.c.l.b16 %v3586
    %v3619 = vunpack.c.l.b16 %v3587
    %v3620 = vunpack.c.l.b16 %v3588
    %v3621 = vunpack.c.l.b16 %v3589
    %v3622 = vpack.c.b16 %v3607, %v3606
    %v3623 = vpack.c.b16 %v3609, %v3608
    %v3624 = vpack.c.b16 %v3611, %v3610
    %v3625 = vpack.c.b16 %v3613, %v3612
    %v3626 = vpack.c.b16 %v3615, %v3614
    %v3627 = vpack.c.b16 %v3617, %v3616
    %v3628 = vpack.c.b16 %v3619, %v3618
    %v3629 = vpack.c.b16 %v3621, %v3620
    %3638 = vmatprep.subr.bf16.mxu0 0
    %3639 = vmatpush1.bf16.msra.mxu0 %v3622
    %3640 = vmatprep.subr.bf16.mxu0 0
    %3641 = vmatpush1.bf16.msra.mxu0 %v3623
    %3642 = vmatprep.subr.bf16.mxu0 0
    %3643 = vmatpush1.bf16.msra.mxu0 %v3624
    %3644 = vmatprep.subr.bf16.mxu0 0
    %3645 = vmatpush1.bf16.msra.mxu0 %v3625
    %3646 = vmatprep.subr.bf16.mxu0 0
    %3647 = vmatpush1.bf16.msra.mxu0 %v3626
    %3648 = vmatprep.subr.bf16.mxu0 0
    %3649 = vmatpush1.bf16.msra.mxu0 %v3627
    %3650 = vmatprep.subr.bf16.mxu0 0
    %3651 = vmatpush1.bf16.msra.mxu0 %v3628
    %3652 = vmatprep.subr.bf16.mxu0 0
    %3653 = vmatpush1.bf16.msra.mxu0 %v3629
    %3654 = vmatprep.subr.bf16.mxu0 0
    %3655 = vmatpush1.bf16.msra.mxu0 0
    %3656 = vmatprep.subr.bf16.mxu0 0
    %3657 = vmatpush1.bf16.msra.mxu0 0
    %3658 = vmatprep.subr.bf16.mxu0 0
    %3659 = vmatpush1.bf16.msra.mxu0 0
    %3660 = vmatprep.subr.bf16.mxu0 0
    %3661 = vmatpush1.bf16.msra.mxu0 0
    %3662 = vmatprep.subr.bf16.mxu0 0
    %3663 = vmatpush1.bf16.msra.mxu0 0
    %3664 = vmatprep.subr.bf16.mxu0 0
    %3665 = vmatpush1.bf16.msra.mxu0 0
    %3666 = vmatprep.subr.bf16.mxu0 0
    %3667 = vmatpush1.bf16.msra.mxu0 0
    %3668 = vmatprep.subr.bf16.mxu0 0
    %3669 = vmatpush1.bf16.msra.mxu0 0
    %3670 = vmatprep.mubr.bf16.mxu0 0
    %3671 = vmatmul.mubr.bf16.gmra.mrb[0].mxu0 %v3572
    %v3672 = vpop.f32.mrb[0].mxu0
    %v3673 = vadd.f32 0.0, %v3672
    %v3674 = vpop.f32.mrb[0].mxu0
    %v3675 = vpop.f32.mrb[0].mxu0
    %v3676 = vpop.f32.mrb[0].mxu0
    %3677 = vdwg.mxu0
    %v3678 = vadd.f32 %v3502, %v3673
    %s3679 = scalar_lea.vmem %s0, 40
    %v3680 = vld [vmem:[%s3679] sm:$0x3]
    %v3683 = vunpack.c.l.s4 1966171168
    %v3684 = vunpack.c.0.s8 %v3683
    %v3685 = vlaneseq
    %v3686 = vshrl.u32 %v3685, 7
    %v3687 = vsub.s32 %v3684, %v3686
    %v3688 = vrot.slane %v3680, %v3687
    %v3689 = vcombine.high %v3688, %v3688
    %v3691 = vunpack.c.l.s4 1966171168
    %v3692 = vunpack.c.0.s8 %v3691
    %v3693 = vlaneseq
    %v3694 = vshrl.u32 %v3693, 7
    %v3695 = vsub.s32 %v3692, %v3694
    %v3696 = vrot.slane %v3688, %v3695
    %v3698 = vunpack.c.l.s4 1966171168
    %v3699 = vunpack.c.0.s8 %v3698
    %v3700 = vlaneseq
    %v3701 = vshrl.u32 %v3700, 7
    %v3702 = vsub.s32 %v3699, %v3701
    %v3703 = vrot.slane %v3689, %v3702
    %3706 = vmatprep.subr.bf16.mxu0 0
    %3707 = vmatpush1.bf16.msra.mxu0 %v157
    %3708 = vmatprep.subr.bf16.mxu0 0
    %3709 = vmatpush1.bf16.msra.mxu0 %v158
    %3710 = vmatprep.subr.bf16.mxu0 0
    %3711 = vmatpush1.bf16.msra.mxu0 %v159
    %3712 = vmatprep.subr.bf16.mxu0 0
    %3713 = vmatpush1.bf16.msra.mxu0 %v160
    %3714 = vmatprep.subr.bf16.mxu0 0
    %3715 = vmatpush1.bf16.msra.mxu0 %v161
    %3716 = vmatprep.subr.bf16.mxu0 0
    %3717 = vmatpush1.bf16.msra.mxu0 %v162
    %3718 = vmatprep.subr.bf16.mxu0 0
    %3719 = vmatpush1.bf16.msra.mxu0 %v163
    %3720 = vmatprep.subr.bf16.mxu0 0
    %3721 = vmatpush1.bf16.msra.mxu0 %v164
    %3722 = vmatprep.subr.bf16.mxu0 0
    %3723 = vmatpush1.bf16.msra.mxu0 %v165
    %3724 = vmatprep.subr.bf16.mxu0 0
    %3725 = vmatpush1.bf16.msra.mxu0 %v166
    %3726 = vmatprep.subr.bf16.mxu0 0
    %3727 = vmatpush1.bf16.msra.mxu0 %v167
    %3728 = vmatprep.subr.bf16.mxu0 0
    %3729 = vmatpush1.bf16.msra.mxu0 %v168
    %3730 = vmatprep.subr.bf16.mxu0 0
    %3731 = vmatpush1.bf16.msra.mxu0 %v169
    %3732 = vmatprep.subr.bf16.mxu0 0
    %3733 = vmatpush1.bf16.msra.mxu0 %v170
    %3734 = vmatprep.subr.bf16.mxu0 0
    %3735 = vmatpush1.bf16.msra.mxu0 %v171
    %3736 = vmatprep.subr.bf16.mxu0 0
    %3737 = vmatpush1.bf16.msra.mxu0 %v172
    %3738 = vmatprep.mubr.bf16.mxu0 %v3703
    %3739 = vmatmul.mubr.bf16.gmra.mrb[0].mxu0 %v3696
    %v3740 = vpop.f32.mrb[0].mxu0
    %v3741 = vadd.f32 %v66, %v3740
    %v3742 = vpop.f32.mrb[0].mxu0
    %v3743 = vpop.f32.mrb[0].mxu0
    %v3744 = vpop.f32.mrb[0].mxu0
    %3745 = vdwg.mxu0
    %vm3746 = vcmp.ge.f32.partialorder %v3741, 0.0
    %v3747 = vsel %vm3746, 1.0, 0.0
    %v3748 = vpack.c.bf16 %v3747, %v3747
    %s3749 = scalar_lea.vmem %s3, 1280
    %v3750 = vld [vmem:[%s3749] sm:$0xf]
    %v3751 = vld [vmem:[%s3749 + $0x4] sm:$0xf]
    %v3752 = vld [vmem:[%s3749 + $0x8] sm:$0xf]
    %v3753 = vld [vmem:[%s3749 + $0xc] sm:$0xf]
    %v3754 = vld [vmem:[%s3749 + $0x10] sm:$0xf]
    %v3755 = vld [vmem:[%s3749 + $0x14] sm:$0xf]
    %v3756 = vld [vmem:[%s3749 + $0x18] sm:$0xf]
    %v3757 = vld [vmem:[%s3749 + $0x1c] sm:$0xf]
    %v3758 = vld [vmem:[%s3749 + $0x20] sm:$0xf]
    %v3759 = vld [vmem:[%s3749 + $0x24] sm:$0xf]
    %v3760 = vld [vmem:[%s3749 + $0x28] sm:$0xf]
    %v3761 = vld [vmem:[%s3749 + $0x2c] sm:$0xf]
    %v3762 = vld [vmem:[%s3749 + $0x30] sm:$0xf]
    %v3763 = vld [vmem:[%s3749 + $0x34] sm:$0xf]
    %v3764 = vld [vmem:[%s3749 + $0x38] sm:$0xf]
    %v3765 = vld [vmem:[%s3749 + $0x3c] sm:$0xf]
    %v3782 = vunpack.c.l.b16 %v3750
    %v3783 = vunpack.c.l.b16 %v3751
    %v3784 = vunpack.c.l.b16 %v3752
    %v3785 = vunpack.c.l.b16 %v3753
    %v3786 = vunpack.c.l.b16 %v3754
    %v3787 = vunpack.c.l.b16 %v3755
    %v3788 = vunpack.c.l.b16 %v3756
    %v3789 = vunpack.c.l.b16 %v3757
    %v3790 = vunpack.c.l.b16 %v3758
    %v3791 = vunpack.c.l.b16 %v3759
    %v3792 = vunpack.c.l.b16 %v3760
    %v3793 = vunpack.c.l.b16 %v3761
    %v3794 = vunpack.c.l.b16 %v3762
    %v3795 = vunpack.c.l.b16 %v3763
    %v3796 = vunpack.c.l.b16 %v3764
    %v3797 = vunpack.c.l.b16 %v3765
    %v3798 = vpack.c.b16 %v3783, %v3782
    %v3799 = vpack.c.b16 %v3785, %v3784
    %v3800 = vpack.c.b16 %v3787, %v3786
    %v3801 = vpack.c.b16 %v3789, %v3788
    %v3802 = vpack.c.b16 %v3791, %v3790
    %v3803 = vpack.c.b16 %v3793, %v3792
    %v3804 = vpack.c.b16 %v3795, %v3794
    %v3805 = vpack.c.b16 %v3797, %v3796
    %3814 = vmatprep.subr.bf16.mxu0 0
    %3815 = vmatpush1.bf16.msra.mxu0 %v3798
    %3816 = vmatprep.subr.bf16.mxu0 0
    %3817 = vmatpush1.bf16.msra.mxu0 %v3799
    %3818 = vmatprep.subr.bf16.mxu0 0
    %3819 = vmatpush1.bf16.msra.mxu0 %v3800
    %3820 = vmatprep.subr.bf16.mxu0 0
    %3821 = vmatpush1.bf16.msra.mxu0 %v3801
    %3822 = vmatprep.subr.bf16.mxu0 0
    %3823 = vmatpush1.bf16.msra.mxu0 %v3802
    %3824 = vmatprep.subr.bf16.mxu0 0
    %3825 = vmatpush1.bf16.msra.mxu0 %v3803
    %3826 = vmatprep.subr.bf16.mxu0 0
    %3827 = vmatpush1.bf16.msra.mxu0 %v3804
    %3828 = vmatprep.subr.bf16.mxu0 0
    %3829 = vmatpush1.bf16.msra.mxu0 %v3805
    %3830 = vmatprep.subr.bf16.mxu0 0
    %3831 = vmatpush1.bf16.msra.mxu0 0
    %3832 = vmatprep.subr.bf16.mxu0 0
    %3833 = vmatpush1.bf16.msra.mxu0 0
    %3834 = vmatprep.subr.bf16.mxu0 0
    %3835 = vmatpush1.bf16.msra.mxu0 0
    %3836 = vmatprep.subr.bf16.mxu0 0
    %3837 = vmatpush1.bf16.msra.mxu0 0
    %3838 = vmatprep.subr.bf16.mxu0 0
    %3839 = vmatpush1.bf16.msra.mxu0 0
    %3840 = vmatprep.subr.bf16.mxu0 0
    %3841 = vmatpush1.bf16.msra.mxu0 0
    %3842 = vmatprep.subr.bf16.mxu0 0
    %3843 = vmatpush1.bf16.msra.mxu0 0
    %3844 = vmatprep.subr.bf16.mxu0 0
    %3845 = vmatpush1.bf16.msra.mxu0 0
    %3846 = vmatprep.mubr.bf16.mxu0 0
    %3847 = vmatmul.mubr.bf16.gmra.mrb[0].mxu0 %v3748
    %v3848 = vpop.f32.mrb[0].mxu0
    %v3849 = vadd.f32 0.0, %v3848
    %v3850 = vpop.f32.mrb[0].mxu0
    %v3851 = vpop.f32.mrb[0].mxu0
    %v3852 = vpop.f32.mrb[0].mxu0
    %3853 = vdwg.mxu0
    %v3854 = vadd.f32 %v3678, %v3849
    %s3855 = scalar_lea.vmem %s0, 42
    %v3856 = vld [vmem:[%s3855] sm:$0x3]
    %v3859 = vunpack.c.l.s4 1966171168
    %v3860 = vunpack.c.0.s8 %v3859
    %v3861 = vlaneseq
    %v3862 = vshrl.u32 %v3861, 7
    %v3863 = vsub.s32 %v3860, %v3862
    %v3864 = vrot.slane %v3856, %v3863
    %v3865 = vcombine.high %v3864, %v3864
    %v3867 = vunpack.c.l.s4 1966171168
    %v3868 = vunpack.c.0.s8 %v3867
    %v3869 = vlaneseq
    %v3870 = vshrl.u32 %v3869, 7
    %v3871 = vsub.s32 %v3868, %v3870
    %v3872 = vrot.slane %v3864, %v3871
    %v3874 = vunpack.c.l.s4 1966171168
    %v3875 = vunpack.c.0.s8 %v3874
    %v3876 = vlaneseq
    %v3877 = vshrl.u32 %v3876, 7
    %v3878 = vsub.s32 %v3875, %v3877
    %v3879 = vrot.slane %v3865, %v3878
    %3882 = vmatprep.subr.bf16.mxu0 0
    %3883 = vmatpush1.bf16.msra.mxu0 %v157
    %3884 = vmatprep.subr.bf16.mxu0 0
    %3885 = vmatpush1.bf16.msra.mxu0 %v158
    %3886 = vmatprep.subr.bf16.mxu0 0
    %3887 = vmatpush1.bf16.msra.mxu0 %v159
    %3888 = vmatprep.subr.bf16.mxu0 0
    %3889 = vmatpush1.bf16.msra.mxu0 %v160
    %3890 = vmatprep.subr.bf16.mxu0 0
    %3891 = vmatpush1.bf16.msra.mxu0 %v161
    %3892 = vmatprep.subr.bf16.mxu0 0
    %3893 = vmatpush1.bf16.msra.mxu0 %v162
    %3894 = vmatprep.subr.bf16.mxu0 0
    %3895 = vmatpush1.bf16.msra.mxu0 %v163
    %3896 = vmatprep.subr.bf16.mxu0 0
    %3897 = vmatpush1.bf16.msra.mxu0 %v164
    %3898 = vmatprep.subr.bf16.mxu0 0
    %3899 = vmatpush1.bf16.msra.mxu0 %v165
    %3900 = vmatprep.subr.bf16.mxu0 0
    %3901 = vmatpush1.bf16.msra.mxu0 %v166
    %3902 = vmatprep.subr.bf16.mxu0 0
    %3903 = vmatpush1.bf16.msra.mxu0 %v167
    %3904 = vmatprep.subr.bf16.mxu0 0
    %3905 = vmatpush1.bf16.msra.mxu0 %v168
    %3906 = vmatprep.subr.bf16.mxu0 0
    %3907 = vmatpush1.bf16.msra.mxu0 %v169
    %3908 = vmatprep.subr.bf16.mxu0 0
    %3909 = vmatpush1.bf16.msra.mxu0 %v170
    %3910 = vmatprep.subr.bf16.mxu0 0
    %3911 = vmatpush1.bf16.msra.mxu0 %v171
    %3912 = vmatprep.subr.bf16.mxu0 0
    %3913 = vmatpush1.bf16.msra.mxu0 %v172
    %3914 = vmatprep.mubr.bf16.mxu0 %v3879
    %3915 = vmatmul.mubr.bf16.gmra.mrb[0].mxu0 %v3872
    %v3916 = vpop.f32.mrb[0].mxu0
    %v3917 = vadd.f32 %v66, %v3916
    %v3918 = vpop.f32.mrb[0].mxu0
    %v3919 = vpop.f32.mrb[0].mxu0
    %v3920 = vpop.f32.mrb[0].mxu0
    %3921 = vdwg.mxu0
    %vm3922 = vcmp.ge.f32.partialorder %v3917, 0.0
    %v3923 = vsel %vm3922, 1.0, 0.0
    %v3924 = vpack.c.bf16 %v3923, %v3923
    %s3925 = scalar_lea.vmem %s3, 1344
    %v3926 = vld [vmem:[%s3925] sm:$0xf]
    %v3927 = vld [vmem:[%s3925 + $0x4] sm:$0xf]
    %v3928 = vld [vmem:[%s3925 + $0x8] sm:$0xf]
    %v3929 = vld [vmem:[%s3925 + $0xc] sm:$0xf]
    %v3930 = vld [vmem:[%s3925 + $0x10] sm:$0xf]
    %v3931 = vld [vmem:[%s3925 + $0x14] sm:$0xf]
    %v3932 = vld [vmem:[%s3925 + $0x18] sm:$0xf]
    %v3933 = vld [vmem:[%s3925 + $0x1c] sm:$0xf]
    %v3934 = vld [vmem:[%s3925 + $0x20] sm:$0xf]
    %v3935 = vld [vmem:[%s3925 + $0x24] sm:$0xf]
    %v3936 = vld [vmem:[%s3925 + $0x28] sm:$0xf]
    %v3937 = vld [vmem:[%s3925 + $0x2c] sm:$0xf]
    %v3938 = vld [vmem:[%s3925 + $0x30] sm:$0xf]
    %v3939 = vld [vmem:[%s3925 + $0x34] sm:$0xf]
    %v3940 = vld [vmem:[%s3925 + $0x38] sm:$0xf]
    %v3941 = vld [vmem:[%s3925 + $0x3c] sm:$0xf]
    %v3958 = vunpack.c.l.b16 %v3926
    %v3959 = vunpack.c.l.b16 %v3927
    %v3960 = vunpack.c.l.b16 %v3928
    %v3961 = vunpack.c.l.b16 %v3929
    %v3962 = vunpack.c.l.b16 %v3930
    %v3963 = vunpack.c.l.b16 %v3931
    %v3964 = vunpack.c.l.b16 %v3932
    %v3965 = vunpack.c.l.b16 %v3933
    %v3966 = vunpack.c.l.b16 %v3934
    %v3967 = vunpack.c.l.b16 %v3935
    %v3968 = vunpack.c.l.b16 %v3936
    %v3969 = vunpack.c.l.b16 %v3937
    %v3970 = vunpack.c.l.b16 %v3938
    %v3971 = vunpack.c.l.b16 %v3939
    %v3972 = vunpack.c.l.b16 %v3940
    %v3973 = vunpack.c.l.b16 %v3941
    %v3974 = vpack.c.b16 %v3959, %v3958
    %v3975 = vpack.c.b16 %v3961, %v3960
    %v3976 = vpack.c.b16 %v3963, %v3962
    %v3977 = vpack.c.b16 %v3965, %v3964
    %v3978 = vpack.c.b16 %v3967, %v3966
    %v3979 = vpack.c.b16 %v3969, %v3968
    %v3980 = vpack.c.b16 %v3971, %v3970
    %v3981 = vpack.c.b16 %v3973, %v3972
    %3990 = vmatprep.subr.bf16.mxu0 0
    %3991 = vmatpush1.bf16.msra.mxu0 %v3974
    %3992 = vmatprep.subr.bf16.mxu0 0
    %3993 = vmatpush1.bf16.msra.mxu0 %v3975
    %3994 = vmatprep.subr.bf16.mxu0 0
    %3995 = vmatpush1.bf16.msra.mxu0 %v3976
    %3996 = vmatprep.subr.bf16.mxu0 0
    %3997 = vmatpush1.bf16.msra.mxu0 %v3977
    %3998 = vmatprep.subr.bf16.mxu0 0
    %3999 = vmatpush1.bf16.msra.mxu0 %v3978
    %4000 = vmatprep.subr.bf16.mxu0 0
    %4001 = vmatpush1.bf16.msra.mxu0 %v3979
    %4002 = vmatprep.subr.bf16.mxu0 0
    %4003 = vmatpush1.bf16.msra.mxu0 %v3980
    %4004 = vmatprep.subr.bf16.mxu0 0
    %4005 = vmatpush1.bf16.msra.mxu0 %v3981
    %4006 = vmatprep.subr.bf16.mxu0 0
    %4007 = vmatpush1.bf16.msra.mxu0 0
    %4008 = vmatprep.subr.bf16.mxu0 0
    %4009 = vmatpush1.bf16.msra.mxu0 0
    %4010 = vmatprep.subr.bf16.mxu0 0
    %4011 = vmatpush1.bf16.msra.mxu0 0
    %4012 = vmatprep.subr.bf16.mxu0 0
    %4013 = vmatpush1.bf16.msra.mxu0 0
    %4014 = vmatprep.subr.bf16.mxu0 0
    %4015 = vmatpush1.bf16.msra.mxu0 0
    %4016 = vmatprep.subr.bf16.mxu0 0
    %4017 = vmatpush1.bf16.msra.mxu0 0
    %4018 = vmatprep.subr.bf16.mxu0 0
    %4019 = vmatpush1.bf16.msra.mxu0 0
    %4020 = vmatprep.subr.bf16.mxu0 0
    %4021 = vmatpush1.bf16.msra.mxu0 0
    %4022 = vmatprep.mubr.bf16.mxu0 0
    %4023 = vmatmul.mubr.bf16.gmra.mrb[0].mxu0 %v3924
    %v4024 = vpop.f32.mrb[0].mxu0
    %v4025 = vadd.f32 0.0, %v4024
    %v4026 = vpop.f32.mrb[0].mxu0
    %v4027 = vpop.f32.mrb[0].mxu0
    %v4028 = vpop.f32.mrb[0].mxu0
    %4029 = vdwg.mxu0
    %v4030 = vadd.f32 %v3854, %v4025
    %s4031 = scalar_lea.vmem %s0, 44
    %v4032 = vld [vmem:[%s4031] sm:$0x3]
    %v4035 = vunpack.c.l.s4 1966171168
    %v4036 = vunpack.c.0.s8 %v4035
    %v4037 = vlaneseq
    %v4038 = vshrl.u32 %v4037, 7
    %v4039 = vsub.s32 %v4036, %v4038
    %v4040 = vrot.slane %v4032, %v4039
    %v4041 = vcombine.high %v4040, %v4040
    %v4043 = vunpack.c.l.s4 1966171168
    %v4044 = vunpack.c.0.s8 %v4043
    %v4045 = vlaneseq
    %v4046 = vshrl.u32 %v4045, 7
    %v4047 = vsub.s32 %v4044, %v4046
    %v4048 = vrot.slane %v4040, %v4047
    %v4050 = vunpack.c.l.s4 1966171168
    %v4051 = vunpack.c.0.s8 %v4050
    %v4052 = vlaneseq
    %v4053 = vshrl.u32 %v4052, 7
    %v4054 = vsub.s32 %v4051, %v4053
    %v4055 = vrot.slane %v4041, %v4054
    %4058 = vmatprep.subr.bf16.mxu0 0
    %4059 = vmatpush1.bf16.msra.mxu0 %v157
    %4060 = vmatprep.subr.bf16.mxu0 0
    %4061 = vmatpush1.bf16.msra.mxu0 %v158
    %4062 = vmatprep.subr.bf16.mxu0 0
    %4063 = vmatpush1.bf16.msra.mxu0 %v159
    %4064 = vmatprep.subr.bf16.mxu0 0
    %4065 = vmatpush1.bf16.msra.mxu0 %v160
    %4066 = vmatprep.subr.bf16.mxu0 0
    %4067 = vmatpush1.bf16.msra.mxu0 %v161
    %4068 = vmatprep.subr.bf16.mxu0 0
    %4069 = vmatpush1.bf16.msra.mxu0 %v162
    %4070 = vmatprep.subr.bf16.mxu0 0
    %4071 = vmatpush1.bf16.msra.mxu0 %v163
    %4072 = vmatprep.subr.bf16.mxu0 0
    %4073 = vmatpush1.bf16.msra.mxu0 %v164
    %4074 = vmatprep.subr.bf16.mxu0 0
    %4075 = vmatpush1.bf16.msra.mxu0 %v165
    %4076 = vmatprep.subr.bf16.mxu0 0
    %4077 = vmatpush1.bf16.msra.mxu0 %v166
    %4078 = vmatprep.subr.bf16.mxu0 0
    %4079 = vmatpush1.bf16.msra.mxu0 %v167
    %4080 = vmatprep.subr.bf16.mxu0 0
    %4081 = vmatpush1.bf16.msra.mxu0 %v168
    %4082 = vmatprep.subr.bf16.mxu0 0
    %4083 = vmatpush1.bf16.msra.mxu0 %v169
    %4084 = vmatprep.subr.bf16.mxu0 0
    %4085 = vmatpush1.bf16.msra.mxu0 %v170
    %4086 = vmatprep.subr.bf16.mxu0 0
    %4087 = vmatpush1.bf16.msra.mxu0 %v171
    %4088 = vmatprep.subr.bf16.mxu0 0
    %4089 = vmatpush1.bf16.msra.mxu0 %v172
    %4090 = vmatprep.mubr.bf16.mxu0 %v4055
    %4091 = vmatmul.mubr.bf16.gmra.mrb[0].mxu0 %v4048
    %v4092 = vpop.f32.mrb[0].mxu0
    %v4093 = vadd.f32 %v66, %v4092
    %v4094 = vpop.f32.mrb[0].mxu0
    %v4095 = vpop.f32.mrb[0].mxu0
    %v4096 = vpop.f32.mrb[0].mxu0
    %4097 = vdwg.mxu0
    %vm4098 = vcmp.ge.f32.partialorder %v4093, 0.0
    %v4099 = vsel %vm4098, 1.0, 0.0
    %v4100 = vpack.c.bf16 %v4099, %v4099
    %s4101 = scalar_lea.vmem %s3, 1408
    %v4102 = vld [vmem:[%s4101] sm:$0xf]
    %v4103 = vld [vmem:[%s4101 + $0x4] sm:$0xf]
    %v4104 = vld [vmem:[%s4101 + $0x8] sm:$0xf]
    %v4105 = vld [vmem:[%s4101 + $0xc] sm:$0xf]
    %v4106 = vld [vmem:[%s4101 + $0x10] sm:$0xf]
    %v4107 = vld [vmem:[%s4101 + $0x14] sm:$0xf]
    %v4108 = vld [vmem:[%s4101 + $0x18] sm:$0xf]
    %v4109 = vld [vmem:[%s4101 + $0x1c] sm:$0xf]
    %v4110 = vld [vmem:[%s4101 + $0x20] sm:$0xf]
    %v4111 = vld [vmem:[%s4101 + $0x24] sm:$0xf]
    %v4112 = vld [vmem:[%s4101 + $0x28] sm:$0xf]
    %v4113 = vld [vmem:[%s4101 + $0x2c] sm:$0xf]
    %v4114 = vld [vmem:[%s4101 + $0x30] sm:$0xf]
    %v4115 = vld [vmem:[%s4101 + $0x34] sm:$0xf]
    %v4116 = vld [vmem:[%s4101 + $0x38] sm:$0xf]
    %v4117 = vld [vmem:[%s4101 + $0x3c] sm:$0xf]
    %v4134 = vunpack.c.l.b16 %v4102
    %v4135 = vunpack.c.l.b16 %v4103
    %v4136 = vunpack.c.l.b16 %v4104
    %v4137 = vunpack.c.l.b16 %v4105
    %v4138 = vunpack.c.l.b16 %v4106
    %v4139 = vunpack.c.l.b16 %v4107
    %v4140 = vunpack.c.l.b16 %v4108
    %v4141 = vunpack.c.l.b16 %v4109
    %v4142 = vunpack.c.l.b16 %v4110
    %v4143 = vunpack.c.l.b16 %v4111
    %v4144 = vunpack.c.l.b16 %v4112
    %v4145 = vunpack.c.l.b16 %v4113
    %v4146 = vunpack.c.l.b16 %v4114
    %v4147 = vunpack.c.l.b16 %v4115
    %v4148 = vunpack.c.l.b16 %v4116
    %v4149 = vunpack.c.l.b16 %v4117
    %v4150 = vpack.c.b16 %v4135, %v4134
    %v4151 = vpack.c.b16 %v4137, %v4136
    %v4152 = vpack.c.b16 %v4139, %v4138
    %v4153 = vpack.c.b16 %v4141, %v4140
    %v4154 = vpack.c.b16 %v4143, %v4142
    %v4155 = vpack.c.b16 %v4145, %v4144
    %v4156 = vpack.c.b16 %v4147, %v4146
    %v4157 = vpack.c.b16 %v4149, %v4148
    %4166 = vmatprep.subr.bf16.mxu0 0
    %4167 = vmatpush1.bf16.msra.mxu0 %v4150
    %4168 = vmatprep.subr.bf16.mxu0 0
    %4169 = vmatpush1.bf16.msra.mxu0 %v4151
    %4170 = vmatprep.subr.bf16.mxu0 0
    %4171 = vmatpush1.bf16.msra.mxu0 %v4152
    %4172 = vmatprep.subr.bf16.mxu0 0
    %4173 = vmatpush1.bf16.msra.mxu0 %v4153
    %4174 = vmatprep.subr.bf16.mxu0 0
    %4175 = vmatpush1.bf16.msra.mxu0 %v4154
    %4176 = vmatprep.subr.bf16.mxu0 0
    %4177 = vmatpush1.bf16.msra.mxu0 %v4155
    %4178 = vmatprep.subr.bf16.mxu0 0
    %4179 = vmatpush1.bf16.msra.mxu0 %v4156
    %4180 = vmatprep.subr.bf16.mxu0 0
    %4181 = vmatpush1.bf16.msra.mxu0 %v4157
    %4182 = vmatprep.subr.bf16.mxu0 0
    %4183 = vmatpush1.bf16.msra.mxu0 0
    %4184 = vmatprep.subr.bf16.mxu0 0
    %4185 = vmatpush1.bf16.msra.mxu0 0
    %4186 = vmatprep.subr.bf16.mxu0 0
    %4187 = vmatpush1.bf16.msra.mxu0 0
    %4188 = vmatprep.subr.bf16.mxu0 0
    %4189 = vmatpush1.bf16.msra.mxu0 0
    %4190 = vmatprep.subr.bf16.mxu0 0
    %4191 = vmatpush1.bf16.msra.mxu0 0
    %4192 = vmatprep.subr.bf16.mxu0 0
    %4193 = vmatpush1.bf16.msra.mxu0 0
    %4194 = vmatprep.subr.bf16.mxu0 0
    %4195 = vmatpush1.bf16.msra.mxu0 0
    %4196 = vmatprep.subr.bf16.mxu0 0
    %4197 = vmatpush1.bf16.msra.mxu0 0
    %4198 = vmatprep.mubr.bf16.mxu0 0
    %4199 = vmatmul.mubr.bf16.gmra.mrb[0].mxu0 %v4100
    %v4200 = vpop.f32.mrb[0].mxu0
    %v4201 = vadd.f32 0.0, %v4200
    %v4202 = vpop.f32.mrb[0].mxu0
    %v4203 = vpop.f32.mrb[0].mxu0
    %v4204 = vpop.f32.mrb[0].mxu0
    %4205 = vdwg.mxu0
    %v4206 = vadd.f32 %v4030, %v4201
    %s4207 = scalar_lea.vmem %s0, 46
    %v4208 = vld [vmem:[%s4207] sm:$0x3]
    %v4211 = vunpack.c.l.s4 1966171168
    %v4212 = vunpack.c.0.s8 %v4211
    %v4213 = vlaneseq
    %v4214 = vshrl.u32 %v4213, 7
    %v4215 = vsub.s32 %v4212, %v4214
    %v4216 = vrot.slane %v4208, %v4215
    %v4217 = vcombine.high %v4216, %v4216
    %v4219 = vunpack.c.l.s4 1966171168
    %v4220 = vunpack.c.0.s8 %v4219
    %v4221 = vlaneseq
    %v4222 = vshrl.u32 %v4221, 7
    %v4223 = vsub.s32 %v4220, %v4222
    %v4224 = vrot.slane %v4216, %v4223
    %v4226 = vunpack.c.l.s4 1966171168
    %v4227 = vunpack.c.0.s8 %v4226
    %v4228 = vlaneseq
    %v4229 = vshrl.u32 %v4228, 7
    %v4230 = vsub.s32 %v4227, %v4229
    %v4231 = vrot.slane %v4217, %v4230
    %4234 = vmatprep.subr.bf16.mxu0 0
    %4235 = vmatpush1.bf16.msra.mxu0 %v157
    %4236 = vmatprep.subr.bf16.mxu0 0
    %4237 = vmatpush1.bf16.msra.mxu0 %v158
    %4238 = vmatprep.subr.bf16.mxu0 0
    %4239 = vmatpush1.bf16.msra.mxu0 %v159
    %4240 = vmatprep.subr.bf16.mxu0 0
    %4241 = vmatpush1.bf16.msra.mxu0 %v160
    %4242 = vmatprep.subr.bf16.mxu0 0
    %4243 = vmatpush1.bf16.msra.mxu0 %v161
    %4244 = vmatprep.subr.bf16.mxu0 0
    %4245 = vmatpush1.bf16.msra.mxu0 %v162
    %4246 = vmatprep.subr.bf16.mxu0 0
    %4247 = vmatpush1.bf16.msra.mxu0 %v163
    %4248 = vmatprep.subr.bf16.mxu0 0
    %4249 = vmatpush1.bf16.msra.mxu0 %v164
    %4250 = vmatprep.subr.bf16.mxu0 0
    %4251 = vmatpush1.bf16.msra.mxu0 %v165
    %4252 = vmatprep.subr.bf16.mxu0 0
    %4253 = vmatpush1.bf16.msra.mxu0 %v166
    %4254 = vmatprep.subr.bf16.mxu0 0
    %4255 = vmatpush1.bf16.msra.mxu0 %v167
    %4256 = vmatprep.subr.bf16.mxu0 0
    %4257 = vmatpush1.bf16.msra.mxu0 %v168
    %4258 = vmatprep.subr.bf16.mxu0 0
    %4259 = vmatpush1.bf16.msra.mxu0 %v169
    %4260 = vmatprep.subr.bf16.mxu0 0
    %4261 = vmatpush1.bf16.msra.mxu0 %v170
    %4262 = vmatprep.subr.bf16.mxu0 0
    %4263 = vmatpush1.bf16.msra.mxu0 %v171
    %4264 = vmatprep.subr.bf16.mxu0 0
    %4265 = vmatpush1.bf16.msra.mxu0 %v172
    %4266 = vmatprep.mubr.bf16.mxu0 %v4231
    %4267 = vmatmul.mubr.bf16.gmra.mrb[0].mxu0 %v4224
    %v4268 = vpop.f32.mrb[0].mxu0
    %v4269 = vadd.f32 %v66, %v4268
    %v4270 = vpop.f32.mrb[0].mxu0
    %v4271 = vpop.f32.mrb[0].mxu0
    %v4272 = vpop.f32.mrb[0].mxu0
    %4273 = vdwg.mxu0
    %vm4274 = vcmp.ge.f32.partialorder %v4269, 0.0
    %v4275 = vsel %vm4274, 1.0, 0.0
    %v4276 = vpack.c.bf16 %v4275, %v4275
    %s4277 = scalar_lea.vmem %s3, 1472
    %v4278 = vld [vmem:[%s4277] sm:$0xf]
    %v4279 = vld [vmem:[%s4277 + $0x4] sm:$0xf]
    %v4280 = vld [vmem:[%s4277 + $0x8] sm:$0xf]
    %v4281 = vld [vmem:[%s4277 + $0xc] sm:$0xf]
    %v4282 = vld [vmem:[%s4277 + $0x10] sm:$0xf]
    %v4283 = vld [vmem:[%s4277 + $0x14] sm:$0xf]
    %v4284 = vld [vmem:[%s4277 + $0x18] sm:$0xf]
    %v4285 = vld [vmem:[%s4277 + $0x1c] sm:$0xf]
    %v4286 = vld [vmem:[%s4277 + $0x20] sm:$0xf]
    %v4287 = vld [vmem:[%s4277 + $0x24] sm:$0xf]
    %v4288 = vld [vmem:[%s4277 + $0x28] sm:$0xf]
    %v4289 = vld [vmem:[%s4277 + $0x2c] sm:$0xf]
    %v4290 = vld [vmem:[%s4277 + $0x30] sm:$0xf]
    %v4291 = vld [vmem:[%s4277 + $0x34] sm:$0xf]
    %v4292 = vld [vmem:[%s4277 + $0x38] sm:$0xf]
    %v4293 = vld [vmem:[%s4277 + $0x3c] sm:$0xf]
    %v4310 = vunpack.c.l.b16 %v4278
    %v4311 = vunpack.c.l.b16 %v4279
    %v4312 = vunpack.c.l.b16 %v4280
    %v4313 = vunpack.c.l.b16 %v4281
    %v4314 = vunpack.c.l.b16 %v4282
    %v4315 = vunpack.c.l.b16 %v4283
    %v4316 = vunpack.c.l.b16 %v4284
    %v4317 = vunpack.c.l.b16 %v4285
    %v4318 = vunpack.c.l.b16 %v4286
    %v4319 = vunpack.c.l.b16 %v4287
    %v4320 = vunpack.c.l.b16 %v4288
    %v4321 = vunpack.c.l.b16 %v4289
    %v4322 = vunpack.c.l.b16 %v4290
    %v4323 = vunpack.c.l.b16 %v4291
    %v4324 = vunpack.c.l.b16 %v4292
    %v4325 = vunpack.c.l.b16 %v4293
    %v4326 = vpack.c.b16 %v4311, %v4310
    %v4327 = vpack.c.b16 %v4313, %v4312
    %v4328 = vpack.c.b16 %v4315, %v4314
    %v4329 = vpack.c.b16 %v4317, %v4316
    %v4330 = vpack.c.b16 %v4319, %v4318
    %v4331 = vpack.c.b16 %v4321, %v4320
    %v4332 = vpack.c.b16 %v4323, %v4322
    %v4333 = vpack.c.b16 %v4325, %v4324
    %4342 = vmatprep.subr.bf16.mxu0 0
    %4343 = vmatpush1.bf16.msra.mxu0 %v4326
    %4344 = vmatprep.subr.bf16.mxu0 0
    %4345 = vmatpush1.bf16.msra.mxu0 %v4327
    %4346 = vmatprep.subr.bf16.mxu0 0
    %4347 = vmatpush1.bf16.msra.mxu0 %v4328
    %4348 = vmatprep.subr.bf16.mxu0 0
    %4349 = vmatpush1.bf16.msra.mxu0 %v4329
    %4350 = vmatprep.subr.bf16.mxu0 0
    %4351 = vmatpush1.bf16.msra.mxu0 %v4330
    %4352 = vmatprep.subr.bf16.mxu0 0
    %4353 = vmatpush1.bf16.msra.mxu0 %v4331
    %4354 = vmatprep.subr.bf16.mxu0 0
    %4355 = vmatpush1.bf16.msra.mxu0 %v4332
    %4356 = vmatprep.subr.bf16.mxu0 0
    %4357 = vmatpush1.bf16.msra.mxu0 %v4333
    %4358 = vmatprep.subr.bf16.mxu0 0
    %4359 = vmatpush1.bf16.msra.mxu0 0
    %4360 = vmatprep.subr.bf16.mxu0 0
    %4361 = vmatpush1.bf16.msra.mxu0 0
    %4362 = vmatprep.subr.bf16.mxu0 0
    %4363 = vmatpush1.bf16.msra.mxu0 0
    %4364 = vmatprep.subr.bf16.mxu0 0
    %4365 = vmatpush1.bf16.msra.mxu0 0
    %4366 = vmatprep.subr.bf16.mxu0 0
    %4367 = vmatpush1.bf16.msra.mxu0 0
    %4368 = vmatprep.subr.bf16.mxu0 0
    %4369 = vmatpush1.bf16.msra.mxu0 0
    %4370 = vmatprep.subr.bf16.mxu0 0
    %4371 = vmatpush1.bf16.msra.mxu0 0
    %4372 = vmatprep.subr.bf16.mxu0 0
    %4373 = vmatpush1.bf16.msra.mxu0 0
    %4374 = vmatprep.mubr.bf16.mxu0 0
    %4375 = vmatmul.mubr.bf16.gmra.mrb[0].mxu0 %v4276
    %v4376 = vpop.f32.mrb[0].mxu0
    %v4377 = vadd.f32 0.0, %v4376
    %v4378 = vpop.f32.mrb[0].mxu0
    %v4379 = vpop.f32.mrb[0].mxu0
    %v4380 = vpop.f32.mrb[0].mxu0
    %4381 = vdwg.mxu0
    %v4382 = vadd.f32 %v4206, %v4377
    %s4383 = scalar_lea.vmem %s0, 48
    %v4384 = vld [vmem:[%s4383] sm:$0x3]
    %v4387 = vunpack.c.l.s4 1966171168
    %v4388 = vunpack.c.0.s8 %v4387
    %v4389 = vlaneseq
    %v4390 = vshrl.u32 %v4389, 7
    %v4391 = vsub.s32 %v4388, %v4390
    %v4392 = vrot.slane %v4384, %v4391
    %v4393 = vcombine.high %v4392, %v4392
    %v4395 = vunpack.c.l.s4 1966171168
    %v4396 = vunpack.c.0.s8 %v4395
    %v4397 = vlaneseq
    %v4398 = vshrl.u32 %v4397, 7
    %v4399 = vsub.s32 %v4396, %v4398
    %v4400 = vrot.slane %v4392, %v4399
    %v4402 = vunpack.c.l.s4 1966171168
    %v4403 = vunpack.c.0.s8 %v4402
    %v4404 = vlaneseq
    %v4405 = vshrl.u32 %v4404, 7
    %v4406 = vsub.s32 %v4403, %v4405
    %v4407 = vrot.slane %v4393, %v4406
    %4410 = vmatprep.subr.bf16.mxu0 0
    %4411 = vmatpush1.bf16.msra.mxu0 %v157
    %4412 = vmatprep.subr.bf16.mxu0 0
    %4413 = vmatpush1.bf16.msra.mxu0 %v158
    %4414 = vmatprep.subr.bf16.mxu0 0
    %4415 = vmatpush1.bf16.msra.mxu0 %v159
    %4416 = vmatprep.subr.bf16.mxu0 0
    %4417 = vmatpush1.bf16.msra.mxu0 %v160
    %4418 = vmatprep.subr.bf16.mxu0 0
    %4419 = vmatpush1.bf16.msra.mxu0 %v161
    %4420 = vmatprep.subr.bf16.mxu0 0
    %4421 = vmatpush1.bf16.msra.mxu0 %v162
    %4422 = vmatprep.subr.bf16.mxu0 0
    %4423 = vmatpush1.bf16.msra.mxu0 %v163
    %4424 = vmatprep.subr.bf16.mxu0 0
    %4425 = vmatpush1.bf16.msra.mxu0 %v164
    %4426 = vmatprep.subr.bf16.mxu0 0
    %4427 = vmatpush1.bf16.msra.mxu0 %v165
    %4428 = vmatprep.subr.bf16.mxu0 0
    %4429 = vmatpush1.bf16.msra.mxu0 %v166
    %4430 = vmatprep.subr.bf16.mxu0 0
    %4431 = vmatpush1.bf16.msra.mxu0 %v167
    %4432 = vmatprep.subr.bf16.mxu0 0
    %4433 = vmatpush1.bf16.msra.mxu0 %v168
    %4434 = vmatprep.subr.bf16.mxu0 0
    %4435 = vmatpush1.bf16.msra.mxu0 %v169
    %4436 = vmatprep.subr.bf16.mxu0 0
    %4437 = vmatpush1.bf16.msra.mxu0 %v170
    %4438 = vmatprep.subr.bf16.mxu0 0
    %4439 = vmatpush1.bf16.msra.mxu0 %v171
    %4440 = vmatprep.subr.bf16.mxu0 0
    %4441 = vmatpush1.bf16.msra.mxu0 %v172
    %4442 = vmatprep.mubr.bf16.mxu0 %v4407
    %4443 = vmatmul.mubr.bf16.gmra.mrb[0].mxu0 %v4400
    %v4444 = vpop.f32.mrb[0].mxu0
    %v4445 = vadd.f32 %v66, %v4444
    %v4446 = vpop.f32.mrb[0].mxu0
    %v4447 = vpop.f32.mrb[0].mxu0
    %v4448 = vpop.f32.mrb[0].mxu0
    %4449 = vdwg.mxu0
    %vm4450 = vcmp.ge.f32.partialorder %v4445, 0.0
    %v4451 = vsel %vm4450, 1.0, 0.0
    %v4452 = vpack.c.bf16 %v4451, %v4451
    %s4453 = scalar_lea.vmem %s3, 1536
    %v4454 = vld [vmem:[%s4453] sm:$0xf]
    %v4455 = vld [vmem:[%s4453 + $0x4] sm:$0xf]
    %v4456 = vld [vmem:[%s4453 + $0x8] sm:$0xf]
    %v4457 = vld [vmem:[%s4453 + $0xc] sm:$0xf]
    %v4458 = vld [vmem:[%s4453 + $0x10] sm:$0xf]
    %v4459 = vld [vmem:[%s4453 + $0x14] sm:$0xf]
    %v4460 = vld [vmem:[%s4453 + $0x18] sm:$0xf]
    %v4461 = vld [vmem:[%s4453 + $0x1c] sm:$0xf]
    %v4462 = vld [vmem:[%s4453 + $0x20] sm:$0xf]
    %v4463 = vld [vmem:[%s4453 + $0x24] sm:$0xf]
    %v4464 = vld [vmem:[%s4453 + $0x28] sm:$0xf]
    %v4465 = vld [vmem:[%s4453 + $0x2c] sm:$0xf]
    %v4466 = vld [vmem:[%s4453 + $0x30] sm:$0xf]
    %v4467 = vld [vmem:[%s4453 + $0x34] sm:$0xf]
    %v4468 = vld [vmem:[%s4453 + $0x38] sm:$0xf]
    %v4469 = vld [vmem:[%s4453 + $0x3c] sm:$0xf]
    %v4486 = vunpack.c.l.b16 %v4454
    %v4487 = vunpack.c.l.b16 %v4455
    %v4488 = vunpack.c.l.b16 %v4456
    %v4489 = vunpack.c.l.b16 %v4457
    %v4490 = vunpack.c.l.b16 %v4458
    %v4491 = vunpack.c.l.b16 %v4459
    %v4492 = vunpack.c.l.b16 %v4460
    %v4493 = vunpack.c.l.b16 %v4461
    %v4494 = vunpack.c.l.b16 %v4462
    %v4495 = vunpack.c.l.b16 %v4463
    %v4496 = vunpack.c.l.b16 %v4464
    %v4497 = vunpack.c.l.b16 %v4465
    %v4498 = vunpack.c.l.b16 %v4466
    %v4499 = vunpack.c.l.b16 %v4467
    %v4500 = vunpack.c.l.b16 %v4468
    %v4501 = vunpack.c.l.b16 %v4469
    %v4502 = vpack.c.b16 %v4487, %v4486
    %v4503 = vpack.c.b16 %v4489, %v4488
    %v4504 = vpack.c.b16 %v4491, %v4490
    %v4505 = vpack.c.b16 %v4493, %v4492
    %v4506 = vpack.c.b16 %v4495, %v4494
    %v4507 = vpack.c.b16 %v4497, %v4496
    %v4508 = vpack.c.b16 %v4499, %v4498
    %v4509 = vpack.c.b16 %v4501, %v4500
    %4518 = vmatprep.subr.bf16.mxu0 0
    %4519 = vmatpush1.bf16.msra.mxu0 %v4502
    %4520 = vmatprep.subr.bf16.mxu0 0
    %4521 = vmatpush1.bf16.msra.mxu0 %v4503
    %4522 = vmatprep.subr.bf16.mxu0 0
    %4523 = vmatpush1.bf16.msra.mxu0 %v4504
    %4524 = vmatprep.subr.bf16.mxu0 0
    %4525 = vmatpush1.bf16.msra.mxu0 %v4505
    %4526 = vmatprep.subr.bf16.mxu0 0
    %4527 = vmatpush1.bf16.msra.mxu0 %v4506
    %4528 = vmatprep.subr.bf16.mxu0 0
    %4529 = vmatpush1.bf16.msra.mxu0 %v4507
    %4530 = vmatprep.subr.bf16.mxu0 0
    %4531 = vmatpush1.bf16.msra.mxu0 %v4508
    %4532 = vmatprep.subr.bf16.mxu0 0
    %4533 = vmatpush1.bf16.msra.mxu0 %v4509
    %4534 = vmatprep.subr.bf16.mxu0 0
    %4535 = vmatpush1.bf16.msra.mxu0 0
    %4536 = vmatprep.subr.bf16.mxu0 0
    %4537 = vmatpush1.bf16.msra.mxu0 0
    %4538 = vmatprep.subr.bf16.mxu0 0
    %4539 = vmatpush1.bf16.msra.mxu0 0
    %4540 = vmatprep.subr.bf16.mxu0 0
    %4541 = vmatpush1.bf16.msra.mxu0 0
    %4542 = vmatprep.subr.bf16.mxu0 0
    %4543 = vmatpush1.bf16.msra.mxu0 0
    %4544 = vmatprep.subr.bf16.mxu0 0
    %4545 = vmatpush1.bf16.msra.mxu0 0
    %4546 = vmatprep.subr.bf16.mxu0 0
    %4547 = vmatpush1.bf16.msra.mxu0 0
    %4548 = vmatprep.subr.bf16.mxu0 0
    %4549 = vmatpush1.bf16.msra.mxu0 0
    %4550 = vmatprep.mubr.bf16.mxu0 0
    %4551 = vmatmul.mubr.bf16.gmra.mrb[0].mxu0 %v4452
    %v4552 = vpop.f32.mrb[0].mxu0
    %v4553 = vadd.f32 0.0, %v4552
    %v4554 = vpop.f32.mrb[0].mxu0
    %v4555 = vpop.f32.mrb[0].mxu0
    %v4556 = vpop.f32.mrb[0].mxu0
    %4557 = vdwg.mxu0
    %v4558 = vadd.f32 %v4382, %v4553
    %s4559 = scalar_lea.vmem %s0, 50
    %v4560 = vld [vmem:[%s4559] sm:$0x3]
    %v4563 = vunpack.c.l.s4 1966171168
    %v4564 = vunpack.c.0.s8 %v4563
    %v4565 = vlaneseq
    %v4566 = vshrl.u32 %v4565, 7
    %v4567 = vsub.s32 %v4564, %v4566
    %v4568 = vrot.slane %v4560, %v4567
    %v4569 = vcombine.high %v4568, %v4568
    %v4571 = vunpack.c.l.s4 1966171168
    %v4572 = vunpack.c.0.s8 %v4571
    %v4573 = vlaneseq
    %v4574 = vshrl.u32 %v4573, 7
    %v4575 = vsub.s32 %v4572, %v4574
    %v4576 = vrot.slane %v4568, %v4575
    %v4578 = vunpack.c.l.s4 1966171168
    %v4579 = vunpack.c.0.s8 %v4578
    %v4580 = vlaneseq
    %v4581 = vshrl.u32 %v4580, 7
    %v4582 = vsub.s32 %v4579, %v4581
    %v4583 = vrot.slane %v4569, %v4582
    %4586 = vmatprep.subr.bf16.mxu0 0
    %4587 = vmatpush1.bf16.msra.mxu0 %v157
    %4588 = vmatprep.subr.bf16.mxu0 0
    %4589 = vmatpush1.bf16.msra.mxu0 %v158
    %4590 = vmatprep.subr.bf16.mxu0 0
    %4591 = vmatpush1.bf16.msra.mxu0 %v159
    %4592 = vmatprep.subr.bf16.mxu0 0
    %4593 = vmatpush1.bf16.msra.mxu0 %v160
    %4594 = vmatprep.subr.bf16.mxu0 0
    %4595 = vmatpush1.bf16.msra.mxu0 %v161
    %4596 = vmatprep.subr.bf16.mxu0 0
    %4597 = vmatpush1.bf16.msra.mxu0 %v162
    %4598 = vmatprep.subr.bf16.mxu0 0
    %4599 = vmatpush1.bf16.msra.mxu0 %v163
    %4600 = vmatprep.subr.bf16.mxu0 0
    %4601 = vmatpush1.bf16.msra.mxu0 %v164
    %4602 = vmatprep.subr.bf16.mxu0 0
    %4603 = vmatpush1.bf16.msra.mxu0 %v165
    %4604 = vmatprep.subr.bf16.mxu0 0
    %4605 = vmatpush1.bf16.msra.mxu0 %v166
    %4606 = vmatprep.subr.bf16.mxu0 0
    %4607 = vmatpush1.bf16.msra.mxu0 %v167
    %4608 = vmatprep.subr.bf16.mxu0 0
    %4609 = vmatpush1.bf16.msra.mxu0 %v168
    %4610 = vmatprep.subr.bf16.mxu0 0
    %4611 = vmatpush1.bf16.msra.mxu0 %v169
    %4612 = vmatprep.subr.bf16.mxu0 0
    %4613 = vmatpush1.bf16.msra.mxu0 %v170
    %4614 = vmatprep.subr.bf16.mxu0 0
    %4615 = vmatpush1.bf16.msra.mxu0 %v171
    %4616 = vmatprep.subr.bf16.mxu0 0
    %4617 = vmatpush1.bf16.msra.mxu0 %v172
    %4618 = vmatprep.mubr.bf16.mxu0 %v4583
    %4619 = vmatmul.mubr.bf16.gmra.mrb[0].mxu0 %v4576
    %v4620 = vpop.f32.mrb[0].mxu0
    %v4621 = vadd.f32 %v66, %v4620
    %v4622 = vpop.f32.mrb[0].mxu0
    %v4623 = vpop.f32.mrb[0].mxu0
    %v4624 = vpop.f32.mrb[0].mxu0
    %4625 = vdwg.mxu0
    %vm4626 = vcmp.ge.f32.partialorder %v4621, 0.0
    %v4627 = vsel %vm4626, 1.0, 0.0
    %v4628 = vpack.c.bf16 %v4627, %v4627
    %s4629 = scalar_lea.vmem %s3, 1600
    %v4630 = vld [vmem:[%s4629] sm:$0xf]
    %v4631 = vld [vmem:[%s4629 + $0x4] sm:$0xf]
    %v4632 = vld [vmem:[%s4629 + $0x8] sm:$0xf]
    %v4633 = vld [vmem:[%s4629 + $0xc] sm:$0xf]
    %v4634 = vld [vmem:[%s4629 + $0x10] sm:$0xf]
    %v4635 = vld [vmem:[%s4629 + $0x14] sm:$0xf]
    %v4636 = vld [vmem:[%s4629 + $0x18] sm:$0xf]
    %v4637 = vld [vmem:[%s4629 + $0x1c] sm:$0xf]
    %v4638 = vld [vmem:[%s4629 + $0x20] sm:$0xf]
    %v4639 = vld [vmem:[%s4629 + $0x24] sm:$0xf]
    %v4640 = vld [vmem:[%s4629 + $0x28] sm:$0xf]
    %v4641 = vld [vmem:[%s4629 + $0x2c] sm:$0xf]
    %v4642 = vld [vmem:[%s4629 + $0x30] sm:$0xf]
    %v4643 = vld [vmem:[%s4629 + $0x34] sm:$0xf]
    %v4644 = vld [vmem:[%s4629 + $0x38] sm:$0xf]
    %v4645 = vld [vmem:[%s4629 + $0x3c] sm:$0xf]
    %v4662 = vunpack.c.l.b16 %v4630
    %v4663 = vunpack.c.l.b16 %v4631
    %v4664 = vunpack.c.l.b16 %v4632
    %v4665 = vunpack.c.l.b16 %v4633
    %v4666 = vunpack.c.l.b16 %v4634
    %v4667 = vunpack.c.l.b16 %v4635
    %v4668 = vunpack.c.l.b16 %v4636
    %v4669 = vunpack.c.l.b16 %v4637
    %v4670 = vunpack.c.l.b16 %v4638
    %v4671 = vunpack.c.l.b16 %v4639
    %v4672 = vunpack.c.l.b16 %v4640
    %v4673 = vunpack.c.l.b16 %v4641
    %v4674 = vunpack.c.l.b16 %v4642
    %v4675 = vunpack.c.l.b16 %v4643
    %v4676 = vunpack.c.l.b16 %v4644
    %v4677 = vunpack.c.l.b16 %v4645
    %v4678 = vpack.c.b16 %v4663, %v4662
    %v4679 = vpack.c.b16 %v4665, %v4664
    %v4680 = vpack.c.b16 %v4667, %v4666
    %v4681 = vpack.c.b16 %v4669, %v4668
    %v4682 = vpack.c.b16 %v4671, %v4670
    %v4683 = vpack.c.b16 %v4673, %v4672
    %v4684 = vpack.c.b16 %v4675, %v4674
    %v4685 = vpack.c.b16 %v4677, %v4676
    %4694 = vmatprep.subr.bf16.mxu0 0
    %4695 = vmatpush1.bf16.msra.mxu0 %v4678
    %4696 = vmatprep.subr.bf16.mxu0 0
    %4697 = vmatpush1.bf16.msra.mxu0 %v4679
    %4698 = vmatprep.subr.bf16.mxu0 0
    %4699 = vmatpush1.bf16.msra.mxu0 %v4680
    %4700 = vmatprep.subr.bf16.mxu0 0
    %4701 = vmatpush1.bf16.msra.mxu0 %v4681
    %4702 = vmatprep.subr.bf16.mxu0 0
    %4703 = vmatpush1.bf16.msra.mxu0 %v4682
    %4704 = vmatprep.subr.bf16.mxu0 0
    %4705 = vmatpush1.bf16.msra.mxu0 %v4683
    %4706 = vmatprep.subr.bf16.mxu0 0
    %4707 = vmatpush1.bf16.msra.mxu0 %v4684
    %4708 = vmatprep.subr.bf16.mxu0 0
    %4709 = vmatpush1.bf16.msra.mxu0 %v4685
    %4710 = vmatprep.subr.bf16.mxu0 0
    %4711 = vmatpush1.bf16.msra.mxu0 0
    %4712 = vmatprep.subr.bf16.mxu0 0
    %4713 = vmatpush1.bf16.msra.mxu0 0
    %4714 = vmatprep.subr.bf16.mxu0 0
    %4715 = vmatpush1.bf16.msra.mxu0 0
    %4716 = vmatprep.subr.bf16.mxu0 0
    %4717 = vmatpush1.bf16.msra.mxu0 0
    %4718 = vmatprep.subr.bf16.mxu0 0
    %4719 = vmatpush1.bf16.msra.mxu0 0
    %4720 = vmatprep.subr.bf16.mxu0 0
    %4721 = vmatpush1.bf16.msra.mxu0 0
    %4722 = vmatprep.subr.bf16.mxu0 0
    %4723 = vmatpush1.bf16.msra.mxu0 0
    %4724 = vmatprep.subr.bf16.mxu0 0
    %4725 = vmatpush1.bf16.msra.mxu0 0
    %4726 = vmatprep.mubr.bf16.mxu0 0
    %4727 = vmatmul.mubr.bf16.gmra.mrb[0].mxu0 %v4628
    %v4728 = vpop.f32.mrb[0].mxu0
    %v4729 = vadd.f32 0.0, %v4728
    %v4730 = vpop.f32.mrb[0].mxu0
    %v4731 = vpop.f32.mrb[0].mxu0
    %v4732 = vpop.f32.mrb[0].mxu0
    %4733 = vdwg.mxu0
    %v4734 = vadd.f32 %v4558, %v4729
    %s4735 = scalar_lea.vmem %s0, 52
    %v4736 = vld [vmem:[%s4735] sm:$0x3]
    %v4739 = vunpack.c.l.s4 1966171168
    %v4740 = vunpack.c.0.s8 %v4739
    %v4741 = vlaneseq
    %v4742 = vshrl.u32 %v4741, 7
    %v4743 = vsub.s32 %v4740, %v4742
    %v4744 = vrot.slane %v4736, %v4743
    %v4745 = vcombine.high %v4744, %v4744
    %v4747 = vunpack.c.l.s4 1966171168
    %v4748 = vunpack.c.0.s8 %v4747
    %v4749 = vlaneseq
    %v4750 = vshrl.u32 %v4749, 7
    %v4751 = vsub.s32 %v4748, %v4750
    %v4752 = vrot.slane %v4744, %v4751
    %v4754 = vunpack.c.l.s4 1966171168
    %v4755 = vunpack.c.0.s8 %v4754
    %v4756 = vlaneseq
    %v4757 = vshrl.u32 %v4756, 7
    %v4758 = vsub.s32 %v4755, %v4757
    %v4759 = vrot.slane %v4745, %v4758
    %4762 = vmatprep.subr.bf16.mxu0 0
    %4763 = vmatpush1.bf16.msra.mxu0 %v157
    %4764 = vmatprep.subr.bf16.mxu0 0
    %4765 = vmatpush1.bf16.msra.mxu0 %v158
    %4766 = vmatprep.subr.bf16.mxu0 0
    %4767 = vmatpush1.bf16.msra.mxu0 %v159
    %4768 = vmatprep.subr.bf16.mxu0 0
    %4769 = vmatpush1.bf16.msra.mxu0 %v160
    %4770 = vmatprep.subr.bf16.mxu0 0
    %4771 = vmatpush1.bf16.msra.mxu0 %v161
    %4772 = vmatprep.subr.bf16.mxu0 0
    %4773 = vmatpush1.bf16.msra.mxu0 %v162
    %4774 = vmatprep.subr.bf16.mxu0 0
    %4775 = vmatpush1.bf16.msra.mxu0 %v163
    %4776 = vmatprep.subr.bf16.mxu0 0
    %4777 = vmatpush1.bf16.msra.mxu0 %v164
    %4778 = vmatprep.subr.bf16.mxu0 0
    %4779 = vmatpush1.bf16.msra.mxu0 %v165
    %4780 = vmatprep.subr.bf16.mxu0 0
    %4781 = vmatpush1.bf16.msra.mxu0 %v166
    %4782 = vmatprep.subr.bf16.mxu0 0
    %4783 = vmatpush1.bf16.msra.mxu0 %v167
    %4784 = vmatprep.subr.bf16.mxu0 0
    %4785 = vmatpush1.bf16.msra.mxu0 %v168
    %4786 = vmatprep.subr.bf16.mxu0 0
    %4787 = vmatpush1.bf16.msra.mxu0 %v169
    %4788 = vmatprep.subr.bf16.mxu0 0
    %4789 = vmatpush1.bf16.msra.mxu0 %v170
    %4790 = vmatprep.subr.bf16.mxu0 0
    %4791 = vmatpush1.bf16.msra.mxu0 %v171
    %4792 = vmatprep.subr.bf16.mxu0 0
    %4793 = vmatpush1.bf16.msra.mxu0 %v172
    %4794 = vmatprep.mubr.bf16.mxu0 %v4759
    %4795 = vmatmul.mubr.bf16.gmra.mrb[0].mxu0 %v4752
    %v4796 = vpop.f32.mrb[0].mxu0
    %v4797 = vadd.f32 %v66, %v4796
    %v4798 = vpop.f32.mrb[0].mxu0
    %v4799 = vpop.f32.mrb[0].mxu0
    %v4800 = vpop.f32.mrb[0].mxu0
    %4801 = vdwg.mxu0
    %vm4802 = vcmp.ge.f32.partialorder %v4797, 0.0
    %v4803 = vsel %vm4802, 1.0, 0.0
    %v4804 = vpack.c.bf16 %v4803, %v4803
    %s4805 = scalar_lea.vmem %s3, 1664
    %v4806 = vld [vmem:[%s4805] sm:$0xf]
    %v4807 = vld [vmem:[%s4805 + $0x4] sm:$0xf]
    %v4808 = vld [vmem:[%s4805 + $0x8] sm:$0xf]
    %v4809 = vld [vmem:[%s4805 + $0xc] sm:$0xf]
    %v4810 = vld [vmem:[%s4805 + $0x10] sm:$0xf]
    %v4811 = vld [vmem:[%s4805 + $0x14] sm:$0xf]
    %v4812 = vld [vmem:[%s4805 + $0x18] sm:$0xf]
    %v4813 = vld [vmem:[%s4805 + $0x1c] sm:$0xf]
    %v4814 = vld [vmem:[%s4805 + $0x20] sm:$0xf]
    %v4815 = vld [vmem:[%s4805 + $0x24] sm:$0xf]
    %v4816 = vld [vmem:[%s4805 + $0x28] sm:$0xf]
    %v4817 = vld [vmem:[%s4805 + $0x2c] sm:$0xf]
    %v4818 = vld [vmem:[%s4805 + $0x30] sm:$0xf]
    %v4819 = vld [vmem:[%s4805 + $0x34] sm:$0xf]
    %v4820 = vld [vmem:[%s4805 + $0x38] sm:$0xf]
    %v4821 = vld [vmem:[%s4805 + $0x3c] sm:$0xf]
    %v4838 = vunpack.c.l.b16 %v4806
    %v4839 = vunpack.c.l.b16 %v4807
    %v4840 = vunpack.c.l.b16 %v4808
    %v4841 = vunpack.c.l.b16 %v4809
    %v4842 = vunpack.c.l.b16 %v4810
    %v4843 = vunpack.c.l.b16 %v4811
    %v4844 = vunpack.c.l.b16 %v4812
    %v4845 = vunpack.c.l.b16 %v4813
    %v4846 = vunpack.c.l.b16 %v4814
    %v4847 = vunpack.c.l.b16 %v4815
    %v4848 = vunpack.c.l.b16 %v4816
    %v4849 = vunpack.c.l.b16 %v4817
    %v4850 = vunpack.c.l.b16 %v4818
    %v4851 = vunpack.c.l.b16 %v4819
    %v4852 = vunpack.c.l.b16 %v4820
    %v4853 = vunpack.c.l.b16 %v4821
    %v4854 = vpack.c.b16 %v4839, %v4838
    %v4855 = vpack.c.b16 %v4841, %v4840
    %v4856 = vpack.c.b16 %v4843, %v4842
    %v4857 = vpack.c.b16 %v4845, %v4844
    %v4858 = vpack.c.b16 %v4847, %v4846
    %v4859 = vpack.c.b16 %v4849, %v4848
    %v4860 = vpack.c.b16 %v4851, %v4850
    %v4861 = vpack.c.b16 %v4853, %v4852
    %4870 = vmatprep.subr.bf16.mxu0 0
    %4871 = vmatpush1.bf16.msra.mxu0 %v4854
    %4872 = vmatprep.subr.bf16.mxu0 0
    %4873 = vmatpush1.bf16.msra.mxu0 %v4855
    %4874 = vmatprep.subr.bf16.mxu0 0
    %4875 = vmatpush1.bf16.msra.mxu0 %v4856
    %4876 = vmatprep.subr.bf16.mxu0 0
    %4877 = vmatpush1.bf16.msra.mxu0 %v4857
    %4878 = vmatprep.subr.bf16.mxu0 0
    %4879 = vmatpush1.bf16.msra.mxu0 %v4858
    %4880 = vmatprep.subr.bf16.mxu0 0
    %4881 = vmatpush1.bf16.msra.mxu0 %v4859
    %4882 = vmatprep.subr.bf16.mxu0 0
    %4883 = vmatpush1.bf16.msra.mxu0 %v4860
    %4884 = vmatprep.subr.bf16.mxu0 0
    %4885 = vmatpush1.bf16.msra.mxu0 %v4861
    %4886 = vmatprep.subr.bf16.mxu0 0
    %4887 = vmatpush1.bf16.msra.mxu0 0
    %4888 = vmatprep.subr.bf16.mxu0 0
    %4889 = vmatpush1.bf16.msra.mxu0 0
    %4890 = vmatprep.subr.bf16.mxu0 0
    %4891 = vmatpush1.bf16.msra.mxu0 0
    %4892 = vmatprep.subr.bf16.mxu0 0
    %4893 = vmatpush1.bf16.msra.mxu0 0
    %4894 = vmatprep.subr.bf16.mxu0 0
    %4895 = vmatpush1.bf16.msra.mxu0 0
    %4896 = vmatprep.subr.bf16.mxu0 0
    %4897 = vmatpush1.bf16.msra.mxu0 0
    %4898 = vmatprep.subr.bf16.mxu0 0
    %4899 = vmatpush1.bf16.msra.mxu0 0
    %4900 = vmatprep.subr.bf16.mxu0 0
    %4901 = vmatpush1.bf16.msra.mxu0 0
    %4902 = vmatprep.mubr.bf16.mxu0 0
    %4903 = vmatmul.mubr.bf16.gmra.mrb[0].mxu0 %v4804
    %v4904 = vpop.f32.mrb[0].mxu0
    %v4905 = vadd.f32 0.0, %v4904
    %v4906 = vpop.f32.mrb[0].mxu0
    %v4907 = vpop.f32.mrb[0].mxu0
    %v4908 = vpop.f32.mrb[0].mxu0
    %4909 = vdwg.mxu0
    %v4910 = vadd.f32 %v4734, %v4905
    %s4911 = scalar_lea.vmem %s0, 54
    %v4912 = vld [vmem:[%s4911] sm:$0x3]
    %v4915 = vunpack.c.l.s4 1966171168
    %v4916 = vunpack.c.0.s8 %v4915
    %v4917 = vlaneseq
    %v4918 = vshrl.u32 %v4917, 7
    %v4919 = vsub.s32 %v4916, %v4918
    %v4920 = vrot.slane %v4912, %v4919
    %v4921 = vcombine.high %v4920, %v4920
    %v4923 = vunpack.c.l.s4 1966171168
    %v4924 = vunpack.c.0.s8 %v4923
    %v4925 = vlaneseq
    %v4926 = vshrl.u32 %v4925, 7
    %v4927 = vsub.s32 %v4924, %v4926
    %v4928 = vrot.slane %v4920, %v4927
    %v4930 = vunpack.c.l.s4 1966171168
    %v4931 = vunpack.c.0.s8 %v4930
    %v4932 = vlaneseq
    %v4933 = vshrl.u32 %v4932, 7
    %v4934 = vsub.s32 %v4931, %v4933
    %v4935 = vrot.slane %v4921, %v4934
    %4938 = vmatprep.subr.bf16.mxu0 0
    %4939 = vmatpush1.bf16.msra.mxu0 %v157
    %4940 = vmatprep.subr.bf16.mxu0 0
    %4941 = vmatpush1.bf16.msra.mxu0 %v158
    %4942 = vmatprep.subr.bf16.mxu0 0
    %4943 = vmatpush1.bf16.msra.mxu0 %v159
    %4944 = vmatprep.subr.bf16.mxu0 0
    %4945 = vmatpush1.bf16.msra.mxu0 %v160
    %4946 = vmatprep.subr.bf16.mxu0 0
    %4947 = vmatpush1.bf16.msra.mxu0 %v161
    %4948 = vmatprep.subr.bf16.mxu0 0
    %4949 = vmatpush1.bf16.msra.mxu0 %v162
    %4950 = vmatprep.subr.bf16.mxu0 0
    %4951 = vmatpush1.bf16.msra.mxu0 %v163
    %4952 = vmatprep.subr.bf16.mxu0 0
    %4953 = vmatpush1.bf16.msra.mxu0 %v164
    %4954 = vmatprep.subr.bf16.mxu0 0
    %4955 = vmatpush1.bf16.msra.mxu0 %v165
    %4956 = vmatprep.subr.bf16.mxu0 0
    %4957 = vmatpush1.bf16.msra.mxu0 %v166
    %4958 = vmatprep.subr.bf16.mxu0 0
    %4959 = vmatpush1.bf16.msra.mxu0 %v167
    %4960 = vmatprep.subr.bf16.mxu0 0
    %4961 = vmatpush1.bf16.msra.mxu0 %v168
    %4962 = vmatprep.subr.bf16.mxu0 0
    %4963 = vmatpush1.bf16.msra.mxu0 %v169
    %4964 = vmatprep.subr.bf16.mxu0 0
    %4965 = vmatpush1.bf16.msra.mxu0 %v170
    %4966 = vmatprep.subr.bf16.mxu0 0
    %4967 = vmatpush1.bf16.msra.mxu0 %v171
    %4968 = vmatprep.subr.bf16.mxu0 0
    %4969 = vmatpush1.bf16.msra.mxu0 %v172
    %4970 = vmatprep.mubr.bf16.mxu0 %v4935
    %4971 = vmatmul.mubr.bf16.gmra.mrb[0].mxu0 %v4928
    %v4972 = vpop.f32.mrb[0].mxu0
    %v4973 = vadd.f32 %v66, %v4972
    %v4974 = vpop.f32.mrb[0].mxu0
    %v4975 = vpop.f32.mrb[0].mxu0
    %v4976 = vpop.f32.mrb[0].mxu0
    %4977 = vdwg.mxu0
    %vm4978 = vcmp.ge.f32.partialorder %v4973, 0.0
    %v4979 = vsel %vm4978, 1.0, 0.0
    %v4980 = vpack.c.bf16 %v4979, %v4979
    %s4981 = scalar_lea.vmem %s3, 1728
    %v4982 = vld [vmem:[%s4981] sm:$0xf]
    %v4983 = vld [vmem:[%s4981 + $0x4] sm:$0xf]
    %v4984 = vld [vmem:[%s4981 + $0x8] sm:$0xf]
    %v4985 = vld [vmem:[%s4981 + $0xc] sm:$0xf]
    %v4986 = vld [vmem:[%s4981 + $0x10] sm:$0xf]
    %v4987 = vld [vmem:[%s4981 + $0x14] sm:$0xf]
    %v4988 = vld [vmem:[%s4981 + $0x18] sm:$0xf]
    %v4989 = vld [vmem:[%s4981 + $0x1c] sm:$0xf]
    %v4990 = vld [vmem:[%s4981 + $0x20] sm:$0xf]
    %v4991 = vld [vmem:[%s4981 + $0x24] sm:$0xf]
    %v4992 = vld [vmem:[%s4981 + $0x28] sm:$0xf]
    %v4993 = vld [vmem:[%s4981 + $0x2c] sm:$0xf]
    %v4994 = vld [vmem:[%s4981 + $0x30] sm:$0xf]
    %v4995 = vld [vmem:[%s4981 + $0x34] sm:$0xf]
    %v4996 = vld [vmem:[%s4981 + $0x38] sm:$0xf]
    %v4997 = vld [vmem:[%s4981 + $0x3c] sm:$0xf]
    %v5014 = vunpack.c.l.b16 %v4982
    %v5015 = vunpack.c.l.b16 %v4983
    %v5016 = vunpack.c.l.b16 %v4984
    %v5017 = vunpack.c.l.b16 %v4985
    %v5018 = vunpack.c.l.b16 %v4986
    %v5019 = vunpack.c.l.b16 %v4987
    %v5020 = vunpack.c.l.b16 %v4988
    %v5021 = vunpack.c.l.b16 %v4989
    %v5022 = vunpack.c.l.b16 %v4990
    %v5023 = vunpack.c.l.b16 %v4991
    %v5024 = vunpack.c.l.b16 %v4992
    %v5025 = vunpack.c.l.b16 %v4993
    %v5026 = vunpack.c.l.b16 %v4994
    %v5027 = vunpack.c.l.b16 %v4995
    %v5028 = vunpack.c.l.b16 %v4996
    %v5029 = vunpack.c.l.b16 %v4997
    %v5030 = vpack.c.b16 %v5015, %v5014
    %v5031 = vpack.c.b16 %v5017, %v5016
    %v5032 = vpack.c.b16 %v5019, %v5018
    %v5033 = vpack.c.b16 %v5021, %v5020
    %v5034 = vpack.c.b16 %v5023, %v5022
    %v5035 = vpack.c.b16 %v5025, %v5024
    %v5036 = vpack.c.b16 %v5027, %v5026
    %v5037 = vpack.c.b16 %v5029, %v5028
    %5046 = vmatprep.subr.bf16.mxu0 0
    %5047 = vmatpush1.bf16.msra.mxu0 %v5030
    %5048 = vmatprep.subr.bf16.mxu0 0
    %5049 = vmatpush1.bf16.msra.mxu0 %v5031
    %5050 = vmatprep.subr.bf16.mxu0 0
    %5051 = vmatpush1.bf16.msra.mxu0 %v5032
    %5052 = vmatprep.subr.bf16.mxu0 0
    %5053 = vmatpush1.bf16.msra.mxu0 %v5033
    %5054 = vmatprep.subr.bf16.mxu0 0
    %5055 = vmatpush1.bf16.msra.mxu0 %v5034
    %5056 = vmatprep.subr.bf16.mxu0 0
    %5057 = vmatpush1.bf16.msra.mxu0 %v5035
    %5058 = vmatprep.subr.bf16.mxu0 0
    %5059 = vmatpush1.bf16.msra.mxu0 %v5036
    %5060 = vmatprep.subr.bf16.mxu0 0
    %5061 = vmatpush1.bf16.msra.mxu0 %v5037
    %5062 = vmatprep.subr.bf16.mxu0 0
    %5063 = vmatpush1.bf16.msra.mxu0 0
    %5064 = vmatprep.subr.bf16.mxu0 0
    %5065 = vmatpush1.bf16.msra.mxu0 0
    %5066 = vmatprep.subr.bf16.mxu0 0
    %5067 = vmatpush1.bf16.msra.mxu0 0
    %5068 = vmatprep.subr.bf16.mxu0 0
    %5069 = vmatpush1.bf16.msra.mxu0 0
    %5070 = vmatprep.subr.bf16.mxu0 0
    %5071 = vmatpush1.bf16.msra.mxu0 0
    %5072 = vmatprep.subr.bf16.mxu0 0
    %5073 = vmatpush1.bf16.msra.mxu0 0
    %5074 = vmatprep.subr.bf16.mxu0 0
    %5075 = vmatpush1.bf16.msra.mxu0 0
    %5076 = vmatprep.subr.bf16.mxu0 0
    %5077 = vmatpush1.bf16.msra.mxu0 0
    %5078 = vmatprep.mubr.bf16.mxu0 0
    %5079 = vmatmul.mubr.bf16.gmra.mrb[0].mxu0 %v4980
    %v5080 = vpop.f32.mrb[0].mxu0
    %v5081 = vadd.f32 0.0, %v5080
    %v5082 = vpop.f32.mrb[0].mxu0
    %v5083 = vpop.f32.mrb[0].mxu0
    %v5084 = vpop.f32.mrb[0].mxu0
    %5085 = vdwg.mxu0
    %v5086 = vadd.f32 %v4910, %v5081
    %s5087 = scalar_lea.vmem %s0, 56
    %v5088 = vld [vmem:[%s5087] sm:$0x3]
    %v5091 = vunpack.c.l.s4 1966171168
    %v5092 = vunpack.c.0.s8 %v5091
    %v5093 = vlaneseq
    %v5094 = vshrl.u32 %v5093, 7
    %v5095 = vsub.s32 %v5092, %v5094
    %v5096 = vrot.slane %v5088, %v5095
    %v5097 = vcombine.high %v5096, %v5096
    %v5099 = vunpack.c.l.s4 1966171168
    %v5100 = vunpack.c.0.s8 %v5099
    %v5101 = vlaneseq
    %v5102 = vshrl.u32 %v5101, 7
    %v5103 = vsub.s32 %v5100, %v5102
    %v5104 = vrot.slane %v5096, %v5103
    %v5106 = vunpack.c.l.s4 1966171168
    %v5107 = vunpack.c.0.s8 %v5106
    %v5108 = vlaneseq
    %v5109 = vshrl.u32 %v5108, 7
    %v5110 = vsub.s32 %v5107, %v5109
    %v5111 = vrot.slane %v5097, %v5110
    %5114 = vmatprep.subr.bf16.mxu0 0
    %5115 = vmatpush1.bf16.msra.mxu0 %v157
    %5116 = vmatprep.subr.bf16.mxu0 0
    %5117 = vmatpush1.bf16.msra.mxu0 %v158
    %5118 = vmatprep.subr.bf16.mxu0 0
    %5119 = vmatpush1.bf16.msra.mxu0 %v159
    %5120 = vmatprep.subr.bf16.mxu0 0
    %5121 = vmatpush1.bf16.msra.mxu0 %v160
    %5122 = vmatprep.subr.bf16.mxu0 0
    %5123 = vmatpush1.bf16.msra.mxu0 %v161
    %5124 = vmatprep.subr.bf16.mxu0 0
    %5125 = vmatpush1.bf16.msra.mxu0 %v162
    %5126 = vmatprep.subr.bf16.mxu0 0
    %5127 = vmatpush1.bf16.msra.mxu0 %v163
    %5128 = vmatprep.subr.bf16.mxu0 0
    %5129 = vmatpush1.bf16.msra.mxu0 %v164
    %5130 = vmatprep.subr.bf16.mxu0 0
    %5131 = vmatpush1.bf16.msra.mxu0 %v165
    %5132 = vmatprep.subr.bf16.mxu0 0
    %5133 = vmatpush1.bf16.msra.mxu0 %v166
    %5134 = vmatprep.subr.bf16.mxu0 0
    %5135 = vmatpush1.bf16.msra.mxu0 %v167
    %5136 = vmatprep.subr.bf16.mxu0 0
    %5137 = vmatpush1.bf16.msra.mxu0 %v168
    %5138 = vmatprep.subr.bf16.mxu0 0
    %5139 = vmatpush1.bf16.msra.mxu0 %v169
    %5140 = vmatprep.subr.bf16.mxu0 0
    %5141 = vmatpush1.bf16.msra.mxu0 %v170
    %5142 = vmatprep.subr.bf16.mxu0 0
    %5143 = vmatpush1.bf16.msra.mxu0 %v171
    %5144 = vmatprep.subr.bf16.mxu0 0
    %5145 = vmatpush1.bf16.msra.mxu0 %v172
    %5146 = vmatprep.mubr.bf16.mxu0 %v5111
    %5147 = vmatmul.mubr.bf16.gmra.mrb[0].mxu0 %v5104
    %v5148 = vpop.f32.mrb[0].mxu0
    %v5149 = vadd.f32 %v66, %v5148
    %v5150 = vpop.f32.mrb[0].mxu0
    %v5151 = vpop.f32.mrb[0].mxu0
    %v5152 = vpop.f32.mrb[0].mxu0
    %5153 = vdwg.mxu0
    %vm5154 = vcmp.ge.f32.partialorder %v5149, 0.0
    %v5155 = vsel %vm5154, 1.0, 0.0
    %v5156 = vpack.c.bf16 %v5155, %v5155
    %s5157 = scalar_lea.vmem %s3, 1792
    %v5158 = vld [vmem:[%s5157] sm:$0xf]
    %v5159 = vld [vmem:[%s5157 + $0x4] sm:$0xf]
    %v5160 = vld [vmem:[%s5157 + $0x8] sm:$0xf]
    %v5161 = vld [vmem:[%s5157 + $0xc] sm:$0xf]
    %v5162 = vld [vmem:[%s5157 + $0x10] sm:$0xf]
    %v5163 = vld [vmem:[%s5157 + $0x14] sm:$0xf]
    %v5164 = vld [vmem:[%s5157 + $0x18] sm:$0xf]
    %v5165 = vld [vmem:[%s5157 + $0x1c] sm:$0xf]
    %v5166 = vld [vmem:[%s5157 + $0x20] sm:$0xf]
    %v5167 = vld [vmem:[%s5157 + $0x24] sm:$0xf]
    %v5168 = vld [vmem:[%s5157 + $0x28] sm:$0xf]
    %v5169 = vld [vmem:[%s5157 + $0x2c] sm:$0xf]
    %v5170 = vld [vmem:[%s5157 + $0x30] sm:$0xf]
    %v5171 = vld [vmem:[%s5157 + $0x34] sm:$0xf]
    %v5172 = vld [vmem:[%s5157 + $0x38] sm:$0xf]
    %v5173 = vld [vmem:[%s5157 + $0x3c] sm:$0xf]
    %v5190 = vunpack.c.l.b16 %v5158
    %v5191 = vunpack.c.l.b16 %v5159
    %v5192 = vunpack.c.l.b16 %v5160
    %v5193 = vunpack.c.l.b16 %v5161
    %v5194 = vunpack.c.l.b16 %v5162
    %v5195 = vunpack.c.l.b16 %v5163
    %v5196 = vunpack.c.l.b16 %v5164
    %v5197 = vunpack.c.l.b16 %v5165
    %v5198 = vunpack.c.l.b16 %v5166
    %v5199 = vunpack.c.l.b16 %v5167
    %v5200 = vunpack.c.l.b16 %v5168
    %v5201 = vunpack.c.l.b16 %v5169
    %v5202 = vunpack.c.l.b16 %v5170
    %v5203 = vunpack.c.l.b16 %v5171
    %v5204 = vunpack.c.l.b16 %v5172
    %v5205 = vunpack.c.l.b16 %v5173
    %v5206 = vpack.c.b16 %v5191, %v5190
    %v5207 = vpack.c.b16 %v5193, %v5192
    %v5208 = vpack.c.b16 %v5195, %v5194
    %v5209 = vpack.c.b16 %v5197, %v5196
    %v5210 = vpack.c.b16 %v5199, %v5198
    %v5211 = vpack.c.b16 %v5201, %v5200
    %v5212 = vpack.c.b16 %v5203, %v5202
    %v5213 = vpack.c.b16 %v5205, %v5204
    %5222 = vmatprep.subr.bf16.mxu0 0
    %5223 = vmatpush1.bf16.msra.mxu0 %v5206
    %5224 = vmatprep.subr.bf16.mxu0 0
    %5225 = vmatpush1.bf16.msra.mxu0 %v5207
    %5226 = vmatprep.subr.bf16.mxu0 0
    %5227 = vmatpush1.bf16.msra.mxu0 %v5208
    %5228 = vmatprep.subr.bf16.mxu0 0
    %5229 = vmatpush1.bf16.msra.mxu0 %v5209
    %5230 = vmatprep.subr.bf16.mxu0 0
    %5231 = vmatpush1.bf16.msra.mxu0 %v5210
    %5232 = vmatprep.subr.bf16.mxu0 0
    %5233 = vmatpush1.bf16.msra.mxu0 %v5211
    %5234 = vmatprep.subr.bf16.mxu0 0
    %5235 = vmatpush1.bf16.msra.mxu0 %v5212
    %5236 = vmatprep.subr.bf16.mxu0 0
    %5237 = vmatpush1.bf16.msra.mxu0 %v5213
    %5238 = vmatprep.subr.bf16.mxu0 0
    %5239 = vmatpush1.bf16.msra.mxu0 0
    %5240 = vmatprep.subr.bf16.mxu0 0
    %5241 = vmatpush1.bf16.msra.mxu0 0
    %5242 = vmatprep.subr.bf16.mxu0 0
    %5243 = vmatpush1.bf16.msra.mxu0 0
    %5244 = vmatprep.subr.bf16.mxu0 0
    %5245 = vmatpush1.bf16.msra.mxu0 0
    %5246 = vmatprep.subr.bf16.mxu0 0
    %5247 = vmatpush1.bf16.msra.mxu0 0
    %5248 = vmatprep.subr.bf16.mxu0 0
    %5249 = vmatpush1.bf16.msra.mxu0 0
    %5250 = vmatprep.subr.bf16.mxu0 0
    %5251 = vmatpush1.bf16.msra.mxu0 0
    %5252 = vmatprep.subr.bf16.mxu0 0
    %5253 = vmatpush1.bf16.msra.mxu0 0
    %5254 = vmatprep.mubr.bf16.mxu0 0
    %5255 = vmatmul.mubr.bf16.gmra.mrb[0].mxu0 %v5156
    %v5256 = vpop.f32.mrb[0].mxu0
    %v5257 = vadd.f32 0.0, %v5256
    %v5258 = vpop.f32.mrb[0].mxu0
    %v5259 = vpop.f32.mrb[0].mxu0
    %v5260 = vpop.f32.mrb[0].mxu0
    %5261 = vdwg.mxu0
    %v5262 = vadd.f32 %v5086, %v5257
    %s5263 = scalar_lea.vmem %s0, 58
    %v5264 = vld [vmem:[%s5263] sm:$0x3]
    %v5267 = vunpack.c.l.s4 1966171168
    %v5268 = vunpack.c.0.s8 %v5267
    %v5269 = vlaneseq
    %v5270 = vshrl.u32 %v5269, 7
    %v5271 = vsub.s32 %v5268, %v5270
    %v5272 = vrot.slane %v5264, %v5271
    %v5273 = vcombine.high %v5272, %v5272
    %v5275 = vunpack.c.l.s4 1966171168
    %v5276 = vunpack.c.0.s8 %v5275
    %v5277 = vlaneseq
    %v5278 = vshrl.u32 %v5277, 7
    %v5279 = vsub.s32 %v5276, %v5278
    %v5280 = vrot.slane %v5272, %v5279
    %v5282 = vunpack.c.l.s4 1966171168
    %v5283 = vunpack.c.0.s8 %v5282
    %v5284 = vlaneseq
    %v5285 = vshrl.u32 %v5284, 7
    %v5286 = vsub.s32 %v5283, %v5285
    %v5287 = vrot.slane %v5273, %v5286
    %5290 = vmatprep.subr.bf16.mxu0 0
    %5291 = vmatpush1.bf16.msra.mxu0 %v157
    %5292 = vmatprep.subr.bf16.mxu0 0
    %5293 = vmatpush1.bf16.msra.mxu0 %v158
    %5294 = vmatprep.subr.bf16.mxu0 0
    %5295 = vmatpush1.bf16.msra.mxu0 %v159
    %5296 = vmatprep.subr.bf16.mxu0 0
    %5297 = vmatpush1.bf16.msra.mxu0 %v160
    %5298 = vmatprep.subr.bf16.mxu0 0
    %5299 = vmatpush1.bf16.msra.mxu0 %v161
    %5300 = vmatprep.subr.bf16.mxu0 0
    %5301 = vmatpush1.bf16.msra.mxu0 %v162
    %5302 = vmatprep.subr.bf16.mxu0 0
    %5303 = vmatpush1.bf16.msra.mxu0 %v163
    %5304 = vmatprep.subr.bf16.mxu0 0
    %5305 = vmatpush1.bf16.msra.mxu0 %v164
    %5306 = vmatprep.subr.bf16.mxu0 0
    %5307 = vmatpush1.bf16.msra.mxu0 %v165
    %5308 = vmatprep.subr.bf16.mxu0 0
    %5309 = vmatpush1.bf16.msra.mxu0 %v166
    %5310 = vmatprep.subr.bf16.mxu0 0
    %5311 = vmatpush1.bf16.msra.mxu0 %v167
    %5312 = vmatprep.subr.bf16.mxu0 0
    %5313 = vmatpush1.bf16.msra.mxu0 %v168
    %5314 = vmatprep.subr.bf16.mxu0 0
    %5315 = vmatpush1.bf16.msra.mxu0 %v169
    %5316 = vmatprep.subr.bf16.mxu0 0
    %5317 = vmatpush1.bf16.msra.mxu0 %v170
    %5318 = vmatprep.subr.bf16.mxu0 0
    %5319 = vmatpush1.bf16.msra.mxu0 %v171
    %5320 = vmatprep.subr.bf16.mxu0 0
    %5321 = vmatpush1.bf16.msra.mxu0 %v172
    %5322 = vmatprep.mubr.bf16.mxu0 %v5287
    %5323 = vmatmul.mubr.bf16.gmra.mrb[0].mxu0 %v5280
    %v5324 = vpop.f32.mrb[0].mxu0
    %v5325 = vadd.f32 %v66, %v5324
    %v5326 = vpop.f32.mrb[0].mxu0
    %v5327 = vpop.f32.mrb[0].mxu0
    %v5328 = vpop.f32.mrb[0].mxu0
    %5329 = vdwg.mxu0
    %vm5330 = vcmp.ge.f32.partialorder %v5325, 0.0
    %v5331 = vsel %vm5330, 1.0, 0.0
    %v5332 = vpack.c.bf16 %v5331, %v5331
    %s5333 = scalar_lea.vmem %s3, 1856
    %v5334 = vld [vmem:[%s5333] sm:$0xf]
    %v5335 = vld [vmem:[%s5333 + $0x4] sm:$0xf]
    %v5336 = vld [vmem:[%s5333 + $0x8] sm:$0xf]
    %v5337 = vld [vmem:[%s5333 + $0xc] sm:$0xf]
    %v5338 = vld [vmem:[%s5333 + $0x10] sm:$0xf]
    %v5339 = vld [vmem:[%s5333 + $0x14] sm:$0xf]
    %v5340 = vld [vmem:[%s5333 + $0x18] sm:$0xf]
    %v5341 = vld [vmem:[%s5333 + $0x1c] sm:$0xf]
    %v5342 = vld [vmem:[%s5333 + $0x20] sm:$0xf]
    %v5343 = vld [vmem:[%s5333 + $0x24] sm:$0xf]
    %v5344 = vld [vmem:[%s5333 + $0x28] sm:$0xf]
    %v5345 = vld [vmem:[%s5333 + $0x2c] sm:$0xf]
    %v5346 = vld [vmem:[%s5333 + $0x30] sm:$0xf]
    %v5347 = vld [vmem:[%s5333 + $0x34] sm:$0xf]
    %v5348 = vld [vmem:[%s5333 + $0x38] sm:$0xf]
    %v5349 = vld [vmem:[%s5333 + $0x3c] sm:$0xf]
    %v5366 = vunpack.c.l.b16 %v5334
    %v5367 = vunpack.c.l.b16 %v5335
    %v5368 = vunpack.c.l.b16 %v5336
    %v5369 = vunpack.c.l.b16 %v5337
    %v5370 = vunpack.c.l.b16 %v5338
    %v5371 = vunpack.c.l.b16 %v5339
    %v5372 = vunpack.c.l.b16 %v5340
    %v5373 = vunpack.c.l.b16 %v5341
    %v5374 = vunpack.c.l.b16 %v5342
    %v5375 = vunpack.c.l.b16 %v5343
    %v5376 = vunpack.c.l.b16 %v5344
    %v5377 = vunpack.c.l.b16 %v5345
    %v5378 = vunpack.c.l.b16 %v5346
    %v5379 = vunpack.c.l.b16 %v5347
    %v5380 = vunpack.c.l.b16 %v5348
    %v5381 = vunpack.c.l.b16 %v5349
    %v5382 = vpack.c.b16 %v5367, %v5366
    %v5383 = vpack.c.b16 %v5369, %v5368
    %v5384 = vpack.c.b16 %v5371, %v5370
    %v5385 = vpack.c.b16 %v5373, %v5372
    %v5386 = vpack.c.b16 %v5375, %v5374
    %v5387 = vpack.c.b16 %v5377, %v5376
    %v5388 = vpack.c.b16 %v5379, %v5378
    %v5389 = vpack.c.b16 %v5381, %v5380
    %5398 = vmatprep.subr.bf16.mxu0 0
    %5399 = vmatpush1.bf16.msra.mxu0 %v5382
    %5400 = vmatprep.subr.bf16.mxu0 0
    %5401 = vmatpush1.bf16.msra.mxu0 %v5383
    %5402 = vmatprep.subr.bf16.mxu0 0
    %5403 = vmatpush1.bf16.msra.mxu0 %v5384
    %5404 = vmatprep.subr.bf16.mxu0 0
    %5405 = vmatpush1.bf16.msra.mxu0 %v5385
    %5406 = vmatprep.subr.bf16.mxu0 0
    %5407 = vmatpush1.bf16.msra.mxu0 %v5386
    %5408 = vmatprep.subr.bf16.mxu0 0
    %5409 = vmatpush1.bf16.msra.mxu0 %v5387
    %5410 = vmatprep.subr.bf16.mxu0 0
    %5411 = vmatpush1.bf16.msra.mxu0 %v5388
    %5412 = vmatprep.subr.bf16.mxu0 0
    %5413 = vmatpush1.bf16.msra.mxu0 %v5389
    %5414 = vmatprep.subr.bf16.mxu0 0
    %5415 = vmatpush1.bf16.msra.mxu0 0
    %5416 = vmatprep.subr.bf16.mxu0 0
    %5417 = vmatpush1.bf16.msra.mxu0 0
    %5418 = vmatprep.subr.bf16.mxu0 0
    %5419 = vmatpush1.bf16.msra.mxu0 0
    %5420 = vmatprep.subr.bf16.mxu0 0
    %5421 = vmatpush1.bf16.msra.mxu0 0
    %5422 = vmatprep.subr.bf16.mxu0 0
    %5423 = vmatpush1.bf16.msra.mxu0 0
    %5424 = vmatprep.subr.bf16.mxu0 0
    %5425 = vmatpush1.bf16.msra.mxu0 0
    %5426 = vmatprep.subr.bf16.mxu0 0
    %5427 = vmatpush1.bf16.msra.mxu0 0
    %5428 = vmatprep.subr.bf16.mxu0 0
    %5429 = vmatpush1.bf16.msra.mxu0 0
    %5430 = vmatprep.mubr.bf16.mxu0 0
    %5431 = vmatmul.mubr.bf16.gmra.mrb[0].mxu0 %v5332
    %v5432 = vpop.f32.mrb[0].mxu0
    %v5433 = vadd.f32 0.0, %v5432
    %v5434 = vpop.f32.mrb[0].mxu0
    %v5435 = vpop.f32.mrb[0].mxu0
    %v5436 = vpop.f32.mrb[0].mxu0
    %5437 = vdwg.mxu0
    %v5438 = vadd.f32 %v5262, %v5433
    %s5439 = scalar_lea.vmem %s0, 60
    %v5440 = vld [vmem:[%s5439] sm:$0x3]
    %v5443 = vunpack.c.l.s4 1966171168
    %v5444 = vunpack.c.0.s8 %v5443
    %v5445 = vlaneseq
    %v5446 = vshrl.u32 %v5445, 7
    %v5447 = vsub.s32 %v5444, %v5446
    %v5448 = vrot.slane %v5440, %v5447
    %v5449 = vcombine.high %v5448, %v5448
    %v5451 = vunpack.c.l.s4 1966171168
    %v5452 = vunpack.c.0.s8 %v5451
    %v5453 = vlaneseq
    %v5454 = vshrl.u32 %v5453, 7
    %v5455 = vsub.s32 %v5452, %v5454
    %v5456 = vrot.slane %v5448, %v5455
    %v5458 = vunpack.c.l.s4 1966171168
    %v5459 = vunpack.c.0.s8 %v5458
    %v5460 = vlaneseq
    %v5461 = vshrl.u32 %v5460, 7
    %v5462 = vsub.s32 %v5459, %v5461
    %v5463 = vrot.slane %v5449, %v5462
    %5466 = vmatprep.subr.bf16.mxu0 0
    %5467 = vmatpush1.bf16.msra.mxu0 %v157
    %5468 = vmatprep.subr.bf16.mxu0 0
    %5469 = vmatpush1.bf16.msra.mxu0 %v158
    %5470 = vmatprep.subr.bf16.mxu0 0
    %5471 = vmatpush1.bf16.msra.mxu0 %v159
    %5472 = vmatprep.subr.bf16.mxu0 0
    %5473 = vmatpush1.bf16.msra.mxu0 %v160
    %5474 = vmatprep.subr.bf16.mxu0 0
    %5475 = vmatpush1.bf16.msra.mxu0 %v161
    %5476 = vmatprep.subr.bf16.mxu0 0
    %5477 = vmatpush1.bf16.msra.mxu0 %v162
    %5478 = vmatprep.subr.bf16.mxu0 0
    %5479 = vmatpush1.bf16.msra.mxu0 %v163
    %5480 = vmatprep.subr.bf16.mxu0 0
    %5481 = vmatpush1.bf16.msra.mxu0 %v164
    %5482 = vmatprep.subr.bf16.mxu0 0
    %5483 = vmatpush1.bf16.msra.mxu0 %v165
    %5484 = vmatprep.subr.bf16.mxu0 0
    %5485 = vmatpush1.bf16.msra.mxu0 %v166
    %5486 = vmatprep.subr.bf16.mxu0 0
    %5487 = vmatpush1.bf16.msra.mxu0 %v167
    %5488 = vmatprep.subr.bf16.mxu0 0
    %5489 = vmatpush1.bf16.msra.mxu0 %v168
    %5490 = vmatprep.subr.bf16.mxu0 0
    %5491 = vmatpush1.bf16.msra.mxu0 %v169
    %5492 = vmatprep.subr.bf16.mxu0 0
    %5493 = vmatpush1.bf16.msra.mxu0 %v170
    %5494 = vmatprep.subr.bf16.mxu0 0
    %5495 = vmatpush1.bf16.msra.mxu0 %v171
    %5496 = vmatprep.subr.bf16.mxu0 0
    %5497 = vmatpush1.bf16.msra.mxu0 %v172
    %5498 = vmatprep.mubr.bf16.mxu0 %v5463
    %5499 = vmatmul.mubr.bf16.gmra.mrb[0].mxu0 %v5456
    %v5500 = vpop.f32.mrb[0].mxu0
    %v5501 = vadd.f32 %v66, %v5500
    %v5502 = vpop.f32.mrb[0].mxu0
    %v5503 = vpop.f32.mrb[0].mxu0
    %v5504 = vpop.f32.mrb[0].mxu0
    %5505 = vdwg.mxu0
    %vm5506 = vcmp.ge.f32.partialorder %v5501, 0.0
    %v5507 = vsel %vm5506, 1.0, 0.0
    %v5508 = vpack.c.bf16 %v5507, %v5507
    %s5509 = scalar_lea.vmem %s3, 1920
    %v5510 = vld [vmem:[%s5509] sm:$0xf]
    %v5511 = vld [vmem:[%s5509 + $0x4] sm:$0xf]
    %v5512 = vld [vmem:[%s5509 + $0x8] sm:$0xf]
    %v5513 = vld [vmem:[%s5509 + $0xc] sm:$0xf]
    %v5514 = vld [vmem:[%s5509 + $0x10] sm:$0xf]
    %v5515 = vld [vmem:[%s5509 + $0x14] sm:$0xf]
    %v5516 = vld [vmem:[%s5509 + $0x18] sm:$0xf]
    %v5517 = vld [vmem:[%s5509 + $0x1c] sm:$0xf]
    %v5518 = vld [vmem:[%s5509 + $0x20] sm:$0xf]
    %v5519 = vld [vmem:[%s5509 + $0x24] sm:$0xf]
    %v5520 = vld [vmem:[%s5509 + $0x28] sm:$0xf]
    %v5521 = vld [vmem:[%s5509 + $0x2c] sm:$0xf]
    %v5522 = vld [vmem:[%s5509 + $0x30] sm:$0xf]
    %v5523 = vld [vmem:[%s5509 + $0x34] sm:$0xf]
    %v5524 = vld [vmem:[%s5509 + $0x38] sm:$0xf]
    %v5525 = vld [vmem:[%s5509 + $0x3c] sm:$0xf]
    %v5542 = vunpack.c.l.b16 %v5510
    %v5543 = vunpack.c.l.b16 %v5511
    %v5544 = vunpack.c.l.b16 %v5512
    %v5545 = vunpack.c.l.b16 %v5513
    %v5546 = vunpack.c.l.b16 %v5514
    %v5547 = vunpack.c.l.b16 %v5515
    %v5548 = vunpack.c.l.b16 %v5516
    %v5549 = vunpack.c.l.b16 %v5517
    %v5550 = vunpack.c.l.b16 %v5518
    %v5551 = vunpack.c.l.b16 %v5519
    %v5552 = vunpack.c.l.b16 %v5520
    %v5553 = vunpack.c.l.b16 %v5521
    %v5554 = vunpack.c.l.b16 %v5522
    %v5555 = vunpack.c.l.b16 %v5523
    %v5556 = vunpack.c.l.b16 %v5524
    %v5557 = vunpack.c.l.b16 %v5525
    %v5558 = vpack.c.b16 %v5543, %v5542
    %v5559 = vpack.c.b16 %v5545, %v5544
    %v5560 = vpack.c.b16 %v5547, %v5546
    %v5561 = vpack.c.b16 %v5549, %v5548
    %v5562 = vpack.c.b16 %v5551, %v5550
    %v5563 = vpack.c.b16 %v5553, %v5552
    %v5564 = vpack.c.b16 %v5555, %v5554
    %v5565 = vpack.c.b16 %v5557, %v5556
    %5574 = vmatprep.subr.bf16.mxu0 0
    %5575 = vmatpush1.bf16.msra.mxu0 %v5558
    %5576 = vmatprep.subr.bf16.mxu0 0
    %5577 = vmatpush1.bf16.msra.mxu0 %v5559
    %5578 = vmatprep.subr.bf16.mxu0 0
    %5579 = vmatpush1.bf16.msra.mxu0 %v5560
    %5580 = vmatprep.subr.bf16.mxu0 0
    %5581 = vmatpush1.bf16.msra.mxu0 %v5561
    %5582 = vmatprep.subr.bf16.mxu0 0
    %5583 = vmatpush1.bf16.msra.mxu0 %v5562
    %5584 = vmatprep.subr.bf16.mxu0 0
    %5585 = vmatpush1.bf16.msra.mxu0 %v5563
    %5586 = vmatprep.subr.bf16.mxu0 0
    %5587 = vmatpush1.bf16.msra.mxu0 %v5564
    %5588 = vmatprep.subr.bf16.mxu0 0
    %5589 = vmatpush1.bf16.msra.mxu0 %v5565
    %5590 = vmatprep.subr.bf16.mxu0 0
    %5591 = vmatpush1.bf16.msra.mxu0 0
    %5592 = vmatprep.subr.bf16.mxu0 0
    %5593 = vmatpush1.bf16.msra.mxu0 0
    %5594 = vmatprep.subr.bf16.mxu0 0
    %5595 = vmatpush1.bf16.msra.mxu0 0
    %5596 = vmatprep.subr.bf16.mxu0 0
    %5597 = vmatpush1.bf16.msra.mxu0 0
    %5598 = vmatprep.subr.bf16.mxu0 0
    %5599 = vmatpush1.bf16.msra.mxu0 0
    %5600 = vmatprep.subr.bf16.mxu0 0
    %5601 = vmatpush1.bf16.msra.mxu0 0
    %5602 = vmatprep.subr.bf16.mxu0 0
    %5603 = vmatpush1.bf16.msra.mxu0 0
    %5604 = vmatprep.subr.bf16.mxu0 0
    %5605 = vmatpush1.bf16.msra.mxu0 0
    %5606 = vmatprep.mubr.bf16.mxu0 0
    %5607 = vmatmul.mubr.bf16.gmra.mrb[0].mxu0 %v5508
    %v5608 = vpop.f32.mrb[0].mxu0
    %v5609 = vadd.f32 0.0, %v5608
    %v5610 = vpop.f32.mrb[0].mxu0
    %v5611 = vpop.f32.mrb[0].mxu0
    %v5612 = vpop.f32.mrb[0].mxu0
    %5613 = vdwg.mxu0
    %v5614 = vadd.f32 %v5438, %v5609
    %s5615 = scalar_lea.vmem %s0, 62
    %v5616 = vld [vmem:[%s5615] sm:$0x3]
    %v5619 = vunpack.c.l.s4 1966171168
    %v5620 = vunpack.c.0.s8 %v5619
    %v5621 = vlaneseq
    %v5622 = vshrl.u32 %v5621, 7
    %v5623 = vsub.s32 %v5620, %v5622
    %v5624 = vrot.slane %v5616, %v5623
    %v5625 = vcombine.high %v5624, %v5624
    %v5627 = vunpack.c.l.s4 1966171168
    %v5628 = vunpack.c.0.s8 %v5627
    %v5629 = vlaneseq
    %v5630 = vshrl.u32 %v5629, 7
    %v5631 = vsub.s32 %v5628, %v5630
    %v5632 = vrot.slane %v5624, %v5631
    %v5634 = vunpack.c.l.s4 1966171168
    %v5635 = vunpack.c.0.s8 %v5634
    %v5636 = vlaneseq
    %v5637 = vshrl.u32 %v5636, 7
    %v5638 = vsub.s32 %v5635, %v5637
    %v5639 = vrot.slane %v5625, %v5638
    %5642 = vmatprep.subr.bf16.mxu0 0
    %5643 = vmatpush1.bf16.msra.mxu0 %v157
    %5644 = vmatprep.subr.bf16.mxu0 0
    %5645 = vmatpush1.bf16.msra.mxu0 %v158
    %5646 = vmatprep.subr.bf16.mxu0 0
    %5647 = vmatpush1.bf16.msra.mxu0 %v159
    %5648 = vmatprep.subr.bf16.mxu0 0
    %5649 = vmatpush1.bf16.msra.mxu0 %v160
    %5650 = vmatprep.subr.bf16.mxu0 0
    %5651 = vmatpush1.bf16.msra.mxu0 %v161
    %5652 = vmatprep.subr.bf16.mxu0 0
    %5653 = vmatpush1.bf16.msra.mxu0 %v162
    %5654 = vmatprep.subr.bf16.mxu0 0
    %5655 = vmatpush1.bf16.msra.mxu0 %v163
    %5656 = vmatprep.subr.bf16.mxu0 0
    %5657 = vmatpush1.bf16.msra.mxu0 %v164
    %5658 = vmatprep.subr.bf16.mxu0 0
    %5659 = vmatpush1.bf16.msra.mxu0 %v165
    %5660 = vmatprep.subr.bf16.mxu0 0
    %5661 = vmatpush1.bf16.msra.mxu0 %v166
    %5662 = vmatprep.subr.bf16.mxu0 0
    %5663 = vmatpush1.bf16.msra.mxu0 %v167
    %5664 = vmatprep.subr.bf16.mxu0 0
    %5665 = vmatpush1.bf16.msra.mxu0 %v168
    %5666 = vmatprep.subr.bf16.mxu0 0
    %5667 = vmatpush1.bf16.msra.mxu0 %v169
    %5668 = vmatprep.subr.bf16.mxu0 0
    %5669 = vmatpush1.bf16.msra.mxu0 %v170
    %5670 = vmatprep.subr.bf16.mxu0 0
    %5671 = vmatpush1.bf16.msra.mxu0 %v171
    %5672 = vmatprep.subr.bf16.mxu0 0
    %5673 = vmatpush1.bf16.msra.mxu0 %v172
    %5674 = vmatprep.mubr.bf16.mxu0 %v5639
    %5675 = vmatmul.mubr.bf16.gmra.mrb[0].mxu0 %v5632
    %v5676 = vpop.f32.mrb[0].mxu0
    %v5677 = vadd.f32 %v66, %v5676
    %v5678 = vpop.f32.mrb[0].mxu0
    %v5679 = vpop.f32.mrb[0].mxu0
    %v5680 = vpop.f32.mrb[0].mxu0
    %5681 = vdwg.mxu0
    %vm5682 = vcmp.ge.f32.partialorder %v5677, 0.0
    %v5683 = vsel %vm5682, 1.0, 0.0
    %v5684 = vpack.c.bf16 %v5683, %v5683
    %s5685 = scalar_lea.vmem %s3, 1984
    %v5686 = vld [vmem:[%s5685] sm:$0xf]
    %v5687 = vld [vmem:[%s5685 + $0x4] sm:$0xf]
    %v5688 = vld [vmem:[%s5685 + $0x8] sm:$0xf]
    %v5689 = vld [vmem:[%s5685 + $0xc] sm:$0xf]
    %v5690 = vld [vmem:[%s5685 + $0x10] sm:$0xf]
    %v5691 = vld [vmem:[%s5685 + $0x14] sm:$0xf]
    %v5692 = vld [vmem:[%s5685 + $0x18] sm:$0xf]
    %v5693 = vld [vmem:[%s5685 + $0x1c] sm:$0xf]
    %v5694 = vld [vmem:[%s5685 + $0x20] sm:$0xf]
    %v5695 = vld [vmem:[%s5685 + $0x24] sm:$0xf]
    %v5696 = vld [vmem:[%s5685 + $0x28] sm:$0xf]
    %v5697 = vld [vmem:[%s5685 + $0x2c] sm:$0xf]
    %v5698 = vld [vmem:[%s5685 + $0x30] sm:$0xf]
    %v5699 = vld [vmem:[%s5685 + $0x34] sm:$0xf]
    %v5700 = vld [vmem:[%s5685 + $0x38] sm:$0xf]
    %v5701 = vld [vmem:[%s5685 + $0x3c] sm:$0xf]
    %v5718 = vunpack.c.l.b16 %v5686
    %v5719 = vunpack.c.l.b16 %v5687
    %v5720 = vunpack.c.l.b16 %v5688
    %v5721 = vunpack.c.l.b16 %v5689
    %v5722 = vunpack.c.l.b16 %v5690
    %v5723 = vunpack.c.l.b16 %v5691
    %v5724 = vunpack.c.l.b16 %v5692
    %v5725 = vunpack.c.l.b16 %v5693
    %v5726 = vunpack.c.l.b16 %v5694
    %v5727 = vunpack.c.l.b16 %v5695
    %v5728 = vunpack.c.l.b16 %v5696
    %v5729 = vunpack.c.l.b16 %v5697
    %v5730 = vunpack.c.l.b16 %v5698
    %v5731 = vunpack.c.l.b16 %v5699
    %v5732 = vunpack.c.l.b16 %v5700
    %v5733 = vunpack.c.l.b16 %v5701
    %v5734 = vpack.c.b16 %v5719, %v5718
    %v5735 = vpack.c.b16 %v5721, %v5720
    %v5736 = vpack.c.b16 %v5723, %v5722
    %v5737 = vpack.c.b16 %v5725, %v5724
    %v5738 = vpack.c.b16 %v5727, %v5726
    %v5739 = vpack.c.b16 %v5729, %v5728
    %v5740 = vpack.c.b16 %v5731, %v5730
    %v5741 = vpack.c.b16 %v5733, %v5732
    %5750 = vmatprep.subr.bf16.mxu0 0
    %5751 = vmatpush1.bf16.msra.mxu0 %v5734
    %5752 = vmatprep.subr.bf16.mxu0 0
    %5753 = vmatpush1.bf16.msra.mxu0 %v5735
    %5754 = vmatprep.subr.bf16.mxu0 0
    %5755 = vmatpush1.bf16.msra.mxu0 %v5736
    %5756 = vmatprep.subr.bf16.mxu0 0
    %5757 = vmatpush1.bf16.msra.mxu0 %v5737
    %5758 = vmatprep.subr.bf16.mxu0 0
    %5759 = vmatpush1.bf16.msra.mxu0 %v5738
    %5760 = vmatprep.subr.bf16.mxu0 0
    %5761 = vmatpush1.bf16.msra.mxu0 %v5739
    %5762 = vmatprep.subr.bf16.mxu0 0
    %5763 = vmatpush1.bf16.msra.mxu0 %v5740
    %5764 = vmatprep.subr.bf16.mxu0 0
    %5765 = vmatpush1.bf16.msra.mxu0 %v5741
    %5766 = vmatprep.subr.bf16.mxu0 0
    %5767 = vmatpush1.bf16.msra.mxu0 0
    %5768 = vmatprep.subr.bf16.mxu0 0
    %5769 = vmatpush1.bf16.msra.mxu0 0
    %5770 = vmatprep.subr.bf16.mxu0 0
    %5771 = vmatpush1.bf16.msra.mxu0 0
    %5772 = vmatprep.subr.bf16.mxu0 0
    %5773 = vmatpush1.bf16.msra.mxu0 0
    %5774 = vmatprep.subr.bf16.mxu0 0
    %5775 = vmatpush1.bf16.msra.mxu0 0
    %5776 = vmatprep.subr.bf16.mxu0 0
    %5777 = vmatpush1.bf16.msra.mxu0 0
    %5778 = vmatprep.subr.bf16.mxu0 0
    %5779 = vmatpush1.bf16.msra.mxu0 0
    %5780 = vmatprep.subr.bf16.mxu0 0
    %5781 = vmatpush1.bf16.msra.mxu0 0
    %5782 = vmatprep.mubr.bf16.mxu0 0
    %5783 = vmatmul.mubr.bf16.gmra.mrb[0].mxu0 %v5684
    %v5784 = vpop.f32.mrb[0].mxu0
    %v5785 = vadd.f32 0.0, %v5784
    %v5786 = vpop.f32.mrb[0].mxu0
    %v5787 = vpop.f32.mrb[0].mxu0
    %v5788 = vpop.f32.mrb[0].mxu0
    %5789 = vdwg.mxu0
    %v5790 = vadd.f32 %v5614, %v5785
    %s5791 = scalar_lea.vmem %s0, 64
    %v5792 = vld [vmem:[%s5791] sm:$0x3]
    %v5795 = vunpack.c.l.s4 1966171168
    %v5796 = vunpack.c.0.s8 %v5795
    %v5797 = vlaneseq
    %v5798 = vshrl.u32 %v5797, 7
    %v5799 = vsub.s32 %v5796, %v5798
    %v5800 = vrot.slane %v5792, %v5799
    %v5801 = vcombine.high %v5800, %v5800
    %v5803 = vunpack.c.l.s4 1966171168
    %v5804 = vunpack.c.0.s8 %v5803
    %v5805 = vlaneseq
    %v5806 = vshrl.u32 %v5805, 7
    %v5807 = vsub.s32 %v5804, %v5806
    %v5808 = vrot.slane %v5800, %v5807
    %v5810 = vunpack.c.l.s4 1966171168
    %v5811 = vunpack.c.0.s8 %v5810
    %v5812 = vlaneseq
    %v5813 = vshrl.u32 %v5812, 7
    %v5814 = vsub.s32 %v5811, %v5813
    %v5815 = vrot.slane %v5801, %v5814
    %5818 = vmatprep.subr.bf16.mxu0 0
    %5819 = vmatpush1.bf16.msra.mxu0 %v157
    %5820 = vmatprep.subr.bf16.mxu0 0
    %5821 = vmatpush1.bf16.msra.mxu0 %v158
    %5822 = vmatprep.subr.bf16.mxu0 0
    %5823 = vmatpush1.bf16.msra.mxu0 %v159
    %5824 = vmatprep.subr.bf16.mxu0 0
    %5825 = vmatpush1.bf16.msra.mxu0 %v160
    %5826 = vmatprep.subr.bf16.mxu0 0
    %5827 = vmatpush1.bf16.msra.mxu0 %v161
    %5828 = vmatprep.subr.bf16.mxu0 0
    %5829 = vmatpush1.bf16.msra.mxu0 %v162
    %5830 = vmatprep.subr.bf16.mxu0 0
    %5831 = vmatpush1.bf16.msra.mxu0 %v163
    %5832 = vmatprep.subr.bf16.mxu0 0
    %5833 = vmatpush1.bf16.msra.mxu0 %v164
    %5834 = vmatprep.subr.bf16.mxu0 0
    %5835 = vmatpush1.bf16.msra.mxu0 %v165
    %5836 = vmatprep.subr.bf16.mxu0 0
    %5837 = vmatpush1.bf16.msra.mxu0 %v166
    %5838 = vmatprep.subr.bf16.mxu0 0
    %5839 = vmatpush1.bf16.msra.mxu0 %v167
    %5840 = vmatprep.subr.bf16.mxu0 0
    %5841 = vmatpush1.bf16.msra.mxu0 %v168
    %5842 = vmatprep.subr.bf16.mxu0 0
    %5843 = vmatpush1.bf16.msra.mxu0 %v169
    %5844 = vmatprep.subr.bf16.mxu0 0
    %5845 = vmatpush1.bf16.msra.mxu0 %v170
    %5846 = vmatprep.subr.bf16.mxu0 0
    %5847 = vmatpush1.bf16.msra.mxu0 %v171
    %5848 = vmatprep.subr.bf16.mxu0 0
    %5849 = vmatpush1.bf16.msra.mxu0 %v172
    %5850 = vmatprep.mubr.bf16.mxu0 %v5815
    %5851 = vmatmul.mubr.bf16.gmra.mrb[0].mxu0 %v5808
    %v5852 = vpop.f32.mrb[0].mxu0
    %v5853 = vadd.f32 %v66, %v5852
    %v5854 = vpop.f32.mrb[0].mxu0
    %v5855 = vpop.f32.mrb[0].mxu0
    %v5856 = vpop.f32.mrb[0].mxu0
    %5857 = vdwg.mxu0
    %vm5858 = vcmp.ge.f32.partialorder %v5853, 0.0
    %v5859 = vsel %vm5858, 1.0, 0.0
    %v5860 = vpack.c.bf16 %v5859, %v5859
    %s5861 = scalar_lea.vmem %s3, 2048
    %v5862 = vld [vmem:[%s5861] sm:$0xf]
    %v5863 = vld [vmem:[%s5861 + $0x4] sm:$0xf]
    %v5864 = vld [vmem:[%s5861 + $0x8] sm:$0xf]
    %v5865 = vld [vmem:[%s5861 + $0xc] sm:$0xf]
    %v5866 = vld [vmem:[%s5861 + $0x10] sm:$0xf]
    %v5867 = vld [vmem:[%s5861 + $0x14] sm:$0xf]
    %v5868 = vld [vmem:[%s5861 + $0x18] sm:$0xf]
    %v5869 = vld [vmem:[%s5861 + $0x1c] sm:$0xf]
    %v5870 = vld [vmem:[%s5861 + $0x20] sm:$0xf]
    %v5871 = vld [vmem:[%s5861 + $0x24] sm:$0xf]
    %v5872 = vld [vmem:[%s5861 + $0x28] sm:$0xf]
    %v5873 = vld [vmem:[%s5861 + $0x2c] sm:$0xf]
    %v5874 = vld [vmem:[%s5861 + $0x30] sm:$0xf]
    %v5875 = vld [vmem:[%s5861 + $0x34] sm:$0xf]
    %v5876 = vld [vmem:[%s5861 + $0x38] sm:$0xf]
    %v5877 = vld [vmem:[%s5861 + $0x3c] sm:$0xf]
    %v5894 = vunpack.c.l.b16 %v5862
    %v5895 = vunpack.c.l.b16 %v5863
    %v5896 = vunpack.c.l.b16 %v5864
    %v5897 = vunpack.c.l.b16 %v5865
    %v5898 = vunpack.c.l.b16 %v5866
    %v5899 = vunpack.c.l.b16 %v5867
    %v5900 = vunpack.c.l.b16 %v5868
    %v5901 = vunpack.c.l.b16 %v5869
    %v5902 = vunpack.c.l.b16 %v5870
    %v5903 = vunpack.c.l.b16 %v5871
    %v5904 = vunpack.c.l.b16 %v5872
    %v5905 = vunpack.c.l.b16 %v5873
    %v5906 = vunpack.c.l.b16 %v5874
    %v5907 = vunpack.c.l.b16 %v5875
    %v5908 = vunpack.c.l.b16 %v5876
    %v5909 = vunpack.c.l.b16 %v5877
    %v5910 = vpack.c.b16 %v5895, %v5894
    %v5911 = vpack.c.b16 %v5897, %v5896
    %v5912 = vpack.c.b16 %v5899, %v5898
    %v5913 = vpack.c.b16 %v5901, %v5900
    %v5914 = vpack.c.b16 %v5903, %v5902
    %v5915 = vpack.c.b16 %v5905, %v5904
    %v5916 = vpack.c.b16 %v5907, %v5906
    %v5917 = vpack.c.b16 %v5909, %v5908
    %5926 = vmatprep.subr.bf16.mxu0 0
    %5927 = vmatpush1.bf16.msra.mxu0 %v5910
    %5928 = vmatprep.subr.bf16.mxu0 0
    %5929 = vmatpush1.bf16.msra.mxu0 %v5911
    %5930 = vmatprep.subr.bf16.mxu0 0
    %5931 = vmatpush1.bf16.msra.mxu0 %v5912
    %5932 = vmatprep.subr.bf16.mxu0 0
    %5933 = vmatpush1.bf16.msra.mxu0 %v5913
    %5934 = vmatprep.subr.bf16.mxu0 0
    %5935 = vmatpush1.bf16.msra.mxu0 %v5914
    %5936 = vmatprep.subr.bf16.mxu0 0
    %5937 = vmatpush1.bf16.msra.mxu0 %v5915
    %5938 = vmatprep.subr.bf16.mxu0 0
    %5939 = vmatpush1.bf16.msra.mxu0 %v5916
    %5940 = vmatprep.subr.bf16.mxu0 0
    %5941 = vmatpush1.bf16.msra.mxu0 %v5917
    %5942 = vmatprep.subr.bf16.mxu0 0
    %5943 = vmatpush1.bf16.msra.mxu0 0
    %5944 = vmatprep.subr.bf16.mxu0 0
    %5945 = vmatpush1.bf16.msra.mxu0 0
    %5946 = vmatprep.subr.bf16.mxu0 0
    %5947 = vmatpush1.bf16.msra.mxu0 0
    %5948 = vmatprep.subr.bf16.mxu0 0
    %5949 = vmatpush1.bf16.msra.mxu0 0
    %5950 = vmatprep.subr.bf16.mxu0 0
    %5951 = vmatpush1.bf16.msra.mxu0 0
    %5952 = vmatprep.subr.bf16.mxu0 0
    %5953 = vmatpush1.bf16.msra.mxu0 0
    %5954 = vmatprep.subr.bf16.mxu0 0
    %5955 = vmatpush1.bf16.msra.mxu0 0
    %5956 = vmatprep.subr.bf16.mxu0 0
    %5957 = vmatpush1.bf16.msra.mxu0 0
    %5958 = vmatprep.mubr.bf16.mxu0 0
    %5959 = vmatmul.mubr.bf16.gmra.mrb[0].mxu0 %v5860
    %v5960 = vpop.f32.mrb[0].mxu0
    %v5961 = vadd.f32 0.0, %v5960
    %v5962 = vpop.f32.mrb[0].mxu0
    %v5963 = vpop.f32.mrb[0].mxu0
    %v5964 = vpop.f32.mrb[0].mxu0
    %5965 = vdwg.mxu0
    %v5966 = vadd.f32 %v5790, %v5961
    %s5967 = scalar_lea.vmem %s0, 66
    %v5968 = vld [vmem:[%s5967] sm:$0x3]
    %v5971 = vunpack.c.l.s4 1966171168
    %v5972 = vunpack.c.0.s8 %v5971
    %v5973 = vlaneseq
    %v5974 = vshrl.u32 %v5973, 7
    %v5975 = vsub.s32 %v5972, %v5974
    %v5976 = vrot.slane %v5968, %v5975
    %v5977 = vcombine.high %v5976, %v5976
    %v5979 = vunpack.c.l.s4 1966171168
    %v5980 = vunpack.c.0.s8 %v5979
    %v5981 = vlaneseq
    %v5982 = vshrl.u32 %v5981, 7
    %v5983 = vsub.s32 %v5980, %v5982
    %v5984 = vrot.slane %v5976, %v5983
    %v5986 = vunpack.c.l.s4 1966171168
    %v5987 = vunpack.c.0.s8 %v5986
    %v5988 = vlaneseq
    %v5989 = vshrl.u32 %v5988, 7
    %v5990 = vsub.s32 %v5987, %v5989
    %v5991 = vrot.slane %v5977, %v5990
    %5994 = vmatprep.subr.bf16.mxu0 0
    %5995 = vmatpush1.bf16.msra.mxu0 %v157
    %5996 = vmatprep.subr.bf16.mxu0 0
    %5997 = vmatpush1.bf16.msra.mxu0 %v158
    %5998 = vmatprep.subr.bf16.mxu0 0
    %5999 = vmatpush1.bf16.msra.mxu0 %v159
    %6000 = vmatprep.subr.bf16.mxu0 0
    %6001 = vmatpush1.bf16.msra.mxu0 %v160
    %6002 = vmatprep.subr.bf16.mxu0 0
    %6003 = vmatpush1.bf16.msra.mxu0 %v161
    %6004 = vmatprep.subr.bf16.mxu0 0
    %6005 = vmatpush1.bf16.msra.mxu0 %v162
    %6006 = vmatprep.subr.bf16.mxu0 0
    %6007 = vmatpush1.bf16.msra.mxu0 %v163
    %6008 = vmatprep.subr.bf16.mxu0 0
    %6009 = vmatpush1.bf16.msra.mxu0 %v164
    %6010 = vmatprep.subr.bf16.mxu0 0
    %6011 = vmatpush1.bf16.msra.mxu0 %v165
    %6012 = vmatprep.subr.bf16.mxu0 0
    %6013 = vmatpush1.bf16.msra.mxu0 %v166
    %6014 = vmatprep.subr.bf16.mxu0 0
    %6015 = vmatpush1.bf16.msra.mxu0 %v167
    %6016 = vmatprep.subr.bf16.mxu0 0
    %6017 = vmatpush1.bf16.msra.mxu0 %v168
    %6018 = vmatprep.subr.bf16.mxu0 0
    %6019 = vmatpush1.bf16.msra.mxu0 %v169
    %6020 = vmatprep.subr.bf16.mxu0 0
    %6021 = vmatpush1.bf16.msra.mxu0 %v170
    %6022 = vmatprep.subr.bf16.mxu0 0
    %6023 = vmatpush1.bf16.msra.mxu0 %v171
    %6024 = vmatprep.subr.bf16.mxu0 0
    %6025 = vmatpush1.bf16.msra.mxu0 %v172
    %6026 = vmatprep.mubr.bf16.mxu0 %v5991
    %6027 = vmatmul.mubr.bf16.gmra.mrb[0].mxu0 %v5984
    %v6028 = vpop.f32.mrb[0].mxu0
    %v6029 = vadd.f32 %v66, %v6028
    %v6030 = vpop.f32.mrb[0].mxu0
    %v6031 = vpop.f32.mrb[0].mxu0
    %v6032 = vpop.f32.mrb[0].mxu0
    %6033 = vdwg.mxu0
    %vm6034 = vcmp.ge.f32.partialorder %v6029, 0.0
    %v6035 = vsel %vm6034, 1.0, 0.0
    %v6036 = vpack.c.bf16 %v6035, %v6035
    %s6037 = scalar_lea.vmem %s3, 2112
    %v6038 = vld [vmem:[%s6037] sm:$0xf]
    %v6039 = vld [vmem:[%s6037 + $0x4] sm:$0xf]
    %v6040 = vld [vmem:[%s6037 + $0x8] sm:$0xf]
    %v6041 = vld [vmem:[%s6037 + $0xc] sm:$0xf]
    %v6042 = vld [vmem:[%s6037 + $0x10] sm:$0xf]
    %v6043 = vld [vmem:[%s6037 + $0x14] sm:$0xf]
    %v6044 = vld [vmem:[%s6037 + $0x18] sm:$0xf]
    %v6045 = vld [vmem:[%s6037 + $0x1c] sm:$0xf]
    %v6046 = vld [vmem:[%s6037 + $0x20] sm:$0xf]
    %v6047 = vld [vmem:[%s6037 + $0x24] sm:$0xf]
    %v6048 = vld [vmem:[%s6037 + $0x28] sm:$0xf]
    %v6049 = vld [vmem:[%s6037 + $0x2c] sm:$0xf]
    %v6050 = vld [vmem:[%s6037 + $0x30] sm:$0xf]
    %v6051 = vld [vmem:[%s6037 + $0x34] sm:$0xf]
    %v6052 = vld [vmem:[%s6037 + $0x38] sm:$0xf]
    %v6053 = vld [vmem:[%s6037 + $0x3c] sm:$0xf]
    %v6070 = vunpack.c.l.b16 %v6038
    %v6071 = vunpack.c.l.b16 %v6039
    %v6072 = vunpack.c.l.b16 %v6040
    %v6073 = vunpack.c.l.b16 %v6041
    %v6074 = vunpack.c.l.b16 %v6042
    %v6075 = vunpack.c.l.b16 %v6043
    %v6076 = vunpack.c.l.b16 %v6044
    %v6077 = vunpack.c.l.b16 %v6045
    %v6078 = vunpack.c.l.b16 %v6046
    %v6079 = vunpack.c.l.b16 %v6047
    %v6080 = vunpack.c.l.b16 %v6048
    %v6081 = vunpack.c.l.b16 %v6049
    %v6082 = vunpack.c.l.b16 %v6050
    %v6083 = vunpack.c.l.b16 %v6051
    %v6084 = vunpack.c.l.b16 %v6052
    %v6085 = vunpack.c.l.b16 %v6053
    %v6086 = vpack.c.b16 %v6071, %v6070
    %v6087 = vpack.c.b16 %v6073, %v6072
    %v6088 = vpack.c.b16 %v6075, %v6074
    %v6089 = vpack.c.b16 %v6077, %v6076
    %v6090 = vpack.c.b16 %v6079, %v6078
    %v6091 = vpack.c.b16 %v6081, %v6080
    %v6092 = vpack.c.b16 %v6083, %v6082
    %v6093 = vpack.c.b16 %v6085, %v6084
    %6102 = vmatprep.subr.bf16.mxu0 0
    %6103 = vmatpush1.bf16.msra.mxu0 %v6086
    %6104 = vmatprep.subr.bf16.mxu0 0
    %6105 = vmatpush1.bf16.msra.mxu0 %v6087
    %6106 = vmatprep.subr.bf16.mxu0 0
    %6107 = vmatpush1.bf16.msra.mxu0 %v6088
    %6108 = vmatprep.subr.bf16.mxu0 0
    %6109 = vmatpush1.bf16.msra.mxu0 %v6089
    %6110 = vmatprep.subr.bf16.mxu0 0
    %6111 = vmatpush1.bf16.msra.mxu0 %v6090
    %6112 = vmatprep.subr.bf16.mxu0 0
    %6113 = vmatpush1.bf16.msra.mxu0 %v6091
    %6114 = vmatprep.subr.bf16.mxu0 0
    %6115 = vmatpush1.bf16.msra.mxu0 %v6092
    %6116 = vmatprep.subr.bf16.mxu0 0
    %6117 = vmatpush1.bf16.msra.mxu0 %v6093
    %6118 = vmatprep.subr.bf16.mxu0 0
    %6119 = vmatpush1.bf16.msra.mxu0 0
    %6120 = vmatprep.subr.bf16.mxu0 0
    %6121 = vmatpush1.bf16.msra.mxu0 0
    %6122 = vmatprep.subr.bf16.mxu0 0
    %6123 = vmatpush1.bf16.msra.mxu0 0
    %6124 = vmatprep.subr.bf16.mxu0 0
    %6125 = vmatpush1.bf16.msra.mxu0 0
    %6126 = vmatprep.subr.bf16.mxu0 0
    %6127 = vmatpush1.bf16.msra.mxu0 0
    %6128 = vmatprep.subr.bf16.mxu0 0
    %6129 = vmatpush1.bf16.msra.mxu0 0
    %6130 = vmatprep.subr.bf16.mxu0 0
    %6131 = vmatpush1.bf16.msra.mxu0 0
    %6132 = vmatprep.subr.bf16.mxu0 0
    %6133 = vmatpush1.bf16.msra.mxu0 0
    %6134 = vmatprep.mubr.bf16.mxu0 0
    %6135 = vmatmul.mubr.bf16.gmra.mrb[0].mxu0 %v6036
    %v6136 = vpop.f32.mrb[0].mxu0
    %v6137 = vadd.f32 0.0, %v6136
    %v6138 = vpop.f32.mrb[0].mxu0
    %v6139 = vpop.f32.mrb[0].mxu0
    %v6140 = vpop.f32.mrb[0].mxu0
    %6141 = vdwg.mxu0
    %v6142 = vadd.f32 %v5966, %v6137
    %s6143 = scalar_lea.vmem %s0, 68
    %v6144 = vld [vmem:[%s6143] sm:$0x3]
    %v6147 = vunpack.c.l.s4 1966171168
    %v6148 = vunpack.c.0.s8 %v6147
    %v6149 = vlaneseq
    %v6150 = vshrl.u32 %v6149, 7
    %v6151 = vsub.s32 %v6148, %v6150
    %v6152 = vrot.slane %v6144, %v6151
    %v6153 = vcombine.high %v6152, %v6152
    %v6155 = vunpack.c.l.s4 1966171168
    %v6156 = vunpack.c.0.s8 %v6155
    %v6157 = vlaneseq
    %v6158 = vshrl.u32 %v6157, 7
    %v6159 = vsub.s32 %v6156, %v6158
    %v6160 = vrot.slane %v6152, %v6159
    %v6162 = vunpack.c.l.s4 1966171168
    %v6163 = vunpack.c.0.s8 %v6162
    %v6164 = vlaneseq
    %v6165 = vshrl.u32 %v6164, 7
    %v6166 = vsub.s32 %v6163, %v6165
    %v6167 = vrot.slane %v6153, %v6166
    %6170 = vmatprep.subr.bf16.mxu0 0
    %6171 = vmatpush1.bf16.msra.mxu0 %v157
    %6172 = vmatprep.subr.bf16.mxu0 0
    %6173 = vmatpush1.bf16.msra.mxu0 %v158
    %6174 = vmatprep.subr.bf16.mxu0 0
    %6175 = vmatpush1.bf16.msra.mxu0 %v159
    %6176 = vmatprep.subr.bf16.mxu0 0
    %6177 = vmatpush1.bf16.msra.mxu0 %v160
    %6178 = vmatprep.subr.bf16.mxu0 0
    %6179 = vmatpush1.bf16.msra.mxu0 %v161
    %6180 = vmatprep.subr.bf16.mxu0 0
    %6181 = vmatpush1.bf16.msra.mxu0 %v162
    %6182 = vmatprep.subr.bf16.mxu0 0
    %6183 = vmatpush1.bf16.msra.mxu0 %v163
    %6184 = vmatprep.subr.bf16.mxu0 0
    %6185 = vmatpush1.bf16.msra.mxu0 %v164
    %6186 = vmatprep.subr.bf16.mxu0 0
    %6187 = vmatpush1.bf16.msra.mxu0 %v165
    %6188 = vmatprep.subr.bf16.mxu0 0
    %6189 = vmatpush1.bf16.msra.mxu0 %v166
    %6190 = vmatprep.subr.bf16.mxu0 0
    %6191 = vmatpush1.bf16.msra.mxu0 %v167
    %6192 = vmatprep.subr.bf16.mxu0 0
    %6193 = vmatpush1.bf16.msra.mxu0 %v168
    %6194 = vmatprep.subr.bf16.mxu0 0
    %6195 = vmatpush1.bf16.msra.mxu0 %v169
    %6196 = vmatprep.subr.bf16.mxu0 0
    %6197 = vmatpush1.bf16.msra.mxu0 %v170
    %6198 = vmatprep.subr.bf16.mxu0 0
    %6199 = vmatpush1.bf16.msra.mxu0 %v171
    %6200 = vmatprep.subr.bf16.mxu0 0
    %6201 = vmatpush1.bf16.msra.mxu0 %v172
    %6202 = vmatprep.mubr.bf16.mxu0 %v6167
    %6203 = vmatmul.mubr.bf16.gmra.mrb[0].mxu0 %v6160
    %v6204 = vpop.f32.mrb[0].mxu0
    %v6205 = vadd.f32 %v66, %v6204
    %v6206 = vpop.f32.mrb[0].mxu0
    %v6207 = vpop.f32.mrb[0].mxu0
    %v6208 = vpop.f32.mrb[0].mxu0
    %6209 = vdwg.mxu0
    %vm6210 = vcmp.ge.f32.partialorder %v6205, 0.0
    %v6211 = vsel %vm6210, 1.0, 0.0
    %v6212 = vpack.c.bf16 %v6211, %v6211
    %s6213 = scalar_lea.vmem %s3, 2176
    %v6214 = vld [vmem:[%s6213] sm:$0xf]
    %v6215 = vld [vmem:[%s6213 + $0x4] sm:$0xf]
    %v6216 = vld [vmem:[%s6213 + $0x8] sm:$0xf]
    %v6217 = vld [vmem:[%s6213 + $0xc] sm:$0xf]
    %v6218 = vld [vmem:[%s6213 + $0x10] sm:$0xf]
    %v6219 = vld [vmem:[%s6213 + $0x14] sm:$0xf]
    %v6220 = vld [vmem:[%s6213 + $0x18] sm:$0xf]
    %v6221 = vld [vmem:[%s6213 + $0x1c] sm:$0xf]
    %v6222 = vld [vmem:[%s6213 + $0x20] sm:$0xf]
    %v6223 = vld [vmem:[%s6213 + $0x24] sm:$0xf]
    %v6224 = vld [vmem:[%s6213 + $0x28] sm:$0xf]
    %v6225 = vld [vmem:[%s6213 + $0x2c] sm:$0xf]
    %v6226 = vld [vmem:[%s6213 + $0x30] sm:$0xf]
    %v6227 = vld [vmem:[%s6213 + $0x34] sm:$0xf]
    %v6228 = vld [vmem:[%s6213 + $0x38] sm:$0xf]
    %v6229 = vld [vmem:[%s6213 + $0x3c] sm:$0xf]
    %v6246 = vunpack.c.l.b16 %v6214
    %v6247 = vunpack.c.l.b16 %v6215
    %v6248 = vunpack.c.l.b16 %v6216
    %v6249 = vunpack.c.l.b16 %v6217
    %v6250 = vunpack.c.l.b16 %v6218
    %v6251 = vunpack.c.l.b16 %v6219
    %v6252 = vunpack.c.l.b16 %v6220
    %v6253 = vunpack.c.l.b16 %v6221
    %v6254 = vunpack.c.l.b16 %v6222
    %v6255 = vunpack.c.l.b16 %v6223
    %v6256 = vunpack.c.l.b16 %v6224
    %v6257 = vunpack.c.l.b16 %v6225
    %v6258 = vunpack.c.l.b16 %v6226
    %v6259 = vunpack.c.l.b16 %v6227
    %v6260 = vunpack.c.l.b16 %v6228
    %v6261 = vunpack.c.l.b16 %v6229
    %v6262 = vpack.c.b16 %v6247, %v6246
    %v6263 = vpack.c.b16 %v6249, %v6248
    %v6264 = vpack.c.b16 %v6251, %v6250
    %v6265 = vpack.c.b16 %v6253, %v6252
    %v6266 = vpack.c.b16 %v6255, %v6254
    %v6267 = vpack.c.b16 %v6257, %v6256
    %v6268 = vpack.c.b16 %v6259, %v6258
    %v6269 = vpack.c.b16 %v6261, %v6260
    %6278 = vmatprep.subr.bf16.mxu0 0
    %6279 = vmatpush1.bf16.msra.mxu0 %v6262
    %6280 = vmatprep.subr.bf16.mxu0 0
    %6281 = vmatpush1.bf16.msra.mxu0 %v6263
    %6282 = vmatprep.subr.bf16.mxu0 0
    %6283 = vmatpush1.bf16.msra.mxu0 %v6264
    %6284 = vmatprep.subr.bf16.mxu0 0
    %6285 = vmatpush1.bf16.msra.mxu0 %v6265
    %6286 = vmatprep.subr.bf16.mxu0 0
    %6287 = vmatpush1.bf16.msra.mxu0 %v6266
    %6288 = vmatprep.subr.bf16.mxu0 0
    %6289 = vmatpush1.bf16.msra.mxu0 %v6267
    %6290 = vmatprep.subr.bf16.mxu0 0
    %6291 = vmatpush1.bf16.msra.mxu0 %v6268
    %6292 = vmatprep.subr.bf16.mxu0 0
    %6293 = vmatpush1.bf16.msra.mxu0 %v6269
    %6294 = vmatprep.subr.bf16.mxu0 0
    %6295 = vmatpush1.bf16.msra.mxu0 0
    %6296 = vmatprep.subr.bf16.mxu0 0
    %6297 = vmatpush1.bf16.msra.mxu0 0
    %6298 = vmatprep.subr.bf16.mxu0 0
    %6299 = vmatpush1.bf16.msra.mxu0 0
    %6300 = vmatprep.subr.bf16.mxu0 0
    %6301 = vmatpush1.bf16.msra.mxu0 0
    %6302 = vmatprep.subr.bf16.mxu0 0
    %6303 = vmatpush1.bf16.msra.mxu0 0
    %6304 = vmatprep.subr.bf16.mxu0 0
    %6305 = vmatpush1.bf16.msra.mxu0 0
    %6306 = vmatprep.subr.bf16.mxu0 0
    %6307 = vmatpush1.bf16.msra.mxu0 0
    %6308 = vmatprep.subr.bf16.mxu0 0
    %6309 = vmatpush1.bf16.msra.mxu0 0
    %6310 = vmatprep.mubr.bf16.mxu0 0
    %6311 = vmatmul.mubr.bf16.gmra.mrb[0].mxu0 %v6212
    %v6312 = vpop.f32.mrb[0].mxu0
    %v6313 = vadd.f32 0.0, %v6312
    %v6314 = vpop.f32.mrb[0].mxu0
    %v6315 = vpop.f32.mrb[0].mxu0
    %v6316 = vpop.f32.mrb[0].mxu0
    %6317 = vdwg.mxu0
    %v6318 = vadd.f32 %v6142, %v6313
    %s6319 = scalar_lea.vmem %s0, 70
    %v6320 = vld [vmem:[%s6319] sm:$0x3]
    %v6323 = vunpack.c.l.s4 1966171168
    %v6324 = vunpack.c.0.s8 %v6323
    %v6325 = vlaneseq
    %v6326 = vshrl.u32 %v6325, 7
    %v6327 = vsub.s32 %v6324, %v6326
    %v6328 = vrot.slane %v6320, %v6327
    %v6329 = vcombine.high %v6328, %v6328
    %v6331 = vunpack.c.l.s4 1966171168
    %v6332 = vunpack.c.0.s8 %v6331
    %v6333 = vlaneseq
    %v6334 = vshrl.u32 %v6333, 7
    %v6335 = vsub.s32 %v6332, %v6334
    %v6336 = vrot.slane %v6328, %v6335
    %v6338 = vunpack.c.l.s4 1966171168
    %v6339 = vunpack.c.0.s8 %v6338
    %v6340 = vlaneseq
    %v6341 = vshrl.u32 %v6340, 7
    %v6342 = vsub.s32 %v6339, %v6341
    %v6343 = vrot.slane %v6329, %v6342
    %6346 = vmatprep.subr.bf16.mxu0 0
    %6347 = vmatpush1.bf16.msra.mxu0 %v157
    %6348 = vmatprep.subr.bf16.mxu0 0
    %6349 = vmatpush1.bf16.msra.mxu0 %v158
    %6350 = vmatprep.subr.bf16.mxu0 0
    %6351 = vmatpush1.bf16.msra.mxu0 %v159
    %6352 = vmatprep.subr.bf16.mxu0 0
    %6353 = vmatpush1.bf16.msra.mxu0 %v160
    %6354 = vmatprep.subr.bf16.mxu0 0
    %6355 = vmatpush1.bf16.msra.mxu0 %v161
    %6356 = vmatprep.subr.bf16.mxu0 0
    %6357 = vmatpush1.bf16.msra.mxu0 %v162
    %6358 = vmatprep.subr.bf16.mxu0 0
    %6359 = vmatpush1.bf16.msra.mxu0 %v163
    %6360 = vmatprep.subr.bf16.mxu0 0
    %6361 = vmatpush1.bf16.msra.mxu0 %v164
    %6362 = vmatprep.subr.bf16.mxu0 0
    %6363 = vmatpush1.bf16.msra.mxu0 %v165
    %6364 = vmatprep.subr.bf16.mxu0 0
    %6365 = vmatpush1.bf16.msra.mxu0 %v166
    %6366 = vmatprep.subr.bf16.mxu0 0
    %6367 = vmatpush1.bf16.msra.mxu0 %v167
    %6368 = vmatprep.subr.bf16.mxu0 0
    %6369 = vmatpush1.bf16.msra.mxu0 %v168
    %6370 = vmatprep.subr.bf16.mxu0 0
    %6371 = vmatpush1.bf16.msra.mxu0 %v169
    %6372 = vmatprep.subr.bf16.mxu0 0
    %6373 = vmatpush1.bf16.msra.mxu0 %v170
    %6374 = vmatprep.subr.bf16.mxu0 0
    %6375 = vmatpush1.bf16.msra.mxu0 %v171
    %6376 = vmatprep.subr.bf16.mxu0 0
    %6377 = vmatpush1.bf16.msra.mxu0 %v172
    %6378 = vmatprep.mubr.bf16.mxu0 %v6343
    %6379 = vmatmul.mubr.bf16.gmra.mrb[0].mxu0 %v6336
    %v6380 = vpop.f32.mrb[0].mxu0
    %v6381 = vadd.f32 %v66, %v6380
    %v6382 = vpop.f32.mrb[0].mxu0
    %v6383 = vpop.f32.mrb[0].mxu0
    %v6384 = vpop.f32.mrb[0].mxu0
    %6385 = vdwg.mxu0
    %vm6386 = vcmp.ge.f32.partialorder %v6381, 0.0
    %v6387 = vsel %vm6386, 1.0, 0.0
    %v6388 = vpack.c.bf16 %v6387, %v6387
    %s6389 = scalar_lea.vmem %s3, 2240
    %v6390 = vld [vmem:[%s6389] sm:$0xf]
    %v6391 = vld [vmem:[%s6389 + $0x4] sm:$0xf]
    %v6392 = vld [vmem:[%s6389 + $0x8] sm:$0xf]
    %v6393 = vld [vmem:[%s6389 + $0xc] sm:$0xf]
    %v6394 = vld [vmem:[%s6389 + $0x10] sm:$0xf]
    %v6395 = vld [vmem:[%s6389 + $0x14] sm:$0xf]
    %v6396 = vld [vmem:[%s6389 + $0x18] sm:$0xf]
    %v6397 = vld [vmem:[%s6389 + $0x1c] sm:$0xf]
    %v6398 = vld [vmem:[%s6389 + $0x20] sm:$0xf]
    %v6399 = vld [vmem:[%s6389 + $0x24] sm:$0xf]
    %v6400 = vld [vmem:[%s6389 + $0x28] sm:$0xf]
    %v6401 = vld [vmem:[%s6389 + $0x2c] sm:$0xf]
    %v6402 = vld [vmem:[%s6389 + $0x30] sm:$0xf]
    %v6403 = vld [vmem:[%s6389 + $0x34] sm:$0xf]
    %v6404 = vld [vmem:[%s6389 + $0x38] sm:$0xf]
    %v6405 = vld [vmem:[%s6389 + $0x3c] sm:$0xf]
    %v6422 = vunpack.c.l.b16 %v6390
    %v6423 = vunpack.c.l.b16 %v6391
    %v6424 = vunpack.c.l.b16 %v6392
    %v6425 = vunpack.c.l.b16 %v6393
    %v6426 = vunpack.c.l.b16 %v6394
    %v6427 = vunpack.c.l.b16 %v6395
    %v6428 = vunpack.c.l.b16 %v6396
    %v6429 = vunpack.c.l.b16 %v6397
    %v6430 = vunpack.c.l.b16 %v6398
    %v6431 = vunpack.c.l.b16 %v6399
    %v6432 = vunpack.c.l.b16 %v6400
    %v6433 = vunpack.c.l.b16 %v6401
    %v6434 = vunpack.c.l.b16 %v6402
    %v6435 = vunpack.c.l.b16 %v6403
    %v6436 = vunpack.c.l.b16 %v6404
    %v6437 = vunpack.c.l.b16 %v6405
    %v6438 = vpack.c.b16 %v6423, %v6422
    %v6439 = vpack.c.b16 %v6425, %v6424
    %v6440 = vpack.c.b16 %v6427, %v6426
    %v6441 = vpack.c.b16 %v6429, %v6428
    %v6442 = vpack.c.b16 %v6431, %v6430
    %v6443 = vpack.c.b16 %v6433, %v6432
    %v6444 = vpack.c.b16 %v6435, %v6434
    %v6445 = vpack.c.b16 %v6437, %v6436
    %6454 = vmatprep.subr.bf16.mxu0 0
    %6455 = vmatpush1.bf16.msra.mxu0 %v6438
    %6456 = vmatprep.subr.bf16.mxu0 0
    %6457 = vmatpush1.bf16.msra.mxu0 %v6439
    %6458 = vmatprep.subr.bf16.mxu0 0
    %6459 = vmatpush1.bf16.msra.mxu0 %v6440
    %6460 = vmatprep.subr.bf16.mxu0 0
    %6461 = vmatpush1.bf16.msra.mxu0 %v6441
    %6462 = vmatprep.subr.bf16.mxu0 0
    %6463 = vmatpush1.bf16.msra.mxu0 %v6442
    %6464 = vmatprep.subr.bf16.mxu0 0
    %6465 = vmatpush1.bf16.msra.mxu0 %v6443
    %6466 = vmatprep.subr.bf16.mxu0 0
    %6467 = vmatpush1.bf16.msra.mxu0 %v6444
    %6468 = vmatprep.subr.bf16.mxu0 0
    %6469 = vmatpush1.bf16.msra.mxu0 %v6445
    %6470 = vmatprep.subr.bf16.mxu0 0
    %6471 = vmatpush1.bf16.msra.mxu0 0
    %6472 = vmatprep.subr.bf16.mxu0 0
    %6473 = vmatpush1.bf16.msra.mxu0 0
    %6474 = vmatprep.subr.bf16.mxu0 0
    %6475 = vmatpush1.bf16.msra.mxu0 0
    %6476 = vmatprep.subr.bf16.mxu0 0
    %6477 = vmatpush1.bf16.msra.mxu0 0
    %6478 = vmatprep.subr.bf16.mxu0 0
    %6479 = vmatpush1.bf16.msra.mxu0 0
    %6480 = vmatprep.subr.bf16.mxu0 0
    %6481 = vmatpush1.bf16.msra.mxu0 0
    %6482 = vmatprep.subr.bf16.mxu0 0
    %6483 = vmatpush1.bf16.msra.mxu0 0
    %6484 = vmatprep.subr.bf16.mxu0 0
    %6485 = vmatpush1.bf16.msra.mxu0 0
    %6486 = vmatprep.mubr.bf16.mxu0 0
    %6487 = vmatmul.mubr.bf16.gmra.mrb[0].mxu0 %v6388
    %v6488 = vpop.f32.mrb[0].mxu0
    %v6489 = vadd.f32 0.0, %v6488
    %v6490 = vpop.f32.mrb[0].mxu0
    %v6491 = vpop.f32.mrb[0].mxu0
    %v6492 = vpop.f32.mrb[0].mxu0
    %6493 = vdwg.mxu0
    %v6494 = vadd.f32 %v6318, %v6489
    %s6495 = scalar_lea.vmem %s0, 72
    %v6496 = vld [vmem:[%s6495] sm:$0x3]
    %v6499 = vunpack.c.l.s4 1966171168
    %v6500 = vunpack.c.0.s8 %v6499
    %v6501 = vlaneseq
    %v6502 = vshrl.u32 %v6501, 7
    %v6503 = vsub.s32 %v6500, %v6502
    %v6504 = vrot.slane %v6496, %v6503
    %v6505 = vcombine.high %v6504, %v6504
    %v6507 = vunpack.c.l.s4 1966171168
    %v6508 = vunpack.c.0.s8 %v6507
    %v6509 = vlaneseq
    %v6510 = vshrl.u32 %v6509, 7
    %v6511 = vsub.s32 %v6508, %v6510
    %v6512 = vrot.slane %v6504, %v6511
    %v6514 = vunpack.c.l.s4 1966171168
    %v6515 = vunpack.c.0.s8 %v6514
    %v6516 = vlaneseq
    %v6517 = vshrl.u32 %v6516, 7
    %v6518 = vsub.s32 %v6515, %v6517
    %v6519 = vrot.slane %v6505, %v6518
    %6522 = vmatprep.subr.bf16.mxu0 0
    %6523 = vmatpush1.bf16.msra.mxu0 %v157
    %6524 = vmatprep.subr.bf16.mxu0 0
    %6525 = vmatpush1.bf16.msra.mxu0 %v158
    %6526 = vmatprep.subr.bf16.mxu0 0
    %6527 = vmatpush1.bf16.msra.mxu0 %v159
    %6528 = vmatprep.subr.bf16.mxu0 0
    %6529 = vmatpush1.bf16.msra.mxu0 %v160
    %6530 = vmatprep.subr.bf16.mxu0 0
    %6531 = vmatpush1.bf16.msra.mxu0 %v161
    %6532 = vmatprep.subr.bf16.mxu0 0
    %6533 = vmatpush1.bf16.msra.mxu0 %v162
    %6534 = vmatprep.subr.bf16.mxu0 0
    %6535 = vmatpush1.bf16.msra.mxu0 %v163
    %6536 = vmatprep.subr.bf16.mxu0 0
    %6537 = vmatpush1.bf16.msra.mxu0 %v164
    %6538 = vmatprep.subr.bf16.mxu0 0
    %6539 = vmatpush1.bf16.msra.mxu0 %v165
    %6540 = vmatprep.subr.bf16.mxu0 0
    %6541 = vmatpush1.bf16.msra.mxu0 %v166
    %6542 = vmatprep.subr.bf16.mxu0 0
    %6543 = vmatpush1.bf16.msra.mxu0 %v167
    %6544 = vmatprep.subr.bf16.mxu0 0
    %6545 = vmatpush1.bf16.msra.mxu0 %v168
    %6546 = vmatprep.subr.bf16.mxu0 0
    %6547 = vmatpush1.bf16.msra.mxu0 %v169
    %6548 = vmatprep.subr.bf16.mxu0 0
    %6549 = vmatpush1.bf16.msra.mxu0 %v170
    %6550 = vmatprep.subr.bf16.mxu0 0
    %6551 = vmatpush1.bf16.msra.mxu0 %v171
    %6552 = vmatprep.subr.bf16.mxu0 0
    %6553 = vmatpush1.bf16.msra.mxu0 %v172
    %6554 = vmatprep.mubr.bf16.mxu0 %v6519
    %6555 = vmatmul.mubr.bf16.gmra.mrb[0].mxu0 %v6512
    %v6556 = vpop.f32.mrb[0].mxu0
    %v6557 = vadd.f32 %v66, %v6556
    %v6558 = vpop.f32.mrb[0].mxu0
    %v6559 = vpop.f32.mrb[0].mxu0
    %v6560 = vpop.f32.mrb[0].mxu0
    %6561 = vdwg.mxu0
    %vm6562 = vcmp.ge.f32.partialorder %v6557, 0.0
    %v6563 = vsel %vm6562, 1.0, 0.0
    %v6564 = vpack.c.bf16 %v6563, %v6563
    %s6565 = scalar_lea.vmem %s3, 2304
    %v6566 = vld [vmem:[%s6565] sm:$0xf]
    %v6567 = vld [vmem:[%s6565 + $0x4] sm:$0xf]
    %v6568 = vld [vmem:[%s6565 + $0x8] sm:$0xf]
    %v6569 = vld [vmem:[%s6565 + $0xc] sm:$0xf]
    %v6570 = vld [vmem:[%s6565 + $0x10] sm:$0xf]
    %v6571 = vld [vmem:[%s6565 + $0x14] sm:$0xf]
    %v6572 = vld [vmem:[%s6565 + $0x18] sm:$0xf]
    %v6573 = vld [vmem:[%s6565 + $0x1c] sm:$0xf]
    %v6574 = vld [vmem:[%s6565 + $0x20] sm:$0xf]
    %v6575 = vld [vmem:[%s6565 + $0x24] sm:$0xf]
    %v6576 = vld [vmem:[%s6565 + $0x28] sm:$0xf]
    %v6577 = vld [vmem:[%s6565 + $0x2c] sm:$0xf]
    %v6578 = vld [vmem:[%s6565 + $0x30] sm:$0xf]
    %v6579 = vld [vmem:[%s6565 + $0x34] sm:$0xf]
    %v6580 = vld [vmem:[%s6565 + $0x38] sm:$0xf]
    %v6581 = vld [vmem:[%s6565 + $0x3c] sm:$0xf]
    %v6598 = vunpack.c.l.b16 %v6566
    %v6599 = vunpack.c.l.b16 %v6567
    %v6600 = vunpack.c.l.b16 %v6568
    %v6601 = vunpack.c.l.b16 %v6569
    %v6602 = vunpack.c.l.b16 %v6570
    %v6603 = vunpack.c.l.b16 %v6571
    %v6604 = vunpack.c.l.b16 %v6572
    %v6605 = vunpack.c.l.b16 %v6573
    %v6606 = vunpack.c.l.b16 %v6574
    %v6607 = vunpack.c.l.b16 %v6575
    %v6608 = vunpack.c.l.b16 %v6576
    %v6609 = vunpack.c.l.b16 %v6577
    %v6610 = vunpack.c.l.b16 %v6578
    %v6611 = vunpack.c.l.b16 %v6579
    %v6612 = vunpack.c.l.b16 %v6580
    %v6613 = vunpack.c.l.b16 %v6581
    %v6614 = vpack.c.b16 %v6599, %v6598
    %v6615 = vpack.c.b16 %v6601, %v6600
    %v6616 = vpack.c.b16 %v6603, %v6602
    %v6617 = vpack.c.b16 %v6605, %v6604
    %v6618 = vpack.c.b16 %v6607, %v6606
    %v6619 = vpack.c.b16 %v6609, %v6608
    %v6620 = vpack.c.b16 %v6611, %v6610
    %v6621 = vpack.c.b16 %v6613, %v6612
    %6630 = vmatprep.subr.bf16.mxu0 0
    %6631 = vmatpush1.bf16.msra.mxu0 %v6614
    %6632 = vmatprep.subr.bf16.mxu0 0
    %6633 = vmatpush1.bf16.msra.mxu0 %v6615
    %6634 = vmatprep.subr.bf16.mxu0 0
    %6635 = vmatpush1.bf16.msra.mxu0 %v6616
    %6636 = vmatprep.subr.bf16.mxu0 0
    %6637 = vmatpush1.bf16.msra.mxu0 %v6617
    %6638 = vmatprep.subr.bf16.mxu0 0
    %6639 = vmatpush1.bf16.msra.mxu0 %v6618
    %6640 = vmatprep.subr.bf16.mxu0 0
    %6641 = vmatpush1.bf16.msra.mxu0 %v6619
    %6642 = vmatprep.subr.bf16.mxu0 0
    %6643 = vmatpush1.bf16.msra.mxu0 %v6620
    %6644 = vmatprep.subr.bf16.mxu0 0
    %6645 = vmatpush1.bf16.msra.mxu0 %v6621
    %6646 = vmatprep.subr.bf16.mxu0 0
    %6647 = vmatpush1.bf16.msra.mxu0 0
    %6648 = vmatprep.subr.bf16.mxu0 0
    %6649 = vmatpush1.bf16.msra.mxu0 0
    %6650 = vmatprep.subr.bf16.mxu0 0
    %6651 = vmatpush1.bf16.msra.mxu0 0
    %6652 = vmatprep.subr.bf16.mxu0 0
    %6653 = vmatpush1.bf16.msra.mxu0 0
    %6654 = vmatprep.subr.bf16.mxu0 0
    %6655 = vmatpush1.bf16.msra.mxu0 0
    %6656 = vmatprep.subr.bf16.mxu0 0
    %6657 = vmatpush1.bf16.msra.mxu0 0
    %6658 = vmatprep.subr.bf16.mxu0 0
    %6659 = vmatpush1.bf16.msra.mxu0 0
    %6660 = vmatprep.subr.bf16.mxu0 0
    %6661 = vmatpush1.bf16.msra.mxu0 0
    %6662 = vmatprep.mubr.bf16.mxu0 0
    %6663 = vmatmul.mubr.bf16.gmra.mrb[0].mxu0 %v6564
    %v6664 = vpop.f32.mrb[0].mxu0
    %v6665 = vadd.f32 0.0, %v6664
    %v6666 = vpop.f32.mrb[0].mxu0
    %v6667 = vpop.f32.mrb[0].mxu0
    %v6668 = vpop.f32.mrb[0].mxu0
    %6669 = vdwg.mxu0
    %v6670 = vadd.f32 %v6494, %v6665
    %s6671 = scalar_lea.vmem %s0, 74
    %v6672 = vld [vmem:[%s6671] sm:$0x3]
    %v6675 = vunpack.c.l.s4 1966171168
    %v6676 = vunpack.c.0.s8 %v6675
    %v6677 = vlaneseq
    %v6678 = vshrl.u32 %v6677, 7
    %v6679 = vsub.s32 %v6676, %v6678
    %v6680 = vrot.slane %v6672, %v6679
    %v6681 = vcombine.high %v6680, %v6680
    %v6683 = vunpack.c.l.s4 1966171168
    %v6684 = vunpack.c.0.s8 %v6683
    %v6685 = vlaneseq
    %v6686 = vshrl.u32 %v6685, 7
    %v6687 = vsub.s32 %v6684, %v6686
    %v6688 = vrot.slane %v6680, %v6687
    %v6690 = vunpack.c.l.s4 1966171168
    %v6691 = vunpack.c.0.s8 %v6690
    %v6692 = vlaneseq
    %v6693 = vshrl.u32 %v6692, 7
    %v6694 = vsub.s32 %v6691, %v6693
    %v6695 = vrot.slane %v6681, %v6694
    %6698 = vmatprep.subr.bf16.mxu0 0
    %6699 = vmatpush1.bf16.msra.mxu0 %v157
    %6700 = vmatprep.subr.bf16.mxu0 0
    %6701 = vmatpush1.bf16.msra.mxu0 %v158
    %6702 = vmatprep.subr.bf16.mxu0 0
    %6703 = vmatpush1.bf16.msra.mxu0 %v159
    %6704 = vmatprep.subr.bf16.mxu0 0
    %6705 = vmatpush1.bf16.msra.mxu0 %v160
    %6706 = vmatprep.subr.bf16.mxu0 0
    %6707 = vmatpush1.bf16.msra.mxu0 %v161
    %6708 = vmatprep.subr.bf16.mxu0 0
    %6709 = vmatpush1.bf16.msra.mxu0 %v162
    %6710 = vmatprep.subr.bf16.mxu0 0
    %6711 = vmatpush1.bf16.msra.mxu0 %v163
    %6712 = vmatprep.subr.bf16.mxu0 0
    %6713 = vmatpush1.bf16.msra.mxu0 %v164
    %6714 = vmatprep.subr.bf16.mxu0 0
    %6715 = vmatpush1.bf16.msra.mxu0 %v165
    %6716 = vmatprep.subr.bf16.mxu0 0
    %6717 = vmatpush1.bf16.msra.mxu0 %v166
    %6718 = vmatprep.subr.bf16.mxu0 0
    %6719 = vmatpush1.bf16.msra.mxu0 %v167
    %6720 = vmatprep.subr.bf16.mxu0 0
    %6721 = vmatpush1.bf16.msra.mxu0 %v168
    %6722 = vmatprep.subr.bf16.mxu0 0
    %6723 = vmatpush1.bf16.msra.mxu0 %v169
    %6724 = vmatprep.subr.bf16.mxu0 0
    %6725 = vmatpush1.bf16.msra.mxu0 %v170
    %6726 = vmatprep.subr.bf16.mxu0 0
    %6727 = vmatpush1.bf16.msra.mxu0 %v171
    %6728 = vmatprep.subr.bf16.mxu0 0
    %6729 = vmatpush1.bf16.msra.mxu0 %v172
    %6730 = vmatprep.mubr.bf16.mxu0 %v6695
    %6731 = vmatmul.mubr.bf16.gmra.mrb[0].mxu0 %v6688
    %v6732 = vpop.f32.mrb[0].mxu0
    %v6733 = vadd.f32 %v66, %v6732
    %v6734 = vpop.f32.mrb[0].mxu0
    %v6735 = vpop.f32.mrb[0].mxu0
    %v6736 = vpop.f32.mrb[0].mxu0
    %6737 = vdwg.mxu0
    %vm6738 = vcmp.ge.f32.partialorder %v6733, 0.0
    %v6739 = vsel %vm6738, 1.0, 0.0
    %v6740 = vpack.c.bf16 %v6739, %v6739
    %s6741 = scalar_lea.vmem %s3, 2368
    %v6742 = vld [vmem:[%s6741] sm:$0xf]
    %v6743 = vld [vmem:[%s6741 + $0x4] sm:$0xf]
    %v6744 = vld [vmem:[%s6741 + $0x8] sm:$0xf]
    %v6745 = vld [vmem:[%s6741 + $0xc] sm:$0xf]
    %v6746 = vld [vmem:[%s6741 + $0x10] sm:$0xf]
    %v6747 = vld [vmem:[%s6741 + $0x14] sm:$0xf]
    %v6748 = vld [vmem:[%s6741 + $0x18] sm:$0xf]
    %v6749 = vld [vmem:[%s6741 + $0x1c] sm:$0xf]
    %v6750 = vld [vmem:[%s6741 + $0x20] sm:$0xf]
    %v6751 = vld [vmem:[%s6741 + $0x24] sm:$0xf]
    %v6752 = vld [vmem:[%s6741 + $0x28] sm:$0xf]
    %v6753 = vld [vmem:[%s6741 + $0x2c] sm:$0xf]
    %v6754 = vld [vmem:[%s6741 + $0x30] sm:$0xf]
    %v6755 = vld [vmem:[%s6741 + $0x34] sm:$0xf]
    %v6756 = vld [vmem:[%s6741 + $0x38] sm:$0xf]
    %v6757 = vld [vmem:[%s6741 + $0x3c] sm:$0xf]
    %v6774 = vunpack.c.l.b16 %v6742
    %v6775 = vunpack.c.l.b16 %v6743
    %v6776 = vunpack.c.l.b16 %v6744
    %v6777 = vunpack.c.l.b16 %v6745
    %v6778 = vunpack.c.l.b16 %v6746
    %v6779 = vunpack.c.l.b16 %v6747
    %v6780 = vunpack.c.l.b16 %v6748
    %v6781 = vunpack.c.l.b16 %v6749
    %v6782 = vunpack.c.l.b16 %v6750
    %v6783 = vunpack.c.l.b16 %v6751
    %v6784 = vunpack.c.l.b16 %v6752
    %v6785 = vunpack.c.l.b16 %v6753
    %v6786 = vunpack.c.l.b16 %v6754
    %v6787 = vunpack.c.l.b16 %v6755
    %v6788 = vunpack.c.l.b16 %v6756
    %v6789 = vunpack.c.l.b16 %v6757
    %v6790 = vpack.c.b16 %v6775, %v6774
    %v6791 = vpack.c.b16 %v6777, %v6776
    %v6792 = vpack.c.b16 %v6779, %v6778
    %v6793 = vpack.c.b16 %v6781, %v6780
    %v6794 = vpack.c.b16 %v6783, %v6782
    %v6795 = vpack.c.b16 %v6785, %v6784
    %v6796 = vpack.c.b16 %v6787, %v6786
    %v6797 = vpack.c.b16 %v6789, %v6788
    %6806 = vmatprep.subr.bf16.mxu0 0
    %6807 = vmatpush1.bf16.msra.mxu0 %v6790
    %6808 = vmatprep.subr.bf16.mxu0 0
    %6809 = vmatpush1.bf16.msra.mxu0 %v6791
    %6810 = vmatprep.subr.bf16.mxu0 0
    %6811 = vmatpush1.bf16.msra.mxu0 %v6792
    %6812 = vmatprep.subr.bf16.mxu0 0
    %6813 = vmatpush1.bf16.msra.mxu0 %v6793
    %6814 = vmatprep.subr.bf16.mxu0 0
    %6815 = vmatpush1.bf16.msra.mxu0 %v6794
    %6816 = vmatprep.subr.bf16.mxu0 0
    %6817 = vmatpush1.bf16.msra.mxu0 %v6795
    %6818 = vmatprep.subr.bf16.mxu0 0
    %6819 = vmatpush1.bf16.msra.mxu0 %v6796
    %6820 = vmatprep.subr.bf16.mxu0 0
    %6821 = vmatpush1.bf16.msra.mxu0 %v6797
    %6822 = vmatprep.subr.bf16.mxu0 0
    %6823 = vmatpush1.bf16.msra.mxu0 0
    %6824 = vmatprep.subr.bf16.mxu0 0
    %6825 = vmatpush1.bf16.msra.mxu0 0
    %6826 = vmatprep.subr.bf16.mxu0 0
    %6827 = vmatpush1.bf16.msra.mxu0 0
    %6828 = vmatprep.subr.bf16.mxu0 0
    %6829 = vmatpush1.bf16.msra.mxu0 0
    %6830 = vmatprep.subr.bf16.mxu0 0
    %6831 = vmatpush1.bf16.msra.mxu0 0
    %6832 = vmatprep.subr.bf16.mxu0 0
    %6833 = vmatpush1.bf16.msra.mxu0 0
    %6834 = vmatprep.subr.bf16.mxu0 0
    %6835 = vmatpush1.bf16.msra.mxu0 0
    %6836 = vmatprep.subr.bf16.mxu0 0
    %6837 = vmatpush1.bf16.msra.mxu0 0
    %6838 = vmatprep.mubr.bf16.mxu0 0
    %6839 = vmatmul.mubr.bf16.gmra.mrb[0].mxu0 %v6740
    %v6840 = vpop.f32.mrb[0].mxu0
    %v6841 = vadd.f32 0.0, %v6840
    %v6842 = vpop.f32.mrb[0].mxu0
    %v6843 = vpop.f32.mrb[0].mxu0
    %v6844 = vpop.f32.mrb[0].mxu0
    %6845 = vdwg.mxu0
    %v6846 = vadd.f32 %v6670, %v6841
    %s6847 = scalar_lea.vmem %s0, 76
    %v6848 = vld [vmem:[%s6847] sm:$0x3]
    %v6851 = vunpack.c.l.s4 1966171168
    %v6852 = vunpack.c.0.s8 %v6851
    %v6853 = vlaneseq
    %v6854 = vshrl.u32 %v6853, 7
    %v6855 = vsub.s32 %v6852, %v6854
    %v6856 = vrot.slane %v6848, %v6855
    %v6857 = vcombine.high %v6856, %v6856
    %v6859 = vunpack.c.l.s4 1966171168
    %v6860 = vunpack.c.0.s8 %v6859
    %v6861 = vlaneseq
    %v6862 = vshrl.u32 %v6861, 7
    %v6863 = vsub.s32 %v6860, %v6862
    %v6864 = vrot.slane %v6856, %v6863
    %v6866 = vunpack.c.l.s4 1966171168
    %v6867 = vunpack.c.0.s8 %v6866
    %v6868 = vlaneseq
    %v6869 = vshrl.u32 %v6868, 7
    %v6870 = vsub.s32 %v6867, %v6869
    %v6871 = vrot.slane %v6857, %v6870
    %6874 = vmatprep.subr.bf16.mxu0 0
    %6875 = vmatpush1.bf16.msra.mxu0 %v157
    %6876 = vmatprep.subr.bf16.mxu0 0
    %6877 = vmatpush1.bf16.msra.mxu0 %v158
    %6878 = vmatprep.subr.bf16.mxu0 0
    %6879 = vmatpush1.bf16.msra.mxu0 %v159
    %6880 = vmatprep.subr.bf16.mxu0 0
    %6881 = vmatpush1.bf16.msra.mxu0 %v160
    %6882 = vmatprep.subr.bf16.mxu0 0
    %6883 = vmatpush1.bf16.msra.mxu0 %v161
    %6884 = vmatprep.subr.bf16.mxu0 0
    %6885 = vmatpush1.bf16.msra.mxu0 %v162
    %6886 = vmatprep.subr.bf16.mxu0 0
    %6887 = vmatpush1.bf16.msra.mxu0 %v163
    %6888 = vmatprep.subr.bf16.mxu0 0
    %6889 = vmatpush1.bf16.msra.mxu0 %v164
    %6890 = vmatprep.subr.bf16.mxu0 0
    %6891 = vmatpush1.bf16.msra.mxu0 %v165
    %6892 = vmatprep.subr.bf16.mxu0 0
    %6893 = vmatpush1.bf16.msra.mxu0 %v166
    %6894 = vmatprep.subr.bf16.mxu0 0
    %6895 = vmatpush1.bf16.msra.mxu0 %v167
    %6896 = vmatprep.subr.bf16.mxu0 0
    %6897 = vmatpush1.bf16.msra.mxu0 %v168
    %6898 = vmatprep.subr.bf16.mxu0 0
    %6899 = vmatpush1.bf16.msra.mxu0 %v169
    %6900 = vmatprep.subr.bf16.mxu0 0
    %6901 = vmatpush1.bf16.msra.mxu0 %v170
    %6902 = vmatprep.subr.bf16.mxu0 0
    %6903 = vmatpush1.bf16.msra.mxu0 %v171
    %6904 = vmatprep.subr.bf16.mxu0 0
    %6905 = vmatpush1.bf16.msra.mxu0 %v172
    %6906 = vmatprep.mubr.bf16.mxu0 %v6871
    %6907 = vmatmul.mubr.bf16.gmra.mrb[0].mxu0 %v6864
    %v6908 = vpop.f32.mrb[0].mxu0
    %v6909 = vadd.f32 %v66, %v6908
    %v6910 = vpop.f32.mrb[0].mxu0
    %v6911 = vpop.f32.mrb[0].mxu0
    %v6912 = vpop.f32.mrb[0].mxu0
    %6913 = vdwg.mxu0
    %vm6914 = vcmp.ge.f32.partialorder %v6909, 0.0
    %v6915 = vsel %vm6914, 1.0, 0.0
    %v6916 = vpack.c.bf16 %v6915, %v6915
    %s6917 = scalar_lea.vmem %s3, 2432
    %v6918 = vld [vmem:[%s6917] sm:$0xf]
    %v6919 = vld [vmem:[%s6917 + $0x4] sm:$0xf]
    %v6920 = vld [vmem:[%s6917 + $0x8] sm:$0xf]
    %v6921 = vld [vmem:[%s6917 + $0xc] sm:$0xf]
    %v6922 = vld [vmem:[%s6917 + $0x10] sm:$0xf]
    %v6923 = vld [vmem:[%s6917 + $0x14] sm:$0xf]
    %v6924 = vld [vmem:[%s6917 + $0x18] sm:$0xf]
    %v6925 = vld [vmem:[%s6917 + $0x1c] sm:$0xf]
    %v6926 = vld [vmem:[%s6917 + $0x20] sm:$0xf]
    %v6927 = vld [vmem:[%s6917 + $0x24] sm:$0xf]
    %v6928 = vld [vmem:[%s6917 + $0x28] sm:$0xf]
    %v6929 = vld [vmem:[%s6917 + $0x2c] sm:$0xf]
    %v6930 = vld [vmem:[%s6917 + $0x30] sm:$0xf]
    %v6931 = vld [vmem:[%s6917 + $0x34] sm:$0xf]
    %v6932 = vld [vmem:[%s6917 + $0x38] sm:$0xf]
    %v6933 = vld [vmem:[%s6917 + $0x3c] sm:$0xf]
    %v6950 = vunpack.c.l.b16 %v6918
    %v6951 = vunpack.c.l.b16 %v6919
    %v6952 = vunpack.c.l.b16 %v6920
    %v6953 = vunpack.c.l.b16 %v6921
    %v6954 = vunpack.c.l.b16 %v6922
    %v6955 = vunpack.c.l.b16 %v6923
    %v6956 = vunpack.c.l.b16 %v6924
    %v6957 = vunpack.c.l.b16 %v6925
    %v6958 = vunpack.c.l.b16 %v6926
    %v6959 = vunpack.c.l.b16 %v6927
    %v6960 = vunpack.c.l.b16 %v6928
    %v6961 = vunpack.c.l.b16 %v6929
    %v6962 = vunpack.c.l.b16 %v6930
    %v6963 = vunpack.c.l.b16 %v6931
    %v6964 = vunpack.c.l.b16 %v6932
    %v6965 = vunpack.c.l.b16 %v6933
    %v6966 = vpack.c.b16 %v6951, %v6950
    %v6967 = vpack.c.b16 %v6953, %v6952
    %v6968 = vpack.c.b16 %v6955, %v6954
    %v6969 = vpack.c.b16 %v6957, %v6956
    %v6970 = vpack.c.b16 %v6959, %v6958
    %v6971 = vpack.c.b16 %v6961, %v6960
    %v6972 = vpack.c.b16 %v6963, %v6962
    %v6973 = vpack.c.b16 %v6965, %v6964
    %6982 = vmatprep.subr.bf16.mxu0 0
    %6983 = vmatpush1.bf16.msra.mxu0 %v6966
    %6984 = vmatprep.subr.bf16.mxu0 0
    %6985 = vmatpush1.bf16.msra.mxu0 %v6967
    %6986 = vmatprep.subr.bf16.mxu0 0
    %6987 = vmatpush1.bf16.msra.mxu0 %v6968
    %6988 = vmatprep.subr.bf16.mxu0 0
    %6989 = vmatpush1.bf16.msra.mxu0 %v6969
    %6990 = vmatprep.subr.bf16.mxu0 0
    %6991 = vmatpush1.bf16.msra.mxu0 %v6970
    %6992 = vmatprep.subr.bf16.mxu0 0
    %6993 = vmatpush1.bf16.msra.mxu0 %v6971
    %6994 = vmatprep.subr.bf16.mxu0 0
    %6995 = vmatpush1.bf16.msra.mxu0 %v6972
    %6996 = vmatprep.subr.bf16.mxu0 0
    %6997 = vmatpush1.bf16.msra.mxu0 %v6973
    %6998 = vmatprep.subr.bf16.mxu0 0
    %6999 = vmatpush1.bf16.msra.mxu0 0
    %7000 = vmatprep.subr.bf16.mxu0 0
    %7001 = vmatpush1.bf16.msra.mxu0 0
    %7002 = vmatprep.subr.bf16.mxu0 0
    %7003 = vmatpush1.bf16.msra.mxu0 0
    %7004 = vmatprep.subr.bf16.mxu0 0
    %7005 = vmatpush1.bf16.msra.mxu0 0
    %7006 = vmatprep.subr.bf16.mxu0 0
    %7007 = vmatpush1.bf16.msra.mxu0 0
    %7008 = vmatprep.subr.bf16.mxu0 0
    %7009 = vmatpush1.bf16.msra.mxu0 0
    %7010 = vmatprep.subr.bf16.mxu0 0
    %7011 = vmatpush1.bf16.msra.mxu0 0
    %7012 = vmatprep.subr.bf16.mxu0 0
    %7013 = vmatpush1.bf16.msra.mxu0 0
    %7014 = vmatprep.mubr.bf16.mxu0 0
    %7015 = vmatmul.mubr.bf16.gmra.mrb[0].mxu0 %v6916
    %v7016 = vpop.f32.mrb[0].mxu0
    %v7017 = vadd.f32 0.0, %v7016
    %v7018 = vpop.f32.mrb[0].mxu0
    %v7019 = vpop.f32.mrb[0].mxu0
    %v7020 = vpop.f32.mrb[0].mxu0
    %7021 = vdwg.mxu0
    %v7022 = vadd.f32 %v6846, %v7017
    %s7023 = scalar_lea.vmem %s0, 78
    %v7024 = vld [vmem:[%s7023] sm:$0x3]
    %v7027 = vunpack.c.l.s4 1966171168
    %v7028 = vunpack.c.0.s8 %v7027
    %v7029 = vlaneseq
    %v7030 = vshrl.u32 %v7029, 7
    %v7031 = vsub.s32 %v7028, %v7030
    %v7032 = vrot.slane %v7024, %v7031
    %v7033 = vcombine.high %v7032, %v7032
    %v7035 = vunpack.c.l.s4 1966171168
    %v7036 = vunpack.c.0.s8 %v7035
    %v7037 = vlaneseq
    %v7038 = vshrl.u32 %v7037, 7
    %v7039 = vsub.s32 %v7036, %v7038
    %v7040 = vrot.slane %v7032, %v7039
    %v7042 = vunpack.c.l.s4 1966171168
    %v7043 = vunpack.c.0.s8 %v7042
    %v7044 = vlaneseq
    %v7045 = vshrl.u32 %v7044, 7
    %v7046 = vsub.s32 %v7043, %v7045
    %v7047 = vrot.slane %v7033, %v7046
    %7050 = vmatprep.subr.bf16.mxu0 0
    %7051 = vmatpush1.bf16.msra.mxu0 %v157
    %7052 = vmatprep.subr.bf16.mxu0 0
    %7053 = vmatpush1.bf16.msra.mxu0 %v158
    %7054 = vmatprep.subr.bf16.mxu0 0
    %7055 = vmatpush1.bf16.msra.mxu0 %v159
    %7056 = vmatprep.subr.bf16.mxu0 0
    %7057 = vmatpush1.bf16.msra.mxu0 %v160
    %7058 = vmatprep.subr.bf16.mxu0 0
    %7059 = vmatpush1.bf16.msra.mxu0 %v161
    %7060 = vmatprep.subr.bf16.mxu0 0
    %7061 = vmatpush1.bf16.msra.mxu0 %v162
    %7062 = vmatprep.subr.bf16.mxu0 0
    %7063 = vmatpush1.bf16.msra.mxu0 %v163
    %7064 = vmatprep.subr.bf16.mxu0 0
    %7065 = vmatpush1.bf16.msra.mxu0 %v164
    %7066 = vmatprep.subr.bf16.mxu0 0
    %7067 = vmatpush1.bf16.msra.mxu0 %v165
    %7068 = vmatprep.subr.bf16.mxu0 0
    %7069 = vmatpush1.bf16.msra.mxu0 %v166
    %7070 = vmatprep.subr.bf16.mxu0 0
    %7071 = vmatpush1.bf16.msra.mxu0 %v167
    %7072 = vmatprep.subr.bf16.mxu0 0
    %7073 = vmatpush1.bf16.msra.mxu0 %v168
    %7074 = vmatprep.subr.bf16.mxu0 0
    %7075 = vmatpush1.bf16.msra.mxu0 %v169
    %7076 = vmatprep.subr.bf16.mxu0 0
    %7077 = vmatpush1.bf16.msra.mxu0 %v170
    %7078 = vmatprep.subr.bf16.mxu0 0
    %7079 = vmatpush1.bf16.msra.mxu0 %v171
    %7080 = vmatprep.subr.bf16.mxu0 0
    %7081 = vmatpush1.bf16.msra.mxu0 %v172
    %7082 = vmatprep.mubr.bf16.mxu0 %v7047
    %7083 = vmatmul.mubr.bf16.gmra.mrb[0].mxu0 %v7040
    %v7084 = vpop.f32.mrb[0].mxu0
    %v7085 = vadd.f32 %v66, %v7084
    %v7086 = vpop.f32.mrb[0].mxu0
    %v7087 = vpop.f32.mrb[0].mxu0
    %v7088 = vpop.f32.mrb[0].mxu0
    %7089 = vdwg.mxu0
    %vm7090 = vcmp.ge.f32.partialorder %v7085, 0.0
    %v7091 = vsel %vm7090, 1.0, 0.0
    %v7092 = vpack.c.bf16 %v7091, %v7091
    %s7093 = scalar_lea.vmem %s3, 2496
    %v7094 = vld [vmem:[%s7093] sm:$0xf]
    %v7095 = vld [vmem:[%s7093 + $0x4] sm:$0xf]
    %v7096 = vld [vmem:[%s7093 + $0x8] sm:$0xf]
    %v7097 = vld [vmem:[%s7093 + $0xc] sm:$0xf]
    %v7098 = vld [vmem:[%s7093 + $0x10] sm:$0xf]
    %v7099 = vld [vmem:[%s7093 + $0x14] sm:$0xf]
    %v7100 = vld [vmem:[%s7093 + $0x18] sm:$0xf]
    %v7101 = vld [vmem:[%s7093 + $0x1c] sm:$0xf]
    %v7102 = vld [vmem:[%s7093 + $0x20] sm:$0xf]
    %v7103 = vld [vmem:[%s7093 + $0x24] sm:$0xf]
    %v7104 = vld [vmem:[%s7093 + $0x28] sm:$0xf]
    %v7105 = vld [vmem:[%s7093 + $0x2c] sm:$0xf]
    %v7106 = vld [vmem:[%s7093 + $0x30] sm:$0xf]
    %v7107 = vld [vmem:[%s7093 + $0x34] sm:$0xf]
    %v7108 = vld [vmem:[%s7093 + $0x38] sm:$0xf]
    %v7109 = vld [vmem:[%s7093 + $0x3c] sm:$0xf]
    %v7126 = vunpack.c.l.b16 %v7094
    %v7127 = vunpack.c.l.b16 %v7095
    %v7128 = vunpack.c.l.b16 %v7096
    %v7129 = vunpack.c.l.b16 %v7097
    %v7130 = vunpack.c.l.b16 %v7098
    %v7131 = vunpack.c.l.b16 %v7099
    %v7132 = vunpack.c.l.b16 %v7100
    %v7133 = vunpack.c.l.b16 %v7101
    %v7134 = vunpack.c.l.b16 %v7102
    %v7135 = vunpack.c.l.b16 %v7103
    %v7136 = vunpack.c.l.b16 %v7104
    %v7137 = vunpack.c.l.b16 %v7105
    %v7138 = vunpack.c.l.b16 %v7106
    %v7139 = vunpack.c.l.b16 %v7107
    %v7140 = vunpack.c.l.b16 %v7108
    %v7141 = vunpack.c.l.b16 %v7109
    %v7142 = vpack.c.b16 %v7127, %v7126
    %v7143 = vpack.c.b16 %v7129, %v7128
    %v7144 = vpack.c.b16 %v7131, %v7130
    %v7145 = vpack.c.b16 %v7133, %v7132
    %v7146 = vpack.c.b16 %v7135, %v7134
    %v7147 = vpack.c.b16 %v7137, %v7136
    %v7148 = vpack.c.b16 %v7139, %v7138
    %v7149 = vpack.c.b16 %v7141, %v7140
    %7158 = vmatprep.subr.bf16.mxu0 0
    %7159 = vmatpush1.bf16.msra.mxu0 %v7142
    %7160 = vmatprep.subr.bf16.mxu0 0
    %7161 = vmatpush1.bf16.msra.mxu0 %v7143
    %7162 = vmatprep.subr.bf16.mxu0 0
    %7163 = vmatpush1.bf16.msra.mxu0 %v7144
    %7164 = vmatprep.subr.bf16.mxu0 0
    %7165 = vmatpush1.bf16.msra.mxu0 %v7145
    %7166 = vmatprep.subr.bf16.mxu0 0
    %7167 = vmatpush1.bf16.msra.mxu0 %v7146
    %7168 = vmatprep.subr.bf16.mxu0 0
    %7169 = vmatpush1.bf16.msra.mxu0 %v7147
    %7170 = vmatprep.subr.bf16.mxu0 0
    %7171 = vmatpush1.bf16.msra.mxu0 %v7148
    %7172 = vmatprep.subr.bf16.mxu0 0
    %7173 = vmatpush1.bf16.msra.mxu0 %v7149
    %7174 = vmatprep.subr.bf16.mxu0 0
    %7175 = vmatpush1.bf16.msra.mxu0 0
    %7176 = vmatprep.subr.bf16.mxu0 0
    %7177 = vmatpush1.bf16.msra.mxu0 0
    %7178 = vmatprep.subr.bf16.mxu0 0
    %7179 = vmatpush1.bf16.msra.mxu0 0
    %7180 = vmatprep.subr.bf16.mxu0 0
    %7181 = vmatpush1.bf16.msra.mxu0 0
    %7182 = vmatprep.subr.bf16.mxu0 0
    %7183 = vmatpush1.bf16.msra.mxu0 0
    %7184 = vmatprep.subr.bf16.mxu0 0
    %7185 = vmatpush1.bf16.msra.mxu0 0
    %7186 = vmatprep.subr.bf16.mxu0 0
    %7187 = vmatpush1.bf16.msra.mxu0 0
    %7188 = vmatprep.subr.bf16.mxu0 0
    %7189 = vmatpush1.bf16.msra.mxu0 0
    %7190 = vmatprep.mubr.bf16.mxu0 0
    %7191 = vmatmul.mubr.bf16.gmra.mrb[0].mxu0 %v7092
    %v7192 = vpop.f32.mrb[0].mxu0
    %v7193 = vadd.f32 0.0, %v7192
    %v7194 = vpop.f32.mrb[0].mxu0
    %v7195 = vpop.f32.mrb[0].mxu0
    %v7196 = vpop.f32.mrb[0].mxu0
    %7197 = vdwg.mxu0
    %v7198 = vadd.f32 %v7022, %v7193
    %s7199 = scalar_lea.vmem %s0, 80
    %v7200 = vld [vmem:[%s7199] sm:$0x3]
    %v7203 = vunpack.c.l.s4 1966171168
    %v7204 = vunpack.c.0.s8 %v7203
    %v7205 = vlaneseq
    %v7206 = vshrl.u32 %v7205, 7
    %v7207 = vsub.s32 %v7204, %v7206
    %v7208 = vrot.slane %v7200, %v7207
    %v7209 = vcombine.high %v7208, %v7208
    %v7211 = vunpack.c.l.s4 1966171168
    %v7212 = vunpack.c.0.s8 %v7211
    %v7213 = vlaneseq
    %v7214 = vshrl.u32 %v7213, 7
    %v7215 = vsub.s32 %v7212, %v7214
    %v7216 = vrot.slane %v7208, %v7215
    %v7218 = vunpack.c.l.s4 1966171168
    %v7219 = vunpack.c.0.s8 %v7218
    %v7220 = vlaneseq
    %v7221 = vshrl.u32 %v7220, 7
    %v7222 = vsub.s32 %v7219, %v7221
    %v7223 = vrot.slane %v7209, %v7222
    %7226 = vmatprep.subr.bf16.mxu0 0
    %7227 = vmatpush1.bf16.msra.mxu0 %v157
    %7228 = vmatprep.subr.bf16.mxu0 0
    %7229 = vmatpush1.bf16.msra.mxu0 %v158
    %7230 = vmatprep.subr.bf16.mxu0 0
    %7231 = vmatpush1.bf16.msra.mxu0 %v159
    %7232 = vmatprep.subr.bf16.mxu0 0
    %7233 = vmatpush1.bf16.msra.mxu0 %v160
    %7234 = vmatprep.subr.bf16.mxu0 0
    %7235 = vmatpush1.bf16.msra.mxu0 %v161
    %7236 = vmatprep.subr.bf16.mxu0 0
    %7237 = vmatpush1.bf16.msra.mxu0 %v162
    %7238 = vmatprep.subr.bf16.mxu0 0
    %7239 = vmatpush1.bf16.msra.mxu0 %v163
    %7240 = vmatprep.subr.bf16.mxu0 0
    %7241 = vmatpush1.bf16.msra.mxu0 %v164
    %7242 = vmatprep.subr.bf16.mxu0 0
    %7243 = vmatpush1.bf16.msra.mxu0 %v165
    %7244 = vmatprep.subr.bf16.mxu0 0
    %7245 = vmatpush1.bf16.msra.mxu0 %v166
    %7246 = vmatprep.subr.bf16.mxu0 0
    %7247 = vmatpush1.bf16.msra.mxu0 %v167
    %7248 = vmatprep.subr.bf16.mxu0 0
    %7249 = vmatpush1.bf16.msra.mxu0 %v168
    %7250 = vmatprep.subr.bf16.mxu0 0
    %7251 = vmatpush1.bf16.msra.mxu0 %v169
    %7252 = vmatprep.subr.bf16.mxu0 0
    %7253 = vmatpush1.bf16.msra.mxu0 %v170
    %7254 = vmatprep.subr.bf16.mxu0 0
    %7255 = vmatpush1.bf16.msra.mxu0 %v171
    %7256 = vmatprep.subr.bf16.mxu0 0
    %7257 = vmatpush1.bf16.msra.mxu0 %v172
    %7258 = vmatprep.mubr.bf16.mxu0 %v7223
    %7259 = vmatmul.mubr.bf16.gmra.mrb[0].mxu0 %v7216
    %v7260 = vpop.f32.mrb[0].mxu0
    %v7261 = vadd.f32 %v66, %v7260
    %v7262 = vpop.f32.mrb[0].mxu0
    %v7263 = vpop.f32.mrb[0].mxu0
    %v7264 = vpop.f32.mrb[0].mxu0
    %7265 = vdwg.mxu0
    %vm7266 = vcmp.ge.f32.partialorder %v7261, 0.0
    %v7267 = vsel %vm7266, 1.0, 0.0
    %v7268 = vpack.c.bf16 %v7267, %v7267
    %s7269 = scalar_lea.vmem %s3, 2560
    %v7270 = vld [vmem:[%s7269] sm:$0xf]
    %v7271 = vld [vmem:[%s7269 + $0x4] sm:$0xf]
    %v7272 = vld [vmem:[%s7269 + $0x8] sm:$0xf]
    %v7273 = vld [vmem:[%s7269 + $0xc] sm:$0xf]
    %v7274 = vld [vmem:[%s7269 + $0x10] sm:$0xf]
    %v7275 = vld [vmem:[%s7269 + $0x14] sm:$0xf]
    %v7276 = vld [vmem:[%s7269 + $0x18] sm:$0xf]
    %v7277 = vld [vmem:[%s7269 + $0x1c] sm:$0xf]
    %v7278 = vld [vmem:[%s7269 + $0x20] sm:$0xf]
    %v7279 = vld [vmem:[%s7269 + $0x24] sm:$0xf]
    %v7280 = vld [vmem:[%s7269 + $0x28] sm:$0xf]
    %v7281 = vld [vmem:[%s7269 + $0x2c] sm:$0xf]
    %v7282 = vld [vmem:[%s7269 + $0x30] sm:$0xf]
    %v7283 = vld [vmem:[%s7269 + $0x34] sm:$0xf]
    %v7284 = vld [vmem:[%s7269 + $0x38] sm:$0xf]
    %v7285 = vld [vmem:[%s7269 + $0x3c] sm:$0xf]
    %v7302 = vunpack.c.l.b16 %v7270
    %v7303 = vunpack.c.l.b16 %v7271
    %v7304 = vunpack.c.l.b16 %v7272
    %v7305 = vunpack.c.l.b16 %v7273
    %v7306 = vunpack.c.l.b16 %v7274
    %v7307 = vunpack.c.l.b16 %v7275
    %v7308 = vunpack.c.l.b16 %v7276
    %v7309 = vunpack.c.l.b16 %v7277
    %v7310 = vunpack.c.l.b16 %v7278
    %v7311 = vunpack.c.l.b16 %v7279
    %v7312 = vunpack.c.l.b16 %v7280
    %v7313 = vunpack.c.l.b16 %v7281
    %v7314 = vunpack.c.l.b16 %v7282
    %v7315 = vunpack.c.l.b16 %v7283
    %v7316 = vunpack.c.l.b16 %v7284
    %v7317 = vunpack.c.l.b16 %v7285
    %v7318 = vpack.c.b16 %v7303, %v7302
    %v7319 = vpack.c.b16 %v7305, %v7304
    %v7320 = vpack.c.b16 %v7307, %v7306
    %v7321 = vpack.c.b16 %v7309, %v7308
    %v7322 = vpack.c.b16 %v7311, %v7310
    %v7323 = vpack.c.b16 %v7313, %v7312
    %v7324 = vpack.c.b16 %v7315, %v7314
    %v7325 = vpack.c.b16 %v7317, %v7316
    %7334 = vmatprep.subr.bf16.mxu0 0
    %7335 = vmatpush1.bf16.msra.mxu0 %v7318
    %7336 = vmatprep.subr.bf16.mxu0 0
    %7337 = vmatpush1.bf16.msra.mxu0 %v7319
    %7338 = vmatprep.subr.bf16.mxu0 0
    %7339 = vmatpush1.bf16.msra.mxu0 %v7320
    %7340 = vmatprep.subr.bf16.mxu0 0
    %7341 = vmatpush1.bf16.msra.mxu0 %v7321
    %7342 = vmatprep.subr.bf16.mxu0 0
    %7343 = vmatpush1.bf16.msra.mxu0 %v7322
    %7344 = vmatprep.subr.bf16.mxu0 0
    %7345 = vmatpush1.bf16.msra.mxu0 %v7323
    %7346 = vmatprep.subr.bf16.mxu0 0
    %7347 = vmatpush1.bf16.msra.mxu0 %v7324
    %7348 = vmatprep.subr.bf16.mxu0 0
    %7349 = vmatpush1.bf16.msra.mxu0 %v7325
    %7350 = vmatprep.subr.bf16.mxu0 0
    %7351 = vmatpush1.bf16.msra.mxu0 0
    %7352 = vmatprep.subr.bf16.mxu0 0
    %7353 = vmatpush1.bf16.msra.mxu0 0
    %7354 = vmatprep.subr.bf16.mxu0 0
    %7355 = vmatpush1.bf16.msra.mxu0 0
    %7356 = vmatprep.subr.bf16.mxu0 0
    %7357 = vmatpush1.bf16.msra.mxu0 0
    %7358 = vmatprep.subr.bf16.mxu0 0
    %7359 = vmatpush1.bf16.msra.mxu0 0
    %7360 = vmatprep.subr.bf16.mxu0 0
    %7361 = vmatpush1.bf16.msra.mxu0 0
    %7362 = vmatprep.subr.bf16.mxu0 0
    %7363 = vmatpush1.bf16.msra.mxu0 0
    %7364 = vmatprep.subr.bf16.mxu0 0
    %7365 = vmatpush1.bf16.msra.mxu0 0
    %7366 = vmatprep.mubr.bf16.mxu0 0
    %7367 = vmatmul.mubr.bf16.gmra.mrb[0].mxu0 %v7268
    %v7368 = vpop.f32.mrb[0].mxu0
    %v7369 = vadd.f32 0.0, %v7368
    %v7370 = vpop.f32.mrb[0].mxu0
    %v7371 = vpop.f32.mrb[0].mxu0
    %v7372 = vpop.f32.mrb[0].mxu0
    %7373 = vdwg.mxu0
    %v7374 = vadd.f32 %v7198, %v7369
    %s7375 = scalar_lea.vmem %s0, 82
    %v7376 = vld [vmem:[%s7375] sm:$0x3]
    %v7379 = vunpack.c.l.s4 1966171168
    %v7380 = vunpack.c.0.s8 %v7379
    %v7381 = vlaneseq
    %v7382 = vshrl.u32 %v7381, 7
    %v7383 = vsub.s32 %v7380, %v7382
    %v7384 = vrot.slane %v7376, %v7383
    %v7385 = vcombine.high %v7384, %v7384
    %v7387 = vunpack.c.l.s4 1966171168
    %v7388 = vunpack.c.0.s8 %v7387
    %v7389 = vlaneseq
    %v7390 = vshrl.u32 %v7389, 7
    %v7391 = vsub.s32 %v7388, %v7390
    %v7392 = vrot.slane %v7384, %v7391
    %v7394 = vunpack.c.l.s4 1966171168
    %v7395 = vunpack.c.0.s8 %v7394
    %v7396 = vlaneseq
    %v7397 = vshrl.u32 %v7396, 7
    %v7398 = vsub.s32 %v7395, %v7397
    %v7399 = vrot.slane %v7385, %v7398
    %7402 = vmatprep.subr.bf16.mxu0 0
    %7403 = vmatpush1.bf16.msra.mxu0 %v157
    %7404 = vmatprep.subr.bf16.mxu0 0
    %7405 = vmatpush1.bf16.msra.mxu0 %v158
    %7406 = vmatprep.subr.bf16.mxu0 0
    %7407 = vmatpush1.bf16.msra.mxu0 %v159
    %7408 = vmatprep.subr.bf16.mxu0 0
    %7409 = vmatpush1.bf16.msra.mxu0 %v160
    %7410 = vmatprep.subr.bf16.mxu0 0
    %7411 = vmatpush1.bf16.msra.mxu0 %v161
    %7412 = vmatprep.subr.bf16.mxu0 0
    %7413 = vmatpush1.bf16.msra.mxu0 %v162
    %7414 = vmatprep.subr.bf16.mxu0 0
    %7415 = vmatpush1.bf16.msra.mxu0 %v163
    %7416 = vmatprep.subr.bf16.mxu0 0
    %7417 = vmatpush1.bf16.msra.mxu0 %v164
    %7418 = vmatprep.subr.bf16.mxu0 0
    %7419 = vmatpush1.bf16.msra.mxu0 %v165
    %7420 = vmatprep.subr.bf16.mxu0 0
    %7421 = vmatpush1.bf16.msra.mxu0 %v166
    %7422 = vmatprep.subr.bf16.mxu0 0
    %7423 = vmatpush1.bf16.msra.mxu0 %v167
    %7424 = vmatprep.subr.bf16.mxu0 0
    %7425 = vmatpush1.bf16.msra.mxu0 %v168
    %7426 = vmatprep.subr.bf16.mxu0 0
    %7427 = vmatpush1.bf16.msra.mxu0 %v169
    %7428 = vmatprep.subr.bf16.mxu0 0
    %7429 = vmatpush1.bf16.msra.mxu0 %v170
    %7430 = vmatprep.subr.bf16.mxu0 0
    %7431 = vmatpush1.bf16.msra.mxu0 %v171
    %7432 = vmatprep.subr.bf16.mxu0 0
    %7433 = vmatpush1.bf16.msra.mxu0 %v172
    %7434 = vmatprep.mubr.bf16.mxu0 %v7399
    %7435 = vmatmul.mubr.bf16.gmra.mrb[0].mxu0 %v7392
    %v7436 = vpop.f32.mrb[0].mxu0
    %v7437 = vadd.f32 %v66, %v7436
    %v7438 = vpop.f32.mrb[0].mxu0
    %v7439 = vpop.f32.mrb[0].mxu0
    %v7440 = vpop.f32.mrb[0].mxu0
    %7441 = vdwg.mxu0
    %vm7442 = vcmp.ge.f32.partialorder %v7437, 0.0
    %v7443 = vsel %vm7442, 1.0, 0.0
    %v7444 = vpack.c.bf16 %v7443, %v7443
    %s7445 = scalar_lea.vmem %s3, 2624
    %v7446 = vld [vmem:[%s7445] sm:$0xf]
    %v7447 = vld [vmem:[%s7445 + $0x4] sm:$0xf]
    %v7448 = vld [vmem:[%s7445 + $0x8] sm:$0xf]
    %v7449 = vld [vmem:[%s7445 + $0xc] sm:$0xf]
    %v7450 = vld [vmem:[%s7445 + $0x10] sm:$0xf]
    %v7451 = vld [vmem:[%s7445 + $0x14] sm:$0xf]
    %v7452 = vld [vmem:[%s7445 + $0x18] sm:$0xf]
    %v7453 = vld [vmem:[%s7445 + $0x1c] sm:$0xf]
    %v7454 = vld [vmem:[%s7445 + $0x20] sm:$0xf]
    %v7455 = vld [vmem:[%s7445 + $0x24] sm:$0xf]
    %v7456 = vld [vmem:[%s7445 + $0x28] sm:$0xf]
    %v7457 = vld [vmem:[%s7445 + $0x2c] sm:$0xf]
    %v7458 = vld [vmem:[%s7445 + $0x30] sm:$0xf]
    %v7459 = vld [vmem:[%s7445 + $0x34] sm:$0xf]
    %v7460 = vld [vmem:[%s7445 + $0x38] sm:$0xf]
    %v7461 = vld [vmem:[%s7445 + $0x3c] sm:$0xf]
    %v7478 = vunpack.c.l.b16 %v7446
    %v7479 = vunpack.c.l.b16 %v7447
    %v7480 = vunpack.c.l.b16 %v7448
    %v7481 = vunpack.c.l.b16 %v7449
    %v7482 = vunpack.c.l.b16 %v7450
    %v7483 = vunpack.c.l.b16 %v7451
    %v7484 = vunpack.c.l.b16 %v7452
    %v7485 = vunpack.c.l.b16 %v7453
    %v7486 = vunpack.c.l.b16 %v7454
    %v7487 = vunpack.c.l.b16 %v7455
    %v7488 = vunpack.c.l.b16 %v7456
    %v7489 = vunpack.c.l.b16 %v7457
    %v7490 = vunpack.c.l.b16 %v7458
    %v7491 = vunpack.c.l.b16 %v7459
    %v7492 = vunpack.c.l.b16 %v7460
    %v7493 = vunpack.c.l.b16 %v7461
    %v7494 = vpack.c.b16 %v7479, %v7478
    %v7495 = vpack.c.b16 %v7481, %v7480
    %v7496 = vpack.c.b16 %v7483, %v7482
    %v7497 = vpack.c.b16 %v7485, %v7484
    %v7498 = vpack.c.b16 %v7487, %v7486
    %v7499 = vpack.c.b16 %v7489, %v7488
    %v7500 = vpack.c.b16 %v7491, %v7490
    %v7501 = vpack.c.b16 %v7493, %v7492
    %7510 = vmatprep.subr.bf16.mxu0 0
    %7511 = vmatpush1.bf16.msra.mxu0 %v7494
    %7512 = vmatprep.subr.bf16.mxu0 0
    %7513 = vmatpush1.bf16.msra.mxu0 %v7495
    %7514 = vmatprep.subr.bf16.mxu0 0
    %7515 = vmatpush1.bf16.msra.mxu0 %v7496
    %7516 = vmatprep.subr.bf16.mxu0 0
    %7517 = vmatpush1.bf16.msra.mxu0 %v7497
    %7518 = vmatprep.subr.bf16.mxu0 0
    %7519 = vmatpush1.bf16.msra.mxu0 %v7498
    %7520 = vmatprep.subr.bf16.mxu0 0
    %7521 = vmatpush1.bf16.msra.mxu0 %v7499
    %7522 = vmatprep.subr.bf16.mxu0 0
    %7523 = vmatpush1.bf16.msra.mxu0 %v7500
    %7524 = vmatprep.subr.bf16.mxu0 0
    %7525 = vmatpush1.bf16.msra.mxu0 %v7501
    %7526 = vmatprep.subr.bf16.mxu0 0
    %7527 = vmatpush1.bf16.msra.mxu0 0
    %7528 = vmatprep.subr.bf16.mxu0 0
    %7529 = vmatpush1.bf16.msra.mxu0 0
    %7530 = vmatprep.subr.bf16.mxu0 0
    %7531 = vmatpush1.bf16.msra.mxu0 0
    %7532 = vmatprep.subr.bf16.mxu0 0
    %7533 = vmatpush1.bf16.msra.mxu0 0
    %7534 = vmatprep.subr.bf16.mxu0 0
    %7535 = vmatpush1.bf16.msra.mxu0 0
    %7536 = vmatprep.subr.bf16.mxu0 0
    %7537 = vmatpush1.bf16.msra.mxu0 0
    %7538 = vmatprep.subr.bf16.mxu0 0
    %7539 = vmatpush1.bf16.msra.mxu0 0
    %7540 = vmatprep.subr.bf16.mxu0 0
    %7541 = vmatpush1.bf16.msra.mxu0 0
    %7542 = vmatprep.mubr.bf16.mxu0 0
    %7543 = vmatmul.mubr.bf16.gmra.mrb[0].mxu0 %v7444
    %v7544 = vpop.f32.mrb[0].mxu0
    %v7545 = vadd.f32 0.0, %v7544
    %v7546 = vpop.f32.mrb[0].mxu0
    %v7547 = vpop.f32.mrb[0].mxu0
    %v7548 = vpop.f32.mrb[0].mxu0
    %7549 = vdwg.mxu0
    %v7550 = vadd.f32 %v7374, %v7545
    %s7551 = scalar_lea.vmem %s0, 84
    %v7552 = vld [vmem:[%s7551] sm:$0x3]
    %v7555 = vunpack.c.l.s4 1966171168
    %v7556 = vunpack.c.0.s8 %v7555
    %v7557 = vlaneseq
    %v7558 = vshrl.u32 %v7557, 7
    %v7559 = vsub.s32 %v7556, %v7558
    %v7560 = vrot.slane %v7552, %v7559
    %v7561 = vcombine.high %v7560, %v7560
    %v7563 = vunpack.c.l.s4 1966171168
    %v7564 = vunpack.c.0.s8 %v7563
    %v7565 = vlaneseq
    %v7566 = vshrl.u32 %v7565, 7
    %v7567 = vsub.s32 %v7564, %v7566
    %v7568 = vrot.slane %v7560, %v7567
    %v7570 = vunpack.c.l.s4 1966171168
    %v7571 = vunpack.c.0.s8 %v7570
    %v7572 = vlaneseq
    %v7573 = vshrl.u32 %v7572, 7
    %v7574 = vsub.s32 %v7571, %v7573
    %v7575 = vrot.slane %v7561, %v7574
    %7578 = vmatprep.subr.bf16.mxu0 0
    %7579 = vmatpush1.bf16.msra.mxu0 %v157
    %7580 = vmatprep.subr.bf16.mxu0 0
    %7581 = vmatpush1.bf16.msra.mxu0 %v158
    %7582 = vmatprep.subr.bf16.mxu0 0
    %7583 = vmatpush1.bf16.msra.mxu0 %v159
    %7584 = vmatprep.subr.bf16.mxu0 0
    %7585 = vmatpush1.bf16.msra.mxu0 %v160
    %7586 = vmatprep.subr.bf16.mxu0 0
    %7587 = vmatpush1.bf16.msra.mxu0 %v161
    %7588 = vmatprep.subr.bf16.mxu0 0
    %7589 = vmatpush1.bf16.msra.mxu0 %v162
    %7590 = vmatprep.subr.bf16.mxu0 0
    %7591 = vmatpush1.bf16.msra.mxu0 %v163
    %7592 = vmatprep.subr.bf16.mxu0 0
    %7593 = vmatpush1.bf16.msra.mxu0 %v164
    %7594 = vmatprep.subr.bf16.mxu0 0
    %7595 = vmatpush1.bf16.msra.mxu0 %v165
    %7596 = vmatprep.subr.bf16.mxu0 0
    %7597 = vmatpush1.bf16.msra.mxu0 %v166
    %7598 = vmatprep.subr.bf16.mxu0 0
    %7599 = vmatpush1.bf16.msra.mxu0 %v167
    %7600 = vmatprep.subr.bf16.mxu0 0
    %7601 = vmatpush1.bf16.msra.mxu0 %v168
    %7602 = vmatprep.subr.bf16.mxu0 0
    %7603 = vmatpush1.bf16.msra.mxu0 %v169
    %7604 = vmatprep.subr.bf16.mxu0 0
    %7605 = vmatpush1.bf16.msra.mxu0 %v170
    %7606 = vmatprep.subr.bf16.mxu0 0
    %7607 = vmatpush1.bf16.msra.mxu0 %v171
    %7608 = vmatprep.subr.bf16.mxu0 0
    %7609 = vmatpush1.bf16.msra.mxu0 %v172
    %7610 = vmatprep.mubr.bf16.mxu0 %v7575
    %7611 = vmatmul.mubr.bf16.gmra.mrb[0].mxu0 %v7568
    %v7612 = vpop.f32.mrb[0].mxu0
    %v7613 = vadd.f32 %v66, %v7612
    %v7614 = vpop.f32.mrb[0].mxu0
    %v7615 = vpop.f32.mrb[0].mxu0
    %v7616 = vpop.f32.mrb[0].mxu0
    %7617 = vdwg.mxu0
    %vm7618 = vcmp.ge.f32.partialorder %v7613, 0.0
    %v7619 = vsel %vm7618, 1.0, 0.0
    %v7620 = vpack.c.bf16 %v7619, %v7619
    %s7621 = scalar_lea.vmem %s3, 2688
    %v7622 = vld [vmem:[%s7621] sm:$0xf]
    %v7623 = vld [vmem:[%s7621 + $0x4] sm:$0xf]
    %v7624 = vld [vmem:[%s7621 + $0x8] sm:$0xf]
    %v7625 = vld [vmem:[%s7621 + $0xc] sm:$0xf]
    %v7626 = vld [vmem:[%s7621 + $0x10] sm:$0xf]
    %v7627 = vld [vmem:[%s7621 + $0x14] sm:$0xf]
    %v7628 = vld [vmem:[%s7621 + $0x18] sm:$0xf]
    %v7629 = vld [vmem:[%s7621 + $0x1c] sm:$0xf]
    %v7630 = vld [vmem:[%s7621 + $0x20] sm:$0xf]
    %v7631 = vld [vmem:[%s7621 + $0x24] sm:$0xf]
    %v7632 = vld [vmem:[%s7621 + $0x28] sm:$0xf]
    %v7633 = vld [vmem:[%s7621 + $0x2c] sm:$0xf]
    %v7634 = vld [vmem:[%s7621 + $0x30] sm:$0xf]
    %v7635 = vld [vmem:[%s7621 + $0x34] sm:$0xf]
    %v7636 = vld [vmem:[%s7621 + $0x38] sm:$0xf]
    %v7637 = vld [vmem:[%s7621 + $0x3c] sm:$0xf]
    %v7654 = vunpack.c.l.b16 %v7622
    %v7655 = vunpack.c.l.b16 %v7623
    %v7656 = vunpack.c.l.b16 %v7624
    %v7657 = vunpack.c.l.b16 %v7625
    %v7658 = vunpack.c.l.b16 %v7626
    %v7659 = vunpack.c.l.b16 %v7627
    %v7660 = vunpack.c.l.b16 %v7628
    %v7661 = vunpack.c.l.b16 %v7629
    %v7662 = vunpack.c.l.b16 %v7630
    %v7663 = vunpack.c.l.b16 %v7631
    %v7664 = vunpack.c.l.b16 %v7632
    %v7665 = vunpack.c.l.b16 %v7633
    %v7666 = vunpack.c.l.b16 %v7634
    %v7667 = vunpack.c.l.b16 %v7635
    %v7668 = vunpack.c.l.b16 %v7636
    %v7669 = vunpack.c.l.b16 %v7637
    %v7670 = vpack.c.b16 %v7655, %v7654
    %v7671 = vpack.c.b16 %v7657, %v7656
    %v7672 = vpack.c.b16 %v7659, %v7658
    %v7673 = vpack.c.b16 %v7661, %v7660
    %v7674 = vpack.c.b16 %v7663, %v7662
    %v7675 = vpack.c.b16 %v7665, %v7664
    %v7676 = vpack.c.b16 %v7667, %v7666
    %v7677 = vpack.c.b16 %v7669, %v7668
    %7686 = vmatprep.subr.bf16.mxu0 0
    %7687 = vmatpush1.bf16.msra.mxu0 %v7670
    %7688 = vmatprep.subr.bf16.mxu0 0
    %7689 = vmatpush1.bf16.msra.mxu0 %v7671
    %7690 = vmatprep.subr.bf16.mxu0 0
    %7691 = vmatpush1.bf16.msra.mxu0 %v7672
    %7692 = vmatprep.subr.bf16.mxu0 0
    %7693 = vmatpush1.bf16.msra.mxu0 %v7673
    %7694 = vmatprep.subr.bf16.mxu0 0
    %7695 = vmatpush1.bf16.msra.mxu0 %v7674
    %7696 = vmatprep.subr.bf16.mxu0 0
    %7697 = vmatpush1.bf16.msra.mxu0 %v7675
    %7698 = vmatprep.subr.bf16.mxu0 0
    %7699 = vmatpush1.bf16.msra.mxu0 %v7676
    %7700 = vmatprep.subr.bf16.mxu0 0
    %7701 = vmatpush1.bf16.msra.mxu0 %v7677
    %7702 = vmatprep.subr.bf16.mxu0 0
    %7703 = vmatpush1.bf16.msra.mxu0 0
    %7704 = vmatprep.subr.bf16.mxu0 0
    %7705 = vmatpush1.bf16.msra.mxu0 0
    %7706 = vmatprep.subr.bf16.mxu0 0
    %7707 = vmatpush1.bf16.msra.mxu0 0
    %7708 = vmatprep.subr.bf16.mxu0 0
    %7709 = vmatpush1.bf16.msra.mxu0 0
    %7710 = vmatprep.subr.bf16.mxu0 0
    %7711 = vmatpush1.bf16.msra.mxu0 0
    %7712 = vmatprep.subr.bf16.mxu0 0
    %7713 = vmatpush1.bf16.msra.mxu0 0
    %7714 = vmatprep.subr.bf16.mxu0 0
    %7715 = vmatpush1.bf16.msra.mxu0 0
    %7716 = vmatprep.subr.bf16.mxu0 0
    %7717 = vmatpush1.bf16.msra.mxu0 0
    %7718 = vmatprep.mubr.bf16.mxu0 0
    %7719 = vmatmul.mubr.bf16.gmra.mrb[0].mxu0 %v7620
    %v7720 = vpop.f32.mrb[0].mxu0
    %v7721 = vadd.f32 0.0, %v7720
    %v7722 = vpop.f32.mrb[0].mxu0
    %v7723 = vpop.f32.mrb[0].mxu0
    %v7724 = vpop.f32.mrb[0].mxu0
    %7725 = vdwg.mxu0
    %v7726 = vadd.f32 %v7550, %v7721
    %s7727 = scalar_lea.vmem %s0, 86
    %v7728 = vld [vmem:[%s7727] sm:$0x3]
    %v7731 = vunpack.c.l.s4 1966171168
    %v7732 = vunpack.c.0.s8 %v7731
    %v7733 = vlaneseq
    %v7734 = vshrl.u32 %v7733, 7
    %v7735 = vsub.s32 %v7732, %v7734
    %v7736 = vrot.slane %v7728, %v7735
    %v7737 = vcombine.high %v7736, %v7736
    %v7739 = vunpack.c.l.s4 1966171168
    %v7740 = vunpack.c.0.s8 %v7739
    %v7741 = vlaneseq
    %v7742 = vshrl.u32 %v7741, 7
    %v7743 = vsub.s32 %v7740, %v7742
    %v7744 = vrot.slane %v7736, %v7743
    %v7746 = vunpack.c.l.s4 1966171168
    %v7747 = vunpack.c.0.s8 %v7746
    %v7748 = vlaneseq
    %v7749 = vshrl.u32 %v7748, 7
    %v7750 = vsub.s32 %v7747, %v7749
    %v7751 = vrot.slane %v7737, %v7750
    %7754 = vmatprep.subr.bf16.mxu0 0
    %7755 = vmatpush1.bf16.msra.mxu0 %v157
    %7756 = vmatprep.subr.bf16.mxu0 0
    %7757 = vmatpush1.bf16.msra.mxu0 %v158
    %7758 = vmatprep.subr.bf16.mxu0 0
    %7759 = vmatpush1.bf16.msra.mxu0 %v159
    %7760 = vmatprep.subr.bf16.mxu0 0
    %7761 = vmatpush1.bf16.msra.mxu0 %v160
    %7762 = vmatprep.subr.bf16.mxu0 0
    %7763 = vmatpush1.bf16.msra.mxu0 %v161
    %7764 = vmatprep.subr.bf16.mxu0 0
    %7765 = vmatpush1.bf16.msra.mxu0 %v162
    %7766 = vmatprep.subr.bf16.mxu0 0
    %7767 = vmatpush1.bf16.msra.mxu0 %v163
    %7768 = vmatprep.subr.bf16.mxu0 0
    %7769 = vmatpush1.bf16.msra.mxu0 %v164
    %7770 = vmatprep.subr.bf16.mxu0 0
    %7771 = vmatpush1.bf16.msra.mxu0 %v165
    %7772 = vmatprep.subr.bf16.mxu0 0
    %7773 = vmatpush1.bf16.msra.mxu0 %v166
    %7774 = vmatprep.subr.bf16.mxu0 0
    %7775 = vmatpush1.bf16.msra.mxu0 %v167
    %7776 = vmatprep.subr.bf16.mxu0 0
    %7777 = vmatpush1.bf16.msra.mxu0 %v168
    %7778 = vmatprep.subr.bf16.mxu0 0
    %7779 = vmatpush1.bf16.msra.mxu0 %v169
    %7780 = vmatprep.subr.bf16.mxu0 0
    %7781 = vmatpush1.bf16.msra.mxu0 %v170
    %7782 = vmatprep.subr.bf16.mxu0 0
    %7783 = vmatpush1.bf16.msra.mxu0 %v171
    %7784 = vmatprep.subr.bf16.mxu0 0
    %7785 = vmatpush1.bf16.msra.mxu0 %v172
    %7786 = vmatprep.mubr.bf16.mxu0 %v7751
    %7787 = vmatmul.mubr.bf16.gmra.mrb[0].mxu0 %v7744
    %v7788 = vpop.f32.mrb[0].mxu0
    %v7789 = vadd.f32 %v66, %v7788
    %v7790 = vpop.f32.mrb[0].mxu0
    %v7791 = vpop.f32.mrb[0].mxu0
    %v7792 = vpop.f32.mrb[0].mxu0
    %7793 = vdwg.mxu0
    %vm7794 = vcmp.ge.f32.partialorder %v7789, 0.0
    %v7795 = vsel %vm7794, 1.0, 0.0
    %v7796 = vpack.c.bf16 %v7795, %v7795
    %s7797 = scalar_lea.vmem %s3, 2752
    %v7798 = vld [vmem:[%s7797] sm:$0xf]
    %v7799 = vld [vmem:[%s7797 + $0x4] sm:$0xf]
    %v7800 = vld [vmem:[%s7797 + $0x8] sm:$0xf]
    %v7801 = vld [vmem:[%s7797 + $0xc] sm:$0xf]
    %v7802 = vld [vmem:[%s7797 + $0x10] sm:$0xf]
    %v7803 = vld [vmem:[%s7797 + $0x14] sm:$0xf]
    %v7804 = vld [vmem:[%s7797 + $0x18] sm:$0xf]
    %v7805 = vld [vmem:[%s7797 + $0x1c] sm:$0xf]
    %v7806 = vld [vmem:[%s7797 + $0x20] sm:$0xf]
    %v7807 = vld [vmem:[%s7797 + $0x24] sm:$0xf]
    %v7808 = vld [vmem:[%s7797 + $0x28] sm:$0xf]
    %v7809 = vld [vmem:[%s7797 + $0x2c] sm:$0xf]
    %v7810 = vld [vmem:[%s7797 + $0x30] sm:$0xf]
    %v7811 = vld [vmem:[%s7797 + $0x34] sm:$0xf]
    %v7812 = vld [vmem:[%s7797 + $0x38] sm:$0xf]
    %v7813 = vld [vmem:[%s7797 + $0x3c] sm:$0xf]
    %v7830 = vunpack.c.l.b16 %v7798
    %v7831 = vunpack.c.l.b16 %v7799
    %v7832 = vunpack.c.l.b16 %v7800
    %v7833 = vunpack.c.l.b16 %v7801
    %v7834 = vunpack.c.l.b16 %v7802
    %v7835 = vunpack.c.l.b16 %v7803
    %v7836 = vunpack.c.l.b16 %v7804
    %v7837 = vunpack.c.l.b16 %v7805
    %v7838 = vunpack.c.l.b16 %v7806
    %v7839 = vunpack.c.l.b16 %v7807
    %v7840 = vunpack.c.l.b16 %v7808
    %v7841 = vunpack.c.l.b16 %v7809
    %v7842 = vunpack.c.l.b16 %v7810
    %v7843 = vunpack.c.l.b16 %v7811
    %v7844 = vunpack.c.l.b16 %v7812
    %v7845 = vunpack.c.l.b16 %v7813
    %v7846 = vpack.c.b16 %v7831, %v7830
    %v7847 = vpack.c.b16 %v7833, %v7832
    %v7848 = vpack.c.b16 %v7835, %v7834
    %v7849 = vpack.c.b16 %v7837, %v7836
    %v7850 = vpack.c.b16 %v7839, %v7838
    %v7851 = vpack.c.b16 %v7841, %v7840
    %v7852 = vpack.c.b16 %v7843, %v7842
    %v7853 = vpack.c.b16 %v7845, %v7844
    %7862 = vmatprep.subr.bf16.mxu0 0
    %7863 = vmatpush1.bf16.msra.mxu0 %v7846
    %7864 = vmatprep.subr.bf16.mxu0 0
    %7865 = vmatpush1.bf16.msra.mxu0 %v7847
    %7866 = vmatprep.subr.bf16.mxu0 0
    %7867 = vmatpush1.bf16.msra.mxu0 %v7848
    %7868 = vmatprep.subr.bf16.mxu0 0
    %7869 = vmatpush1.bf16.msra.mxu0 %v7849
    %7870 = vmatprep.subr.bf16.mxu0 0
    %7871 = vmatpush1.bf16.msra.mxu0 %v7850
    %7872 = vmatprep.subr.bf16.mxu0 0
    %7873 = vmatpush1.bf16.msra.mxu0 %v7851
    %7874 = vmatprep.subr.bf16.mxu0 0
    %7875 = vmatpush1.bf16.msra.mxu0 %v7852
    %7876 = vmatprep.subr.bf16.mxu0 0
    %7877 = vmatpush1.bf16.msra.mxu0 %v7853
    %7878 = vmatprep.subr.bf16.mxu0 0
    %7879 = vmatpush1.bf16.msra.mxu0 0
    %7880 = vmatprep.subr.bf16.mxu0 0
    %7881 = vmatpush1.bf16.msra.mxu0 0
    %7882 = vmatprep.subr.bf16.mxu0 0
    %7883 = vmatpush1.bf16.msra.mxu0 0
    %7884 = vmatprep.subr.bf16.mxu0 0
    %7885 = vmatpush1.bf16.msra.mxu0 0
    %7886 = vmatprep.subr.bf16.mxu0 0
    %7887 = vmatpush1.bf16.msra.mxu0 0
    %7888 = vmatprep.subr.bf16.mxu0 0
    %7889 = vmatpush1.bf16.msra.mxu0 0
    %7890 = vmatprep.subr.bf16.mxu0 0
    %7891 = vmatpush1.bf16.msra.mxu0 0
    %7892 = vmatprep.subr.bf16.mxu0 0
    %7893 = vmatpush1.bf16.msra.mxu0 0
    %7894 = vmatprep.mubr.bf16.mxu0 0
    %7895 = vmatmul.mubr.bf16.gmra.mrb[0].mxu0 %v7796
    %v7896 = vpop.f32.mrb[0].mxu0
    %v7897 = vadd.f32 0.0, %v7896
    %v7898 = vpop.f32.mrb[0].mxu0
    %v7899 = vpop.f32.mrb[0].mxu0
    %v7900 = vpop.f32.mrb[0].mxu0
    %7901 = vdwg.mxu0
    %v7902 = vadd.f32 %v7726, %v7897
    %s7903 = scalar_lea.vmem %s0, 88
    %v7904 = vld [vmem:[%s7903] sm:$0x3]
    %v7907 = vunpack.c.l.s4 1966171168
    %v7908 = vunpack.c.0.s8 %v7907
    %v7909 = vlaneseq
    %v7910 = vshrl.u32 %v7909, 7
    %v7911 = vsub.s32 %v7908, %v7910
    %v7912 = vrot.slane %v7904, %v7911
    %v7913 = vcombine.high %v7912, %v7912
    %v7915 = vunpack.c.l.s4 1966171168
    %v7916 = vunpack.c.0.s8 %v7915
    %v7917 = vlaneseq
    %v7918 = vshrl.u32 %v7917, 7
    %v7919 = vsub.s32 %v7916, %v7918
    %v7920 = vrot.slane %v7912, %v7919
    %v7922 = vunpack.c.l.s4 1966171168
    %v7923 = vunpack.c.0.s8 %v7922
    %v7924 = vlaneseq
    %v7925 = vshrl.u32 %v7924, 7
    %v7926 = vsub.s32 %v7923, %v7925
    %v7927 = vrot.slane %v7913, %v7926
    %7930 = vmatprep.subr.bf16.mxu0 0
    %7931 = vmatpush1.bf16.msra.mxu0 %v157
    %7932 = vmatprep.subr.bf16.mxu0 0
    %7933 = vmatpush1.bf16.msra.mxu0 %v158
    %7934 = vmatprep.subr.bf16.mxu0 0
    %7935 = vmatpush1.bf16.msra.mxu0 %v159
    %7936 = vmatprep.subr.bf16.mxu0 0
    %7937 = vmatpush1.bf16.msra.mxu0 %v160
    %7938 = vmatprep.subr.bf16.mxu0 0
    %7939 = vmatpush1.bf16.msra.mxu0 %v161
    %7940 = vmatprep.subr.bf16.mxu0 0
    %7941 = vmatpush1.bf16.msra.mxu0 %v162
    %7942 = vmatprep.subr.bf16.mxu0 0
    %7943 = vmatpush1.bf16.msra.mxu0 %v163
    %7944 = vmatprep.subr.bf16.mxu0 0
    %7945 = vmatpush1.bf16.msra.mxu0 %v164
    %7946 = vmatprep.subr.bf16.mxu0 0
    %7947 = vmatpush1.bf16.msra.mxu0 %v165
    %7948 = vmatprep.subr.bf16.mxu0 0
    %7949 = vmatpush1.bf16.msra.mxu0 %v166
    %7950 = vmatprep.subr.bf16.mxu0 0
    %7951 = vmatpush1.bf16.msra.mxu0 %v167
    %7952 = vmatprep.subr.bf16.mxu0 0
    %7953 = vmatpush1.bf16.msra.mxu0 %v168
    %7954 = vmatprep.subr.bf16.mxu0 0
    %7955 = vmatpush1.bf16.msra.mxu0 %v169
    %7956 = vmatprep.subr.bf16.mxu0 0
    %7957 = vmatpush1.bf16.msra.mxu0 %v170
    %7958 = vmatprep.subr.bf16.mxu0 0
    %7959 = vmatpush1.bf16.msra.mxu0 %v171
    %7960 = vmatprep.subr.bf16.mxu0 0
    %7961 = vmatpush1.bf16.msra.mxu0 %v172
    %7962 = vmatprep.mubr.bf16.mxu0 %v7927
    %7963 = vmatmul.mubr.bf16.gmra.mrb[0].mxu0 %v7920
    %v7964 = vpop.f32.mrb[0].mxu0
    %v7965 = vadd.f32 %v66, %v7964
    %v7966 = vpop.f32.mrb[0].mxu0
    %v7967 = vpop.f32.mrb[0].mxu0
    %v7968 = vpop.f32.mrb[0].mxu0
    %7969 = vdwg.mxu0
    %vm7970 = vcmp.ge.f32.partialorder %v7965, 0.0
    %v7971 = vsel %vm7970, 1.0, 0.0
    %v7972 = vpack.c.bf16 %v7971, %v7971
    %s7973 = scalar_lea.vmem %s3, 2816
    %v7974 = vld [vmem:[%s7973] sm:$0xf]
    %v7975 = vld [vmem:[%s7973 + $0x4] sm:$0xf]
    %v7976 = vld [vmem:[%s7973 + $0x8] sm:$0xf]
    %v7977 = vld [vmem:[%s7973 + $0xc] sm:$0xf]
    %v7978 = vld [vmem:[%s7973 + $0x10] sm:$0xf]
    %v7979 = vld [vmem:[%s7973 + $0x14] sm:$0xf]
    %v7980 = vld [vmem:[%s7973 + $0x18] sm:$0xf]
    %v7981 = vld [vmem:[%s7973 + $0x1c] sm:$0xf]
    %v7982 = vld [vmem:[%s7973 + $0x20] sm:$0xf]
    %v7983 = vld [vmem:[%s7973 + $0x24] sm:$0xf]
    %v7984 = vld [vmem:[%s7973 + $0x28] sm:$0xf]
    %v7985 = vld [vmem:[%s7973 + $0x2c] sm:$0xf]
    %v7986 = vld [vmem:[%s7973 + $0x30] sm:$0xf]
    %v7987 = vld [vmem:[%s7973 + $0x34] sm:$0xf]
    %v7988 = vld [vmem:[%s7973 + $0x38] sm:$0xf]
    %v7989 = vld [vmem:[%s7973 + $0x3c] sm:$0xf]
    %v8006 = vunpack.c.l.b16 %v7974
    %v8007 = vunpack.c.l.b16 %v7975
    %v8008 = vunpack.c.l.b16 %v7976
    %v8009 = vunpack.c.l.b16 %v7977
    %v8010 = vunpack.c.l.b16 %v7978
    %v8011 = vunpack.c.l.b16 %v7979
    %v8012 = vunpack.c.l.b16 %v7980
    %v8013 = vunpack.c.l.b16 %v7981
    %v8014 = vunpack.c.l.b16 %v7982
    %v8015 = vunpack.c.l.b16 %v7983
    %v8016 = vunpack.c.l.b16 %v7984
    %v8017 = vunpack.c.l.b16 %v7985
    %v8018 = vunpack.c.l.b16 %v7986
    %v8019 = vunpack.c.l.b16 %v7987
    %v8020 = vunpack.c.l.b16 %v7988
    %v8021 = vunpack.c.l.b16 %v7989
    %v8022 = vpack.c.b16 %v8007, %v8006
    %v8023 = vpack.c.b16 %v8009, %v8008
    %v8024 = vpack.c.b16 %v8011, %v8010
    %v8025 = vpack.c.b16 %v8013, %v8012
    %v8026 = vpack.c.b16 %v8015, %v8014
    %v8027 = vpack.c.b16 %v8017, %v8016
    %v8028 = vpack.c.b16 %v8019, %v8018
    %v8029 = vpack.c.b16 %v8021, %v8020
    %8038 = vmatprep.subr.bf16.mxu0 0
    %8039 = vmatpush1.bf16.msra.mxu0 %v8022
    %8040 = vmatprep.subr.bf16.mxu0 0
    %8041 = vmatpush1.bf16.msra.mxu0 %v8023
    %8042 = vmatprep.subr.bf16.mxu0 0
    %8043 = vmatpush1.bf16.msra.mxu0 %v8024
    %8044 = vmatprep.subr.bf16.mxu0 0
    %8045 = vmatpush1.bf16.msra.mxu0 %v8025
    %8046 = vmatprep.subr.bf16.mxu0 0
    %8047 = vmatpush1.bf16.msra.mxu0 %v8026
    %8048 = vmatprep.subr.bf16.mxu0 0
    %8049 = vmatpush1.bf16.msra.mxu0 %v8027
    %8050 = vmatprep.subr.bf16.mxu0 0
    %8051 = vmatpush1.bf16.msra.mxu0 %v8028
    %8052 = vmatprep.subr.bf16.mxu0 0
    %8053 = vmatpush1.bf16.msra.mxu0 %v8029
    %8054 = vmatprep.subr.bf16.mxu0 0
    %8055 = vmatpush1.bf16.msra.mxu0 0
    %8056 = vmatprep.subr.bf16.mxu0 0
    %8057 = vmatpush1.bf16.msra.mxu0 0
    %8058 = vmatprep.subr.bf16.mxu0 0
    %8059 = vmatpush1.bf16.msra.mxu0 0
    %8060 = vmatprep.subr.bf16.mxu0 0
    %8061 = vmatpush1.bf16.msra.mxu0 0
    %8062 = vmatprep.subr.bf16.mxu0 0
    %8063 = vmatpush1.bf16.msra.mxu0 0
    %8064 = vmatprep.subr.bf16.mxu0 0
    %8065 = vmatpush1.bf16.msra.mxu0 0
    %8066 = vmatprep.subr.bf16.mxu0 0
    %8067 = vmatpush1.bf16.msra.mxu0 0
    %8068 = vmatprep.subr.bf16.mxu0 0
    %8069 = vmatpush1.bf16.msra.mxu0 0
    %8070 = vmatprep.mubr.bf16.mxu0 0
    %8071 = vmatmul.mubr.bf16.gmra.mrb[0].mxu0 %v7972
    %v8072 = vpop.f32.mrb[0].mxu0
    %v8073 = vadd.f32 0.0, %v8072
    %v8074 = vpop.f32.mrb[0].mxu0
    %v8075 = vpop.f32.mrb[0].mxu0
    %v8076 = vpop.f32.mrb[0].mxu0
    %8077 = vdwg.mxu0
    %v8078 = vadd.f32 %v7902, %v8073
    %s8079 = scalar_lea.vmem %s0, 90
    %v8080 = vld [vmem:[%s8079] sm:$0x3]
    %v8083 = vunpack.c.l.s4 1966171168
    %v8084 = vunpack.c.0.s8 %v8083
    %v8085 = vlaneseq
    %v8086 = vshrl.u32 %v8085, 7
    %v8087 = vsub.s32 %v8084, %v8086
    %v8088 = vrot.slane %v8080, %v8087
    %v8089 = vcombine.high %v8088, %v8088
    %v8091 = vunpack.c.l.s4 1966171168
    %v8092 = vunpack.c.0.s8 %v8091
    %v8093 = vlaneseq
    %v8094 = vshrl.u32 %v8093, 7
    %v8095 = vsub.s32 %v8092, %v8094
    %v8096 = vrot.slane %v8088, %v8095
    %v8098 = vunpack.c.l.s4 1966171168
    %v8099 = vunpack.c.0.s8 %v8098
    %v8100 = vlaneseq
    %v8101 = vshrl.u32 %v8100, 7
    %v8102 = vsub.s32 %v8099, %v8101
    %v8103 = vrot.slane %v8089, %v8102
    %8106 = vmatprep.subr.bf16.mxu0 0
    %8107 = vmatpush1.bf16.msra.mxu0 %v157
    %8108 = vmatprep.subr.bf16.mxu0 0
    %8109 = vmatpush1.bf16.msra.mxu0 %v158
    %8110 = vmatprep.subr.bf16.mxu0 0
    %8111 = vmatpush1.bf16.msra.mxu0 %v159
    %8112 = vmatprep.subr.bf16.mxu0 0
    %8113 = vmatpush1.bf16.msra.mxu0 %v160
    %8114 = vmatprep.subr.bf16.mxu0 0
    %8115 = vmatpush1.bf16.msra.mxu0 %v161
    %8116 = vmatprep.subr.bf16.mxu0 0
    %8117 = vmatpush1.bf16.msra.mxu0 %v162
    %8118 = vmatprep.subr.bf16.mxu0 0
    %8119 = vmatpush1.bf16.msra.mxu0 %v163
    %8120 = vmatprep.subr.bf16.mxu0 0
    %8121 = vmatpush1.bf16.msra.mxu0 %v164
    %8122 = vmatprep.subr.bf16.mxu0 0
    %8123 = vmatpush1.bf16.msra.mxu0 %v165
    %8124 = vmatprep.subr.bf16.mxu0 0
    %8125 = vmatpush1.bf16.msra.mxu0 %v166
    %8126 = vmatprep.subr.bf16.mxu0 0
    %8127 = vmatpush1.bf16.msra.mxu0 %v167
    %8128 = vmatprep.subr.bf16.mxu0 0
    %8129 = vmatpush1.bf16.msra.mxu0 %v168
    %8130 = vmatprep.subr.bf16.mxu0 0
    %8131 = vmatpush1.bf16.msra.mxu0 %v169
    %8132 = vmatprep.subr.bf16.mxu0 0
    %8133 = vmatpush1.bf16.msra.mxu0 %v170
    %8134 = vmatprep.subr.bf16.mxu0 0
    %8135 = vmatpush1.bf16.msra.mxu0 %v171
    %8136 = vmatprep.subr.bf16.mxu0 0
    %8137 = vmatpush1.bf16.msra.mxu0 %v172
    %8138 = vmatprep.mubr.bf16.mxu0 %v8103
    %8139 = vmatmul.mubr.bf16.gmra.mrb[0].mxu0 %v8096
    %v8140 = vpop.f32.mrb[0].mxu0
    %v8141 = vadd.f32 %v66, %v8140
    %v8142 = vpop.f32.mrb[0].mxu0
    %v8143 = vpop.f32.mrb[0].mxu0
    %v8144 = vpop.f32.mrb[0].mxu0
    %8145 = vdwg.mxu0
    %vm8146 = vcmp.ge.f32.partialorder %v8141, 0.0
    %v8147 = vsel %vm8146, 1.0, 0.0
    %v8148 = vpack.c.bf16 %v8147, %v8147
    %s8149 = scalar_lea.vmem %s3, 2880
    %v8150 = vld [vmem:[%s8149] sm:$0xf]
    %v8151 = vld [vmem:[%s8149 + $0x4] sm:$0xf]
    %v8152 = vld [vmem:[%s8149 + $0x8] sm:$0xf]
    %v8153 = vld [vmem:[%s8149 + $0xc] sm:$0xf]
    %v8154 = vld [vmem:[%s8149 + $0x10] sm:$0xf]
    %v8155 = vld [vmem:[%s8149 + $0x14] sm:$0xf]
    %v8156 = vld [vmem:[%s8149 + $0x18] sm:$0xf]
    %v8157 = vld [vmem:[%s8149 + $0x1c] sm:$0xf]
    %v8158 = vld [vmem:[%s8149 + $0x20] sm:$0xf]
    %v8159 = vld [vmem:[%s8149 + $0x24] sm:$0xf]
    %v8160 = vld [vmem:[%s8149 + $0x28] sm:$0xf]
    %v8161 = vld [vmem:[%s8149 + $0x2c] sm:$0xf]
    %v8162 = vld [vmem:[%s8149 + $0x30] sm:$0xf]
    %v8163 = vld [vmem:[%s8149 + $0x34] sm:$0xf]
    %v8164 = vld [vmem:[%s8149 + $0x38] sm:$0xf]
    %v8165 = vld [vmem:[%s8149 + $0x3c] sm:$0xf]
    %v8182 = vunpack.c.l.b16 %v8150
    %v8183 = vunpack.c.l.b16 %v8151
    %v8184 = vunpack.c.l.b16 %v8152
    %v8185 = vunpack.c.l.b16 %v8153
    %v8186 = vunpack.c.l.b16 %v8154
    %v8187 = vunpack.c.l.b16 %v8155
    %v8188 = vunpack.c.l.b16 %v8156
    %v8189 = vunpack.c.l.b16 %v8157
    %v8190 = vunpack.c.l.b16 %v8158
    %v8191 = vunpack.c.l.b16 %v8159
    %v8192 = vunpack.c.l.b16 %v8160
    %v8193 = vunpack.c.l.b16 %v8161
    %v8194 = vunpack.c.l.b16 %v8162
    %v8195 = vunpack.c.l.b16 %v8163
    %v8196 = vunpack.c.l.b16 %v8164
    %v8197 = vunpack.c.l.b16 %v8165
    %v8198 = vpack.c.b16 %v8183, %v8182
    %v8199 = vpack.c.b16 %v8185, %v8184
    %v8200 = vpack.c.b16 %v8187, %v8186
    %v8201 = vpack.c.b16 %v8189, %v8188
    %v8202 = vpack.c.b16 %v8191, %v8190
    %v8203 = vpack.c.b16 %v8193, %v8192
    %v8204 = vpack.c.b16 %v8195, %v8194
    %v8205 = vpack.c.b16 %v8197, %v8196
    %8214 = vmatprep.subr.bf16.mxu0 0
    %8215 = vmatpush1.bf16.msra.mxu0 %v8198
    %8216 = vmatprep.subr.bf16.mxu0 0
    %8217 = vmatpush1.bf16.msra.mxu0 %v8199
    %8218 = vmatprep.subr.bf16.mxu0 0
    %8219 = vmatpush1.bf16.msra.mxu0 %v8200
    %8220 = vmatprep.subr.bf16.mxu0 0
    %8221 = vmatpush1.bf16.msra.mxu0 %v8201
    %8222 = vmatprep.subr.bf16.mxu0 0
    %8223 = vmatpush1.bf16.msra.mxu0 %v8202
    %8224 = vmatprep.subr.bf16.mxu0 0
    %8225 = vmatpush1.bf16.msra.mxu0 %v8203
    %8226 = vmatprep.subr.bf16.mxu0 0
    %8227 = vmatpush1.bf16.msra.mxu0 %v8204
    %8228 = vmatprep.subr.bf16.mxu0 0
    %8229 = vmatpush1.bf16.msra.mxu0 %v8205
    %8230 = vmatprep.subr.bf16.mxu0 0
    %8231 = vmatpush1.bf16.msra.mxu0 0
    %8232 = vmatprep.subr.bf16.mxu0 0
    %8233 = vmatpush1.bf16.msra.mxu0 0
    %8234 = vmatprep.subr.bf16.mxu0 0
    %8235 = vmatpush1.bf16.msra.mxu0 0
    %8236 = vmatprep.subr.bf16.mxu0 0
    %8237 = vmatpush1.bf16.msra.mxu0 0
    %8238 = vmatprep.subr.bf16.mxu0 0
    %8239 = vmatpush1.bf16.msra.mxu0 0
    %8240 = vmatprep.subr.bf16.mxu0 0
    %8241 = vmatpush1.bf16.msra.mxu0 0
    %8242 = vmatprep.subr.bf16.mxu0 0
    %8243 = vmatpush1.bf16.msra.mxu0 0
    %8244 = vmatprep.subr.bf16.mxu0 0
    %8245 = vmatpush1.bf16.msra.mxu0 0
    %8246 = vmatprep.mubr.bf16.mxu0 0
    %8247 = vmatmul.mubr.bf16.gmra.mrb[0].mxu0 %v8148
    %v8248 = vpop.f32.mrb[0].mxu0
    %v8249 = vadd.f32 0.0, %v8248
    %v8250 = vpop.f32.mrb[0].mxu0
    %v8251 = vpop.f32.mrb[0].mxu0
    %v8252 = vpop.f32.mrb[0].mxu0
    %8253 = vdwg.mxu0
    %v8254 = vadd.f32 %v8078, %v8249
    %s8255 = scalar_lea.vmem %s0, 92
    %v8256 = vld [vmem:[%s8255] sm:$0x3]
    %v8259 = vunpack.c.l.s4 1966171168
    %v8260 = vunpack.c.0.s8 %v8259
    %v8261 = vlaneseq
    %v8262 = vshrl.u32 %v8261, 7
    %v8263 = vsub.s32 %v8260, %v8262
    %v8264 = vrot.slane %v8256, %v8263
    %v8265 = vcombine.high %v8264, %v8264
    %v8267 = vunpack.c.l.s4 1966171168
    %v8268 = vunpack.c.0.s8 %v8267
    %v8269 = vlaneseq
    %v8270 = vshrl.u32 %v8269, 7
    %v8271 = vsub.s32 %v8268, %v8270
    %v8272 = vrot.slane %v8264, %v8271
    %v8274 = vunpack.c.l.s4 1966171168
    %v8275 = vunpack.c.0.s8 %v8274
    %v8276 = vlaneseq
    %v8277 = vshrl.u32 %v8276, 7
    %v8278 = vsub.s32 %v8275, %v8277
    %v8279 = vrot.slane %v8265, %v8278
    %8282 = vmatprep.subr.bf16.mxu0 0
    %8283 = vmatpush1.bf16.msra.mxu0 %v157
    %8284 = vmatprep.subr.bf16.mxu0 0
    %8285 = vmatpush1.bf16.msra.mxu0 %v158
    %8286 = vmatprep.subr.bf16.mxu0 0
    %8287 = vmatpush1.bf16.msra.mxu0 %v159
    %8288 = vmatprep.subr.bf16.mxu0 0
    %8289 = vmatpush1.bf16.msra.mxu0 %v160
    %8290 = vmatprep.subr.bf16.mxu0 0
    %8291 = vmatpush1.bf16.msra.mxu0 %v161
    %8292 = vmatprep.subr.bf16.mxu0 0
    %8293 = vmatpush1.bf16.msra.mxu0 %v162
    %8294 = vmatprep.subr.bf16.mxu0 0
    %8295 = vmatpush1.bf16.msra.mxu0 %v163
    %8296 = vmatprep.subr.bf16.mxu0 0
    %8297 = vmatpush1.bf16.msra.mxu0 %v164
    %8298 = vmatprep.subr.bf16.mxu0 0
    %8299 = vmatpush1.bf16.msra.mxu0 %v165
    %8300 = vmatprep.subr.bf16.mxu0 0
    %8301 = vmatpush1.bf16.msra.mxu0 %v166
    %8302 = vmatprep.subr.bf16.mxu0 0
    %8303 = vmatpush1.bf16.msra.mxu0 %v167
    %8304 = vmatprep.subr.bf16.mxu0 0
    %8305 = vmatpush1.bf16.msra.mxu0 %v168
    %8306 = vmatprep.subr.bf16.mxu0 0
    %8307 = vmatpush1.bf16.msra.mxu0 %v169
    %8308 = vmatprep.subr.bf16.mxu0 0
    %8309 = vmatpush1.bf16.msra.mxu0 %v170
    %8310 = vmatprep.subr.bf16.mxu0 0
    %8311 = vmatpush1.bf16.msra.mxu0 %v171
    %8312 = vmatprep.subr.bf16.mxu0 0
    %8313 = vmatpush1.bf16.msra.mxu0 %v172
    %8314 = vmatprep.mubr.bf16.mxu0 %v8279
    %8315 = vmatmul.mubr.bf16.gmra.mrb[0].mxu0 %v8272
    %v8316 = vpop.f32.mrb[0].mxu0
    %v8317 = vadd.f32 %v66, %v8316
    %v8318 = vpop.f32.mrb[0].mxu0
    %v8319 = vpop.f32.mrb[0].mxu0
    %v8320 = vpop.f32.mrb[0].mxu0
    %8321 = vdwg.mxu0
    %vm8322 = vcmp.ge.f32.partialorder %v8317, 0.0
    %v8323 = vsel %vm8322, 1.0, 0.0
    %v8324 = vpack.c.bf16 %v8323, %v8323
    %s8325 = scalar_lea.vmem %s3, 2944
    %v8326 = vld [vmem:[%s8325] sm:$0xf]
    %v8327 = vld [vmem:[%s8325 + $0x4] sm:$0xf]
    %v8328 = vld [vmem:[%s8325 + $0x8] sm:$0xf]
    %v8329 = vld [vmem:[%s8325 + $0xc] sm:$0xf]
    %v8330 = vld [vmem:[%s8325 + $0x10] sm:$0xf]
    %v8331 = vld [vmem:[%s8325 + $0x14] sm:$0xf]
    %v8332 = vld [vmem:[%s8325 + $0x18] sm:$0xf]
    %v8333 = vld [vmem:[%s8325 + $0x1c] sm:$0xf]
    %v8334 = vld [vmem:[%s8325 + $0x20] sm:$0xf]
    %v8335 = vld [vmem:[%s8325 + $0x24] sm:$0xf]
    %v8336 = vld [vmem:[%s8325 + $0x28] sm:$0xf]
    %v8337 = vld [vmem:[%s8325 + $0x2c] sm:$0xf]
    %v8338 = vld [vmem:[%s8325 + $0x30] sm:$0xf]
    %v8339 = vld [vmem:[%s8325 + $0x34] sm:$0xf]
    %v8340 = vld [vmem:[%s8325 + $0x38] sm:$0xf]
    %v8341 = vld [vmem:[%s8325 + $0x3c] sm:$0xf]
    %v8358 = vunpack.c.l.b16 %v8326
    %v8359 = vunpack.c.l.b16 %v8327
    %v8360 = vunpack.c.l.b16 %v8328
    %v8361 = vunpack.c.l.b16 %v8329
    %v8362 = vunpack.c.l.b16 %v8330
    %v8363 = vunpack.c.l.b16 %v8331
    %v8364 = vunpack.c.l.b16 %v8332
    %v8365 = vunpack.c.l.b16 %v8333
    %v8366 = vunpack.c.l.b16 %v8334
    %v8367 = vunpack.c.l.b16 %v8335
    %v8368 = vunpack.c.l.b16 %v8336
    %v8369 = vunpack.c.l.b16 %v8337
    %v8370 = vunpack.c.l.b16 %v8338
    %v8371 = vunpack.c.l.b16 %v8339
    %v8372 = vunpack.c.l.b16 %v8340
    %v8373 = vunpack.c.l.b16 %v8341
    %v8374 = vpack.c.b16 %v8359, %v8358
    %v8375 = vpack.c.b16 %v8361, %v8360
    %v8376 = vpack.c.b16 %v8363, %v8362
    %v8377 = vpack.c.b16 %v8365, %v8364
    %v8378 = vpack.c.b16 %v8367, %v8366
    %v8379 = vpack.c.b16 %v8369, %v8368
    %v8380 = vpack.c.b16 %v8371, %v8370
    %v8381 = vpack.c.b16 %v8373, %v8372
    %8390 = vmatprep.subr.bf16.mxu0 0
    %8391 = vmatpush1.bf16.msra.mxu0 %v8374
    %8392 = vmatprep.subr.bf16.mxu0 0
    %8393 = vmatpush1.bf16.msra.mxu0 %v8375
    %8394 = vmatprep.subr.bf16.mxu0 0
    %8395 = vmatpush1.bf16.msra.mxu0 %v8376
    %8396 = vmatprep.subr.bf16.mxu0 0
    %8397 = vmatpush1.bf16.msra.mxu0 %v8377
    %8398 = vmatprep.subr.bf16.mxu0 0
    %8399 = vmatpush1.bf16.msra.mxu0 %v8378
    %8400 = vmatprep.subr.bf16.mxu0 0
    %8401 = vmatpush1.bf16.msra.mxu0 %v8379
    %8402 = vmatprep.subr.bf16.mxu0 0
    %8403 = vmatpush1.bf16.msra.mxu0 %v8380
    %8404 = vmatprep.subr.bf16.mxu0 0
    %8405 = vmatpush1.bf16.msra.mxu0 %v8381
    %8406 = vmatprep.subr.bf16.mxu0 0
    %8407 = vmatpush1.bf16.msra.mxu0 0
    %8408 = vmatprep.subr.bf16.mxu0 0
    %8409 = vmatpush1.bf16.msra.mxu0 0
    %8410 = vmatprep.subr.bf16.mxu0 0
    %8411 = vmatpush1.bf16.msra.mxu0 0
    %8412 = vmatprep.subr.bf16.mxu0 0
    %8413 = vmatpush1.bf16.msra.mxu0 0
    %8414 = vmatprep.subr.bf16.mxu0 0
    %8415 = vmatpush1.bf16.msra.mxu0 0
    %8416 = vmatprep.subr.bf16.mxu0 0
    %8417 = vmatpush1.bf16.msra.mxu0 0
    %8418 = vmatprep.subr.bf16.mxu0 0
    %8419 = vmatpush1.bf16.msra.mxu0 0
    %8420 = vmatprep.subr.bf16.mxu0 0
    %8421 = vmatpush1.bf16.msra.mxu0 0
    %8422 = vmatprep.mubr.bf16.mxu0 0
    %8423 = vmatmul.mubr.bf16.gmra.mrb[0].mxu0 %v8324
    %v8424 = vpop.f32.mrb[0].mxu0
    %v8425 = vadd.f32 0.0, %v8424
    %v8426 = vpop.f32.mrb[0].mxu0
    %v8427 = vpop.f32.mrb[0].mxu0
    %v8428 = vpop.f32.mrb[0].mxu0
    %8429 = vdwg.mxu0
    %v8430 = vadd.f32 %v8254, %v8425
    %s8431 = scalar_lea.vmem %s0, 94
    %v8432 = vld [vmem:[%s8431] sm:$0x3]
    %v8435 = vunpack.c.l.s4 1966171168
    %v8436 = vunpack.c.0.s8 %v8435
    %v8437 = vlaneseq
    %v8438 = vshrl.u32 %v8437, 7
    %v8439 = vsub.s32 %v8436, %v8438
    %v8440 = vrot.slane %v8432, %v8439
    %v8441 = vcombine.high %v8440, %v8440
    %v8443 = vunpack.c.l.s4 1966171168
    %v8444 = vunpack.c.0.s8 %v8443
    %v8445 = vlaneseq
    %v8446 = vshrl.u32 %v8445, 7
    %v8447 = vsub.s32 %v8444, %v8446
    %v8448 = vrot.slane %v8440, %v8447
    %v8450 = vunpack.c.l.s4 1966171168
    %v8451 = vunpack.c.0.s8 %v8450
    %v8452 = vlaneseq
    %v8453 = vshrl.u32 %v8452, 7
    %v8454 = vsub.s32 %v8451, %v8453
    %v8455 = vrot.slane %v8441, %v8454
    %8458 = vmatprep.subr.bf16.mxu0 0
    %8459 = vmatpush1.bf16.msra.mxu0 %v157
    %8460 = vmatprep.subr.bf16.mxu0 0
    %8461 = vmatpush1.bf16.msra.mxu0 %v158
    %8462 = vmatprep.subr.bf16.mxu0 0
    %8463 = vmatpush1.bf16.msra.mxu0 %v159
    %8464 = vmatprep.subr.bf16.mxu0 0
    %8465 = vmatpush1.bf16.msra.mxu0 %v160
    %8466 = vmatprep.subr.bf16.mxu0 0
    %8467 = vmatpush1.bf16.msra.mxu0 %v161
    %8468 = vmatprep.subr.bf16.mxu0 0
    %8469 = vmatpush1.bf16.msra.mxu0 %v162
    %8470 = vmatprep.subr.bf16.mxu0 0
    %8471 = vmatpush1.bf16.msra.mxu0 %v163
    %8472 = vmatprep.subr.bf16.mxu0 0
    %8473 = vmatpush1.bf16.msra.mxu0 %v164
    %8474 = vmatprep.subr.bf16.mxu0 0
    %8475 = vmatpush1.bf16.msra.mxu0 %v165
    %8476 = vmatprep.subr.bf16.mxu0 0
    %8477 = vmatpush1.bf16.msra.mxu0 %v166
    %8478 = vmatprep.subr.bf16.mxu0 0
    %8479 = vmatpush1.bf16.msra.mxu0 %v167
    %8480 = vmatprep.subr.bf16.mxu0 0
    %8481 = vmatpush1.bf16.msra.mxu0 %v168
    %8482 = vmatprep.subr.bf16.mxu0 0
    %8483 = vmatpush1.bf16.msra.mxu0 %v169
    %8484 = vmatprep.subr.bf16.mxu0 0
    %8485 = vmatpush1.bf16.msra.mxu0 %v170
    %8486 = vmatprep.subr.bf16.mxu0 0
    %8487 = vmatpush1.bf16.msra.mxu0 %v171
    %8488 = vmatprep.subr.bf16.mxu0 0
    %8489 = vmatpush1.bf16.msra.mxu0 %v172
    %8490 = vmatprep.mubr.bf16.mxu0 %v8455
    %8491 = vmatmul.mubr.bf16.gmra.mrb[0].mxu0 %v8448
    %v8492 = vpop.f32.mrb[0].mxu0
    %v8493 = vadd.f32 %v66, %v8492
    %v8494 = vpop.f32.mrb[0].mxu0
    %v8495 = vpop.f32.mrb[0].mxu0
    %v8496 = vpop.f32.mrb[0].mxu0
    %8497 = vdwg.mxu0
    %vm8498 = vcmp.ge.f32.partialorder %v8493, 0.0
    %v8499 = vsel %vm8498, 1.0, 0.0
    %v8500 = vpack.c.bf16 %v8499, %v8499
    %s8501 = scalar_lea.vmem %s3, 3008
    %v8502 = vld [vmem:[%s8501] sm:$0xf]
    %v8503 = vld [vmem:[%s8501 + $0x4] sm:$0xf]
    %v8504 = vld [vmem:[%s8501 + $0x8] sm:$0xf]
    %v8505 = vld [vmem:[%s8501 + $0xc] sm:$0xf]
    %v8506 = vld [vmem:[%s8501 + $0x10] sm:$0xf]
    %v8507 = vld [vmem:[%s8501 + $0x14] sm:$0xf]
    %v8508 = vld [vmem:[%s8501 + $0x18] sm:$0xf]
    %v8509 = vld [vmem:[%s8501 + $0x1c] sm:$0xf]
    %v8510 = vld [vmem:[%s8501 + $0x20] sm:$0xf]
    %v8511 = vld [vmem:[%s8501 + $0x24] sm:$0xf]
    %v8512 = vld [vmem:[%s8501 + $0x28] sm:$0xf]
    %v8513 = vld [vmem:[%s8501 + $0x2c] sm:$0xf]
    %v8514 = vld [vmem:[%s8501 + $0x30] sm:$0xf]
    %v8515 = vld [vmem:[%s8501 + $0x34] sm:$0xf]
    %v8516 = vld [vmem:[%s8501 + $0x38] sm:$0xf]
    %v8517 = vld [vmem:[%s8501 + $0x3c] sm:$0xf]
    %v8534 = vunpack.c.l.b16 %v8502
    %v8535 = vunpack.c.l.b16 %v8503
    %v8536 = vunpack.c.l.b16 %v8504
    %v8537 = vunpack.c.l.b16 %v8505
    %v8538 = vunpack.c.l.b16 %v8506
    %v8539 = vunpack.c.l.b16 %v8507
    %v8540 = vunpack.c.l.b16 %v8508
    %v8541 = vunpack.c.l.b16 %v8509
    %v8542 = vunpack.c.l.b16 %v8510
    %v8543 = vunpack.c.l.b16 %v8511
    %v8544 = vunpack.c.l.b16 %v8512
    %v8545 = vunpack.c.l.b16 %v8513
    %v8546 = vunpack.c.l.b16 %v8514
    %v8547 = vunpack.c.l.b16 %v8515
    %v8548 = vunpack.c.l.b16 %v8516
    %v8549 = vunpack.c.l.b16 %v8517
    %v8550 = vpack.c.b16 %v8535, %v8534
    %v8551 = vpack.c.b16 %v8537, %v8536
    %v8552 = vpack.c.b16 %v8539, %v8538
    %v8553 = vpack.c.b16 %v8541, %v8540
    %v8554 = vpack.c.b16 %v8543, %v8542
    %v8555 = vpack.c.b16 %v8545, %v8544
    %v8556 = vpack.c.b16 %v8547, %v8546
    %v8557 = vpack.c.b16 %v8549, %v8548
    %8566 = vmatprep.subr.bf16.mxu0 0
    %8567 = vmatpush1.bf16.msra.mxu0 %v8550
    %8568 = vmatprep.subr.bf16.mxu0 0
    %8569 = vmatpush1.bf16.msra.mxu0 %v8551
    %8570 = vmatprep.subr.bf16.mxu0 0
    %8571 = vmatpush1.bf16.msra.mxu0 %v8552
    %8572 = vmatprep.subr.bf16.mxu0 0
    %8573 = vmatpush1.bf16.msra.mxu0 %v8553
    %8574 = vmatprep.subr.bf16.mxu0 0
    %8575 = vmatpush1.bf16.msra.mxu0 %v8554
    %8576 = vmatprep.subr.bf16.mxu0 0
    %8577 = vmatpush1.bf16.msra.mxu0 %v8555
    %8578 = vmatprep.subr.bf16.mxu0 0
    %8579 = vmatpush1.bf16.msra.mxu0 %v8556
    %8580 = vmatprep.subr.bf16.mxu0 0
    %8581 = vmatpush1.bf16.msra.mxu0 %v8557
    %8582 = vmatprep.subr.bf16.mxu0 0
    %8583 = vmatpush1.bf16.msra.mxu0 0
    %8584 = vmatprep.subr.bf16.mxu0 0
    %8585 = vmatpush1.bf16.msra.mxu0 0
    %8586 = vmatprep.subr.bf16.mxu0 0
    %8587 = vmatpush1.bf16.msra.mxu0 0
    %8588 = vmatprep.subr.bf16.mxu0 0
    %8589 = vmatpush1.bf16.msra.mxu0 0
    %8590 = vmatprep.subr.bf16.mxu0 0
    %8591 = vmatpush1.bf16.msra.mxu0 0
    %8592 = vmatprep.subr.bf16.mxu0 0
    %8593 = vmatpush1.bf16.msra.mxu0 0
    %8594 = vmatprep.subr.bf16.mxu0 0
    %8595 = vmatpush1.bf16.msra.mxu0 0
    %8596 = vmatprep.subr.bf16.mxu0 0
    %8597 = vmatpush1.bf16.msra.mxu0 0
    %8598 = vmatprep.mubr.bf16.mxu0 0
    %8599 = vmatmul.mubr.bf16.gmra.mrb[0].mxu0 %v8500
    %v8600 = vpop.f32.mrb[0].mxu0
    %v8601 = vadd.f32 0.0, %v8600
    %v8602 = vpop.f32.mrb[0].mxu0
    %v8603 = vpop.f32.mrb[0].mxu0
    %v8604 = vpop.f32.mrb[0].mxu0
    %8605 = vdwg.mxu0
    %v8606 = vadd.f32 %v8430, %v8601
    %s8607 = scalar_lea.vmem %s0, 96
    %v8608 = vld [vmem:[%s8607] sm:$0x3]
    %v8611 = vunpack.c.l.s4 1966171168
    %v8612 = vunpack.c.0.s8 %v8611
    %v8613 = vlaneseq
    %v8614 = vshrl.u32 %v8613, 7
    %v8615 = vsub.s32 %v8612, %v8614
    %v8616 = vrot.slane %v8608, %v8615
    %v8617 = vcombine.high %v8616, %v8616
    %v8619 = vunpack.c.l.s4 1966171168
    %v8620 = vunpack.c.0.s8 %v8619
    %v8621 = vlaneseq
    %v8622 = vshrl.u32 %v8621, 7
    %v8623 = vsub.s32 %v8620, %v8622
    %v8624 = vrot.slane %v8616, %v8623
    %v8626 = vunpack.c.l.s4 1966171168
    %v8627 = vunpack.c.0.s8 %v8626
    %v8628 = vlaneseq
    %v8629 = vshrl.u32 %v8628, 7
    %v8630 = vsub.s32 %v8627, %v8629
    %v8631 = vrot.slane %v8617, %v8630
    %8634 = vmatprep.subr.bf16.mxu0 0
    %8635 = vmatpush1.bf16.msra.mxu0 %v157
    %8636 = vmatprep.subr.bf16.mxu0 0
    %8637 = vmatpush1.bf16.msra.mxu0 %v158
    %8638 = vmatprep.subr.bf16.mxu0 0
    %8639 = vmatpush1.bf16.msra.mxu0 %v159
    %8640 = vmatprep.subr.bf16.mxu0 0
    %8641 = vmatpush1.bf16.msra.mxu0 %v160
    %8642 = vmatprep.subr.bf16.mxu0 0
    %8643 = vmatpush1.bf16.msra.mxu0 %v161
    %8644 = vmatprep.subr.bf16.mxu0 0
    %8645 = vmatpush1.bf16.msra.mxu0 %v162
    %8646 = vmatprep.subr.bf16.mxu0 0
    %8647 = vmatpush1.bf16.msra.mxu0 %v163
    %8648 = vmatprep.subr.bf16.mxu0 0
    %8649 = vmatpush1.bf16.msra.mxu0 %v164
    %8650 = vmatprep.subr.bf16.mxu0 0
    %8651 = vmatpush1.bf16.msra.mxu0 %v165
    %8652 = vmatprep.subr.bf16.mxu0 0
    %8653 = vmatpush1.bf16.msra.mxu0 %v166
    %8654 = vmatprep.subr.bf16.mxu0 0
    %8655 = vmatpush1.bf16.msra.mxu0 %v167
    %8656 = vmatprep.subr.bf16.mxu0 0
    %8657 = vmatpush1.bf16.msra.mxu0 %v168
    %8658 = vmatprep.subr.bf16.mxu0 0
    %8659 = vmatpush1.bf16.msra.mxu0 %v169
    %8660 = vmatprep.subr.bf16.mxu0 0
    %8661 = vmatpush1.bf16.msra.mxu0 %v170
    %8662 = vmatprep.subr.bf16.mxu0 0
    %8663 = vmatpush1.bf16.msra.mxu0 %v171
    %8664 = vmatprep.subr.bf16.mxu0 0
    %8665 = vmatpush1.bf16.msra.mxu0 %v172
    %8666 = vmatprep.mubr.bf16.mxu0 %v8631
    %8667 = vmatmul.mubr.bf16.gmra.mrb[0].mxu0 %v8624
    %v8668 = vpop.f32.mrb[0].mxu0
    %v8669 = vadd.f32 %v66, %v8668
    %v8670 = vpop.f32.mrb[0].mxu0
    %v8671 = vpop.f32.mrb[0].mxu0
    %v8672 = vpop.f32.mrb[0].mxu0
    %8673 = vdwg.mxu0
    %vm8674 = vcmp.ge.f32.partialorder %v8669, 0.0
    %v8675 = vsel %vm8674, 1.0, 0.0
    %v8676 = vpack.c.bf16 %v8675, %v8675
    %s8677 = scalar_lea.vmem %s3, 3072
    %v8678 = vld [vmem:[%s8677] sm:$0xf]
    %v8679 = vld [vmem:[%s8677 + $0x4] sm:$0xf]
    %v8680 = vld [vmem:[%s8677 + $0x8] sm:$0xf]
    %v8681 = vld [vmem:[%s8677 + $0xc] sm:$0xf]
    %v8682 = vld [vmem:[%s8677 + $0x10] sm:$0xf]
    %v8683 = vld [vmem:[%s8677 + $0x14] sm:$0xf]
    %v8684 = vld [vmem:[%s8677 + $0x18] sm:$0xf]
    %v8685 = vld [vmem:[%s8677 + $0x1c] sm:$0xf]
    %v8686 = vld [vmem:[%s8677 + $0x20] sm:$0xf]
    %v8687 = vld [vmem:[%s8677 + $0x24] sm:$0xf]
    %v8688 = vld [vmem:[%s8677 + $0x28] sm:$0xf]
    %v8689 = vld [vmem:[%s8677 + $0x2c] sm:$0xf]
    %v8690 = vld [vmem:[%s8677 + $0x30] sm:$0xf]
    %v8691 = vld [vmem:[%s8677 + $0x34] sm:$0xf]
    %v8692 = vld [vmem:[%s8677 + $0x38] sm:$0xf]
    %v8693 = vld [vmem:[%s8677 + $0x3c] sm:$0xf]
    %v8710 = vunpack.c.l.b16 %v8678
    %v8711 = vunpack.c.l.b16 %v8679
    %v8712 = vunpack.c.l.b16 %v8680
    %v8713 = vunpack.c.l.b16 %v8681
    %v8714 = vunpack.c.l.b16 %v8682
    %v8715 = vunpack.c.l.b16 %v8683
    %v8716 = vunpack.c.l.b16 %v8684
    %v8717 = vunpack.c.l.b16 %v8685
    %v8718 = vunpack.c.l.b16 %v8686
    %v8719 = vunpack.c.l.b16 %v8687
    %v8720 = vunpack.c.l.b16 %v8688
    %v8721 = vunpack.c.l.b16 %v8689
    %v8722 = vunpack.c.l.b16 %v8690
    %v8723 = vunpack.c.l.b16 %v8691
    %v8724 = vunpack.c.l.b16 %v8692
    %v8725 = vunpack.c.l.b16 %v8693
    %v8726 = vpack.c.b16 %v8711, %v8710
    %v8727 = vpack.c.b16 %v8713, %v8712
    %v8728 = vpack.c.b16 %v8715, %v8714
    %v8729 = vpack.c.b16 %v8717, %v8716
    %v8730 = vpack.c.b16 %v8719, %v8718
    %v8731 = vpack.c.b16 %v8721, %v8720
    %v8732 = vpack.c.b16 %v8723, %v8722
    %v8733 = vpack.c.b16 %v8725, %v8724
    %8742 = vmatprep.subr.bf16.mxu0 0
    %8743 = vmatpush1.bf16.msra.mxu0 %v8726
    %8744 = vmatprep.subr.bf16.mxu0 0
    %8745 = vmatpush1.bf16.msra.mxu0 %v8727
    %8746 = vmatprep.subr.bf16.mxu0 0
    %8747 = vmatpush1.bf16.msra.mxu0 %v8728
    %8748 = vmatprep.subr.bf16.mxu0 0
    %8749 = vmatpush1.bf16.msra.mxu0 %v8729
    %8750 = vmatprep.subr.bf16.mxu0 0
    %8751 = vmatpush1.bf16.msra.mxu0 %v8730
    %8752 = vmatprep.subr.bf16.mxu0 0
    %8753 = vmatpush1.bf16.msra.mxu0 %v8731
    %8754 = vmatprep.subr.bf16.mxu0 0
    %8755 = vmatpush1.bf16.msra.mxu0 %v8732
    %8756 = vmatprep.subr.bf16.mxu0 0
    %8757 = vmatpush1.bf16.msra.mxu0 %v8733
    %8758 = vmatprep.subr.bf16.mxu0 0
    %8759 = vmatpush1.bf16.msra.mxu0 0
    %8760 = vmatprep.subr.bf16.mxu0 0
    %8761 = vmatpush1.bf16.msra.mxu0 0
    %8762 = vmatprep.subr.bf16.mxu0 0
    %8763 = vmatpush1.bf16.msra.mxu0 0
    %8764 = vmatprep.subr.bf16.mxu0 0
    %8765 = vmatpush1.bf16.msra.mxu0 0
    %8766 = vmatprep.subr.bf16.mxu0 0
    %8767 = vmatpush1.bf16.msra.mxu0 0
    %8768 = vmatprep.subr.bf16.mxu0 0
    %8769 = vmatpush1.bf16.msra.mxu0 0
    %8770 = vmatprep.subr.bf16.mxu0 0
    %8771 = vmatpush1.bf16.msra.mxu0 0
    %8772 = vmatprep.subr.bf16.mxu0 0
    %8773 = vmatpush1.bf16.msra.mxu0 0
    %8774 = vmatprep.mubr.bf16.mxu0 0
    %8775 = vmatmul.mubr.bf16.gmra.mrb[0].mxu0 %v8676
    %v8776 = vpop.f32.mrb[0].mxu0
    %v8777 = vadd.f32 0.0, %v8776
    %v8778 = vpop.f32.mrb[0].mxu0
    %v8779 = vpop.f32.mrb[0].mxu0
    %v8780 = vpop.f32.mrb[0].mxu0
    %8781 = vdwg.mxu0
    %v8782 = vadd.f32 %v8606, %v8777
    %v8783 = vld [vmem:[%s4] sm:$0x1]
    %v8785 = vlaneseq
    %v8786 = vshrl.u32 %v8785, 7
    %v8787 = vsub.s32 0, %v8786
    %v8788 = vrot.slane %v8783, %v8787
    %v8790 = vadd.f32 %v8782, %v8788
    %v8791 = vmax.f32 %v8790, 0.0
    %v8792 = vpack.c.bf16 %v8791, %v8791
    %v8793 = vld [vmem:[%s5] sm:$0xf]
    %v8794 = vld [vmem:[%s5 + $0x4] sm:$0xf]
    %v8795 = vld [vmem:[%s5 + $0x8] sm:$0xf]
    %v8796 = vld [vmem:[%s5 + $0xc] sm:$0xf]
    %v8797 = vld [vmem:[%s5 + $0x10] sm:$0xf]
    %v8798 = vld [vmem:[%s5 + $0x14] sm:$0xf]
    %v8799 = vld [vmem:[%s5 + $0x18] sm:$0xf]
    %v8800 = vld [vmem:[%s5 + $0x1c] sm:$0xf]
    %v8801 = vld [vmem:[%s5 + $0x20] sm:$0xf]
    %v8802 = vld [vmem:[%s5 + $0x24] sm:$0xf]
    %v8803 = vld [vmem:[%s5 + $0x28] sm:$0xf]
    %v8804 = vld [vmem:[%s5 + $0x2c] sm:$0xf]
    %v8805 = vld [vmem:[%s5 + $0x30] sm:$0xf]
    %v8806 = vld [vmem:[%s5 + $0x34] sm:$0xf]
    %v8807 = vld [vmem:[%s5 + $0x38] sm:$0xf]
    %v8808 = vld [vmem:[%s5 + $0x3c] sm:$0xf]
    %v8809 = vld [vmem:[%s6] sm:$0x1]
    %v8811 = vlaneseq
    %v8812 = vshrl.u32 %v8811, 7
    %v8813 = vsub.s32 0, %v8812
    %v8814 = vrot.slane %v8809, %v8813
    %v8832 = vunpack.c.l.b16 %v8793
    %v8833 = vunpack.c.l.b16 %v8794
    %v8834 = vunpack.c.l.b16 %v8795
    %v8835 = vunpack.c.l.b16 %v8796
    %v8836 = vunpack.c.l.b16 %v8797
    %v8837 = vunpack.c.l.b16 %v8798
    %v8838 = vunpack.c.l.b16 %v8799
    %v8839 = vunpack.c.l.b16 %v8800
    %v8840 = vunpack.c.l.b16 %v8801
    %v8841 = vunpack.c.l.b16 %v8802
    %v8842 = vunpack.c.l.b16 %v8803
    %v8843 = vunpack.c.l.b16 %v8804
    %v8844 = vunpack.c.l.b16 %v8805
    %v8845 = vunpack.c.l.b16 %v8806
    %v8846 = vunpack.c.l.b16 %v8807
    %v8847 = vunpack.c.l.b16 %v8808
    %v8848 = vpack.c.b16 %v8833, %v8832
    %v8849 = vpack.c.b16 %v8835, %v8834
    %v8850 = vpack.c.b16 %v8837, %v8836
    %v8851 = vpack.c.b16 %v8839, %v8838
    %v8852 = vpack.c.b16 %v8841, %v8840
    %v8853 = vpack.c.b16 %v8843, %v8842
    %v8854 = vpack.c.b16 %v8845, %v8844
    %v8855 = vpack.c.b16 %v8847, %v8846
    %8864 = vmatprep.subr.bf16.mxu0 0
    %8865 = vmatpush1.bf16.msra.mxu0 %v8848
    %8866 = vmatprep.subr.bf16.mxu0 0
    %8867 = vmatpush1.bf16.msra.mxu0 %v8849
    %8868 = vmatprep.subr.bf16.mxu0 0
    %8869 = vmatpush1.bf16.msra.mxu0 %v8850
    %8870 = vmatprep.subr.bf16.mxu0 0
    %8871 = vmatpush1.bf16.msra.mxu0 %v8851
    %8872 = vmatprep.subr.bf16.mxu0 0
    %8873 = vmatpush1.bf16.msra.mxu0 %v8852
    %8874 = vmatprep.subr.bf16.mxu0 0
    %8875 = vmatpush1.bf16.msra.mxu0 %v8853
    %8876 = vmatprep.subr.bf16.mxu0 0
    %8877 = vmatpush1.bf16.msra.mxu0 %v8854
    %8878 = vmatprep.subr.bf16.mxu0 0
    %8879 = vmatpush1.bf16.msra.mxu0 %v8855
    %8880 = vmatprep.subr.bf16.mxu0 0
    %8881 = vmatpush1.bf16.msra.mxu0 0
    %8882 = vmatprep.subr.bf16.mxu0 0
    %8883 = vmatpush1.bf16.msra.mxu0 0
    %8884 = vmatprep.subr.bf16.mxu0 0
    %8885 = vmatpush1.bf16.msra.mxu0 0
    %8886 = vmatprep.subr.bf16.mxu0 0
    %8887 = vmatpush1.bf16.msra.mxu0 0
    %8888 = vmatprep.subr.bf16.mxu0 0
    %8889 = vmatpush1.bf16.msra.mxu0 0
    %8890 = vmatprep.subr.bf16.mxu0 0
    %8891 = vmatpush1.bf16.msra.mxu0 0
    %8892 = vmatprep.subr.bf16.mxu0 0
    %8893 = vmatpush1.bf16.msra.mxu0 0
    %8894 = vmatprep.subr.bf16.mxu0 0
    %8895 = vmatpush1.bf16.msra.mxu0 0
    %8896 = vmatprep.mubr.bf16.mxu0 0
    %8897 = vmatmul.mubr.bf16.gmra.mrb[0].mxu0 %v8792
    %v8898 = vpop.f32.mrb[0].mxu0
    %v8899 = vadd.f32 %v8814, %v8898
    %v8900 = vpop.f32.mrb[0].mxu0
    %v8901 = vpop.f32.mrb[0].mxu0
    %v8902 = vpop.f32.mrb[0].mxu0
    %8903 = vdwg.mxu0
    %8904 = vst [vmem:[#allocation2] sm:$0x3] %v8899
    // Predicated region
    $region30: #{mnist_real0_forward.3} parent=1 // pred_check
      _
    $region31: #{mnist_real0_forward.3} parent=1 // pred_check_branch
      %8906 = sbr.rel (0) target = $region33
    $region32: #{mnist_real0_forward.3} parent=1 // pred_region
      %s8908 = ssub.s32 32, 32
      %8909 = vsyncadd [#allocation3], %s8908
      %s8911 = sshll.u32 [#allocation2], 4
      %s8912 = int_to_ptr.vmem [resolvable:$true] %s8911
      %8914 = dma.vmem_to_hbm [thread:$0]  %s8912, 32, %s7, [#allocation3]
    $region33: #{mnist_real0_forward.3} parent=1 // pred_fallthru
      _
    // Predicated region
    $region34: #{mnist_real0_forward.3} parent=1 // pred_check
      _
    $region35: #{mnist_real0_forward.3} parent=1 // pred_check_branch
      %8916 = sbr.rel (0) target = $region37
    $region36: #{mnist_real0_forward.3} parent=1 // pred_region
      %8917 = dma.done [#allocation3], 32
    $region37: #{mnist_real0_forward.3} parent=1 // pred_fallthru
      _
    %8918 = vsyncpa [#allocation3], 1

</llo_original>
